<compile_context>
chip_gen: v6e
topology: v6e:2x2x1
jax: 0.10.0
libtpu: 0.0.40
codegen_flags: <defaults>
</compile_context>

<pallas_src>
import functools
import math
from typing import NamedTuple

import jax
import jax.numpy as jnp
from jax.experimental import pallas as pl
from jax.experimental.pallas import tpu as pltpu


class ModelConfig(NamedTuple):
    enc_in: int
    dec_in: int
    c_out: int
    d_model: int
    n_heads: int
    d_ff: int
    e_layers: int
    d_layers: int
    seq_len: int
    label_len: int
    pred_len: int
    mark_dim: int


# ----------------------------- in-kernel helpers -----------------------------

def _layer_norm(x, g, b):
    # x: [L, D], g/b: [1, D]
    mu = jnp.mean(x, axis=-1, keepdims=True)
    xc = x - mu
    var = jnp.mean(xc * xc, axis=-1, keepdims=True)
    return xc * jax.lax.rsqrt(var + 1e-5) * g + b


def _ffn(x, w1, b1, w2, b2):
    # conv1 (kernel=1) + ReLU, then conv2 (kernel=1)
    y = jnp.maximum(jnp.dot(x, w1, preferred_element_type=jnp.float32) + b1, 0.0)
    return jnp.dot(y, w2, preferred_element_type=jnp.float32) + b2


def _mha(q_in, kv_in, wqkvo, bias4, n_heads, mask, want_attn):
    """Multi-head attention for ONE batch element.

    q_in: [L, D]   kv_in: [S, D]
    wqkvo: [D, 4D] columns = [Wq | Wk | Wv | Wo]  (1/sqrt(E) folded into Wq)
    bias4: [4, D]  rows = [bq, bk, bv, bo]        (bq scaled)
    mask : additive [L, S] mask or None
    Returns (out [L, D], list of per-head attn [L, S] if want_attn else []).
    """
    D = q_in.shape[1]
    E = D // n_heads
    # Full-width projections (single matmul each), heads are lane slices.
    q = jnp.dot(q_in, wqkvo[:, 0:D], preferred_element_type=jnp.float32) + bias4[0:1]
    k = jnp.dot(kv_in, wqkvo[:, D:2 * D], preferred_element_type=jnp.float32) + bias4[1:2]
    v = jnp.dot(kv_in, wqkvo[:, 2 * D:3 * D], preferred_element_type=jnp.float32) + bias4[2:3]
    dn = (((1,), (1,)), ((), ()))     # contract last dims: [L,E] x [S,E] -> [L,S]
    ctxs, attns = [], []
    for h in range(n_heads):
        sl = slice(h * E, (h + 1) * E)
        s = jax.lax.dot_general(q[:, sl], k[:, sl], dn,
                                preferred_element_type=jnp.float32)
        if mask is not None:
            s = s + mask
        m = jnp.max(s, axis=-1, keepdims=True)
        e = jnp.exp(s - m)
        p = e / jnp.sum(e, axis=-1, keepdims=True)   # exact softmax (attn is output)
        if want_attn:
            attns.append(p)
        ctxs.append(jnp.dot(p, v[:, sl], preferred_element_type=jnp.float32))
    ctx = jnp.concatenate(ctxs, axis=-1)             # [L, D], head-major columns
    out = jnp.dot(ctx, wqkvo[:, 3 * D:4 * D],
                  preferred_element_type=jnp.float32) + bias4[3:4]
    return out, attns


def _embed(xcat, emb_w, pos, c_in):
    """DataEmbedding: circular Conv1d(k=3, no bias) + time linear + pos emb.

    xcat : [L, c_in + n_marks]  (x and time-marks pre-concatenated)
    emb_w: [3*c_in + n_marks, D] rows ordered [W_center; W_time; W_prev; W_next]
    pos  : [L, D]
    The circular shifts are sublane slice+concat rolls; conv taps + time linear
    collapse into a single matmul.
    """
    x = xcat[:, :c_in]
    xm1 = jnp.concatenate([x[-1:], x[:-1]], axis=0)   # x[l-1], circular
    xp1 = jnp.concatenate([x[1:], x[:1]], axis=0)     # x[l+1], circular
    inp = jnp.concatenate([xcat, xm1, xp1], axis=-1)  # [L, (C+M)+2C]
    return jnp.dot(inp, emb_w, preferred_element_type=jnp.float32) + pos
    # dropout == identity (eval)


# ----------------------------- fused model kernel -----------------------------

def _model_kernel(xe_ref, xd_ref, pos_ref, embw_ref, wqkvo_ref,
                  w1_ref, b1_ref, w2_ref, evec_ref, dvec_ref, gvec_ref, pw_ref,
                  out_ref, attn_ref, *, n_heads, enc_in, dec_in):
    L = xe_ref.shape[1]
    Ld = xd_ref.shape[1]
    e_layers = evec_ref.shape[0]
    d_layers = dvec_ref.shape[0]
    we = xe_ref.shape[2] + 2 * enc_in          # rows of the encoder embedding matrix

    pos = pos_ref[...]
    embw = embw_ref[...]
    gvec = gvec_ref[...]

    # ---------------- encoder ----------------
    x = _embed(xe_ref[0], embw[:we], pos[:L], enc_in)
    attn_list = []
    for l in range(e_layers):
        vec = evec_ref[l]                      # [9, D]: bq bk bv bo b2 g1 b1 g2 b2
        new_x, attns = _mha(x, x, wqkvo_ref[l], vec[0:4], n_heads, None, True)
        attn_list.extend(attns)
        x = _layer_norm(x + new_x, vec[5:6], vec[6:7])
        y = _ffn(x, w1_ref[l], b1_ref[l], w2_ref[l], vec[4:5])
        x = _layer_norm(x + y, vec[7:8], vec[8:9])
    enc_out = _layer_norm(x, gvec[0:1], gvec[1:2])
    # lane-dense single store of all encoder attention maps: [L, e_layers*H*S]
    attn_ref[0] = jnp.concatenate(attn_list, axis=-1)

    # ---------------- decoder ----------------
    xd = _embed(xd_ref[0], embw[we:], pos[L:], dec_in)
    if d_layers > 0:   # build the causal mask ONCE (hoisted out of the layer loop)
        row = jax.lax.broadcasted_iota(jnp.int32, (Ld, Ld), 0)
        col = jax.lax.broadcasted_iota(jnp.int32, (Ld, Ld), 1)
        causal = jnp.where(col > row, jnp.float32(-1e30), jnp.float32(0.0))
    for l in range(d_layers):
        vec = dvec_ref[l]                      # [15, D]
        sa, _ = _mha(xd, xd, wqkvo_ref[e_layers + 2 * l], vec[0:4],
                     n_heads, causal, False)
        xd = _layer_norm(xd + sa, vec[9:10], vec[10:11])
        ca, _ = _mha(xd, enc_out, wqkvo_ref[e_layers + 2 * l + 1], vec[4:8],
                     n_heads, None, False)
        xd = _layer_norm(xd + ca, vec[11:12], vec[12:13])
        y = _ffn(xd, w1_ref[e_layers + l], b1_ref[e_layers + l],
                 w2_ref[e_layers + l], vec[8:9])
        xd = _layer_norm(xd + y, vec[13:14], vec[14:15])
    xd = _layer_norm(xd, gvec[2:3], gvec[3:4])
    c_out = out_ref.shape[2]
    out_ref[0] = (jnp.dot(xd, pw_ref[...], preferred_element_type=jnp.float32)
                  + gvec[4:5, :c_out])


# ----------------------------- BlockSpec helpers -----------------------------

def _batched_spec(shape):
    n_rest = len(shape) - 1
    blk = (1,) + tuple(int(s) for s in shape[1:])
    return pl.BlockSpec(blk, lambda b, _n=n_rest: (b,) + (0,) * _n)


def _full_spec(shape):
    nd = len(shape)
    return pl.BlockSpec(tuple(int(s) for s in shape), lambda b, _n=nd: (0,) * _n)


# ----------------------------- host-side packing (run ONCE) -----------------------------

def positional_embedding(L, d_model):
    pos = jnp.arange(L, dtype=jnp.float32)[:, None]
    div = jnp.exp(jnp.arange(0, d_model, 2, dtype=jnp.float32)
                  * (-math.log(10000.0) / d_model))
    pe = jnp.zeros((L, d_model), jnp.float32)
    pe = pe.at[:, 0::2].set(jnp.sin(pos * div))
    pe = pe.at[:, 1::2].set(jnp.cos(pos * div))
    return pe


def prepare_packed(params, cfg):
    """Pack all weights into a small number of stacked tensors (outside jit)."""
    D = cfg.d_model
    E = D // cfg.n_heads
    scale = 1.0 / math.sqrt(E)
    dec_len = cfg.label_len + cfg.pred_len

    def emb_flat(emb):
        # conv_w [D, C, 3] -> taps [3, C, D]; rows: [W_center; W_time; W_prev; W_next]
        w = jnp.transpose(emb["conv_w"], (2, 1, 0))
        return jnp.concatenate([w[1], emb["time_w"], w[0], w[2]], axis=0)

    def attn_pack(p):
        wqkvo = jnp.concatenate([p["wq"] * scale, p["wk"], p["wv"], p["wo"]], axis=1)
        bias4 = jnp.stack([p["bq"] * scale, p["bk"], p["bv"], p["bo"]], axis=0)
        return wqkvo, bias4

    wqkvo_list, evec_list, dvec_list = [], [], []
    w1_list, b1_list, w2_list = [], [], []

    for lp in params["enc_layers"]:
        w, b4 = attn_pack(lp["attn"])
        wqkvo_list.append(w)
        evec_list.append(jnp.concatenate(
            [b4, lp["b2"][None, :],
             lp["ln1_g"][None, :], lp["ln1_b"][None, :],
             lp["ln2_g"][None, :], lp["ln2_b"][None, :]], axis=0))   # [9, D]
        w1_list.append(lp["w1"]); b1_list.append(lp["b1"][None, :]); w2_list.append(lp["w2"])

    for lp in params["dec_layers"]:
        ws, bs4 = attn_pack(lp["self_attn"])
        wc, bc4 = attn_pack(lp["cross_attn"])
        wqkvo_list.append(ws); wqkvo_list.append(wc)
        dvec_list.append(jnp.concatenate(
            [bs4, bc4, lp["b2"][None, :],
             lp["ln1_g"][None, :], lp["ln1_b"][None, :],
             lp["ln2_g"][None, :], lp["ln2_b"][None, :],
             lp["ln3_g"][None, :], lp["ln3_b"][None, :]], axis=0))   # [15, D]
        w1_list.append(lp["w1"]); b1_list.append(lp["b1"][None, :]); w2_list.append(lp["w2"])

    pb_pad = jnp.zeros((D,), jnp.float32).at[:cfg.c_out].set(params["proj_b"])
    gvec = jnp.stack([params["enc_norm_g"], params["enc_norm_b"],
                      params["dec_norm_g"], params["dec_norm_b"], pb_pad], axis=0)

    return dict(
        pos=jnp.concatenate([positional_embedding(cfg.seq_len, D),
                             positional_embedding(dec_len, D)], axis=0),
        embw=jnp.concatenate([emb_flat(params["enc_emb"]),
                              emb_flat(params["dec_emb"])], axis=0),
        wqkvo=jnp.stack(wqkvo_list, axis=0),   # [e + 2d, D, 4D]
        w1=jnp.stack(w1_list, axis=0),         # [e + d, D, d_ff]
        b1=jnp.stack(b1_list, axis=0),         # [e + d, 1, d_ff]
        w2=jnp.stack(w2_list, axis=0),         # [e + d, d_ff, D]
        evec=jnp.stack(evec_list, axis=0),     # [e, 9, D]
        dvec=jnp.stack(dvec_list, axis=0),     # [d, 15, D]
        gvec=gvec,                             # [5, D]
        pw=params["proj_w"],                   # [D, c_out]
    )


# ----------------------------- forward -----------------------------

@functools.partial(jax.jit, static_argnames=("cfg",))
def model_forward(packed, x_enc, x_mark_enc, x_dec, x_mark_dec, *, cfg):
    B, L, _ = x_enc.shape
    Ld = x_dec.shape[1]
    H, eL = cfg.n_heads, cfg.e_layers

    # Cut operand count: x and its time-marks travel as one batched input each.
    xe = jnp.concatenate([x_enc, x_mark_enc], axis=-1)
    xd = jnp.concatenate([x_dec, x_mark_dec], axis=-1)

    ins = [xe, xd, packed["pos"], packed["embw"], packed["wqkvo"],
           packed["w1"], packed["b1"], packed["w2"],
           packed["evec"], packed["dvec"], packed["gvec"], packed["pw"]]
    in_specs = ([_batched_spec(xe.shape), _batched_spec(xd.shape)]
                + [_full_spec(a.shape) for a in ins[2:]])

    out_shapes = [jax.ShapeDtypeStruct((B, Ld, cfg.c_out), jnp.float32),
                  jax.ShapeDtypeStruct((B, L, eL * H * L), jnp.float32)]
    out_specs = [_batched_spec((B, Ld, cfg.c_out)),
                 _batched_spec((B, L, eL * H * L))]

    dec_out, attn_flat = pl.pallas_call(
        functools.partial(_model_kernel, n_heads=H,
                          enc_in=cfg.enc_in, dec_in=cfg.dec_in),
        grid=(B,),
        in_specs=in_specs,
        out_specs=out_specs,
        out_shape=out_shapes,
        compiler_params=pltpu.CompilerParams(
            dimension_semantics=("parallel",),   # 2 TCs on v7x take one batch each
            vmem_limit_bytes=32 * 1024 * 1024),
    )(*ins)

    # un-flatten the lane-dense attention maps: [B, L, e, H, S] -> [B, e, H, L, S]
    attn5 = attn_flat.reshape(B, L, eL, H, L).transpose(0, 2, 3, 1, 4)
    attns = [attn5[:, l] for l in range(eL)]
    return dec_out[:, -cfg.pred_len:, :], attns
    # TODO(synk): dropout is treated as identity (inference/eval semantics).


# ----------------------------- parameter init -----------------------------

def _lin(key, din, dout, scale=0.1):
    kw, kb = jax.random.split(key)
    w = scale * jax.random.normal(kw, (din, dout), jnp.float32)
    b = scale * jax.random.normal(kb, (dout,), jnp.float32)
    return w, b


def make_params(key, cfg):
    keys = iter(jax.random.split(key, 256))
    d_model, d_ff = cfg.d_model, cfg.d_ff

    def attn_params():
        wq, bq = _lin(next(keys), d_model, d_model)
        wk, bk = _lin(next(keys), d_model, d_model)
        wv, bv = _lin(next(keys), d_model, d_model)
        wo, bo = _lin(next(keys), d_model, d_model)
        return dict(wq=wq, bq=bq, wk=wk, bk=bk, wv=wv, bv=bv, wo=wo, bo=bo)

    def emb_params(c_in):
        conv_w = 0.1 * jax.random.normal(next(keys), (d_model, c_in, 3), jnp.float32)
        time_w = 0.1 * jax.random.normal(next(keys), (cfg.mark_dim, d_model), jnp.float32)
        return dict(conv_w=conv_w, time_w=time_w)

    def ff():
        w1, b1 = _lin(next(keys), d_model, d_ff)
        w2, b2 = _lin(next(keys), d_ff, d_model)
        return w1, b1, w2, b2

    enc_layers = []
    for _ in range(cfg.e_layers):
        w1, b1, w2, b2 = ff()
        enc_layers.append(dict(
            attn=attn_params(), w1=w1, b1=b1, w2=w2, b2=b2,
            ln1_g=jnp.ones((d_model,)), ln1_b=jnp.zeros((d_model,)),
            ln2_g=jnp.ones((d_model,)), ln2_b=jnp.zeros((d_model,))))

    dec_layers = []
    for _ in range(cfg.d_layers):
        w1, b1, w2, b2 = ff()
        dec_layers.append(dict(
            self_attn=attn_params(), cross_attn=attn_params(),
            w1=w1, b1=b1, w2=w2, b2=b2,
            ln1_g=jnp.ones((d_model,)), ln1_b=jnp.zeros((d_model,)),
            ln2_g=jnp.ones((d_model,)), ln2_b=jnp.zeros((d_model,)),
            ln3_g=jnp.ones((d_model,)), ln3_b=jnp.zeros((d_model,))))

    proj_w, proj_b = _lin(next(keys), d_model, cfg.c_out)
    return dict(
        enc_emb=emb_params(cfg.enc_in), dec_emb=emb_params(cfg.dec_in),
        enc_layers=enc_layers, dec_layers=dec_layers,
        enc_norm_g=jnp.ones((d_model,)), enc_norm_b=jnp.zeros((d_model,)),
        dec_norm_g=jnp.ones((d_model,)), dec_norm_b=jnp.zeros((d_model,)),
        proj_w=proj_w, proj_b=proj_b)


# ----------------------------- main -----------------------------

if __name__ == "__main__":
    cfg = ModelConfig(enc_in=4, dec_in=4, c_out=4, d_model=32, n_heads=4, d_ff=64,
                      e_layers=2, d_layers=1, seq_len=16, label_len=8, pred_len=8,
                      mark_dim=4)
    B = 2
    dec_len = cfg.label_len + cfg.pred_len

    key = jax.random.PRNGKey(0)
    kp, k1, k2, k3, k4 = jax.random.split(key, 5)
    params = make_params(kp, cfg)
    packed = prepare_packed(params, cfg)     # weight packing runs ONCE, outside jit

    x_enc = jax.random.normal(k1, (B, cfg.seq_len, cfg.enc_in), jnp.float32)
    x_mark_enc = jax.random.normal(k2, (B, cfg.seq_len, cfg.mark_dim), jnp.float32)
    x_dec = jax.random.normal(k3, (B, dec_len, cfg.dec_in), jnp.float32)
    x_mark_dec = jax.random.normal(k4, (B, dec_len, cfg.mark_dim), jnp.float32)

    out, attns = model_forward(packed, x_enc, x_mark_enc, x_dec, x_mark_dec, cfg=cfg)
    out = jax.block_until_ready(out)
    attns = [jax.block_until_ready(a) for a in attns]

    assert out.shape == (B, cfg.pred_len, cfg.c_out)
    assert len(attns) == cfg.e_layers
    assert attns[0].shape == (B, cfg.n_heads, cfg.seq_len, cfg.seq_len)
    assert bool(jnp.all(jnp.isfinite(out)))
    assert bool(jnp.allclose(jnp.sum(attns[0], axis=-1), 1.0, atol=1e-4))
    print("KERNEL_OK")
</pallas_src>

<mosaic_0001>
module attributes {stable_mosaic.version = 11 : i64} {
  func.func @_model_kernel(%arg0: i32, %arg1: memref<1x16x8xf32, #tpu.memory_space<vmem>>, %arg2: memref<1x16x8xf32, #tpu.memory_space<vmem>>, %arg3: memref<32x32xf32, #tpu.memory_space<vmem>>, %arg4: memref<32x32xf32, #tpu.memory_space<vmem>>, %arg5: memref<4x32x128xf32, #tpu.memory_space<vmem>>, %arg6: memref<3x32x64xf32, #tpu.memory_space<vmem>>, %arg7: memref<3x1x64xf32, #tpu.memory_space<vmem>>, %arg8: memref<3x64x32xf32, #tpu.memory_space<vmem>>, %arg9: memref<2x9x32xf32, #tpu.memory_space<vmem>>, %arg10: memref<1x15x32xf32, #tpu.memory_space<vmem>>, %arg11: memref<5x32xf32, #tpu.memory_space<vmem>>, %arg12: memref<32x4xf32, #tpu.memory_space<vmem>>, %arg13: memref<1x16x4xf32, #tpu.memory_space<vmem>>, %arg14: memref<1x16x128xf32, #tpu.memory_space<vmem>>) attributes {dimension_semantics = [#tpu.dimension_semantics<parallel>], iteration_bounds = array<i64: 2>, scalar_prefetch = 0 : i64, scratch_operands = 0 : i64, tpu.core_type = #tpu.core_type<tc>, window_params = [{transform_indices = @transform_0, window_bounds = array<i64: 1, 16, 8>}, {transform_indices = @transform_1, window_bounds = array<i64: 1, 16, 8>}, {pipeline_mode = #tpu.pipeline_mode<synchronous>, transform_indices = @transform_2, window_bounds = array<i64: 32, 32>}, {pipeline_mode = #tpu.pipeline_mode<synchronous>, transform_indices = @transform_3, window_bounds = array<i64: 32, 32>}, {pipeline_mode = #tpu.pipeline_mode<synchronous>, transform_indices = @transform_4, window_bounds = array<i64: 4, 32, 128>}, {pipeline_mode = #tpu.pipeline_mode<synchronous>, transform_indices = @transform_5, window_bounds = array<i64: 3, 32, 64>}, {pipeline_mode = #tpu.pipeline_mode<synchronous>, transform_indices = @transform_6, window_bounds = array<i64: 3, 1, 64>}, {pipeline_mode = #tpu.pipeline_mode<synchronous>, transform_indices = @transform_7, window_bounds = array<i64: 3, 64, 32>}, {pipeline_mode = #tpu.pipeline_mode<synchronous>, transform_indices = @transform_8, window_bounds = array<i64: 2, 9, 32>}, {pipeline_mode = #tpu.pipeline_mode<synchronous>, transform_indices = @transform_9, window_bounds = array<i64: 1, 15, 32>}, {pipeline_mode = #tpu.pipeline_mode<synchronous>, transform_indices = @transform_10, window_bounds = array<i64: 5, 32>}, {pipeline_mode = #tpu.pipeline_mode<synchronous>, transform_indices = @transform_11, window_bounds = array<i64: 32, 4>}, {transform_indices = @transform_12, window_bounds = array<i64: 1, 16, 4>}, {transform_indices = @transform_13, window_bounds = array<i64: 1, 16, 128>}]} {
    %c0 = arith.constant 0 : index
    %c0_0 = arith.constant 0 : index
    %0 = vector.load %arg3[%c0, %c0_0] : memref<32x32xf32, #tpu.memory_space<vmem>>, vector<32x32xf32>
    %c0_1 = arith.constant 0 : index
    %c0_2 = arith.constant 0 : index
    %1 = vector.load %arg4[%c0_1, %c0_2] : memref<32x32xf32, #tpu.memory_space<vmem>>, vector<32x32xf32>
    %c0_3 = arith.constant 0 : index
    %c0_4 = arith.constant 0 : index
    %2 = vector.load %arg11[%c0_3, %c0_4] : memref<5x32xf32, #tpu.memory_space<vmem>>, vector<5x32xf32>
    %c0_5 = arith.constant 0 : index
    %c0_6 = arith.constant 0 : index
    %c0_7 = arith.constant 0 : index
    %3 = vector.load %arg1[%c0_5, %c0_6, %c0_7] : memref<1x16x8xf32, #tpu.memory_space<vmem>>, vector<1x16x8xf32>
    %4 = vector.shape_cast %3 : vector<1x16x8xf32> to vector<16x8xf32>
    %5 = vector.extract_strided_slice %1 {offsets = [0, 0], sizes = [16, 32], strides = [1, 1]} : vector<32x32xf32> to vector<16x32xf32>
    %6 = vector.extract_strided_slice %0 {offsets = [0, 0], sizes = [16, 32], strides = [1, 1]} : vector<32x32xf32> to vector<16x32xf32>
    %7 = vector.extract_strided_slice %4 {offsets = [0, 0], sizes = [16, 4], strides = [1, 1]} : vector<16x8xf32> to vector<16x4xf32>
    %8 = vector.extract_strided_slice %7 {offsets = [15, 0], sizes = [1, 4], strides = [1, 1]} : vector<16x4xf32> to vector<1x4xf32>
    %9 = vector.extract_strided_slice %7 {offsets = [0, 0], sizes = [15, 4], strides = [1, 1]} : vector<16x4xf32> to vector<15x4xf32>
    %10 = tpu.concatenate %8, %9 in 0 : vector<1x4xf32>, vector<15x4xf32> -> vector<16x4xf32>
    %11 = vector.extract_strided_slice %7 {offsets = [1, 0], sizes = [15, 4], strides = [1, 1]} : vector<16x4xf32> to vector<15x4xf32>
    %12 = vector.extract_strided_slice %7 {offsets = [0, 0], sizes = [1, 4], strides = [1, 1]} : vector<16x4xf32> to vector<1x4xf32>
    %13 = tpu.concatenate %11, %12 in 0 : vector<15x4xf32>, vector<1x4xf32> -> vector<16x4xf32>
    %14 = tpu.concatenate %4, %10, %13 in 1 : vector<16x8xf32>, vector<16x4xf32>, vector<16x4xf32> -> vector<16x16xf32>
    %cst = arith.constant dense<0.000000e+00> : vector<16x32xf32>
    %15 = tpu.matmul %14, %5, %cst {dimension_numbers = #tpu.dot_dimension_numbers<[1], [0], [0], [1], [0, 0, 1, 1], [], []>} : vector<16x16xf32>, vector<16x32xf32>, vector<16x32xf32> -> vector<16x32xf32>
    %16 = arith.addf %15, %6 : vector<16x32xf32>
    %c0_8 = arith.constant 0 : index
    %c0_9 = arith.constant 0 : index
    %c0_10 = arith.constant 0 : index
    %17 = vector.load %arg9[%c0_8, %c0_9, %c0_10] : memref<2x9x32xf32, #tpu.memory_space<vmem>>, vector<1x9x32xf32>
    %18 = vector.shape_cast %17 : vector<1x9x32xf32> to vector<9x32xf32>
    %c0_11 = arith.constant 0 : index
    %c0_12 = arith.constant 0 : index
    %c0_13 = arith.constant 0 : index
    %19 = vector.load %arg5[%c0_11, %c0_12, %c0_13] : memref<4x32x128xf32, #tpu.memory_space<vmem>>, vector<1x32x128xf32>
    %20 = vector.shape_cast %19 : vector<1x32x128xf32> to vector<32x128xf32>
    %21 = vector.extract_strided_slice %18 {offsets = [0, 0], sizes = [4, 32], strides = [1, 1]} : vector<9x32xf32> to vector<4x32xf32>
    %22 = vector.extract_strided_slice %20 {offsets = [0, 0], sizes = [32, 32], strides = [1, 1]} : vector<32x128xf32> to vector<32x32xf32>
    %cst_14 = arith.constant dense<0.000000e+00> : vector<16x32xf32>
    %23 = tpu.matmul %16, %22, %cst_14 {dimension_numbers = #tpu.dot_dimension_numbers<[1], [0], [0], [1], [0, 0, 1, 1], [], []>} : vector<16x32xf32>, vector<32x32xf32>, vector<16x32xf32> -> vector<16x32xf32>
    %24 = vector.extract_strided_slice %21 {offsets = [0, 0], sizes = [1, 32], strides = [1, 1]} : vector<4x32xf32> to vector<1x32xf32>
    %25 = vector.broadcast %24 : vector<1x32xf32> to vector<16x32xf32>
    %26 = arith.addf %23, %25 : vector<16x32xf32>
    %27 = vector.extract_strided_slice %20 {offsets = [0, 32], sizes = [32, 32], strides = [1, 1]} : vector<32x128xf32> to vector<32x32xf32>
    %cst_15 = arith.constant dense<0.000000e+00> : vector<16x32xf32>
    %28 = tpu.matmul %16, %27, %cst_15 {dimension_numbers = #tpu.dot_dimension_numbers<[1], [0], [0], [1], [0, 0, 1, 1], [], []>} : vector<16x32xf32>, vector<32x32xf32>, vector<16x32xf32> -> vector<16x32xf32>
    %29 = vector.extract_strided_slice %21 {offsets = [1, 0], sizes = [1, 32], strides = [1, 1]} : vector<4x32xf32> to vector<1x32xf32>
    %30 = vector.broadcast %29 : vector<1x32xf32> to vector<16x32xf32>
    %31 = arith.addf %28, %30 : vector<16x32xf32>
    %32 = vector.extract_strided_slice %20 {offsets = [0, 64], sizes = [32, 32], strides = [1, 1]} : vector<32x128xf32> to vector<32x32xf32>
    %cst_16 = arith.constant dense<0.000000e+00> : vector<16x32xf32>
    %33 = tpu.matmul %16, %32, %cst_16 {dimension_numbers = #tpu.dot_dimension_numbers<[1], [0], [0], [1], [0, 0, 1, 1], [], []>} : vector<16x32xf32>, vector<32x32xf32>, vector<16x32xf32> -> vector<16x32xf32>
    %34 = vector.extract_strided_slice %21 {offsets = [2, 0], sizes = [1, 32], strides = [1, 1]} : vector<4x32xf32> to vector<1x32xf32>
    %35 = vector.broadcast %34 : vector<1x32xf32> to vector<16x32xf32>
    %36 = arith.addf %33, %35 : vector<16x32xf32>
    %37 = vector.extract_strided_slice %26 {offsets = [0, 0], sizes = [16, 8], strides = [1, 1]} : vector<16x32xf32> to vector<16x8xf32>
    %38 = vector.extract_strided_slice %31 {offsets = [0, 0], sizes = [16, 8], strides = [1, 1]} : vector<16x32xf32> to vector<16x8xf32>
    %cst_17 = arith.constant dense<0.000000e+00> : vector<16x16xf32>
    %39 = tpu.matmul %37, %38, %cst_17 {dimension_numbers = #tpu.dot_dimension_numbers<[1], [1], [0], [0], [0, 0, 1, 0], [], []>} : vector<16x8xf32>, vector<16x8xf32>, vector<16x16xf32> -> vector<16x16xf32>
    %cst_18 = arith.constant dense<0xFF800000> : vector<16xf32>
    %40 = vector.multi_reduction <maximumf>, %39, %cst_18 [1] : vector<16x16xf32> to vector<16xf32>
    %41 = vector.shape_cast %40 : vector<16xf32> to vector<16x1xf32>
    %42 = vector.broadcast %41 : vector<16x1xf32> to vector<16x16xf32>
    %43 = arith.subf %39, %42 : vector<16x16xf32>
    %44 = math.exp %43 : vector<16x16xf32>
    %cst_19 = arith.constant dense<0.000000e+00> : vector<16xf32>
    %45 = vector.multi_reduction <add>, %44, %cst_19 [1] : vector<16x16xf32> to vector<16xf32>
    %46 = vector.shape_cast %45 : vector<16xf32> to vector<16x1xf32>
    %47 = vector.broadcast %46 : vector<16x1xf32> to vector<16x16xf32>
    %48 = arith.divf %44, %47 : vector<16x16xf32>
    %49 = vector.extract_strided_slice %36 {offsets = [0, 0], sizes = [16, 8], strides = [1, 1]} : vector<16x32xf32> to vector<16x8xf32>
    %cst_20 = arith.constant dense<0.000000e+00> : vector<16x8xf32>
    %50 = tpu.matmul %48, %49, %cst_20 {dimension_numbers = #tpu.dot_dimension_numbers<[1], [0], [0], [1], [0, 0, 1, 1], [], []>} : vector<16x16xf32>, vector<16x8xf32>, vector<16x8xf32> -> vector<16x8xf32>
    %51 = vector.extract_strided_slice %26 {offsets = [0, 8], sizes = [16, 8], strides = [1, 1]} : vector<16x32xf32> to vector<16x8xf32>
    %52 = vector.extract_strided_slice %31 {offsets = [0, 8], sizes = [16, 8], strides = [1, 1]} : vector<16x32xf32> to vector<16x8xf32>
    %cst_21 = arith.constant dense<0.000000e+00> : vector<16x16xf32>
    %53 = tpu.matmul %51, %52, %cst_21 {dimension_numbers = #tpu.dot_dimension_numbers<[1], [1], [0], [0], [0, 0, 1, 0], [], []>} : vector<16x8xf32>, vector<16x8xf32>, vector<16x16xf32> -> vector<16x16xf32>
    %cst_22 = arith.constant dense<0xFF800000> : vector<16xf32>
    %54 = vector.multi_reduction <maximumf>, %53, %cst_22 [1] : vector<16x16xf32> to vector<16xf32>
    %55 = vector.shape_cast %54 : vector<16xf32> to vector<16x1xf32>
    %56 = vector.broadcast %55 : vector<16x1xf32> to vector<16x16xf32>
    %57 = arith.subf %53, %56 : vector<16x16xf32>
    %58 = math.exp %57 : vector<16x16xf32>
    %cst_23 = arith.constant dense<0.000000e+00> : vector<16xf32>
    %59 = vector.multi_reduction <add>, %58, %cst_23 [1] : vector<16x16xf32> to vector<16xf32>
    %60 = vector.shape_cast %59 : vector<16xf32> to vector<16x1xf32>
    %61 = vector.broadcast %60 : vector<16x1xf32> to vector<16x16xf32>
    %62 = arith.divf %58, %61 : vector<16x16xf32>
    %63 = vector.extract_strided_slice %36 {offsets = [0, 8], sizes = [16, 8], strides = [1, 1]} : vector<16x32xf32> to vector<16x8xf32>
    %cst_24 = arith.constant dense<0.000000e+00> : vector<16x8xf32>
    %64 = tpu.matmul %62, %63, %cst_24 {dimension_numbers = #tpu.dot_dimension_numbers<[1], [0], [0], [1], [0, 0, 1, 1], [], []>} : vector<16x16xf32>, vector<16x8xf32>, vector<16x8xf32> -> vector<16x8xf32>
    %65 = vector.extract_strided_slice %26 {offsets = [0, 16], sizes = [16, 8], strides = [1, 1]} : vector<16x32xf32> to vector<16x8xf32>
    %66 = vector.extract_strided_slice %31 {offsets = [0, 16], sizes = [16, 8], strides = [1, 1]} : vector<16x32xf32> to vector<16x8xf32>
    %cst_25 = arith.constant dense<0.000000e+00> : vector<16x16xf32>
    %67 = tpu.matmul %65, %66, %cst_25 {dimension_numbers = #tpu.dot_dimension_numbers<[1], [1], [0], [0], [0, 0, 1, 0], [], []>} : vector<16x8xf32>, vector<16x8xf32>, vector<16x16xf32> -> vector<16x16xf32>
    %cst_26 = arith.constant dense<0xFF800000> : vector<16xf32>
    %68 = vector.multi_reduction <maximumf>, %67, %cst_26 [1] : vector<16x16xf32> to vector<16xf32>
    %69 = vector.shape_cast %68 : vector<16xf32> to vector<16x1xf32>
    %70 = vector.broadcast %69 : vector<16x1xf32> to vector<16x16xf32>
    %71 = arith.subf %67, %70 : vector<16x16xf32>
    %72 = math.exp %71 : vector<16x16xf32>
    %cst_27 = arith.constant dense<0.000000e+00> : vector<16xf32>
    %73 = vector.multi_reduction <add>, %72, %cst_27 [1] : vector<16x16xf32> to vector<16xf32>
    %74 = vector.shape_cast %73 : vector<16xf32> to vector<16x1xf32>
    %75 = vector.broadcast %74 : vector<16x1xf32> to vector<16x16xf32>
    %76 = arith.divf %72, %75 : vector<16x16xf32>
    %77 = vector.extract_strided_slice %36 {offsets = [0, 16], sizes = [16, 8], strides = [1, 1]} : vector<16x32xf32> to vector<16x8xf32>
    %cst_28 = arith.constant dense<0.000000e+00> : vector<16x8xf32>
    %78 = tpu.matmul %76, %77, %cst_28 {dimension_numbers = #tpu.dot_dimension_numbers<[1], [0], [0], [1], [0, 0, 1, 1], [], []>} : vector<16x16xf32>, vector<16x8xf32>, vector<16x8xf32> -> vector<16x8xf32>
    %79 = vector.extract_strided_slice %26 {offsets = [0, 24], sizes = [16, 8], strides = [1, 1]} : vector<16x32xf32> to vector<16x8xf32>
    %80 = vector.extract_strided_slice %31 {offsets = [0, 24], sizes = [16, 8], strides = [1, 1]} : vector<16x32xf32> to vector<16x8xf32>
    %cst_29 = arith.constant dense<0.000000e+00> : vector<16x16xf32>
    %81 = tpu.matmul %79, %80, %cst_29 {dimension_numbers = #tpu.dot_dimension_numbers<[1], [1], [0], [0], [0, 0, 1, 0], [], []>} : vector<16x8xf32>, vector<16x8xf32>, vector<16x16xf32> -> vector<16x16xf32>
    %cst_30 = arith.constant dense<0xFF800000> : vector<16xf32>
    %82 = vector.multi_reduction <maximumf>, %81, %cst_30 [1] : vector<16x16xf32> to vector<16xf32>
    %83 = vector.shape_cast %82 : vector<16xf32> to vector<16x1xf32>
    %84 = vector.broadcast %83 : vector<16x1xf32> to vector<16x16xf32>
    %85 = arith.subf %81, %84 : vector<16x16xf32>
    %86 = math.exp %85 : vector<16x16xf32>
    %cst_31 = arith.constant dense<0.000000e+00> : vector<16xf32>
    %87 = vector.multi_reduction <add>, %86, %cst_31 [1] : vector<16x16xf32> to vector<16xf32>
    %88 = vector.shape_cast %87 : vector<16xf32> to vector<16x1xf32>
    %89 = vector.broadcast %88 : vector<16x1xf32> to vector<16x16xf32>
    %90 = arith.divf %86, %89 : vector<16x16xf32>
    %91 = vector.extract_strided_slice %36 {offsets = [0, 24], sizes = [16, 8], strides = [1, 1]} : vector<16x32xf32> to vector<16x8xf32>
    %cst_32 = arith.constant dense<0.000000e+00> : vector<16x8xf32>
    %92 = tpu.matmul %90, %91, %cst_32 {dimension_numbers = #tpu.dot_dimension_numbers<[1], [0], [0], [1], [0, 0, 1, 1], [], []>} : vector<16x16xf32>, vector<16x8xf32>, vector<16x8xf32> -> vector<16x8xf32>
    %93 = tpu.concatenate %50, %64, %78, %92 in 1 : vector<16x8xf32>, vector<16x8xf32>, vector<16x8xf32>, vector<16x8xf32> -> vector<16x32xf32>
    %94 = vector.extract_strided_slice %20 {offsets = [0, 96], sizes = [32, 32], strides = [1, 1]} : vector<32x128xf32> to vector<32x32xf32>
    %cst_33 = arith.constant dense<0.000000e+00> : vector<16x32xf32>
    %95 = tpu.matmul %93, %94, %cst_33 {dimension_numbers = #tpu.dot_dimension_numbers<[1], [0], [0], [1], [0, 0, 1, 1], [], []>} : vector<16x32xf32>, vector<32x32xf32>, vector<16x32xf32> -> vector<16x32xf32>
    %96 = vector.extract_strided_slice %21 {offsets = [3, 0], sizes = [1, 32], strides = [1, 1]} : vector<4x32xf32> to vector<1x32xf32>
    %97 = vector.broadcast %96 : vector<1x32xf32> to vector<16x32xf32>
    %98 = arith.addf %95, %97 : vector<16x32xf32>
    %99 = arith.addf %16, %98 : vector<16x32xf32>
    %100 = vector.extract_strided_slice %18 {offsets = [5, 0], sizes = [1, 32], strides = [1, 1]} : vector<9x32xf32> to vector<1x32xf32>
    %101 = vector.extract_strided_slice %18 {offsets = [6, 0], sizes = [1, 32], strides = [1, 1]} : vector<9x32xf32> to vector<1x32xf32>
    %cst_34 = arith.constant dense<0.000000e+00> : vector<16xf32>
    %102 = vector.multi_reduction <add>, %99, %cst_34 [1] : vector<16x32xf32> to vector<16xf32>
    %103 = vector.shape_cast %102 : vector<16xf32> to vector<16x1xf32>
    %cst_35 = arith.constant 3.200000e+01 : f32
    %104 = vector.broadcast %cst_35 : f32 to vector<16x1xf32>
    %105 = arith.divf %103, %104 : vector<16x1xf32>
    %106 = vector.broadcast %105 : vector<16x1xf32> to vector<16x32xf32>
    %107 = arith.subf %99, %106 : vector<16x32xf32>
    %108 = arith.mulf %107, %107 : vector<16x32xf32>
    %cst_36 = arith.constant dense<0.000000e+00> : vector<16xf32>
    %109 = vector.multi_reduction <add>, %108, %cst_36 [1] : vector<16x32xf32> to vector<16xf32>
    %110 = vector.shape_cast %109 : vector<16xf32> to vector<16x1xf32>
    %cst_37 = arith.constant 3.200000e+01 : f32
    %111 = vector.broadcast %cst_37 : f32 to vector<16x1xf32>
    %112 = arith.divf %110, %111 : vector<16x1xf32>
    %cst_38 = arith.constant 9.99999974E-6 : f32
    %113 = vector.broadcast %cst_38 : f32 to vector<16x1xf32>
    %114 = arith.addf %112, %113 : vector<16x1xf32>
    %115 = math.rsqrt %114 : vector<16x1xf32>
    %116 = vector.broadcast %115 : vector<16x1xf32> to vector<16x32xf32>
    %117 = arith.mulf %107, %116 : vector<16x32xf32>
    %118 = vector.broadcast %100 : vector<1x32xf32> to vector<16x32xf32>
    %119 = arith.mulf %117, %118 : vector<16x32xf32>
    %120 = vector.broadcast %101 : vector<1x32xf32> to vector<16x32xf32>
    %121 = arith.addf %119, %120 : vector<16x32xf32>
    %c0_39 = arith.constant 0 : index
    %c0_40 = arith.constant 0 : index
    %c0_41 = arith.constant 0 : index
    %122 = vector.load %arg6[%c0_39, %c0_40, %c0_41] : memref<3x32x64xf32, #tpu.memory_space<vmem>>, vector<1x32x64xf32>
    %123 = vector.shape_cast %122 : vector<1x32x64xf32> to vector<32x64xf32>
    %c0_42 = arith.constant 0 : index
    %c0_43 = arith.constant 0 : index
    %c0_44 = arith.constant 0 : index
    %124 = vector.load %arg7[%c0_42, %c0_43, %c0_44] : memref<3x1x64xf32, #tpu.memory_space<vmem>>, vector<1x1x64xf32>
    %125 = vector.shape_cast %124 : vector<1x1x64xf32> to vector<1x64xf32>
    %c0_45 = arith.constant 0 : index
    %c0_46 = arith.constant 0 : index
    %c0_47 = arith.constant 0 : index
    %126 = vector.load %arg8[%c0_45, %c0_46, %c0_47] : memref<3x64x32xf32, #tpu.memory_space<vmem>>, vector<1x64x32xf32>
    %127 = vector.shape_cast %126 : vector<1x64x32xf32> to vector<64x32xf32>
    %128 = vector.extract_strided_slice %18 {offsets = [4, 0], sizes = [1, 32], strides = [1, 1]} : vector<9x32xf32> to vector<1x32xf32>
    %cst_48 = arith.constant dense<0.000000e+00> : vector<16x64xf32>
    %129 = tpu.matmul %121, %123, %cst_48 {dimension_numbers = #tpu.dot_dimension_numbers<[1], [0], [0], [1], [0, 0, 1, 1], [], []>} : vector<16x32xf32>, vector<32x64xf32>, vector<16x64xf32> -> vector<16x64xf32>
    %130 = vector.broadcast %125 : vector<1x64xf32> to vector<16x64xf32>
    %131 = arith.addf %129, %130 : vector<16x64xf32>
    %cst_49 = arith.constant 0.000000e+00 : f32
    %132 = vector.broadcast %cst_49 : f32 to vector<16x64xf32>
    %133 = arith.maximumf %131, %132 : vector<16x64xf32>
    %cst_50 = arith.constant dense<0.000000e+00> : vector<16x32xf32>
    %134 = tpu.matmul %133, %127, %cst_50 {dimension_numbers = #tpu.dot_dimension_numbers<[1], [0], [0], [1], [0, 0, 1, 1], [], []>} : vector<16x64xf32>, vector<64x32xf32>, vector<16x32xf32> -> vector<16x32xf32>
    %135 = vector.broadcast %128 : vector<1x32xf32> to vector<16x32xf32>
    %136 = arith.addf %134, %135 : vector<16x32xf32>
    %137 = arith.addf %121, %136 : vector<16x32xf32>
    %138 = vector.extract_strided_slice %18 {offsets = [7, 0], sizes = [1, 32], strides = [1, 1]} : vector<9x32xf32> to vector<1x32xf32>
    %139 = vector.extract_strided_slice %18 {offsets = [8, 0], sizes = [1, 32], strides = [1, 1]} : vector<9x32xf32> to vector<1x32xf32>
    %cst_51 = arith.constant dense<0.000000e+00> : vector<16xf32>
    %140 = vector.multi_reduction <add>, %137, %cst_51 [1] : vector<16x32xf32> to vector<16xf32>
    %141 = vector.shape_cast %140 : vector<16xf32> to vector<16x1xf32>
    %cst_52 = arith.constant 3.200000e+01 : f32
    %142 = vector.broadcast %cst_52 : f32 to vector<16x1xf32>
    %143 = arith.divf %141, %142 : vector<16x1xf32>
    %144 = vector.broadcast %143 : vector<16x1xf32> to vector<16x32xf32>
    %145 = arith.subf %137, %144 : vector<16x32xf32>
    %146 = arith.mulf %145, %145 : vector<16x32xf32>
    %cst_53 = arith.constant dense<0.000000e+00> : vector<16xf32>
    %147 = vector.multi_reduction <add>, %146, %cst_53 [1] : vector<16x32xf32> to vector<16xf32>
    %148 = vector.shape_cast %147 : vector<16xf32> to vector<16x1xf32>
    %cst_54 = arith.constant 3.200000e+01 : f32
    %149 = vector.broadcast %cst_54 : f32 to vector<16x1xf32>
    %150 = arith.divf %148, %149 : vector<16x1xf32>
    %cst_55 = arith.constant 9.99999974E-6 : f32
    %151 = vector.broadcast %cst_55 : f32 to vector<16x1xf32>
    %152 = arith.addf %150, %151 : vector<16x1xf32>
    %153 = math.rsqrt %152 : vector<16x1xf32>
    %154 = vector.broadcast %153 : vector<16x1xf32> to vector<16x32xf32>
    %155 = arith.mulf %145, %154 : vector<16x32xf32>
    %156 = vector.broadcast %138 : vector<1x32xf32> to vector<16x32xf32>
    %157 = arith.mulf %155, %156 : vector<16x32xf32>
    %158 = vector.broadcast %139 : vector<1x32xf32> to vector<16x32xf32>
    %159 = arith.addf %157, %158 : vector<16x32xf32>
    %c1 = arith.constant 1 : index
    %c0_56 = arith.constant 0 : index
    %c0_57 = arith.constant 0 : index
    %160 = vector.load %arg9[%c1, %c0_56, %c0_57] : memref<2x9x32xf32, #tpu.memory_space<vmem>>, vector<1x9x32xf32>
    %161 = vector.shape_cast %160 : vector<1x9x32xf32> to vector<9x32xf32>
    %c1_58 = arith.constant 1 : index
    %c0_59 = arith.constant 0 : index
    %c0_60 = arith.constant 0 : index
    %162 = vector.load %arg5[%c1_58, %c0_59, %c0_60] : memref<4x32x128xf32, #tpu.memory_space<vmem>>, vector<1x32x128xf32>
    %163 = vector.shape_cast %162 : vector<1x32x128xf32> to vector<32x128xf32>
    %164 = vector.extract_strided_slice %161 {offsets = [0, 0], sizes = [4, 32], strides = [1, 1]} : vector<9x32xf32> to vector<4x32xf32>
    %165 = vector.extract_strided_slice %163 {offsets = [0, 0], sizes = [32, 32], strides = [1, 1]} : vector<32x128xf32> to vector<32x32xf32>
    %cst_61 = arith.constant dense<0.000000e+00> : vector<16x32xf32>
    %166 = tpu.matmul %159, %165, %cst_61 {dimension_numbers = #tpu.dot_dimension_numbers<[1], [0], [0], [1], [0, 0, 1, 1], [], []>} : vector<16x32xf32>, vector<32x32xf32>, vector<16x32xf32> -> vector<16x32xf32>
    %167 = vector.extract_strided_slice %164 {offsets = [0, 0], sizes = [1, 32], strides = [1, 1]} : vector<4x32xf32> to vector<1x32xf32>
    %168 = vector.broadcast %167 : vector<1x32xf32> to vector<16x32xf32>
    %169 = arith.addf %166, %168 : vector<16x32xf32>
    %170 = vector.extract_strided_slice %163 {offsets = [0, 32], sizes = [32, 32], strides = [1, 1]} : vector<32x128xf32> to vector<32x32xf32>
    %cst_62 = arith.constant dense<0.000000e+00> : vector<16x32xf32>
    %171 = tpu.matmul %159, %170, %cst_62 {dimension_numbers = #tpu.dot_dimension_numbers<[1], [0], [0], [1], [0, 0, 1, 1], [], []>} : vector<16x32xf32>, vector<32x32xf32>, vector<16x32xf32> -> vector<16x32xf32>
    %172 = vector.extract_strided_slice %164 {offsets = [1, 0], sizes = [1, 32], strides = [1, 1]} : vector<4x32xf32> to vector<1x32xf32>
    %173 = vector.broadcast %172 : vector<1x32xf32> to vector<16x32xf32>
    %174 = arith.addf %171, %173 : vector<16x32xf32>
    %175 = vector.extract_strided_slice %163 {offsets = [0, 64], sizes = [32, 32], strides = [1, 1]} : vector<32x128xf32> to vector<32x32xf32>
    %cst_63 = arith.constant dense<0.000000e+00> : vector<16x32xf32>
    %176 = tpu.matmul %159, %175, %cst_63 {dimension_numbers = #tpu.dot_dimension_numbers<[1], [0], [0], [1], [0, 0, 1, 1], [], []>} : vector<16x32xf32>, vector<32x32xf32>, vector<16x32xf32> -> vector<16x32xf32>
    %177 = vector.extract_strided_slice %164 {offsets = [2, 0], sizes = [1, 32], strides = [1, 1]} : vector<4x32xf32> to vector<1x32xf32>
    %178 = vector.broadcast %177 : vector<1x32xf32> to vector<16x32xf32>
    %179 = arith.addf %176, %178 : vector<16x32xf32>
    %180 = vector.extract_strided_slice %169 {offsets = [0, 0], sizes = [16, 8], strides = [1, 1]} : vector<16x32xf32> to vector<16x8xf32>
    %181 = vector.extract_strided_slice %174 {offsets = [0, 0], sizes = [16, 8], strides = [1, 1]} : vector<16x32xf32> to vector<16x8xf32>
    %cst_64 = arith.constant dense<0.000000e+00> : vector<16x16xf32>
    %182 = tpu.matmul %180, %181, %cst_64 {dimension_numbers = #tpu.dot_dimension_numbers<[1], [1], [0], [0], [0, 0, 1, 0], [], []>} : vector<16x8xf32>, vector<16x8xf32>, vector<16x16xf32> -> vector<16x16xf32>
    %cst_65 = arith.constant dense<0xFF800000> : vector<16xf32>
    %183 = vector.multi_reduction <maximumf>, %182, %cst_65 [1] : vector<16x16xf32> to vector<16xf32>
    %184 = vector.shape_cast %183 : vector<16xf32> to vector<16x1xf32>
    %185 = vector.broadcast %184 : vector<16x1xf32> to vector<16x16xf32>
    %186 = arith.subf %182, %185 : vector<16x16xf32>
    %187 = math.exp %186 : vector<16x16xf32>
    %cst_66 = arith.constant dense<0.000000e+00> : vector<16xf32>
    %188 = vector.multi_reduction <add>, %187, %cst_66 [1] : vector<16x16xf32> to vector<16xf32>
    %189 = vector.shape_cast %188 : vector<16xf32> to vector<16x1xf32>
    %190 = vector.broadcast %189 : vector<16x1xf32> to vector<16x16xf32>
    %191 = arith.divf %187, %190 : vector<16x16xf32>
    %192 = vector.extract_strided_slice %179 {offsets = [0, 0], sizes = [16, 8], strides = [1, 1]} : vector<16x32xf32> to vector<16x8xf32>
    %cst_67 = arith.constant dense<0.000000e+00> : vector<16x8xf32>
    %193 = tpu.matmul %191, %192, %cst_67 {dimension_numbers = #tpu.dot_dimension_numbers<[1], [0], [0], [1], [0, 0, 1, 1], [], []>} : vector<16x16xf32>, vector<16x8xf32>, vector<16x8xf32> -> vector<16x8xf32>
    %194 = vector.extract_strided_slice %169 {offsets = [0, 8], sizes = [16, 8], strides = [1, 1]} : vector<16x32xf32> to vector<16x8xf32>
    %195 = vector.extract_strided_slice %174 {offsets = [0, 8], sizes = [16, 8], strides = [1, 1]} : vector<16x32xf32> to vector<16x8xf32>
    %cst_68 = arith.constant dense<0.000000e+00> : vector<16x16xf32>
    %196 = tpu.matmul %194, %195, %cst_68 {dimension_numbers = #tpu.dot_dimension_numbers<[1], [1], [0], [0], [0, 0, 1, 0], [], []>} : vector<16x8xf32>, vector<16x8xf32>, vector<16x16xf32> -> vector<16x16xf32>
    %cst_69 = arith.constant dense<0xFF800000> : vector<16xf32>
    %197 = vector.multi_reduction <maximumf>, %196, %cst_69 [1] : vector<16x16xf32> to vector<16xf32>
    %198 = vector.shape_cast %197 : vector<16xf32> to vector<16x1xf32>
    %199 = vector.broadcast %198 : vector<16x1xf32> to vector<16x16xf32>
    %200 = arith.subf %196, %199 : vector<16x16xf32>
    %201 = math.exp %200 : vector<16x16xf32>
    %cst_70 = arith.constant dense<0.000000e+00> : vector<16xf32>
    %202 = vector.multi_reduction <add>, %201, %cst_70 [1] : vector<16x16xf32> to vector<16xf32>
    %203 = vector.shape_cast %202 : vector<16xf32> to vector<16x1xf32>
    %204 = vector.broadcast %203 : vector<16x1xf32> to vector<16x16xf32>
    %205 = arith.divf %201, %204 : vector<16x16xf32>
    %206 = vector.extract_strided_slice %179 {offsets = [0, 8], sizes = [16, 8], strides = [1, 1]} : vector<16x32xf32> to vector<16x8xf32>
    %cst_71 = arith.constant dense<0.000000e+00> : vector<16x8xf32>
    %207 = tpu.matmul %205, %206, %cst_71 {dimension_numbers = #tpu.dot_dimension_numbers<[1], [0], [0], [1], [0, 0, 1, 1], [], []>} : vector<16x16xf32>, vector<16x8xf32>, vector<16x8xf32> -> vector<16x8xf32>
    %208 = vector.extract_strided_slice %169 {offsets = [0, 16], sizes = [16, 8], strides = [1, 1]} : vector<16x32xf32> to vector<16x8xf32>
    %209 = vector.extract_strided_slice %174 {offsets = [0, 16], sizes = [16, 8], strides = [1, 1]} : vector<16x32xf32> to vector<16x8xf32>
    %cst_72 = arith.constant dense<0.000000e+00> : vector<16x16xf32>
    %210 = tpu.matmul %208, %209, %cst_72 {dimension_numbers = #tpu.dot_dimension_numbers<[1], [1], [0], [0], [0, 0, 1, 0], [], []>} : vector<16x8xf32>, vector<16x8xf32>, vector<16x16xf32> -> vector<16x16xf32>
    %cst_73 = arith.constant dense<0xFF800000> : vector<16xf32>
    %211 = vector.multi_reduction <maximumf>, %210, %cst_73 [1] : vector<16x16xf32> to vector<16xf32>
    %212 = vector.shape_cast %211 : vector<16xf32> to vector<16x1xf32>
    %213 = vector.broadcast %212 : vector<16x1xf32> to vector<16x16xf32>
    %214 = arith.subf %210, %213 : vector<16x16xf32>
    %215 = math.exp %214 : vector<16x16xf32>
    %cst_74 = arith.constant dense<0.000000e+00> : vector<16xf32>
    %216 = vector.multi_reduction <add>, %215, %cst_74 [1] : vector<16x16xf32> to vector<16xf32>
    %217 = vector.shape_cast %216 : vector<16xf32> to vector<16x1xf32>
    %218 = vector.broadcast %217 : vector<16x1xf32> to vector<16x16xf32>
    %219 = arith.divf %215, %218 : vector<16x16xf32>
    %220 = vector.extract_strided_slice %179 {offsets = [0, 16], sizes = [16, 8], strides = [1, 1]} : vector<16x32xf32> to vector<16x8xf32>
    %cst_75 = arith.constant dense<0.000000e+00> : vector<16x8xf32>
    %221 = tpu.matmul %219, %220, %cst_75 {dimension_numbers = #tpu.dot_dimension_numbers<[1], [0], [0], [1], [0, 0, 1, 1], [], []>} : vector<16x16xf32>, vector<16x8xf32>, vector<16x8xf32> -> vector<16x8xf32>
    %222 = vector.extract_strided_slice %169 {offsets = [0, 24], sizes = [16, 8], strides = [1, 1]} : vector<16x32xf32> to vector<16x8xf32>
    %223 = vector.extract_strided_slice %174 {offsets = [0, 24], sizes = [16, 8], strides = [1, 1]} : vector<16x32xf32> to vector<16x8xf32>
    %cst_76 = arith.constant dense<0.000000e+00> : vector<16x16xf32>
    %224 = tpu.matmul %222, %223, %cst_76 {dimension_numbers = #tpu.dot_dimension_numbers<[1], [1], [0], [0], [0, 0, 1, 0], [], []>} : vector<16x8xf32>, vector<16x8xf32>, vector<16x16xf32> -> vector<16x16xf32>
    %cst_77 = arith.constant dense<0xFF800000> : vector<16xf32>
    %225 = vector.multi_reduction <maximumf>, %224, %cst_77 [1] : vector<16x16xf32> to vector<16xf32>
    %226 = vector.shape_cast %225 : vector<16xf32> to vector<16x1xf32>
    %227 = vector.broadcast %226 : vector<16x1xf32> to vector<16x16xf32>
    %228 = arith.subf %224, %227 : vector<16x16xf32>
    %229 = math.exp %228 : vector<16x16xf32>
    %cst_78 = arith.constant dense<0.000000e+00> : vector<16xf32>
    %230 = vector.multi_reduction <add>, %229, %cst_78 [1] : vector<16x16xf32> to vector<16xf32>
    %231 = vector.shape_cast %230 : vector<16xf32> to vector<16x1xf32>
    %232 = vector.broadcast %231 : vector<16x1xf32> to vector<16x16xf32>
    %233 = arith.divf %229, %232 : vector<16x16xf32>
    %234 = vector.extract_strided_slice %179 {offsets = [0, 24], sizes = [16, 8], strides = [1, 1]} : vector<16x32xf32> to vector<16x8xf32>
    %cst_79 = arith.constant dense<0.000000e+00> : vector<16x8xf32>
    %235 = tpu.matmul %233, %234, %cst_79 {dimension_numbers = #tpu.dot_dimension_numbers<[1], [0], [0], [1], [0, 0, 1, 1], [], []>} : vector<16x16xf32>, vector<16x8xf32>, vector<16x8xf32> -> vector<16x8xf32>
    %236 = tpu.concatenate %193, %207, %221, %235 in 1 : vector<16x8xf32>, vector<16x8xf32>, vector<16x8xf32>, vector<16x8xf32> -> vector<16x32xf32>
    %237 = vector.extract_strided_slice %163 {offsets = [0, 96], sizes = [32, 32], strides = [1, 1]} : vector<32x128xf32> to vector<32x32xf32>
    %cst_80 = arith.constant dense<0.000000e+00> : vector<16x32xf32>
    %238 = tpu.matmul %236, %237, %cst_80 {dimension_numbers = #tpu.dot_dimension_numbers<[1], [0], [0], [1], [0, 0, 1, 1], [], []>} : vector<16x32xf32>, vector<32x32xf32>, vector<16x32xf32> -> vector<16x32xf32>
    %239 = vector.extract_strided_slice %164 {offsets = [3, 0], sizes = [1, 32], strides = [1, 1]} : vector<4x32xf32> to vector<1x32xf32>
    %240 = vector.broadcast %239 : vector<1x32xf32> to vector<16x32xf32>
    %241 = arith.addf %238, %240 : vector<16x32xf32>
    %242 = arith.addf %159, %241 : vector<16x32xf32>
    %243 = vector.extract_strided_slice %161 {offsets = [5, 0], sizes = [1, 32], strides = [1, 1]} : vector<9x32xf32> to vector<1x32xf32>
    %244 = vector.extract_strided_slice %161 {offsets = [6, 0], sizes = [1, 32], strides = [1, 1]} : vector<9x32xf32> to vector<1x32xf32>
    %cst_81 = arith.constant dense<0.000000e+00> : vector<16xf32>
    %245 = vector.multi_reduction <add>, %242, %cst_81 [1] : vector<16x32xf32> to vector<16xf32>
    %246 = vector.shape_cast %245 : vector<16xf32> to vector<16x1xf32>
    %cst_82 = arith.constant 3.200000e+01 : f32
    %247 = vector.broadcast %cst_82 : f32 to vector<16x1xf32>
    %248 = arith.divf %246, %247 : vector<16x1xf32>
    %249 = vector.broadcast %248 : vector<16x1xf32> to vector<16x32xf32>
    %250 = arith.subf %242, %249 : vector<16x32xf32>
    %251 = arith.mulf %250, %250 : vector<16x32xf32>
    %cst_83 = arith.constant dense<0.000000e+00> : vector<16xf32>
    %252 = vector.multi_reduction <add>, %251, %cst_83 [1] : vector<16x32xf32> to vector<16xf32>
    %253 = vector.shape_cast %252 : vector<16xf32> to vector<16x1xf32>
    %cst_84 = arith.constant 3.200000e+01 : f32
    %254 = vector.broadcast %cst_84 : f32 to vector<16x1xf32>
    %255 = arith.divf %253, %254 : vector<16x1xf32>
    %cst_85 = arith.constant 9.99999974E-6 : f32
    %256 = vector.broadcast %cst_85 : f32 to vector<16x1xf32>
    %257 = arith.addf %255, %256 : vector<16x1xf32>
    %258 = math.rsqrt %257 : vector<16x1xf32>
    %259 = vector.broadcast %258 : vector<16x1xf32> to vector<16x32xf32>
    %260 = arith.mulf %250, %259 : vector<16x32xf32>
    %261 = vector.broadcast %243 : vector<1x32xf32> to vector<16x32xf32>
    %262 = arith.mulf %260, %261 : vector<16x32xf32>
    %263 = vector.broadcast %244 : vector<1x32xf32> to vector<16x32xf32>
    %264 = arith.addf %262, %263 : vector<16x32xf32>
    %c1_86 = arith.constant 1 : index
    %c0_87 = arith.constant 0 : index
    %c0_88 = arith.constant 0 : index
    %265 = vector.load %arg6[%c1_86, %c0_87, %c0_88] : memref<3x32x64xf32, #tpu.memory_space<vmem>>, vector<1x32x64xf32>
    %266 = vector.shape_cast %265 : vector<1x32x64xf32> to vector<32x64xf32>
    %c1_89 = arith.constant 1 : index
    %c0_90 = arith.constant 0 : index
    %c0_91 = arith.constant 0 : index
    %267 = vector.load %arg7[%c1_89, %c0_90, %c0_91] : memref<3x1x64xf32, #tpu.memory_space<vmem>>, vector<1x1x64xf32>
    %268 = vector.shape_cast %267 : vector<1x1x64xf32> to vector<1x64xf32>
    %c1_92 = arith.constant 1 : index
    %c0_93 = arith.constant 0 : index
    %c0_94 = arith.constant 0 : index
    %269 = vector.load %arg8[%c1_92, %c0_93, %c0_94] : memref<3x64x32xf32, #tpu.memory_space<vmem>>, vector<1x64x32xf32>
    %270 = vector.shape_cast %269 : vector<1x64x32xf32> to vector<64x32xf32>
    %271 = vector.extract_strided_slice %161 {offsets = [4, 0], sizes = [1, 32], strides = [1, 1]} : vector<9x32xf32> to vector<1x32xf32>
    %cst_95 = arith.constant dense<0.000000e+00> : vector<16x64xf32>
    %272 = tpu.matmul %264, %266, %cst_95 {dimension_numbers = #tpu.dot_dimension_numbers<[1], [0], [0], [1], [0, 0, 1, 1], [], []>} : vector<16x32xf32>, vector<32x64xf32>, vector<16x64xf32> -> vector<16x64xf32>
    %273 = vector.broadcast %268 : vector<1x64xf32> to vector<16x64xf32>
    %274 = arith.addf %272, %273 : vector<16x64xf32>
    %cst_96 = arith.constant 0.000000e+00 : f32
    %275 = vector.broadcast %cst_96 : f32 to vector<16x64xf32>
    %276 = arith.maximumf %274, %275 : vector<16x64xf32>
    %cst_97 = arith.constant dense<0.000000e+00> : vector<16x32xf32>
    %277 = tpu.matmul %276, %270, %cst_97 {dimension_numbers = #tpu.dot_dimension_numbers<[1], [0], [0], [1], [0, 0, 1, 1], [], []>} : vector<16x64xf32>, vector<64x32xf32>, vector<16x32xf32> -> vector<16x32xf32>
    %278 = vector.broadcast %271 : vector<1x32xf32> to vector<16x32xf32>
    %279 = arith.addf %277, %278 : vector<16x32xf32>
    %280 = arith.addf %264, %279 : vector<16x32xf32>
    %281 = vector.extract_strided_slice %161 {offsets = [7, 0], sizes = [1, 32], strides = [1, 1]} : vector<9x32xf32> to vector<1x32xf32>
    %282 = vector.extract_strided_slice %161 {offsets = [8, 0], sizes = [1, 32], strides = [1, 1]} : vector<9x32xf32> to vector<1x32xf32>
    %cst_98 = arith.constant dense<0.000000e+00> : vector<16xf32>
    %283 = vector.multi_reduction <add>, %280, %cst_98 [1] : vector<16x32xf32> to vector<16xf32>
    %284 = vector.shape_cast %283 : vector<16xf32> to vector<16x1xf32>
    %cst_99 = arith.constant 3.200000e+01 : f32
    %285 = vector.broadcast %cst_99 : f32 to vector<16x1xf32>
    %286 = arith.divf %284, %285 : vector<16x1xf32>
    %287 = vector.broadcast %286 : vector<16x1xf32> to vector<16x32xf32>
    %288 = arith.subf %280, %287 : vector<16x32xf32>
    %289 = arith.mulf %288, %288 : vector<16x32xf32>
    %cst_100 = arith.constant dense<0.000000e+00> : vector<16xf32>
    %290 = vector.multi_reduction <add>, %289, %cst_100 [1] : vector<16x32xf32> to vector<16xf32>
    %291 = vector.shape_cast %290 : vector<16xf32> to vector<16x1xf32>
    %cst_101 = arith.constant 3.200000e+01 : f32
    %292 = vector.broadcast %cst_101 : f32 to vector<16x1xf32>
    %293 = arith.divf %291, %292 : vector<16x1xf32>
    %cst_102 = arith.constant 9.99999974E-6 : f32
    %294 = vector.broadcast %cst_102 : f32 to vector<16x1xf32>
    %295 = arith.addf %293, %294 : vector<16x1xf32>
    %296 = math.rsqrt %295 : vector<16x1xf32>
    %297 = vector.broadcast %296 : vector<16x1xf32> to vector<16x32xf32>
    %298 = arith.mulf %288, %297 : vector<16x32xf32>
    %299 = vector.broadcast %281 : vector<1x32xf32> to vector<16x32xf32>
    %300 = arith.mulf %298, %299 : vector<16x32xf32>
    %301 = vector.broadcast %282 : vector<1x32xf32> to vector<16x32xf32>
    %302 = arith.addf %300, %301 : vector<16x32xf32>
    %303 = vector.extract_strided_slice %2 {offsets = [0, 0], sizes = [1, 32], strides = [1, 1]} : vector<5x32xf32> to vector<1x32xf32>
    %304 = vector.extract_strided_slice %2 {offsets = [1, 0], sizes = [1, 32], strides = [1, 1]} : vector<5x32xf32> to vector<1x32xf32>
    %cst_103 = arith.constant dense<0.000000e+00> : vector<16xf32>
    %305 = vector.multi_reduction <add>, %302, %cst_103 [1] : vector<16x32xf32> to vector<16xf32>
    %306 = vector.shape_cast %305 : vector<16xf32> to vector<16x1xf32>
    %cst_104 = arith.constant 3.200000e+01 : f32
    %307 = vector.broadcast %cst_104 : f32 to vector<16x1xf32>
    %308 = arith.divf %306, %307 : vector<16x1xf32>
    %309 = vector.broadcast %308 : vector<16x1xf32> to vector<16x32xf32>
    %310 = arith.subf %302, %309 : vector<16x32xf32>
    %311 = arith.mulf %310, %310 : vector<16x32xf32>
    %cst_105 = arith.constant dense<0.000000e+00> : vector<16xf32>
    %312 = vector.multi_reduction <add>, %311, %cst_105 [1] : vector<16x32xf32> to vector<16xf32>
    %313 = vector.shape_cast %312 : vector<16xf32> to vector<16x1xf32>
    %cst_106 = arith.constant 3.200000e+01 : f32
    %314 = vector.broadcast %cst_106 : f32 to vector<16x1xf32>
    %315 = arith.divf %313, %314 : vector<16x1xf32>
    %cst_107 = arith.constant 9.99999974E-6 : f32
    %316 = vector.broadcast %cst_107 : f32 to vector<16x1xf32>
    %317 = arith.addf %315, %316 : vector<16x1xf32>
    %318 = math.rsqrt %317 : vector<16x1xf32>
    %319 = vector.broadcast %318 : vector<16x1xf32> to vector<16x32xf32>
    %320 = arith.mulf %310, %319 : vector<16x32xf32>
    %321 = vector.broadcast %303 : vector<1x32xf32> to vector<16x32xf32>
    %322 = arith.mulf %320, %321 : vector<16x32xf32>
    %323 = vector.broadcast %304 : vector<1x32xf32> to vector<16x32xf32>
    %324 = arith.addf %322, %323 : vector<16x32xf32>
    %325 = tpu.concatenate %48, %62, %76, %90, %191, %205, %219, %233 in 1 : vector<16x16xf32>, vector<16x16xf32>, vector<16x16xf32>, vector<16x16xf32>, vector<16x16xf32>, vector<16x16xf32>, vector<16x16xf32>, vector<16x16xf32> -> vector<16x128xf32>
    %c0_108 = arith.constant 0 : index
    %c0_109 = arith.constant 0 : index
    %c0_110 = arith.constant 0 : index
    %326 = vector.load %arg14[%c0_108, %c0_109, %c0_110] : memref<1x16x128xf32, #tpu.memory_space<vmem>>, vector<1x16x128xf32>
    %327 = vector.shape_cast %326 : vector<1x16x128xf32> to vector<16x128xf32>
    %328 = vector.shape_cast %325 : vector<16x128xf32> to vector<1x16x128xf32>
    tpu.vector_store %arg14[%c0_108, %c0_109, %c0_110], %328 {strides = array<i32>} : memref<1x16x128xf32, #tpu.memory_space<vmem>>, vector<1x16x128xf32>,
    %c0_111 = arith.constant 0 : index
    %c0_112 = arith.constant 0 : index
    %c0_113 = arith.constant 0 : index
    %329 = vector.load %arg2[%c0_111, %c0_112, %c0_113] : memref<1x16x8xf32, #tpu.memory_space<vmem>>, vector<1x16x8xf32>
    %330 = vector.shape_cast %329 : vector<1x16x8xf32> to vector<16x8xf32>
    %331 = vector.extract_strided_slice %1 {offsets = [16, 0], sizes = [16, 32], strides = [1, 1]} : vector<32x32xf32> to vector<16x32xf32>
    %332 = vector.extract_strided_slice %0 {offsets = [16, 0], sizes = [16, 32], strides = [1, 1]} : vector<32x32xf32> to vector<16x32xf32>
    %333 = vector.extract_strided_slice %330 {offsets = [0, 0], sizes = [16, 4], strides = [1, 1]} : vector<16x8xf32> to vector<16x4xf32>
    %334 = vector.extract_strided_slice %333 {offsets = [15, 0], sizes = [1, 4], strides = [1, 1]} : vector<16x4xf32> to vector<1x4xf32>
    %335 = vector.extract_strided_slice %333 {offsets = [0, 0], sizes = [15, 4], strides = [1, 1]} : vector<16x4xf32> to vector<15x4xf32>
    %336 = tpu.concatenate %334, %335 in 0 : vector<1x4xf32>, vector<15x4xf32> -> vector<16x4xf32>
    %337 = vector.extract_strided_slice %333 {offsets = [1, 0], sizes = [15, 4], strides = [1, 1]} : vector<16x4xf32> to vector<15x4xf32>
    %338 = vector.extract_strided_slice %333 {offsets = [0, 0], sizes = [1, 4], strides = [1, 1]} : vector<16x4xf32> to vector<1x4xf32>
    %339 = tpu.concatenate %337, %338 in 0 : vector<15x4xf32>, vector<1x4xf32> -> vector<16x4xf32>
    %340 = tpu.concatenate %330, %336, %339 in 1 : vector<16x8xf32>, vector<16x4xf32>, vector<16x4xf32> -> vector<16x16xf32>
    %cst_114 = arith.constant dense<0.000000e+00> : vector<16x32xf32>
    %341 = tpu.matmul %340, %331, %cst_114 {dimension_numbers = #tpu.dot_dimension_numbers<[1], [0], [0], [1], [0, 0, 1, 1], [], []>} : vector<16x16xf32>, vector<16x32xf32>, vector<16x32xf32> -> vector<16x32xf32>
    %342 = arith.addf %341, %332 : vector<16x32xf32>
    %343 = tpu.iota {dimensions = array<i32: 0>} : vector<16x16xi32>
    %344 = tpu.iota {dimensions = array<i32: 1>} : vector<16x16xi32>
    %345 = arith.cmpi sgt, %344, %343 : vector<16x16xi32>
    %cst_115 = arith.constant -1.000000e+30 : f32
    %cst_116 = arith.constant 0.000000e+00 : f32
    %346 = vector.broadcast %cst_115 : f32 to vector<16x16xf32>
    %347 = vector.broadcast %cst_116 : f32 to vector<16x16xf32>
    %348 = arith.select %345, %346, %347 : vector<16x16xi1>, vector<16x16xf32>
    %c0_117 = arith.constant 0 : index
    %c0_118 = arith.constant 0 : index
    %c0_119 = arith.constant 0 : index
    %349 = vector.load %arg10[%c0_117, %c0_118, %c0_119] : memref<1x15x32xf32, #tpu.memory_space<vmem>>, vector<1x15x32xf32>
    %350 = vector.shape_cast %349 : vector<1x15x32xf32> to vector<15x32xf32>
    %c2 = arith.constant 2 : index
    %c0_120 = arith.constant 0 : index
    %c0_121 = arith.constant 0 : index
    %351 = vector.load %arg5[%c2, %c0_120, %c0_121] : memref<4x32x128xf32, #tpu.memory_space<vmem>>, vector<1x32x128xf32>
    %352 = vector.shape_cast %351 : vector<1x32x128xf32> to vector<32x128xf32>
    %353 = vector.extract_strided_slice %350 {offsets = [0, 0], sizes = [4, 32], strides = [1, 1]} : vector<15x32xf32> to vector<4x32xf32>
    %354 = vector.extract_strided_slice %352 {offsets = [0, 0], sizes = [32, 32], strides = [1, 1]} : vector<32x128xf32> to vector<32x32xf32>
    %cst_122 = arith.constant dense<0.000000e+00> : vector<16x32xf32>
    %355 = tpu.matmul %342, %354, %cst_122 {dimension_numbers = #tpu.dot_dimension_numbers<[1], [0], [0], [1], [0, 0, 1, 1], [], []>} : vector<16x32xf32>, vector<32x32xf32>, vector<16x32xf32> -> vector<16x32xf32>
    %356 = vector.extract_strided_slice %353 {offsets = [0, 0], sizes = [1, 32], strides = [1, 1]} : vector<4x32xf32> to vector<1x32xf32>
    %357 = vector.broadcast %356 : vector<1x32xf32> to vector<16x32xf32>
    %358 = arith.addf %355, %357 : vector<16x32xf32>
    %359 = vector.extract_strided_slice %352 {offsets = [0, 32], sizes = [32, 32], strides = [1, 1]} : vector<32x128xf32> to vector<32x32xf32>
    %cst_123 = arith.constant dense<0.000000e+00> : vector<16x32xf32>
    %360 = tpu.matmul %342, %359, %cst_123 {dimension_numbers = #tpu.dot_dimension_numbers<[1], [0], [0], [1], [0, 0, 1, 1], [], []>} : vector<16x32xf32>, vector<32x32xf32>, vector<16x32xf32> -> vector<16x32xf32>
    %361 = vector.extract_strided_slice %353 {offsets = [1, 0], sizes = [1, 32], strides = [1, 1]} : vector<4x32xf32> to vector<1x32xf32>
    %362 = vector.broadcast %361 : vector<1x32xf32> to vector<16x32xf32>
    %363 = arith.addf %360, %362 : vector<16x32xf32>
    %364 = vector.extract_strided_slice %352 {offsets = [0, 64], sizes = [32, 32], strides = [1, 1]} : vector<32x128xf32> to vector<32x32xf32>
    %cst_124 = arith.constant dense<0.000000e+00> : vector<16x32xf32>
    %365 = tpu.matmul %342, %364, %cst_124 {dimension_numbers = #tpu.dot_dimension_numbers<[1], [0], [0], [1], [0, 0, 1, 1], [], []>} : vector<16x32xf32>, vector<32x32xf32>, vector<16x32xf32> -> vector<16x32xf32>
    %366 = vector.extract_strided_slice %353 {offsets = [2, 0], sizes = [1, 32], strides = [1, 1]} : vector<4x32xf32> to vector<1x32xf32>
    %367 = vector.broadcast %366 : vector<1x32xf32> to vector<16x32xf32>
    %368 = arith.addf %365, %367 : vector<16x32xf32>
    %369 = vector.extract_strided_slice %358 {offsets = [0, 0], sizes = [16, 8], strides = [1, 1]} : vector<16x32xf32> to vector<16x8xf32>
    %370 = vector.extract_strided_slice %363 {offsets = [0, 0], sizes = [16, 8], strides = [1, 1]} : vector<16x32xf32> to vector<16x8xf32>
    %cst_125 = arith.constant dense<0.000000e+00> : vector<16x16xf32>
    %371 = tpu.matmul %369, %370, %cst_125 {dimension_numbers = #tpu.dot_dimension_numbers<[1], [1], [0], [0], [0, 0, 1, 0], [], []>} : vector<16x8xf32>, vector<16x8xf32>, vector<16x16xf32> -> vector<16x16xf32>
    %372 = arith.addf %371, %348 : vector<16x16xf32>
    %cst_126 = arith.constant dense<0xFF800000> : vector<16xf32>
    %373 = vector.multi_reduction <maximumf>, %372, %cst_126 [1] : vector<16x16xf32> to vector<16xf32>
    %374 = vector.shape_cast %373 : vector<16xf32> to vector<16x1xf32>
    %375 = vector.broadcast %374 : vector<16x1xf32> to vector<16x16xf32>
    %376 = arith.subf %372, %375 : vector<16x16xf32>
    %377 = math.exp %376 : vector<16x16xf32>
    %cst_127 = arith.constant dense<0.000000e+00> : vector<16xf32>
    %378 = vector.multi_reduction <add>, %377, %cst_127 [1] : vector<16x16xf32> to vector<16xf32>
    %379 = vector.shape_cast %378 : vector<16xf32> to vector<16x1xf32>
    %380 = vector.broadcast %379 : vector<16x1xf32> to vector<16x16xf32>
    %381 = arith.divf %377, %380 : vector<16x16xf32>
    %382 = vector.extract_strided_slice %368 {offsets = [0, 0], sizes = [16, 8], strides = [1, 1]} : vector<16x32xf32> to vector<16x8xf32>
    %cst_128 = arith.constant dense<0.000000e+00> : vector<16x8xf32>
    %383 = tpu.matmul %381, %382, %cst_128 {dimension_numbers = #tpu.dot_dimension_numbers<[1], [0], [0], [1], [0, 0, 1, 1], [], []>} : vector<16x16xf32>, vector<16x8xf32>, vector<16x8xf32> -> vector<16x8xf32>
    %384 = vector.extract_strided_slice %358 {offsets = [0, 8], sizes = [16, 8], strides = [1, 1]} : vector<16x32xf32> to vector<16x8xf32>
    %385 = vector.extract_strided_slice %363 {offsets = [0, 8], sizes = [16, 8], strides = [1, 1]} : vector<16x32xf32> to vector<16x8xf32>
    %cst_129 = arith.constant dense<0.000000e+00> : vector<16x16xf32>
    %386 = tpu.matmul %384, %385, %cst_129 {dimension_numbers = #tpu.dot_dimension_numbers<[1], [1], [0], [0], [0, 0, 1, 0], [], []>} : vector<16x8xf32>, vector<16x8xf32>, vector<16x16xf32> -> vector<16x16xf32>
    %387 = arith.addf %386, %348 : vector<16x16xf32>
    %cst_130 = arith.constant dense<0xFF800000> : vector<16xf32>
    %388 = vector.multi_reduction <maximumf>, %387, %cst_130 [1] : vector<16x16xf32> to vector<16xf32>
    %389 = vector.shape_cast %388 : vector<16xf32> to vector<16x1xf32>
    %390 = vector.broadcast %389 : vector<16x1xf32> to vector<16x16xf32>
    %391 = arith.subf %387, %390 : vector<16x16xf32>
    %392 = math.exp %391 : vector<16x16xf32>
    %cst_131 = arith.constant dense<0.000000e+00> : vector<16xf32>
    %393 = vector.multi_reduction <add>, %392, %cst_131 [1] : vector<16x16xf32> to vector<16xf32>
    %394 = vector.shape_cast %393 : vector<16xf32> to vector<16x1xf32>
    %395 = vector.broadcast %394 : vector<16x1xf32> to vector<16x16xf32>
    %396 = arith.divf %392, %395 : vector<16x16xf32>
    %397 = vector.extract_strided_slice %368 {offsets = [0, 8], sizes = [16, 8], strides = [1, 1]} : vector<16x32xf32> to vector<16x8xf32>
    %cst_132 = arith.constant dense<0.000000e+00> : vector<16x8xf32>
    %398 = tpu.matmul %396, %397, %cst_132 {dimension_numbers = #tpu.dot_dimension_numbers<[1], [0], [0], [1], [0, 0, 1, 1], [], []>} : vector<16x16xf32>, vector<16x8xf32>, vector<16x8xf32> -> vector<16x8xf32>
    %399 = vector.extract_strided_slice %358 {offsets = [0, 16], sizes = [16, 8], strides = [1, 1]} : vector<16x32xf32> to vector<16x8xf32>
    %400 = vector.extract_strided_slice %363 {offsets = [0, 16], sizes = [16, 8], strides = [1, 1]} : vector<16x32xf32> to vector<16x8xf32>
    %cst_133 = arith.constant dense<0.000000e+00> : vector<16x16xf32>
    %401 = tpu.matmul %399, %400, %cst_133 {dimension_numbers = #tpu.dot_dimension_numbers<[1], [1], [0], [0], [0, 0, 1, 0], [], []>} : vector<16x8xf32>, vector<16x8xf32>, vector<16x16xf32> -> vector<16x16xf32>
    %402 = arith.addf %401, %348 : vector<16x16xf32>
    %cst_134 = arith.constant dense<0xFF800000> : vector<16xf32>
    %403 = vector.multi_reduction <maximumf>, %402, %cst_134 [1] : vector<16x16xf32> to vector<16xf32>
    %404 = vector.shape_cast %403 : vector<16xf32> to vector<16x1xf32>
    %405 = vector.broadcast %404 : vector<16x1xf32> to vector<16x16xf32>
    %406 = arith.subf %402, %405 : vector<16x16xf32>
    %407 = math.exp %406 : vector<16x16xf32>
    %cst_135 = arith.constant dense<0.000000e+00> : vector<16xf32>
    %408 = vector.multi_reduction <add>, %407, %cst_135 [1] : vector<16x16xf32> to vector<16xf32>
    %409 = vector.shape_cast %408 : vector<16xf32> to vector<16x1xf32>
    %410 = vector.broadcast %409 : vector<16x1xf32> to vector<16x16xf32>
    %411 = arith.divf %407, %410 : vector<16x16xf32>
    %412 = vector.extract_strided_slice %368 {offsets = [0, 16], sizes = [16, 8], strides = [1, 1]} : vector<16x32xf32> to vector<16x8xf32>
    %cst_136 = arith.constant dense<0.000000e+00> : vector<16x8xf32>
    %413 = tpu.matmul %411, %412, %cst_136 {dimension_numbers = #tpu.dot_dimension_numbers<[1], [0], [0], [1], [0, 0, 1, 1], [], []>} : vector<16x16xf32>, vector<16x8xf32>, vector<16x8xf32> -> vector<16x8xf32>
    %414 = vector.extract_strided_slice %358 {offsets = [0, 24], sizes = [16, 8], strides = [1, 1]} : vector<16x32xf32> to vector<16x8xf32>
    %415 = vector.extract_strided_slice %363 {offsets = [0, 24], sizes = [16, 8], strides = [1, 1]} : vector<16x32xf32> to vector<16x8xf32>
    %cst_137 = arith.constant dense<0.000000e+00> : vector<16x16xf32>
    %416 = tpu.matmul %414, %415, %cst_137 {dimension_numbers = #tpu.dot_dimension_numbers<[1], [1], [0], [0], [0, 0, 1, 0], [], []>} : vector<16x8xf32>, vector<16x8xf32>, vector<16x16xf32> -> vector<16x16xf32>
    %417 = arith.addf %416, %348 : vector<16x16xf32>
    %cst_138 = arith.constant dense<0xFF800000> : vector<16xf32>
    %418 = vector.multi_reduction <maximumf>, %417, %cst_138 [1] : vector<16x16xf32> to vector<16xf32>
    %419 = vector.shape_cast %418 : vector<16xf32> to vector<16x1xf32>
    %420 = vector.broadcast %419 : vector<16x1xf32> to vector<16x16xf32>
    %421 = arith.subf %417, %420 : vector<16x16xf32>
    %422 = math.exp %421 : vector<16x16xf32>
    %cst_139 = arith.constant dense<0.000000e+00> : vector<16xf32>
    %423 = vector.multi_reduction <add>, %422, %cst_139 [1] : vector<16x16xf32> to vector<16xf32>
    %424 = vector.shape_cast %423 : vector<16xf32> to vector<16x1xf32>
    %425 = vector.broadcast %424 : vector<16x1xf32> to vector<16x16xf32>
    %426 = arith.divf %422, %425 : vector<16x16xf32>
    %427 = vector.extract_strided_slice %368 {offsets = [0, 24], sizes = [16, 8], strides = [1, 1]} : vector<16x32xf32> to vector<16x8xf32>
    %cst_140 = arith.constant dense<0.000000e+00> : vector<16x8xf32>
    %428 = tpu.matmul %426, %427, %cst_140 {dimension_numbers = #tpu.dot_dimension_numbers<[1], [0], [0], [1], [0, 0, 1, 1], [], []>} : vector<16x16xf32>, vector<16x8xf32>, vector<16x8xf32> -> vector<16x8xf32>
    %429 = tpu.concatenate %383, %398, %413, %428 in 1 : vector<16x8xf32>, vector<16x8xf32>, vector<16x8xf32>, vector<16x8xf32> -> vector<16x32xf32>
    %430 = vector.extract_strided_slice %352 {offsets = [0, 96], sizes = [32, 32], strides = [1, 1]} : vector<32x128xf32> to vector<32x32xf32>
    %cst_141 = arith.constant dense<0.000000e+00> : vector<16x32xf32>
    %431 = tpu.matmul %429, %430, %cst_141 {dimension_numbers = #tpu.dot_dimension_numbers<[1], [0], [0], [1], [0, 0, 1, 1], [], []>} : vector<16x32xf32>, vector<32x32xf32>, vector<16x32xf32> -> vector<16x32xf32>
    %432 = vector.extract_strided_slice %353 {offsets = [3, 0], sizes = [1, 32], strides = [1, 1]} : vector<4x32xf32> to vector<1x32xf32>
    %433 = vector.broadcast %432 : vector<1x32xf32> to vector<16x32xf32>
    %434 = arith.addf %431, %433 : vector<16x32xf32>
    %435 = arith.addf %342, %434 : vector<16x32xf32>
    %436 = vector.extract_strided_slice %350 {offsets = [9, 0], sizes = [1, 32], strides = [1, 1]} : vector<15x32xf32> to vector<1x32xf32>
    %437 = vector.extract_strided_slice %350 {offsets = [10, 0], sizes = [1, 32], strides = [1, 1]} : vector<15x32xf32> to vector<1x32xf32>
    %cst_142 = arith.constant dense<0.000000e+00> : vector<16xf32>
    %438 = vector.multi_reduction <add>, %435, %cst_142 [1] : vector<16x32xf32> to vector<16xf32>
    %439 = vector.shape_cast %438 : vector<16xf32> to vector<16x1xf32>
    %cst_143 = arith.constant 3.200000e+01 : f32
    %440 = vector.broadcast %cst_143 : f32 to vector<16x1xf32>
    %441 = arith.divf %439, %440 : vector<16x1xf32>
    %442 = vector.broadcast %441 : vector<16x1xf32> to vector<16x32xf32>
    %443 = arith.subf %435, %442 : vector<16x32xf32>
    %444 = arith.mulf %443, %443 : vector<16x32xf32>
    %cst_144 = arith.constant dense<0.000000e+00> : vector<16xf32>
    %445 = vector.multi_reduction <add>, %444, %cst_144 [1] : vector<16x32xf32> to vector<16xf32>
    %446 = vector.shape_cast %445 : vector<16xf32> to vector<16x1xf32>
    %cst_145 = arith.constant 3.200000e+01 : f32
    %447 = vector.broadcast %cst_145 : f32 to vector<16x1xf32>
    %448 = arith.divf %446, %447 : vector<16x1xf32>
    %cst_146 = arith.constant 9.99999974E-6 : f32
    %449 = vector.broadcast %cst_146 : f32 to vector<16x1xf32>
    %450 = arith.addf %448, %449 : vector<16x1xf32>
    %451 = math.rsqrt %450 : vector<16x1xf32>
    %452 = vector.broadcast %451 : vector<16x1xf32> to vector<16x32xf32>
    %453 = arith.mulf %443, %452 : vector<16x32xf32>
    %454 = vector.broadcast %436 : vector<1x32xf32> to vector<16x32xf32>
    %455 = arith.mulf %453, %454 : vector<16x32xf32>
    %456 = vector.broadcast %437 : vector<1x32xf32> to vector<16x32xf32>
    %457 = arith.addf %455, %456 : vector<16x32xf32>
    %c3 = arith.constant 3 : index
    %c0_147 = arith.constant 0 : index
    %c0_148 = arith.constant 0 : index
    %458 = vector.load %arg5[%c3, %c0_147, %c0_148] : memref<4x32x128xf32, #tpu.memory_space<vmem>>, vector<1x32x128xf32>
    %459 = vector.shape_cast %458 : vector<1x32x128xf32> to vector<32x128xf32>
    %460 = vector.extract_strided_slice %350 {offsets = [4, 0], sizes = [4, 32], strides = [1, 1]} : vector<15x32xf32> to vector<4x32xf32>
    %461 = vector.extract_strided_slice %459 {offsets = [0, 0], sizes = [32, 32], strides = [1, 1]} : vector<32x128xf32> to vector<32x32xf32>
    %cst_149 = arith.constant dense<0.000000e+00> : vector<16x32xf32>
    %462 = tpu.matmul %457, %461, %cst_149 {dimension_numbers = #tpu.dot_dimension_numbers<[1], [0], [0], [1], [0, 0, 1, 1], [], []>} : vector<16x32xf32>, vector<32x32xf32>, vector<16x32xf32> -> vector<16x32xf32>
    %463 = vector.extract_strided_slice %460 {offsets = [0, 0], sizes = [1, 32], strides = [1, 1]} : vector<4x32xf32> to vector<1x32xf32>
    %464 = vector.broadcast %463 : vector<1x32xf32> to vector<16x32xf32>
    %465 = arith.addf %462, %464 : vector<16x32xf32>
    %466 = vector.extract_strided_slice %459 {offsets = [0, 32], sizes = [32, 32], strides = [1, 1]} : vector<32x128xf32> to vector<32x32xf32>
    %cst_150 = arith.constant dense<0.000000e+00> : vector<16x32xf32>
    %467 = tpu.matmul %324, %466, %cst_150 {dimension_numbers = #tpu.dot_dimension_numbers<[1], [0], [0], [1], [0, 0, 1, 1], [], []>} : vector<16x32xf32>, vector<32x32xf32>, vector<16x32xf32> -> vector<16x32xf32>
    %468 = vector.extract_strided_slice %460 {offsets = [1, 0], sizes = [1, 32], strides = [1, 1]} : vector<4x32xf32> to vector<1x32xf32>
    %469 = vector.broadcast %468 : vector<1x32xf32> to vector<16x32xf32>
    %470 = arith.addf %467, %469 : vector<16x32xf32>
    %471 = vector.extract_strided_slice %459 {offsets = [0, 64], sizes = [32, 32], strides = [1, 1]} : vector<32x128xf32> to vector<32x32xf32>
    %cst_151 = arith.constant dense<0.000000e+00> : vector<16x32xf32>
    %472 = tpu.matmul %324, %471, %cst_151 {dimension_numbers = #tpu.dot_dimension_numbers<[1], [0], [0], [1], [0, 0, 1, 1], [], []>} : vector<16x32xf32>, vector<32x32xf32>, vector<16x32xf32> -> vector<16x32xf32>
    %473 = vector.extract_strided_slice %460 {offsets = [2, 0], sizes = [1, 32], strides = [1, 1]} : vector<4x32xf32> to vector<1x32xf32>
    %474 = vector.broadcast %473 : vector<1x32xf32> to vector<16x32xf32>
    %475 = arith.addf %472, %474 : vector<16x32xf32>
    %476 = vector.extract_strided_slice %465 {offsets = [0, 0], sizes = [16, 8], strides = [1, 1]} : vector<16x32xf32> to vector<16x8xf32>
    %477 = vector.extract_strided_slice %470 {offsets = [0, 0], sizes = [16, 8], strides = [1, 1]} : vector<16x32xf32> to vector<16x8xf32>
    %cst_152 = arith.constant dense<0.000000e+00> : vector<16x16xf32>
    %478 = tpu.matmul %476, %477, %cst_152 {dimension_numbers = #tpu.dot_dimension_numbers<[1], [1], [0], [0], [0, 0, 1, 0], [], []>} : vector<16x8xf32>, vector<16x8xf32>, vector<16x16xf32> -> vector<16x16xf32>
    %cst_153 = arith.constant dense<0xFF800000> : vector<16xf32>
    %479 = vector.multi_reduction <maximumf>, %478, %cst_153 [1] : vector<16x16xf32> to vector<16xf32>
    %480 = vector.shape_cast %479 : vector<16xf32> to vector<16x1xf32>
    %481 = vector.broadcast %480 : vector<16x1xf32> to vector<16x16xf32>
    %482 = arith.subf %478, %481 : vector<16x16xf32>
    %483 = math.exp %482 : vector<16x16xf32>
    %cst_154 = arith.constant dense<0.000000e+00> : vector<16xf32>
    %484 = vector.multi_reduction <add>, %483, %cst_154 [1] : vector<16x16xf32> to vector<16xf32>
    %485 = vector.shape_cast %484 : vector<16xf32> to vector<16x1xf32>
    %486 = vector.broadcast %485 : vector<16x1xf32> to vector<16x16xf32>
    %487 = arith.divf %483, %486 : vector<16x16xf32>
    %488 = vector.extract_strided_slice %475 {offsets = [0, 0], sizes = [16, 8], strides = [1, 1]} : vector<16x32xf32> to vector<16x8xf32>
    %cst_155 = arith.constant dense<0.000000e+00> : vector<16x8xf32>
    %489 = tpu.matmul %487, %488, %cst_155 {dimension_numbers = #tpu.dot_dimension_numbers<[1], [0], [0], [1], [0, 0, 1, 1], [], []>} : vector<16x16xf32>, vector<16x8xf32>, vector<16x8xf32> -> vector<16x8xf32>
    %490 = vector.extract_strided_slice %465 {offsets = [0, 8], sizes = [16, 8], strides = [1, 1]} : vector<16x32xf32> to vector<16x8xf32>
    %491 = vector.extract_strided_slice %470 {offsets = [0, 8], sizes = [16, 8], strides = [1, 1]} : vector<16x32xf32> to vector<16x8xf32>
    %cst_156 = arith.constant dense<0.000000e+00> : vector<16x16xf32>
    %492 = tpu.matmul %490, %491, %cst_156 {dimension_numbers = #tpu.dot_dimension_numbers<[1], [1], [0], [0], [0, 0, 1, 0], [], []>} : vector<16x8xf32>, vector<16x8xf32>, vector<16x16xf32> -> vector<16x16xf32>
    %cst_157 = arith.constant dense<0xFF800000> : vector<16xf32>
    %493 = vector.multi_reduction <maximumf>, %492, %cst_157 [1] : vector<16x16xf32> to vector<16xf32>
    %494 = vector.shape_cast %493 : vector<16xf32> to vector<16x1xf32>
    %495 = vector.broadcast %494 : vector<16x1xf32> to vector<16x16xf32>
    %496 = arith.subf %492, %495 : vector<16x16xf32>
    %497 = math.exp %496 : vector<16x16xf32>
    %cst_158 = arith.constant dense<0.000000e+00> : vector<16xf32>
    %498 = vector.multi_reduction <add>, %497, %cst_158 [1] : vector<16x16xf32> to vector<16xf32>
    %499 = vector.shape_cast %498 : vector<16xf32> to vector<16x1xf32>
    %500 = vector.broadcast %499 : vector<16x1xf32> to vector<16x16xf32>
    %501 = arith.divf %497, %500 : vector<16x16xf32>
    %502 = vector.extract_strided_slice %475 {offsets = [0, 8], sizes = [16, 8], strides = [1, 1]} : vector<16x32xf32> to vector<16x8xf32>
    %cst_159 = arith.constant dense<0.000000e+00> : vector<16x8xf32>
    %503 = tpu.matmul %501, %502, %cst_159 {dimension_numbers = #tpu.dot_dimension_numbers<[1], [0], [0], [1], [0, 0, 1, 1], [], []>} : vector<16x16xf32>, vector<16x8xf32>, vector<16x8xf32> -> vector<16x8xf32>
    %504 = vector.extract_strided_slice %465 {offsets = [0, 16], sizes = [16, 8], strides = [1, 1]} : vector<16x32xf32> to vector<16x8xf32>
    %505 = vector.extract_strided_slice %470 {offsets = [0, 16], sizes = [16, 8], strides = [1, 1]} : vector<16x32xf32> to vector<16x8xf32>
    %cst_160 = arith.constant dense<0.000000e+00> : vector<16x16xf32>
    %506 = tpu.matmul %504, %505, %cst_160 {dimension_numbers = #tpu.dot_dimension_numbers<[1], [1], [0], [0], [0, 0, 1, 0], [], []>} : vector<16x8xf32>, vector<16x8xf32>, vector<16x16xf32> -> vector<16x16xf32>
    %cst_161 = arith.constant dense<0xFF800000> : vector<16xf32>
    %507 = vector.multi_reduction <maximumf>, %506, %cst_161 [1] : vector<16x16xf32> to vector<16xf32>
    %508 = vector.shape_cast %507 : vector<16xf32> to vector<16x1xf32>
    %509 = vector.broadcast %508 : vector<16x1xf32> to vector<16x16xf32>
    %510 = arith.subf %506, %509 : vector<16x16xf32>
    %511 = math.exp %510 : vector<16x16xf32>
    %cst_162 = arith.constant dense<0.000000e+00> : vector<16xf32>
    %512 = vector.multi_reduction <add>, %511, %cst_162 [1] : vector<16x16xf32> to vector<16xf32>
    %513 = vector.shape_cast %512 : vector<16xf32> to vector<16x1xf32>
    %514 = vector.broadcast %513 : vector<16x1xf32> to vector<16x16xf32>
    %515 = arith.divf %511, %514 : vector<16x16xf32>
    %516 = vector.extract_strided_slice %475 {offsets = [0, 16], sizes = [16, 8], strides = [1, 1]} : vector<16x32xf32> to vector<16x8xf32>
    %cst_163 = arith.constant dense<0.000000e+00> : vector<16x8xf32>
    %517 = tpu.matmul %515, %516, %cst_163 {dimension_numbers = #tpu.dot_dimension_numbers<[1], [0], [0], [1], [0, 0, 1, 1], [], []>} : vector<16x16xf32>, vector<16x8xf32>, vector<16x8xf32> -> vector<16x8xf32>
    %518 = vector.extract_strided_slice %465 {offsets = [0, 24], sizes = [16, 8], strides = [1, 1]} : vector<16x32xf32> to vector<16x8xf32>
    %519 = vector.extract_strided_slice %470 {offsets = [0, 24], sizes = [16, 8], strides = [1, 1]} : vector<16x32xf32> to vector<16x8xf32>
    %cst_164 = arith.constant dense<0.000000e+00> : vector<16x16xf32>
    %520 = tpu.matmul %518, %519, %cst_164 {dimension_numbers = #tpu.dot_dimension_numbers<[1], [1], [0], [0], [0, 0, 1, 0], [], []>} : vector<16x8xf32>, vector<16x8xf32>, vector<16x16xf32> -> vector<16x16xf32>
    %cst_165 = arith.constant dense<0xFF800000> : vector<16xf32>
    %521 = vector.multi_reduction <maximumf>, %520, %cst_165 [1] : vector<16x16xf32> to vector<16xf32>
    %522 = vector.shape_cast %521 : vector<16xf32> to vector<16x1xf32>
    %523 = vector.broadcast %522 : vector<16x1xf32> to vector<16x16xf32>
    %524 = arith.subf %520, %523 : vector<16x16xf32>
    %525 = math.exp %524 : vector<16x16xf32>
    %cst_166 = arith.constant dense<0.000000e+00> : vector<16xf32>
    %526 = vector.multi_reduction <add>, %525, %cst_166 [1] : vector<16x16xf32> to vector<16xf32>
    %527 = vector.shape_cast %526 : vector<16xf32> to vector<16x1xf32>
    %528 = vector.broadcast %527 : vector<16x1xf32> to vector<16x16xf32>
    %529 = arith.divf %525, %528 : vector<16x16xf32>
    %530 = vector.extract_strided_slice %475 {offsets = [0, 24], sizes = [16, 8], strides = [1, 1]} : vector<16x32xf32> to vector<16x8xf32>
    %cst_167 = arith.constant dense<0.000000e+00> : vector<16x8xf32>
    %531 = tpu.matmul %529, %530, %cst_167 {dimension_numbers = #tpu.dot_dimension_numbers<[1], [0], [0], [1], [0, 0, 1, 1], [], []>} : vector<16x16xf32>, vector<16x8xf32>, vector<16x8xf32> -> vector<16x8xf32>
    %532 = tpu.concatenate %489, %503, %517, %531 in 1 : vector<16x8xf32>, vector<16x8xf32>, vector<16x8xf32>, vector<16x8xf32> -> vector<16x32xf32>
    %533 = vector.extract_strided_slice %459 {offsets = [0, 96], sizes = [32, 32], strides = [1, 1]} : vector<32x128xf32> to vector<32x32xf32>
    %cst_168 = arith.constant dense<0.000000e+00> : vector<16x32xf32>
    %534 = tpu.matmul %532, %533, %cst_168 {dimension_numbers = #tpu.dot_dimension_numbers<[1], [0], [0], [1], [0, 0, 1, 1], [], []>} : vector<16x32xf32>, vector<32x32xf32>, vector<16x32xf32> -> vector<16x32xf32>
    %535 = vector.extract_strided_slice %460 {offsets = [3, 0], sizes = [1, 32], strides = [1, 1]} : vector<4x32xf32> to vector<1x32xf32>
    %536 = vector.broadcast %535 : vector<1x32xf32> to vector<16x32xf32>
    %537 = arith.addf %534, %536 : vector<16x32xf32>
    %538 = arith.addf %457, %537 : vector<16x32xf32>
    %539 = vector.extract_strided_slice %350 {offsets = [11, 0], sizes = [1, 32], strides = [1, 1]} : vector<15x32xf32> to vector<1x32xf32>
    %540 = vector.extract_strided_slice %350 {offsets = [12, 0], sizes = [1, 32], strides = [1, 1]} : vector<15x32xf32> to vector<1x32xf32>
    %cst_169 = arith.constant dense<0.000000e+00> : vector<16xf32>
    %541 = vector.multi_reduction <add>, %538, %cst_169 [1] : vector<16x32xf32> to vector<16xf32>
    %542 = vector.shape_cast %541 : vector<16xf32> to vector<16x1xf32>
    %cst_170 = arith.constant 3.200000e+01 : f32
    %543 = vector.broadcast %cst_170 : f32 to vector<16x1xf32>
    %544 = arith.divf %542, %543 : vector<16x1xf32>
    %545 = vector.broadcast %544 : vector<16x1xf32> to vector<16x32xf32>
    %546 = arith.subf %538, %545 : vector<16x32xf32>
    %547 = arith.mulf %546, %546 : vector<16x32xf32>
    %cst_171 = arith.constant dense<0.000000e+00> : vector<16xf32>
    %548 = vector.multi_reduction <add>, %547, %cst_171 [1] : vector<16x32xf32> to vector<16xf32>
    %549 = vector.shape_cast %548 : vector<16xf32> to vector<16x1xf32>
    %cst_172 = arith.constant 3.200000e+01 : f32
    %550 = vector.broadcast %cst_172 : f32 to vector<16x1xf32>
    %551 = arith.divf %549, %550 : vector<16x1xf32>
    %cst_173 = arith.constant 9.99999974E-6 : f32
    %552 = vector.broadcast %cst_173 : f32 to vector<16x1xf32>
    %553 = arith.addf %551, %552 : vector<16x1xf32>
    %554 = math.rsqrt %553 : vector<16x1xf32>
    %555 = vector.broadcast %554 : vector<16x1xf32> to vector<16x32xf32>
    %556 = arith.mulf %546, %555 : vector<16x32xf32>
    %557 = vector.broadcast %539 : vector<1x32xf32> to vector<16x32xf32>
    %558 = arith.mulf %556, %557 : vector<16x32xf32>
    %559 = vector.broadcast %540 : vector<1x32xf32> to vector<16x32xf32>
    %560 = arith.addf %558, %559 : vector<16x32xf32>
    %c2_174 = arith.constant 2 : index
    %c0_175 = arith.constant 0 : index
    %c0_176 = arith.constant 0 : index
    %561 = vector.load %arg6[%c2_174, %c0_175, %c0_176] : memref<3x32x64xf32, #tpu.memory_space<vmem>>, vector<1x32x64xf32>
    %562 = vector.shape_cast %561 : vector<1x32x64xf32> to vector<32x64xf32>
    %c2_177 = arith.constant 2 : index
    %c0_178 = arith.constant 0 : index
    %c0_179 = arith.constant 0 : index
    %563 = vector.load %arg7[%c2_177, %c0_178, %c0_179] : memref<3x1x64xf32, #tpu.memory_space<vmem>>, vector<1x1x64xf32>
    %564 = vector.shape_cast %563 : vector<1x1x64xf32> to vector<1x64xf32>
    %c2_180 = arith.constant 2 : index
    %c0_181 = arith.constant 0 : index
    %c0_182 = arith.constant 0 : index
    %565 = vector.load %arg8[%c2_180, %c0_181, %c0_182] : memref<3x64x32xf32, #tpu.memory_space<vmem>>, vector<1x64x32xf32>
    %566 = vector.shape_cast %565 : vector<1x64x32xf32> to vector<64x32xf32>
    %567 = vector.extract_strided_slice %350 {offsets = [8, 0], sizes = [1, 32], strides = [1, 1]} : vector<15x32xf32> to vector<1x32xf32>
    %cst_183 = arith.constant dense<0.000000e+00> : vector<16x64xf32>
    %568 = tpu.matmul %560, %562, %cst_183 {dimension_numbers = #tpu.dot_dimension_numbers<[1], [0], [0], [1], [0, 0, 1, 1], [], []>} : vector<16x32xf32>, vector<32x64xf32>, vector<16x64xf32> -> vector<16x64xf32>
    %569 = vector.broadcast %564 : vector<1x64xf32> to vector<16x64xf32>
    %570 = arith.addf %568, %569 : vector<16x64xf32>
    %cst_184 = arith.constant 0.000000e+00 : f32
    %571 = vector.broadcast %cst_184 : f32 to vector<16x64xf32>
    %572 = arith.maximumf %570, %571 : vector<16x64xf32>
    %cst_185 = arith.constant dense<0.000000e+00> : vector<16x32xf32>
    %573 = tpu.matmul %572, %566, %cst_185 {dimension_numbers = #tpu.dot_dimension_numbers<[1], [0], [0], [1], [0, 0, 1, 1], [], []>} : vector<16x64xf32>, vector<64x32xf32>, vector<16x32xf32> -> vector<16x32xf32>
    %574 = vector.broadcast %567 : vector<1x32xf32> to vector<16x32xf32>
    %575 = arith.addf %573, %574 : vector<16x32xf32>
    %576 = arith.addf %560, %575 : vector<16x32xf32>
    %577 = vector.extract_strided_slice %350 {offsets = [13, 0], sizes = [1, 32], strides = [1, 1]} : vector<15x32xf32> to vector<1x32xf32>
    %578 = vector.extract_strided_slice %350 {offsets = [14, 0], sizes = [1, 32], strides = [1, 1]} : vector<15x32xf32> to vector<1x32xf32>
    %cst_186 = arith.constant dense<0.000000e+00> : vector<16xf32>
    %579 = vector.multi_reduction <add>, %576, %cst_186 [1] : vector<16x32xf32> to vector<16xf32>
    %580 = vector.shape_cast %579 : vector<16xf32> to vector<16x1xf32>
    %cst_187 = arith.constant 3.200000e+01 : f32
    %581 = vector.broadcast %cst_187 : f32 to vector<16x1xf32>
    %582 = arith.divf %580, %581 : vector<16x1xf32>
    %583 = vector.broadcast %582 : vector<16x1xf32> to vector<16x32xf32>
    %584 = arith.subf %576, %583 : vector<16x32xf32>
    %585 = arith.mulf %584, %584 : vector<16x32xf32>
    %cst_188 = arith.constant dense<0.000000e+00> : vector<16xf32>
    %586 = vector.multi_reduction <add>, %585, %cst_188 [1] : vector<16x32xf32> to vector<16xf32>
    %587 = vector.shape_cast %586 : vector<16xf32> to vector<16x1xf32>
    %cst_189 = arith.constant 3.200000e+01 : f32
    %588 = vector.broadcast %cst_189 : f32 to vector<16x1xf32>
    %589 = arith.divf %587, %588 : vector<16x1xf32>
    %cst_190 = arith.constant 9.99999974E-6 : f32
    %590 = vector.broadcast %cst_190 : f32 to vector<16x1xf32>
    %591 = arith.addf %589, %590 : vector<16x1xf32>
    %592 = math.rsqrt %591 : vector<16x1xf32>
    %593 = vector.broadcast %592 : vector<16x1xf32> to vector<16x32xf32>
    %594 = arith.mulf %584, %593 : vector<16x32xf32>
    %595 = vector.broadcast %577 : vector<1x32xf32> to vector<16x32xf32>
    %596 = arith.mulf %594, %595 : vector<16x32xf32>
    %597 = vector.broadcast %578 : vector<1x32xf32> to vector<16x32xf32>
    %598 = arith.addf %596, %597 : vector<16x32xf32>
    %599 = vector.extract_strided_slice %2 {offsets = [2, 0], sizes = [1, 32], strides = [1, 1]} : vector<5x32xf32> to vector<1x32xf32>
    %600 = vector.extract_strided_slice %2 {offsets = [3, 0], sizes = [1, 32], strides = [1, 1]} : vector<5x32xf32> to vector<1x32xf32>
    %cst_191 = arith.constant dense<0.000000e+00> : vector<16xf32>
    %601 = vector.multi_reduction <add>, %598, %cst_191 [1] : vector<16x32xf32> to vector<16xf32>
    %602 = vector.shape_cast %601 : vector<16xf32> to vector<16x1xf32>
    %cst_192 = arith.constant 3.200000e+01 : f32
    %603 = vector.broadcast %cst_192 : f32 to vector<16x1xf32>
    %604 = arith.divf %602, %603 : vector<16x1xf32>
    %605 = vector.broadcast %604 : vector<16x1xf32> to vector<16x32xf32>
    %606 = arith.subf %598, %605 : vector<16x32xf32>
    %607 = arith.mulf %606, %606 : vector<16x32xf32>
    %cst_193 = arith.constant dense<0.000000e+00> : vector<16xf32>
    %608 = vector.multi_reduction <add>, %607, %cst_193 [1] : vector<16x32xf32> to vector<16xf32>
    %609 = vector.shape_cast %608 : vector<16xf32> to vector<16x1xf32>
    %cst_194 = arith.constant 3.200000e+01 : f32
    %610 = vector.broadcast %cst_194 : f32 to vector<16x1xf32>
    %611 = arith.divf %609, %610 : vector<16x1xf32>
    %cst_195 = arith.constant 9.99999974E-6 : f32
    %612 = vector.broadcast %cst_195 : f32 to vector<16x1xf32>
    %613 = arith.addf %611, %612 : vector<16x1xf32>
    %614 = math.rsqrt %613 : vector<16x1xf32>
    %615 = vector.broadcast %614 : vector<16x1xf32> to vector<16x32xf32>
    %616 = arith.mulf %606, %615 : vector<16x32xf32>
    %617 = vector.broadcast %599 : vector<1x32xf32> to vector<16x32xf32>
    %618 = arith.mulf %616, %617 : vector<16x32xf32>
    %619 = vector.broadcast %600 : vector<1x32xf32> to vector<16x32xf32>
    %620 = arith.addf %618, %619 : vector<16x32xf32>
    %c0_196 = arith.constant 0 : index
    %c0_197 = arith.constant 0 : index
    %621 = vector.load %arg12[%c0_196, %c0_197] : memref<32x4xf32, #tpu.memory_space<vmem>>, vector<32x4xf32>
    %cst_198 = arith.constant dense<0.000000e+00> : vector<16x4xf32>
    %622 = tpu.matmul %620, %621, %cst_198 {dimension_numbers = #tpu.dot_dimension_numbers<[1], [0], [0], [1], [0, 0, 1, 1], [], []>} : vector<16x32xf32>, vector<32x4xf32>, vector<16x4xf32> -> vector<16x4xf32>
    %623 = vector.extract_strided_slice %2 {offsets = [4, 0], sizes = [1, 4], strides = [1, 1]} : vector<5x32xf32> to vector<1x4xf32>
    %624 = vector.broadcast %623 : vector<1x4xf32> to vector<16x4xf32>
    %625 = arith.addf %622, %624 : vector<16x4xf32>
    %c0_199 = arith.constant 0 : index
    %c0_200 = arith.constant 0 : index
    %c0_201 = arith.constant 0 : index
    %626 = vector.load %arg13[%c0_199, %c0_200, %c0_201] : memref<1x16x4xf32, #tpu.memory_space<vmem>>, vector<1x16x4xf32>
    %627 = vector.shape_cast %626 : vector<1x16x4xf32> to vector<16x4xf32>
    %628 = vector.shape_cast %625 : vector<16x4xf32> to vector<1x16x4xf32>
    tpu.vector_store %arg13[%c0_199, %c0_200, %c0_201], %628 {strides = array<i32>} : memref<1x16x4xf32, #tpu.memory_space<vmem>>, vector<1x16x4xf32>,
    return
  }
  func.func @transform_0(%arg0: i32) -> (i32, i32, i32) {
    %c0_i32 = arith.constant 0 : i32
    %c0_i32_0 = arith.constant 0 : i32
    %c0_i32_1 = arith.constant 0 : i32
    return %arg0, %c0_i32, %c0_i32_0 : i32, i32, i32
  }
  func.func @transform_1(%arg0: i32) -> (i32, i32, i32) {
    %c0_i32 = arith.constant 0 : i32
    %c0_i32_0 = arith.constant 0 : i32
    %c0_i32_1 = arith.constant 0 : i32
    return %arg0, %c0_i32, %c0_i32_0 : i32, i32, i32
  }
  func.func @transform_2(%arg0: i32) -> (i32, i32) {
    %c0_i32 = arith.constant 0 : i32
    %c0_i32_0 = arith.constant 0 : i32
    %c0_i32_1 = arith.constant 0 : i32
    return %c0_i32, %c0_i32_0 : i32, i32
  }
  func.func @transform_3(%arg0: i32) -> (i32, i32) {
    %c0_i32 = arith.constant 0 : i32
    %c0_i32_0 = arith.constant 0 : i32
    %c0_i32_1 = arith.constant 0 : i32
    return %c0_i32, %c0_i32_0 : i32, i32
  }
  func.func @transform_4(%arg0: i32) -> (i32, i32, i32) {
    %c0_i32 = arith.constant 0 : i32
    %c0_i32_0 = arith.constant 0 : i32
    %c0_i32_1 = arith.constant 0 : i32
    %c0_i32_2 = arith.constant 0 : i32
    return %c0_i32, %c0_i32_0, %c0_i32_1 : i32, i32, i32
  }
  func.func @transform_5(%arg0: i32) -> (i32, i32, i32) {
    %c0_i32 = arith.constant 0 : i32
    %c0_i32_0 = arith.constant 0 : i32
    %c0_i32_1 = arith.constant 0 : i32
    %c0_i32_2 = arith.constant 0 : i32
    return %c0_i32, %c0_i32_0, %c0_i32_1 : i32, i32, i32
  }
  func.func @transform_6(%arg0: i32) -> (i32, i32, i32) {
    %c0_i32 = arith.constant 0 : i32
    %c0_i32_0 = arith.constant 0 : i32
    %c0_i32_1 = arith.constant 0 : i32
    %c0_i32_2 = arith.constant 0 : i32
    return %c0_i32, %c0_i32_0, %c0_i32_1 : i32, i32, i32
  }
  func.func @transform_7(%arg0: i32) -> (i32, i32, i32) {
    %c0_i32 = arith.constant 0 : i32
    %c0_i32_0 = arith.constant 0 : i32
    %c0_i32_1 = arith.constant 0 : i32
    %c0_i32_2 = arith.constant 0 : i32
    return %c0_i32, %c0_i32_0, %c0_i32_1 : i32, i32, i32
  }
  func.func @transform_8(%arg0: i32) -> (i32, i32, i32) {
    %c0_i32 = arith.constant 0 : i32
    %c0_i32_0 = arith.constant 0 : i32
    %c0_i32_1 = arith.constant 0 : i32
    %c0_i32_2 = arith.constant 0 : i32
    return %c0_i32, %c0_i32_0, %c0_i32_1 : i32, i32, i32
  }
  func.func @transform_9(%arg0: i32) -> (i32, i32, i32) {
    %c0_i32 = arith.constant 0 : i32
    %c0_i32_0 = arith.constant 0 : i32
    %c0_i32_1 = arith.constant 0 : i32
    %c0_i32_2 = arith.constant 0 : i32
    return %c0_i32, %c0_i32_0, %c0_i32_1 : i32, i32, i32
  }
  func.func @transform_10(%arg0: i32) -> (i32, i32) {
    %c0_i32 = arith.constant 0 : i32
    %c0_i32_0 = arith.constant 0 : i32
    %c0_i32_1 = arith.constant 0 : i32
    return %c0_i32, %c0_i32_0 : i32, i32
  }
  func.func @transform_11(%arg0: i32) -> (i32, i32) {
    %c0_i32 = arith.constant 0 : i32
    %c0_i32_0 = arith.constant 0 : i32
    %c0_i32_1 = arith.constant 0 : i32
    return %c0_i32, %c0_i32_0 : i32, i32
  }
  func.func @transform_12(%arg0: i32) -> (i32, i32, i32) {
    %c0_i32 = arith.constant 0 : i32
    %c0_i32_0 = arith.constant 0 : i32
    %c0_i32_1 = arith.constant 0 : i32
    return %arg0, %c0_i32, %c0_i32_0 : i32, i32, i32
  }
  func.func @transform_13(%arg0: i32) -> (i32, i32, i32) {
    %c0_i32 = arith.constant 0 : i32
    %c0_i32_0 = arith.constant 0 : i32
    %c0_i32_1 = arith.constant 0 : i32
    return %arg0, %c0_i32, %c0_i32_0 : i32, i32, i32
  }
}

</mosaic_0001>

<llo_original>
// kernel: model_forward.1
$region0: #{model_forward.1}
  #allocation0 [shape = 'u32[]', space=smem, size = 0x4, offset = 0x4, fixed_abs, tag = 'smem constant byte address 0x4 - core index']
  #allocation1 [shape = 'u32[144,128]{1,0:T(1,128)}', space=vmem, size = 0x12000, scoped, tag = 'internal scratch']
  %s0 = inlined_call_operand.vmem [shape: f32[2,16,8], index: 0, kind: input, shape index: {}]
  %s1 = inlined_call_operand.vmem [shape: f32[2,16,8], index: 1, kind: input, shape index: {}]
  %s2 = inlined_call_operand.vmem [shape: f32[32,32], index: 2, kind: input, shape index: {}]
  %s3 = inlined_call_operand.vmem [shape: f32[32,32], index: 3, kind: input, shape index: {}]
  %s4 = inlined_call_operand.vmem [shape: f32[4,32,128], index: 4, kind: input, shape index: {}]
  %s5 = inlined_call_operand.vmem [shape: f32[3,32,64], index: 5, kind: input, shape index: {}]
  %s6 = inlined_call_operand.vmem [shape: f32[3,1,64], index: 6, kind: input, shape index: {}]
  %s7 = inlined_call_operand.vmem [shape: f32[3,64,32], index: 7, kind: input, shape index: {}]
  %s8 = inlined_call_operand.vmem [shape: f32[2,9,32], index: 8, kind: input, shape index: {}]
  %s9 = inlined_call_operand.vmem [shape: f32[1,15,32], index: 9, kind: input, shape index: {}]
  %s10 = inlined_call_operand.vmem [shape: f32[5,32], index: 10, kind: input, shape index: {}]
  %s11 = inlined_call_operand.vmem [shape: f32[32,4], index: 11, kind: input, shape index: {}]
  %s12 = inlined_call_operand.vmem [shape: f32[2,16,4], index: 12, kind: output, shape index: {0}]
  %s13 = inlined_call_operand.vmem [shape: f32[2,16,128], index: 13, kind: output, shape index: {1}]
  %14 = xla_tuple %s12, %s13
  %s15 = sld [smem:[#allocation0]]
  $region89: #{model_forward.1} parent=0
    _
  %s17 = ssub.s32 1, %s15
  %s18 = scalar_select 0, %s17, %s15
  loop: start=0, step=1, limit=4
  $region2: #{model_forward.1} parent=0 // loop_pre_header
    _
  $region3: #{model_forward.1} parent=0 // loop_header
    %s20 = sphi 0, %s24
    %p21 = scmp.ge.s32.totalorder %s20, 4
    %s30 = sphi 0, %s32
    %s33 = sphi 0, %s30
    %s34 = sphi 0, %s33
    %s50 = sphi 0, %s34
    %s56 = sphi 0, %s58
    %s59 = sphi 0, %s56
    %s60 = sphi 0, %s59
    %s76 = sphi 0, %s60
    %s80 = sphi 0, %s80
    %s82 = sphi 0, %s80
    %s83 = sphi 0, %s82
    %s97 = sphi 0, %s83
    %s101 = sphi 0, %s101
    %s103 = sphi 0, %s101
    %s104 = sphi 0, %s103
    %s118 = sphi 0, %s104
    %s122 = sphi 0, %s122
    %s124 = sphi 0, %s122
    %s125 = sphi 0, %s124
    %s139 = sphi 0, %s125
    %s143 = sphi 0, %s143
    %s145 = sphi 0, %s143
    %s146 = sphi 0, %s145
    %s160 = sphi 0, %s146
    %s164 = sphi 0, %s164
    %s166 = sphi 0, %s164
    %s167 = sphi 0, %s166
    %s181 = sphi 0, %s167
    %s185 = sphi 0, %s185
    %s187 = sphi 0, %s185
    %s188 = sphi 0, %s187
    %s202 = sphi 0, %s188
    %s206 = sphi 0, %s206
    %s208 = sphi 0, %s206
    %s209 = sphi 0, %s208
    %s223 = sphi 0, %s209
    %s227 = sphi 0, %s227
    %s229 = sphi 0, %s227
    %s230 = sphi 0, %s229
    %s244 = sphi 0, %s230
    %s248 = sphi 0, %s248
    %s250 = sphi 0, %s248
    %s251 = sphi 0, %s250
    %s265 = sphi 0, %s251
    %s269 = sphi 0, %s269
    %s271 = sphi 0, %s269
    %s272 = sphi 0, %s271
    %s286 = sphi 0, %s272
    %s292 = sphi 0, %s294
    %s295 = sphi 0, %s292
    %s296 = sphi 0, %s295
    %s312 = sphi 0, %s296
    %s318 = sphi 0, %s320
    %s321 = sphi 0, %s318
    %s322 = sphi 0, %s321
    %s338 = sphi 0, %s322
  $region4: #{model_forward.1} parent=0 // loop_header_branch
    %23 = sbr.rel (%p21) target = $region8
  $region5: #{model_forward.1} parent=0 // loop_body
    %s25 = ssub.s32 %s20, 1
    %s26 = ssub.s32 %s20, 2
    %s27 = sadd.s32 %s20, 1
    %s28 = ssub.s32 %s20, %s27
    %p29 = scmp.eq.s32.totalorder %s28, 0
    %s31 = sadd.s32 %s30, 1
    %s32 = scalar_select %p29, %s30, %s31
    %p35 = pneg %p29
    %p36 = scmp.eq.s32.totalorder %s20, 1
    %p37 = por %p35, %p36
    %p38 = scmp.ne.s32.totalorder %s30, %s33
    %p39 = scmp.eq.s32.totalorder %s20, 0
    %p40 = por %p38, %p39
    %p41 = scmp.ne.s32.totalorder %s30, %s33
    %p42 = scmp.eq.s32.totalorder %s25, 1
    %p43 = por %p41, %p42
    %p44 = scmp.ne.s32.totalorder %s33, %s34
    %p45 = scmp.eq.s32.totalorder %s25, 0
    %p46 = por %p44, %p45
    %p47 = scmp.ne.s32.totalorder %s33, %s34
    %p48 = scmp.eq.s32.totalorder %s26, 1
    %p49 = por %p47, %p48
    %p51 = scmp.ne.s32.totalorder %s34, %s50
    %p52 = scmp.eq.s32.totalorder %s26, 0
    %p53 = por %p51, %p52
    %s54 = ssub.s32 %s20, %s27
    %p55 = scmp.eq.s32.totalorder %s54, 0
    %s57 = sadd.s32 %s56, 1
    %s58 = scalar_select %p55, %s56, %s57
    %p61 = pneg %p55
    %p62 = scmp.eq.s32.totalorder %s20, 1
    %p63 = por %p61, %p62
    %p64 = scmp.ne.s32.totalorder %s56, %s59
    %p65 = scmp.eq.s32.totalorder %s20, 0
    %p66 = por %p64, %p65
    %p67 = scmp.ne.s32.totalorder %s56, %s59
    %p68 = scmp.eq.s32.totalorder %s25, 1
    %p69 = por %p67, %p68
    %p70 = scmp.ne.s32.totalorder %s59, %s60
    %p71 = scmp.eq.s32.totalorder %s25, 0
    %p72 = por %p70, %p71
    %p73 = scmp.ne.s32.totalorder %s59, %s60
    %p74 = scmp.eq.s32.totalorder %s26, 1
    %p75 = por %p73, %p74
    %p77 = scmp.ne.s32.totalorder %s60, %s76
    %p78 = scmp.eq.s32.totalorder %s26, 0
    %p79 = por %p77, %p78
    %s81 = sadd.s32 %s80, 1
    %p84 = scmp.eq.s32.totalorder %s20, 1
    %p85 = scmp.ne.s32.totalorder %s80, %s82
    %p86 = scmp.eq.s32.totalorder %s20, 0
    %p87 = por %p85, %p86
    %p88 = scmp.ne.s32.totalorder %s80, %s82
    %p89 = scmp.eq.s32.totalorder %s25, 1
    %p90 = por %p88, %p89
    %p91 = scmp.ne.s32.totalorder %s82, %s83
    %p92 = scmp.eq.s32.totalorder %s25, 0
    %p93 = por %p91, %p92
    %p94 = scmp.ne.s32.totalorder %s82, %s83
    %p95 = scmp.eq.s32.totalorder %s26, 1
    %p96 = por %p94, %p95
    %p98 = scmp.ne.s32.totalorder %s83, %s97
    %p99 = scmp.eq.s32.totalorder %s26, 0
    %p100 = por %p98, %p99
    %s102 = sadd.s32 %s101, 1
    %p105 = scmp.eq.s32.totalorder %s20, 1
    %p106 = scmp.ne.s32.totalorder %s101, %s103
    %p107 = scmp.eq.s32.totalorder %s20, 0
    %p108 = por %p106, %p107
    %p109 = scmp.ne.s32.totalorder %s101, %s103
    %p110 = scmp.eq.s32.totalorder %s25, 1
    %p111 = por %p109, %p110
    %p112 = scmp.ne.s32.totalorder %s103, %s104
    %p113 = scmp.eq.s32.totalorder %s25, 0
    %p114 = por %p112, %p113
    %p115 = scmp.ne.s32.totalorder %s103, %s104
    %p116 = scmp.eq.s32.totalorder %s26, 1
    %p117 = por %p115, %p116
    %p119 = scmp.ne.s32.totalorder %s104, %s118
    %p120 = scmp.eq.s32.totalorder %s26, 0
    %p121 = por %p119, %p120
    %s123 = sadd.s32 %s122, 1
    %p126 = scmp.eq.s32.totalorder %s20, 1
    %p127 = scmp.ne.s32.totalorder %s122, %s124
    %p128 = scmp.eq.s32.totalorder %s20, 0
    %p129 = por %p127, %p128
    %p130 = scmp.ne.s32.totalorder %s122, %s124
    %p131 = scmp.eq.s32.totalorder %s25, 1
    %p132 = por %p130, %p131
    %p133 = scmp.ne.s32.totalorder %s124, %s125
    %p134 = scmp.eq.s32.totalorder %s25, 0
    %p135 = por %p133, %p134
    %p136 = scmp.ne.s32.totalorder %s124, %s125
    %p137 = scmp.eq.s32.totalorder %s26, 1
    %p138 = por %p136, %p137
    %p140 = scmp.ne.s32.totalorder %s125, %s139
    %p141 = scmp.eq.s32.totalorder %s26, 0
    %p142 = por %p140, %p141
    %s144 = sadd.s32 %s143, 1
    %p147 = scmp.eq.s32.totalorder %s20, 1
    %p148 = scmp.ne.s32.totalorder %s143, %s145
    %p149 = scmp.eq.s32.totalorder %s20, 0
    %p150 = por %p148, %p149
    %p151 = scmp.ne.s32.totalorder %s143, %s145
    %p152 = scmp.eq.s32.totalorder %s25, 1
    %p153 = por %p151, %p152
    %p154 = scmp.ne.s32.totalorder %s145, %s146
    %p155 = scmp.eq.s32.totalorder %s25, 0
    %p156 = por %p154, %p155
    %p157 = scmp.ne.s32.totalorder %s145, %s146
    %p158 = scmp.eq.s32.totalorder %s26, 1
    %p159 = por %p157, %p158
    %p161 = scmp.ne.s32.totalorder %s146, %s160
    %p162 = scmp.eq.s32.totalorder %s26, 0
    %p163 = por %p161, %p162
    %s165 = sadd.s32 %s164, 1
    %p168 = scmp.eq.s32.totalorder %s20, 1
    %p169 = scmp.ne.s32.totalorder %s164, %s166
    %p170 = scmp.eq.s32.totalorder %s20, 0
    %p171 = por %p169, %p170
    %p172 = scmp.ne.s32.totalorder %s164, %s166
    %p173 = scmp.eq.s32.totalorder %s25, 1
    %p174 = por %p172, %p173
    %p175 = scmp.ne.s32.totalorder %s166, %s167
    %p176 = scmp.eq.s32.totalorder %s25, 0
    %p177 = por %p175, %p176
    %p178 = scmp.ne.s32.totalorder %s166, %s167
    %p179 = scmp.eq.s32.totalorder %s26, 1
    %p180 = por %p178, %p179
    %p182 = scmp.ne.s32.totalorder %s167, %s181
    %p183 = scmp.eq.s32.totalorder %s26, 0
    %p184 = por %p182, %p183
    %s186 = sadd.s32 %s185, 1
    %p189 = scmp.eq.s32.totalorder %s20, 1
    %p190 = scmp.ne.s32.totalorder %s185, %s187
    %p191 = scmp.eq.s32.totalorder %s20, 0
    %p192 = por %p190, %p191
    %p193 = scmp.ne.s32.totalorder %s185, %s187
    %p194 = scmp.eq.s32.totalorder %s25, 1
    %p195 = por %p193, %p194
    %p196 = scmp.ne.s32.totalorder %s187, %s188
    %p197 = scmp.eq.s32.totalorder %s25, 0
    %p198 = por %p196, %p197
    %p199 = scmp.ne.s32.totalorder %s187, %s188
    %p200 = scmp.eq.s32.totalorder %s26, 1
    %p201 = por %p199, %p200
    %p203 = scmp.ne.s32.totalorder %s188, %s202
    %p204 = scmp.eq.s32.totalorder %s26, 0
    %p205 = por %p203, %p204
    %s207 = sadd.s32 %s206, 1
    %p210 = scmp.eq.s32.totalorder %s20, 1
    %p211 = scmp.ne.s32.totalorder %s206, %s208
    %p212 = scmp.eq.s32.totalorder %s20, 0
    %p213 = por %p211, %p212
    %p214 = scmp.ne.s32.totalorder %s206, %s208
    %p215 = scmp.eq.s32.totalorder %s25, 1
    %p216 = por %p214, %p215
    %p217 = scmp.ne.s32.totalorder %s208, %s209
    %p218 = scmp.eq.s32.totalorder %s25, 0
    %p219 = por %p217, %p218
    %p220 = scmp.ne.s32.totalorder %s208, %s209
    %p221 = scmp.eq.s32.totalorder %s26, 1
    %p222 = por %p220, %p221
    %p224 = scmp.ne.s32.totalorder %s209, %s223
    %p225 = scmp.eq.s32.totalorder %s26, 0
    %p226 = por %p224, %p225
    %s228 = sadd.s32 %s227, 1
    %p231 = scmp.eq.s32.totalorder %s20, 1
    %p232 = scmp.ne.s32.totalorder %s227, %s229
    %p233 = scmp.eq.s32.totalorder %s20, 0
    %p234 = por %p232, %p233
    %p235 = scmp.ne.s32.totalorder %s227, %s229
    %p236 = scmp.eq.s32.totalorder %s25, 1
    %p237 = por %p235, %p236
    %p238 = scmp.ne.s32.totalorder %s229, %s230
    %p239 = scmp.eq.s32.totalorder %s25, 0
    %p240 = por %p238, %p239
    %p241 = scmp.ne.s32.totalorder %s229, %s230
    %p242 = scmp.eq.s32.totalorder %s26, 1
    %p243 = por %p241, %p242
    %p245 = scmp.ne.s32.totalorder %s230, %s244
    %p246 = scmp.eq.s32.totalorder %s26, 0
    %p247 = por %p245, %p246
    %s249 = sadd.s32 %s248, 1
    %p252 = scmp.eq.s32.totalorder %s20, 1
    %p253 = scmp.ne.s32.totalorder %s248, %s250
    %p254 = scmp.eq.s32.totalorder %s20, 0
    %p255 = por %p253, %p254
    %p256 = scmp.ne.s32.totalorder %s248, %s250
    %p257 = scmp.eq.s32.totalorder %s25, 1
    %p258 = por %p256, %p257
    %p259 = scmp.ne.s32.totalorder %s250, %s251
    %p260 = scmp.eq.s32.totalorder %s25, 0
    %p261 = por %p259, %p260
    %p262 = scmp.ne.s32.totalorder %s250, %s251
    %p263 = scmp.eq.s32.totalorder %s26, 1
    %p264 = por %p262, %p263
    %p266 = scmp.ne.s32.totalorder %s251, %s265
    %p267 = scmp.eq.s32.totalorder %s26, 0
    %p268 = por %p266, %p267
    %s270 = sadd.s32 %s269, 1
    %p273 = scmp.eq.s32.totalorder %s20, 1
    %p274 = scmp.ne.s32.totalorder %s269, %s271
    %p275 = scmp.eq.s32.totalorder %s20, 0
    %p276 = por %p274, %p275
    %p277 = scmp.ne.s32.totalorder %s269, %s271
    %p278 = scmp.eq.s32.totalorder %s25, 1
    %p279 = por %p277, %p278
    %p280 = scmp.ne.s32.totalorder %s271, %s272
    %p281 = scmp.eq.s32.totalorder %s25, 0
    %p282 = por %p280, %p281
    %p283 = scmp.ne.s32.totalorder %s271, %s272
    %p284 = scmp.eq.s32.totalorder %s26, 1
    %p285 = por %p283, %p284
    %p287 = scmp.ne.s32.totalorder %s272, %s286
    %p288 = scmp.eq.s32.totalorder %s26, 0
    %p289 = por %p287, %p288
    %s290 = ssub.s32 %s20, %s27
    %p291 = scmp.eq.s32.totalorder %s290, 0
    %s293 = sadd.s32 %s292, 1
    %s294 = scalar_select %p291, %s292, %s293
    %p297 = pneg %p291
    %p298 = scmp.eq.s32.totalorder %s20, 1
    %p299 = por %p297, %p298
    %p300 = scmp.ne.s32.totalorder %s292, %s295
    %p301 = scmp.eq.s32.totalorder %s20, 0
    %p302 = por %p300, %p301
    %p303 = scmp.ne.s32.totalorder %s292, %s295
    %p304 = scmp.eq.s32.totalorder %s25, 1
    %p305 = por %p303, %p304
    %p306 = scmp.ne.s32.totalorder %s295, %s296
    %p307 = scmp.eq.s32.totalorder %s25, 0
    %p308 = por %p306, %p307
    %p309 = scmp.ne.s32.totalorder %s295, %s296
    %p310 = scmp.eq.s32.totalorder %s26, 1
    %p311 = por %p309, %p310
    %p313 = scmp.ne.s32.totalorder %s296, %s312
    %p314 = scmp.eq.s32.totalorder %s26, 0
    %p315 = por %p313, %p314
    %s316 = ssub.s32 %s20, %s27
    %p317 = scmp.eq.s32.totalorder %s316, 0
    %s319 = sadd.s32 %s318, 1
    %s320 = scalar_select %p317, %s318, %s319
    %p323 = pneg %p317
    %p324 = scmp.eq.s32.totalorder %s20, 1
    %p325 = por %p323, %p324
    %p326 = scmp.ne.s32.totalorder %s318, %s321
    %p327 = scmp.eq.s32.totalorder %s20, 0
    %p328 = por %p326, %p327
    %p329 = scmp.ne.s32.totalorder %s318, %s321
    %p330 = scmp.eq.s32.totalorder %s25, 1
    %p331 = por %p329, %p330
    %p332 = scmp.ne.s32.totalorder %s321, %s322
    %p333 = scmp.eq.s32.totalorder %s25, 0
    %p334 = por %p332, %p333
    %p335 = scmp.ne.s32.totalorder %s321, %s322
    %p336 = scmp.eq.s32.totalorder %s26, 1
    %p337 = por %p335, %p336
    %p339 = scmp.ne.s32.totalorder %s322, %s338
    %p340 = scmp.eq.s32.totalorder %s26, 0
    %p341 = por %p339, %p340
    %p342 = scmp.le.s32.totalorder 1, %s20
    %p343 = scmp.lt.s32.totalorder %s20, 3
    %p344 = pnand %p342, %p343
    %p345 = pneg %p344
    // Predicated region
    $region9: #{model_forward.1} parent=5 // pred_check
      _
    $region10: #{model_forward.1} parent=5 // pred_check_branch
      %347 = sbr.rel (%p344) target = $region12
    $region11: #{model_forward.1} parent=5 // pred_region
      %s348 = ssub.s32 %s20, 1
      // Predicated region
      $region13: #{model_forward.1} parent=11 // pred_check
        %p349 = pneg %p93
      $region14: #{model_forward.1} parent=11 // pred_check_branch
        %351 = sbr.rel (%p349) target = $region16
      $region15: #{model_forward.1} parent=11 // pred_region
        _
      $region16: #{model_forward.1} parent=11 // pred_fallthru
        _
      // Predicated region
      $region17: #{model_forward.1} parent=11 // pred_check
        %p352 = pneg %p114
      $region18: #{model_forward.1} parent=11 // pred_check_branch
        %354 = sbr.rel (%p352) target = $region20
      $region19: #{model_forward.1} parent=11 // pred_region
        _
      $region20: #{model_forward.1} parent=11 // pred_fallthru
        _
      // Predicated region
      $region21: #{model_forward.1} parent=11 // pred_check
        %p355 = pneg %p135
      $region22: #{model_forward.1} parent=11 // pred_check_branch
        %357 = sbr.rel (%p355) target = $region24
      $region23: #{model_forward.1} parent=11 // pred_region
        _
      $region24: #{model_forward.1} parent=11 // pred_fallthru
        _
      // Predicated region
      $region25: #{model_forward.1} parent=11 // pred_check
        %p358 = pneg %p156
      $region26: #{model_forward.1} parent=11 // pred_check_branch
        %360 = sbr.rel (%p358) target = $region28
      $region27: #{model_forward.1} parent=11 // pred_region
        _
      $region28: #{model_forward.1} parent=11 // pred_fallthru
        _
      // Predicated region
      $region29: #{model_forward.1} parent=11 // pred_check
        %p361 = pneg %p177
      $region30: #{model_forward.1} parent=11 // pred_check_branch
        %363 = sbr.rel (%p361) target = $region32
      $region31: #{model_forward.1} parent=11 // pred_region
        _
      $region32: #{model_forward.1} parent=11 // pred_fallthru
        _
      // Predicated region
      $region33: #{model_forward.1} parent=11 // pred_check
        %p364 = pneg %p198
      $region34: #{model_forward.1} parent=11 // pred_check_branch
        %366 = sbr.rel (%p364) target = $region36
      $region35: #{model_forward.1} parent=11 // pred_region
        _
      $region36: #{model_forward.1} parent=11 // pred_fallthru
        _
      // Predicated region
      $region37: #{model_forward.1} parent=11 // pred_check
        %p367 = pneg %p219
      $region38: #{model_forward.1} parent=11 // pred_check_branch
        %369 = sbr.rel (%p367) target = $region40
      $region39: #{model_forward.1} parent=11 // pred_region
        _
      $region40: #{model_forward.1} parent=11 // pred_fallthru
        _
      // Predicated region
      $region41: #{model_forward.1} parent=11 // pred_check
        %p370 = pneg %p240
      $region42: #{model_forward.1} parent=11 // pred_check_branch
        %372 = sbr.rel (%p370) target = $region44
      $region43: #{model_forward.1} parent=11 // pred_region
        _
      $region44: #{model_forward.1} parent=11 // pred_fallthru
        _
      // Predicated region
      $region45: #{model_forward.1} parent=11 // pred_check
        %p373 = pneg %p261
      $region46: #{model_forward.1} parent=11 // pred_check_branch
        %375 = sbr.rel (%p373) target = $region48
      $region47: #{model_forward.1} parent=11 // pred_region
        _
      $region48: #{model_forward.1} parent=11 // pred_fallthru
        _
      // Predicated region
      $region49: #{model_forward.1} parent=11 // pred_check
        %p376 = pneg %p282
      $region50: #{model_forward.1} parent=11 // pred_check_branch
        %378 = sbr.rel (%p376) target = $region52
      $region51: #{model_forward.1} parent=11 // pred_region
        _
      $region52: #{model_forward.1} parent=11 // pred_fallthru
        _
    $region12: #{model_forward.1} parent=5 // pred_fallthru
      _
    %p379 = scmp.lt.s32.totalorder %s20, 2
    // Predicated region
    $region53: #{model_forward.1} parent=5 // pred_check
      %p380 = pneg %p379
    $region54: #{model_forward.1} parent=5 // pred_check_branch
      %382 = sbr.rel (%p380) target = $region56
    $region55: #{model_forward.1} parent=5 // pred_region
      // Predicated region
      $region57: #{model_forward.1} parent=55 // pred_check
        %p383 = pneg %p40
      $region58: #{model_forward.1} parent=55 // pred_check_branch
        %385 = sbr.rel (%p383) target = $region60
      $region59: #{model_forward.1} parent=55 // pred_region
        %p386 = scmp.lt.s32.totalorder %s20, 1
        %s387 = scalar_select %p386, %s20, 1
        %s388 = smul.addr %s387, 2
        %s389 = smul.addr %s388, 8
        %s390 = scalar_lea.vmem %s0, %s389
      $region60: #{model_forward.1} parent=55 // pred_fallthru
        _
      // Predicated region
      $region61: #{model_forward.1} parent=55 // pred_check
        %p391 = pneg %p66
      $region62: #{model_forward.1} parent=55 // pred_check_branch
        %393 = sbr.rel (%p391) target = $region64
      $region63: #{model_forward.1} parent=55 // pred_region
        %p394 = scmp.lt.s32.totalorder %s20, 1
        %s395 = scalar_select %p394, %s20, 1
        %s396 = smul.addr %s395, 2
        %s397 = smul.addr %s396, 8
        %s398 = scalar_lea.vmem %s1, %s397
      $region64: #{model_forward.1} parent=55 // pred_fallthru
        _
    $region56: #{model_forward.1} parent=5 // pred_fallthru
      _
    %p399 = scmp.le.s32.totalorder 1, %s20
    %p400 = scmp.lt.s32.totalorder %s20, 3
    %p401 = pnand %p399, %p400
    %p402 = pneg %p401
    // Predicated region
    $region65: #{model_forward.1} parent=5 // pred_check
      _
    $region66: #{model_forward.1} parent=5 // pred_check_branch
      %404 = sbr.rel (%p401) target = $region68
    $region67: #{model_forward.1} parent=5 // pred_region
      %s405 = ssub.s32 %s20, 1
      %p406 = scmp.lt.s32.totalorder %s25, 1
      %s407 = scalar_select %p406, %s25, 1
      %s408 = smul.addr %s407, 2
      %s409 = smul.addr %s408, 8
      %s410 = scalar_lea.vmem %s0, %s409
      %p411 = pneg %p46
      %p412 = pneg %p43
      %p413 = scmp.lt.s32.totalorder %s25, 1
      %s414 = scalar_select %p413, %s25, 1
      %s415 = smul.addr %s414, 2
      %s416 = smul.addr %s415, 8
      %s417 = scalar_lea.vmem %s1, %s416
      %p418 = pneg %p72
      %p419 = pneg %p69
      %p420 = pneg %p93
      %p421 = pneg %p90
      %p422 = pneg %p114
      %p423 = pneg %p111
      %p424 = pneg %p135
      %p425 = pneg %p132
      %p426 = pneg %p156
      %p427 = pneg %p153
      %p428 = pneg %p177
      %p429 = pneg %p174
      %p430 = pneg %p198
      %p431 = pneg %p195
      %p432 = pneg %p219
      %p433 = pneg %p216
      %p434 = pneg %p240
      %p435 = pneg %p237
      %p436 = pneg %p261
      %p437 = pneg %p258
      %p438 = pneg %p282
      %p439 = pneg %p279
      %p440 = pneg %p308
      %p441 = pneg %p305
      %p442 = scmp.lt.s32.totalorder %s25, 1
      %s443 = scalar_select %p442, %s25, 1
      %s444 = smul.addr %s443, 2
      %s445 = smul.addr %s444, 8
      %s446 = scalar_lea.vmem %s12, %s445
      %p447 = pneg %p334
      %p448 = pneg %p331
      %p449 = scmp.lt.s32.totalorder %s25, 1
      %s450 = scalar_select %p449, %s25, 1
      %s451 = smul.addr %s450, 2
      %s452 = smul.addr %s451, 8
      %s453 = scalar_lea.vmem %s13, %s452
      %p454 = scmp.lt.s32.totalorder %s25, 1
      %s455 = scalar_select %p454, %s25, 1
      %s456 = smul.addr %s455, 2
      %s457 = smul.addr %s456, 8
      %s458 = scalar_lea.vmem %s0, %s457
      %p459 = scmp.lt.s32.totalorder %s25, 1
      %s460 = scalar_select %p459, %s25, 1
      %s461 = smul.addr %s460, 2
      %s462 = smul.addr %s461, 8
      %s463 = scalar_lea.vmem %s1, %s462
      %p464 = scmp.lt.s32.totalorder %s25, 1
      %s465 = scalar_select %p464, %s25, 1
      %s466 = smul.addr %s465, 2
      %s467 = smul.addr %s466, 8
      %s468 = scalar_lea.vmem %s12, %s467
      %p469 = scmp.lt.s32.totalorder %s25, 1
      %s470 = scalar_select %p469, %s25, 1
      %s471 = smul.addr %s470, 2
      %s472 = smul.addr %s471, 8
      %s473 = scalar_lea.vmem %s13, %s472
      %v474 = vld [vmem:[%s2] sm:$0xff]
      %v475 = vld [vmem:[%s2 + $0x8] sm:$0xff]
      %v476 = vld [vmem:[%s2 + $0x10] sm:$0xff]
      %v477 = vld [vmem:[%s2 + $0x18] sm:$0xff]
      %v478 = vld [vmem:[%s3] sm:$0xff]
      %v479 = vld [vmem:[%s3 + $0x8] sm:$0xff]
      %v480 = vld [vmem:[%s3 + $0x10] sm:$0xff]
      %v481 = vld [vmem:[%s3 + $0x18] sm:$0xff]
      %v482 = vld [vmem:[%s10] sm:$0x1f]
      %v483 = vld [vmem:[%s458] sm:$0xff]
      %v484 = vld [vmem:[%s458 + $0x8] sm:$0xff]
      %v486 = vrot.slane %v484, 7
      %vm489 = vcmask 1040384
      %v490 = vrot.slane %v483, 7
      %v491 = vsel %vm489, %v490, %v486
      %v493 = vsel %vm489, %v486, %v490
      %vm494 = vcmask 1046528
      %v495 = vrot.slane %v483, 1
      %v496 = vrot.slane %v484, 1
      %v497 = vsel %vm494, %v495, %v496
      %v500 = vsel %vm494, %v496, %v495
      %502 = vrot.lane.b32.xlu0 %v493, 8
      %v503 = vpop.permute.xlu0 %502
      %504 = vrot.lane.b32.xlu0 %v491, 8
      %v505 = vpop.permute.xlu0 %504
      %509 = vrot.lane.b32.xlu0 %v497, 12
      %v510 = vpop.permute.xlu0 %509
      %511 = vrot.lane.b32.xlu0 %v500, 12
      %v512 = vpop.permute.xlu0 %511
      %vm515 = vcmask 64512
      %v516 = vsel %vm515, %v483, %v503
      %v517 = vsel %vm515, %v484, %v505
      %vm518 = vcmask 97280
      %v519 = vsel %vm518, %v516, %v510
      %v520 = vsel %vm518, %v517, %v512
      %vm521 = vcmask 130048
      %v523 = vsel %vm521, %v519, 0
      %v526 = vsel %vm521, %v520, 0
      %528 = vmatprep.subr.mxu0 0.0
      %529 = vmatpush1.msra.mxu0 0.0
      %530 = vmatprep.subr.mxu0 0.0
      %531 = vmatpush1.msra.mxu0 0.0
      %532 = vmatprep.subr.mxu0 0.0
      %533 = vmatpush1.msra.mxu0 0.0
      %534 = vmatprep.subr.mxu0 0.0
      %535 = vmatpush1.msra.mxu0 0.0
      %536 = vmatprep.subr.mxu0 0.0
      %537 = vmatpush1.msra.mxu0 0.0
      %538 = vmatprep.subr.mxu0 0.0
      %539 = vmatpush1.msra.mxu0 0.0
      %540 = vmatprep.subr.mxu0 0.0
      %541 = vmatpush1.msra.mxu0 0.0
      %542 = vmatprep.subr.mxu0 0.0
      %543 = vmatpush1.msra.mxu0 0.0
      %544 = vmatprep.subr.mxu0 0.0
      %545 = vmatpush1.msra.mxu0 0.0
      %546 = vmatprep.subr.mxu0 0.0
      %547 = vmatpush1.msra.mxu0 0.0
      %548 = vmatprep.subr.mxu0 0.0
      %549 = vmatpush1.msra.mxu0 0.0
      %550 = vmatprep.subr.mxu0 0.0
      %551 = vmatpush1.msra.mxu0 0.0
      %552 = vmatprep.subr.mxu0 0.0
      %553 = vmatpush1.msra.mxu0 0.0
      %554 = vmatprep.subr.mxu0 0.0
      %555 = vmatpush1.msra.mxu0 0.0
      %556 = vmatprep.subr.mxu0 0.0
      %557 = vmatpush1.msra.mxu0 %v479
      %558 = vmatprep.subr.mxu0 0.0
      %559 = vmatpush1.msra.mxu0 %v478
      %560 = vmatprep.subr.mxu0 0.0
      %561 = vmatpush2.msra.mxu0 0.0
      %562 = vmatprep.subr.mxu0 0.0
      %563 = vmatpush2.msra.mxu0 0.0
      %564 = vmatprep.subr.mxu0 0.0
      %565 = vmatpush2.msra.mxu0 0.0
      %566 = vmatprep.subr.mxu0 0.0
      %567 = vmatpush2.msra.mxu0 0.0
      %568 = vmatprep.subr.mxu0 0.0
      %569 = vmatpush2.msra.mxu0 0.0
      %570 = vmatprep.subr.mxu0 0.0
      %571 = vmatpush2.msra.mxu0 0.0
      %572 = vmatprep.subr.mxu0 0.0
      %573 = vmatpush2.msra.mxu0 0.0
      %574 = vmatprep.subr.mxu0 0.0
      %575 = vmatpush2.msra.mxu0 0.0
      %576 = vmatprep.subr.mxu0 0.0
      %577 = vmatpush2.msra.mxu0 0.0
      %578 = vmatprep.subr.mxu0 0.0
      %579 = vmatpush2.msra.mxu0 0.0
      %580 = vmatprep.subr.mxu0 0.0
      %581 = vmatpush2.msra.mxu0 0.0
      %582 = vmatprep.subr.mxu0 0.0
      %583 = vmatpush2.msra.mxu0 0.0
      %584 = vmatprep.subr.mxu0 0.0
      %585 = vmatpush2.msra.mxu0 0.0
      %586 = vmatprep.subr.mxu0 0.0
      %587 = vmatpush2.msra.mxu0 0.0
      %588 = vmatprep.subr.mxu0 0.0
      %589 = vmatpush2.msra.mxu0 0.0
      %590 = vmatprep.subr.mxu0 0.0
      %591 = vmatpush2.msra.mxu0 0.0
      %592 = vmatprep.mubr.f32.mxu0 0.0
      %593 = vmatmul.mubr.f32.gmra.mxu0 %v523
      %v594 = vpop.f32.mrf.mxu0
      %v595 = vadd.f32 %v474, %v594
      %v596 = vpop.f32.mrf.mxu0
      %597 = vmatprep.mubr.f32.mxu0 0.0
      %598 = vmatmul.mubr.f32.gmra.mxu0 %v526
      %v599 = vpop.f32.mrf.mxu0
      %v600 = vadd.f32 %v475, %v599
      %v601 = vpop.f32.mrf.mxu0
      %602 = vdwg.mxu0
      %v603 = vld [vmem:[%s8] sm:$0xff]
      %v604 = vld [vmem:[%s8 + $0x8] sm:$0x1]
      %v605 = vld [vmem:[%s4] sm:$0xff]
      %v606 = vld [vmem:[%s4 + $0x8] sm:$0xff]
      %v607 = vld [vmem:[%s4 + $0x10] sm:$0xff]
      %v608 = vld [vmem:[%s4 + $0x18] sm:$0xff]
      %v609 = vlaneseq
      %v610 = vshrl.u32 %v609, 7
      %v611 = vsub.s32 0, %v610
      %v612 = vrot.slane %v603, %v611
      %vm613 = vcmask 261120
      %v615 = vsel %vm613, %v595, 0
      %v618 = vsel %vm613, %v600, 0
      %620 = vmatprep.subr.mxu0 0.0
      %621 = vmatpush1.msra.mxu0 0.0
      %622 = vmatprep.subr.mxu0 0.0
      %623 = vmatpush1.msra.mxu0 0.0
      %624 = vmatprep.subr.mxu0 0.0
      %625 = vmatpush1.msra.mxu0 0.0
      %626 = vmatprep.subr.mxu0 0.0
      %627 = vmatpush1.msra.mxu0 0.0
      %628 = vmatprep.subr.mxu0 0.0
      %629 = vmatpush1.msra.mxu0 0.0
      %630 = vmatprep.subr.mxu0 0.0
      %631 = vmatpush1.msra.mxu0 0.0
      %632 = vmatprep.subr.mxu0 0.0
      %633 = vmatpush1.msra.mxu0 0.0
      %634 = vmatprep.subr.mxu0 0.0
      %635 = vmatpush1.msra.mxu0 0.0
      %636 = vmatprep.subr.mxu0 0.0
      %637 = vmatpush1.msra.mxu0 0.0
      %638 = vmatprep.subr.mxu0 0.0
      %639 = vmatpush1.msra.mxu0 0.0
      %640 = vmatprep.subr.mxu0 0.0
      %641 = vmatpush1.msra.mxu0 0.0
      %642 = vmatprep.subr.mxu0 0.0
      %643 = vmatpush1.msra.mxu0 0.0
      %644 = vmatprep.subr.mxu0 0.0
      %645 = vmatpush1.msra.mxu0 %v608
      %646 = vmatprep.subr.mxu0 0.0
      %647 = vmatpush1.msra.mxu0 %v607
      %648 = vmatprep.subr.mxu0 0.0
      %649 = vmatpush1.msra.mxu0 %v606
      %650 = vmatprep.subr.mxu0 0.0
      %651 = vmatpush1.msra.mxu0 %v605
      %652 = vmatprep.subr.mxu0 0.0
      %653 = vmatpush2.msra.mxu0 0.0
      %654 = vmatprep.subr.mxu0 0.0
      %655 = vmatpush2.msra.mxu0 0.0
      %656 = vmatprep.subr.mxu0 0.0
      %657 = vmatpush2.msra.mxu0 0.0
      %658 = vmatprep.subr.mxu0 0.0
      %659 = vmatpush2.msra.mxu0 0.0
      %660 = vmatprep.subr.mxu0 0.0
      %661 = vmatpush2.msra.mxu0 0.0
      %662 = vmatprep.subr.mxu0 0.0
      %663 = vmatpush2.msra.mxu0 0.0
      %664 = vmatprep.subr.mxu0 0.0
      %665 = vmatpush2.msra.mxu0 0.0
      %666 = vmatprep.subr.mxu0 0.0
      %667 = vmatpush2.msra.mxu0 0.0
      %668 = vmatprep.subr.mxu0 0.0
      %669 = vmatpush2.msra.mxu0 0.0
      %670 = vmatprep.subr.mxu0 0.0
      %671 = vmatpush2.msra.mxu0 0.0
      %672 = vmatprep.subr.mxu0 0.0
      %673 = vmatpush2.msra.mxu0 0.0
      %674 = vmatprep.subr.mxu0 0.0
      %675 = vmatpush2.msra.mxu0 0.0
      %676 = vmatprep.subr.mxu0 0.0
      %677 = vmatpush2.msra.mxu0 0.0
      %678 = vmatprep.subr.mxu0 0.0
      %679 = vmatpush2.msra.mxu0 0.0
      %680 = vmatprep.subr.mxu0 0.0
      %681 = vmatpush2.msra.mxu0 0.0
      %682 = vmatprep.subr.mxu0 0.0
      %683 = vmatpush2.msra.mxu0 0.0
      %684 = vmatprep.mubr.f32.mxu0 0.0
      %685 = vmatmul.mubr.f32.gmra.mxu0 %v615
      %v686 = vpop.f32.mrf.mxu0
      %v687 = vadd.f32 %v612, %v686
      %v688 = vpop.f32.mrf.mxu0
      %689 = vmatprep.mubr.f32.mxu0 0.0
      %690 = vmatmul.mubr.f32.gmra.mxu0 %v618
      %v691 = vpop.f32.mrf.mxu0
      %v692 = vadd.f32 %v612, %v691
      %v693 = vpop.f32.mrf.mxu0
      %694 = vdwg.mxu0
      %v695 = vlaneseq
      %v696 = vshrl.u32 %v695, 7
      %v697 = vsub.s32 1, %v696
      %v698 = vrot.slane %v603, %v697
      %703 = vrot.lane.b32.xlu0 %v605, 96
      %v704 = vpop.permute.xlu0 %703
      %705 = vrot.lane.b32.xlu0 %v606, 96
      %v706 = vpop.permute.xlu0 %705
      %707 = vrot.lane.b32.xlu0 %v607, 96
      %v708 = vpop.permute.xlu0 %707
      %709 = vrot.lane.b32.xlu0 %v608, 96
      %v710 = vpop.permute.xlu0 %709
      %715 = vmatprep.subr.mxu0 0.0
      %716 = vmatpush1.msra.mxu0 0.0
      %717 = vmatprep.subr.mxu0 0.0
      %718 = vmatpush1.msra.mxu0 0.0
      %719 = vmatprep.subr.mxu0 0.0
      %720 = vmatpush1.msra.mxu0 0.0
      %721 = vmatprep.subr.mxu0 0.0
      %722 = vmatpush1.msra.mxu0 0.0
      %723 = vmatprep.subr.mxu0 0.0
      %724 = vmatpush1.msra.mxu0 0.0
      %725 = vmatprep.subr.mxu0 0.0
      %726 = vmatpush1.msra.mxu0 0.0
      %727 = vmatprep.subr.mxu0 0.0
      %728 = vmatpush1.msra.mxu0 0.0
      %729 = vmatprep.subr.mxu0 0.0
      %730 = vmatpush1.msra.mxu0 0.0
      %731 = vmatprep.subr.mxu0 0.0
      %732 = vmatpush1.msra.mxu0 0.0
      %733 = vmatprep.subr.mxu0 0.0
      %734 = vmatpush1.msra.mxu0 0.0
      %735 = vmatprep.subr.mxu0 0.0
      %736 = vmatpush1.msra.mxu0 0.0
      %737 = vmatprep.subr.mxu0 0.0
      %738 = vmatpush1.msra.mxu0 0.0
      %739 = vmatprep.subr.mxu0 0.0
      %740 = vmatpush1.msra.mxu0 %v710
      %741 = vmatprep.subr.mxu0 0.0
      %742 = vmatpush1.msra.mxu0 %v708
      %743 = vmatprep.subr.mxu0 0.0
      %744 = vmatpush1.msra.mxu0 %v706
      %745 = vmatprep.subr.mxu0 0.0
      %746 = vmatpush1.msra.mxu0 %v704
      %747 = vmatprep.subr.mxu0 0.0
      %748 = vmatpush2.msra.mxu0 0.0
      %749 = vmatprep.subr.mxu0 0.0
      %750 = vmatpush2.msra.mxu0 0.0
      %751 = vmatprep.subr.mxu0 0.0
      %752 = vmatpush2.msra.mxu0 0.0
      %753 = vmatprep.subr.mxu0 0.0
      %754 = vmatpush2.msra.mxu0 0.0
      %755 = vmatprep.subr.mxu0 0.0
      %756 = vmatpush2.msra.mxu0 0.0
      %757 = vmatprep.subr.mxu0 0.0
      %758 = vmatpush2.msra.mxu0 0.0
      %759 = vmatprep.subr.mxu0 0.0
      %760 = vmatpush2.msra.mxu0 0.0
      %761 = vmatprep.subr.mxu0 0.0
      %762 = vmatpush2.msra.mxu0 0.0
      %763 = vmatprep.subr.mxu0 0.0
      %764 = vmatpush2.msra.mxu0 0.0
      %765 = vmatprep.subr.mxu0 0.0
      %766 = vmatpush2.msra.mxu0 0.0
      %767 = vmatprep.subr.mxu0 0.0
      %768 = vmatpush2.msra.mxu0 0.0
      %769 = vmatprep.subr.mxu0 0.0
      %770 = vmatpush2.msra.mxu0 0.0
      %771 = vmatprep.subr.mxu0 0.0
      %772 = vmatpush2.msra.mxu0 0.0
      %773 = vmatprep.subr.mxu0 0.0
      %774 = vmatpush2.msra.mxu0 0.0
      %775 = vmatprep.subr.mxu0 0.0
      %776 = vmatpush2.msra.mxu0 0.0
      %777 = vmatprep.subr.mxu0 0.0
      %778 = vmatpush2.msra.mxu0 0.0
      %779 = vmatprep.mubr.f32.mxu0 0.0
      %780 = vmatmul.mubr.f32.gmra.mxu0 %v615
      %v781 = vpop.f32.mrf.mxu0
      %v782 = vadd.f32 %v698, %v781
      %v783 = vpop.f32.mrf.mxu0
      %784 = vmatprep.mubr.f32.mxu0 0.0
      %785 = vmatmul.mubr.f32.gmra.mxu0 %v618
      %v786 = vpop.f32.mrf.mxu0
      %v787 = vadd.f32 %v698, %v786
      %v788 = vpop.f32.mrf.mxu0
      %789 = vdwg.mxu0
      %v790 = vlaneseq
      %v791 = vshrl.u32 %v790, 7
      %v792 = vsub.s32 2, %v791
      %v793 = vrot.slane %v603, %v792
      %794 = vrot.lane.b32.xlu0 %v605, 64
      %v795 = vpop.permute.xlu0 %794
      %796 = vrot.lane.b32.xlu0 %v606, 64
      %v797 = vpop.permute.xlu0 %796
      %798 = vrot.lane.b32.xlu0 %v607, 64
      %v799 = vpop.permute.xlu0 %798
      %800 = vrot.lane.b32.xlu0 %v608, 64
      %v801 = vpop.permute.xlu0 %800
      %806 = vmatprep.subr.mxu0 0.0
      %807 = vmatpush1.msra.mxu0 0.0
      %808 = vmatprep.subr.mxu0 0.0
      %809 = vmatpush1.msra.mxu0 0.0
      %810 = vmatprep.subr.mxu0 0.0
      %811 = vmatpush1.msra.mxu0 0.0
      %812 = vmatprep.subr.mxu0 0.0
      %813 = vmatpush1.msra.mxu0 0.0
      %814 = vmatprep.subr.mxu0 0.0
      %815 = vmatpush1.msra.mxu0 0.0
      %816 = vmatprep.subr.mxu0 0.0
      %817 = vmatpush1.msra.mxu0 0.0
      %818 = vmatprep.subr.mxu0 0.0
      %819 = vmatpush1.msra.mxu0 0.0
      %820 = vmatprep.subr.mxu0 0.0
      %821 = vmatpush1.msra.mxu0 0.0
      %822 = vmatprep.subr.mxu0 0.0
      %823 = vmatpush1.msra.mxu0 0.0
      %824 = vmatprep.subr.mxu0 0.0
      %825 = vmatpush1.msra.mxu0 0.0
      %826 = vmatprep.subr.mxu0 0.0
      %827 = vmatpush1.msra.mxu0 0.0
      %828 = vmatprep.subr.mxu0 0.0
      %829 = vmatpush1.msra.mxu0 0.0
      %830 = vmatprep.subr.mxu0 0.0
      %831 = vmatpush1.msra.mxu0 %v801
      %832 = vmatprep.subr.mxu0 0.0
      %833 = vmatpush1.msra.mxu0 %v799
      %834 = vmatprep.subr.mxu0 0.0
      %835 = vmatpush1.msra.mxu0 %v797
      %836 = vmatprep.subr.mxu0 0.0
      %837 = vmatpush1.msra.mxu0 %v795
      %838 = vmatprep.subr.mxu0 0.0
      %839 = vmatpush2.msra.mxu0 0.0
      %840 = vmatprep.subr.mxu0 0.0
      %841 = vmatpush2.msra.mxu0 0.0
      %842 = vmatprep.subr.mxu0 0.0
      %843 = vmatpush2.msra.mxu0 0.0
      %844 = vmatprep.subr.mxu0 0.0
      %845 = vmatpush2.msra.mxu0 0.0
      %846 = vmatprep.subr.mxu0 0.0
      %847 = vmatpush2.msra.mxu0 0.0
      %848 = vmatprep.subr.mxu0 0.0
      %849 = vmatpush2.msra.mxu0 0.0
      %850 = vmatprep.subr.mxu0 0.0
      %851 = vmatpush2.msra.mxu0 0.0
      %852 = vmatprep.subr.mxu0 0.0
      %853 = vmatpush2.msra.mxu0 0.0
      %854 = vmatprep.subr.mxu0 0.0
      %855 = vmatpush2.msra.mxu0 0.0
      %856 = vmatprep.subr.mxu0 0.0
      %857 = vmatpush2.msra.mxu0 0.0
      %858 = vmatprep.subr.mxu0 0.0
      %859 = vmatpush2.msra.mxu0 0.0
      %860 = vmatprep.subr.mxu0 0.0
      %861 = vmatpush2.msra.mxu0 0.0
      %862 = vmatprep.subr.mxu0 0.0
      %863 = vmatpush2.msra.mxu0 0.0
      %864 = vmatprep.subr.mxu0 0.0
      %865 = vmatpush2.msra.mxu0 0.0
      %866 = vmatprep.subr.mxu0 0.0
      %867 = vmatpush2.msra.mxu0 0.0
      %868 = vmatprep.subr.mxu0 0.0
      %869 = vmatpush2.msra.mxu0 0.0
      %870 = vmatprep.mubr.f32.mxu0 0.0
      %871 = vmatmul.mubr.f32.gmra.mxu0 %v615
      %v872 = vpop.f32.mrf.mxu0
      %v873 = vadd.f32 %v793, %v872
      %v874 = vpop.f32.mrf.mxu0
      %875 = vmatprep.mubr.f32.mxu0 0.0
      %876 = vmatmul.mubr.f32.gmra.mxu0 %v618
      %v877 = vpop.f32.mrf.mxu0
      %v878 = vadd.f32 %v793, %v877
      %v879 = vpop.f32.mrf.mxu0
      %880 = vdwg.mxu0
      %v882 = vsel %vm515, %v687, 0
      %v885 = vsel %vm515, %v692, 0
      %v888 = vsel %vm515, %v782, 0
      %v891 = vsel %vm515, %v787, 0
      %893 = vmatprep.subr.mxu0 0.0
      %894 = vmatpush1.xpose.msra.mxu0 0.0
      %895 = vmatprep.subr.mxu0 0.0
      %896 = vmatpush1.xpose.msra.mxu0 0.0
      %897 = vmatprep.subr.mxu0 0.0
      %898 = vmatpush1.xpose.msra.mxu0 0.0
      %899 = vmatprep.subr.mxu0 0.0
      %900 = vmatpush1.xpose.msra.mxu0 0.0
      %901 = vmatprep.subr.mxu0 0.0
      %902 = vmatpush1.xpose.msra.mxu0 0.0
      %903 = vmatprep.subr.mxu0 0.0
      %904 = vmatpush1.xpose.msra.mxu0 0.0
      %905 = vmatprep.subr.mxu0 0.0
      %906 = vmatpush1.xpose.msra.mxu0 0.0
      %907 = vmatprep.subr.mxu0 0.0
      %908 = vmatpush1.xpose.msra.mxu0 0.0
      %909 = vmatprep.subr.mxu0 0.0
      %910 = vmatpush1.xpose.msra.mxu0 0.0
      %911 = vmatprep.subr.mxu0 0.0
      %912 = vmatpush1.xpose.msra.mxu0 0.0
      %913 = vmatprep.subr.mxu0 0.0
      %914 = vmatpush1.xpose.msra.mxu0 0.0
      %915 = vmatprep.subr.mxu0 0.0
      %916 = vmatpush1.xpose.msra.mxu0 0.0
      %917 = vmatprep.subr.mxu0 0.0
      %918 = vmatpush1.xpose.msra.mxu0 0.0
      %919 = vmatprep.subr.mxu0 0.0
      %920 = vmatpush1.xpose.msra.mxu0 0.0
      %921 = vmatprep.subr.mxu0 0.0
      %922 = vmatpush1.xpose.msra.mxu0 %v891
      %923 = vmatprep.subr.mxu0 0.0
      %924 = vmatpush1.xpose.msra.mxu0 %v888
      %925 = vmatprep.subr.mxu0 0.0
      %926 = vmatpush2.xpose.msra.mxu0 0.0
      %927 = vmatprep.subr.mxu0 0.0
      %928 = vmatpush2.xpose.msra.mxu0 0.0
      %929 = vmatprep.subr.mxu0 0.0
      %930 = vmatpush2.xpose.msra.mxu0 0.0
      %931 = vmatprep.subr.mxu0 0.0
      %932 = vmatpush2.xpose.msra.mxu0 0.0
      %933 = vmatprep.subr.mxu0 0.0
      %934 = vmatpush2.xpose.msra.mxu0 0.0
      %935 = vmatprep.subr.mxu0 0.0
      %936 = vmatpush2.xpose.msra.mxu0 0.0
      %937 = vmatprep.subr.mxu0 0.0
      %938 = vmatpush2.xpose.msra.mxu0 0.0
      %939 = vmatprep.subr.mxu0 0.0
      %940 = vmatpush2.xpose.msra.mxu0 0.0
      %941 = vmatprep.subr.mxu0 0.0
      %942 = vmatpush2.xpose.msra.mxu0 0.0
      %943 = vmatprep.subr.mxu0 0.0
      %944 = vmatpush2.xpose.msra.mxu0 0.0
      %945 = vmatprep.subr.mxu0 0.0
      %946 = vmatpush2.xpose.msra.mxu0 0.0
      %947 = vmatprep.subr.mxu0 0.0
      %948 = vmatpush2.xpose.msra.mxu0 0.0
      %949 = vmatprep.subr.mxu0 0.0
      %950 = vmatpush2.xpose.msra.mxu0 0.0
      %951 = vmatprep.subr.mxu0 0.0
      %952 = vmatpush2.xpose.msra.mxu0 0.0
      %953 = vmatprep.subr.mxu0 0.0
      %954 = vmatpush2.xpose.msra.mxu0 0.0
      %955 = vmatprep.subr.mxu0 0.0
      %956 = vmatpush2.xpose.msra.mxu0 0.0
      %957 = vmatprep.mubr.f32.mxu0 0.0
      %958 = vmatmul.mubr.f32.gmra.mxu0 %v882
      %v959 = vpop.f32.mrf.mxu0
      %v960 = vadd.f32 0.0, %v959
      %v961 = vpop.f32.mrf.mxu0
      %962 = vmatprep.mubr.f32.mxu0 0.0
      %963 = vmatmul.mubr.f32.gmra.mxu0 %v885
      %v964 = vpop.f32.mrf.mxu0
      %v965 = vadd.f32 0.0, %v964
      %v966 = vpop.f32.mrf.mxu0
      %967 = vdwg.mxu0
      %v968 = vsel %vm521, %v960, -inf
      %969 = vmax.xlane.f32.xlu0 %v968
      %v970 = vpop.xlane.xlu0 %969
      %v971 = vsel %vm521, %v965, -inf
      %972 = vmax.xlane.f32.xlu0 %v971
      %v973 = vpop.xlane.xlu0 %972
      %v974 = vsub.f32 %v960, %v970
      %v975 = vsub.f32 %v965, %v973
      %v976 = vmul.f32 %v974, 1.442695
      %v977 = vpow.pop %v976
      %v978 = vmul.f32 %v975, 1.442695
      %v979 = vpow.pop %v978
      %v980 = vsel %vm521, %v977, 0.0
      %981 = vadd.xlane.f32.xlu0 %v980
      %v982 = vpop.xlane.xlu0 %981
      %v983 = vsel %vm521, %v979, 0.0
      %984 = vadd.xlane.f32.xlu0 %v983
      %v985 = vpop.xlane.xlu0 %984
      %v986 = vrcp.pop %v982
      %v987 = vmul.f32 %v977, %v986
      %v988 = vrcp.pop %v985
      %v989 = vmul.f32 %v979, %v988
      %v991 = vsel %vm521, %v987, 0
      %v994 = vsel %vm521, %v989, 0
      %996 = vmatprep.subr.mxu0 0.0
      %997 = vmatpush1.msra.mxu0 0.0
      %998 = vmatprep.subr.mxu0 0.0
      %999 = vmatpush1.msra.mxu0 0.0
      %1000 = vmatprep.subr.mxu0 0.0
      %1001 = vmatpush1.msra.mxu0 0.0
      %1002 = vmatprep.subr.mxu0 0.0
      %1003 = vmatpush1.msra.mxu0 0.0
      %1004 = vmatprep.subr.mxu0 0.0
      %1005 = vmatpush1.msra.mxu0 0.0
      %1006 = vmatprep.subr.mxu0 0.0
      %1007 = vmatpush1.msra.mxu0 0.0
      %1008 = vmatprep.subr.mxu0 0.0
      %1009 = vmatpush1.msra.mxu0 0.0
      %1010 = vmatprep.subr.mxu0 0.0
      %1011 = vmatpush1.msra.mxu0 0.0
      %1012 = vmatprep.subr.mxu0 0.0
      %1013 = vmatpush1.msra.mxu0 0.0
      %1014 = vmatprep.subr.mxu0 0.0
      %1015 = vmatpush1.msra.mxu0 0.0
      %1016 = vmatprep.subr.mxu0 0.0
      %1017 = vmatpush1.msra.mxu0 0.0
      %1018 = vmatprep.subr.mxu0 0.0
      %1019 = vmatpush1.msra.mxu0 0.0
      %1020 = vmatprep.subr.mxu0 0.0
      %1021 = vmatpush1.msra.mxu0 0.0
      %1022 = vmatprep.subr.mxu0 0.0
      %1023 = vmatpush1.msra.mxu0 0.0
      %1024 = vmatprep.subr.mxu0 0.0
      %1025 = vmatpush1.msra.mxu0 %v878
      %1026 = vmatprep.subr.mxu0 0.0
      %1027 = vmatpush1.msra.mxu0 %v873
      %1028 = vmatprep.subr.mxu0 0.0
      %1029 = vmatpush2.msra.mxu0 0.0
      %1030 = vmatprep.subr.mxu0 0.0
      %1031 = vmatpush2.msra.mxu0 0.0
      %1032 = vmatprep.subr.mxu0 0.0
      %1033 = vmatpush2.msra.mxu0 0.0
      %1034 = vmatprep.subr.mxu0 0.0
      %1035 = vmatpush2.msra.mxu0 0.0
      %1036 = vmatprep.subr.mxu0 0.0
      %1037 = vmatpush2.msra.mxu0 0.0
      %1038 = vmatprep.subr.mxu0 0.0
      %1039 = vmatpush2.msra.mxu0 0.0
      %1040 = vmatprep.subr.mxu0 0.0
      %1041 = vmatpush2.msra.mxu0 0.0
      %1042 = vmatprep.subr.mxu0 0.0
      %1043 = vmatpush2.msra.mxu0 0.0
      %1044 = vmatprep.subr.mxu0 0.0
      %1045 = vmatpush2.msra.mxu0 0.0
      %1046 = vmatprep.subr.mxu0 0.0
      %1047 = vmatpush2.msra.mxu0 0.0
      %1048 = vmatprep.subr.mxu0 0.0
      %1049 = vmatpush2.msra.mxu0 0.0
      %1050 = vmatprep.subr.mxu0 0.0
      %1051 = vmatpush2.msra.mxu0 0.0
      %1052 = vmatprep.subr.mxu0 0.0
      %1053 = vmatpush2.msra.mxu0 0.0
      %1054 = vmatprep.subr.mxu0 0.0
      %1055 = vmatpush2.msra.mxu0 0.0
      %1056 = vmatprep.subr.mxu0 0.0
      %1057 = vmatpush2.msra.mxu0 0.0
      %1058 = vmatprep.subr.mxu0 0.0
      %1059 = vmatpush2.msra.mxu0 0.0
      %1060 = vmatprep.mubr.f32.mxu0 0.0
      %1061 = vmatmul.mubr.f32.gmra.mxu0 %v991
      %v1062 = vpop.f32.mrf.mxu0
      %v1063 = vadd.f32 0.0, %v1062
      %v1064 = vpop.f32.mrf.mxu0
      %1065 = vmatprep.mubr.f32.mxu0 0.0
      %1066 = vmatmul.mubr.f32.gmra.mxu0 %v994
      %v1067 = vpop.f32.mrf.mxu0
      %v1068 = vadd.f32 0.0, %v1067
      %v1069 = vpop.f32.mrf.mxu0
      %1070 = vdwg.mxu0
      %1071 = vrot.lane.b32.xlu0 %v687, 120
      %v1072 = vpop.permute.xlu0 %1071
      %1073 = vrot.lane.b32.xlu0 %v692, 120
      %v1074 = vpop.permute.xlu0 %1073
      %1075 = vrot.lane.b32.xlu0 %v782, 120
      %v1076 = vpop.permute.xlu0 %1075
      %1077 = vrot.lane.b32.xlu0 %v787, 120
      %v1078 = vpop.permute.xlu0 %1077
      %v1079 = vsel %vm515, %v1072, 0
      %v1081 = vsel %vm515, %v1074, 0
      %v1083 = vsel %vm515, %v1076, 0
      %v1085 = vsel %vm515, %v1078, 0
      %1087 = vmatprep.subr.mxu0 0.0
      %1088 = vmatpush1.xpose.msra.mxu0 0.0
      %1089 = vmatprep.subr.mxu0 0.0
      %1090 = vmatpush1.xpose.msra.mxu0 0.0
      %1091 = vmatprep.subr.mxu0 0.0
      %1092 = vmatpush1.xpose.msra.mxu0 0.0
      %1093 = vmatprep.subr.mxu0 0.0
      %1094 = vmatpush1.xpose.msra.mxu0 0.0
      %1095 = vmatprep.subr.mxu0 0.0
      %1096 = vmatpush1.xpose.msra.mxu0 0.0
      %1097 = vmatprep.subr.mxu0 0.0
      %1098 = vmatpush1.xpose.msra.mxu0 0.0
      %1099 = vmatprep.subr.mxu0 0.0
      %1100 = vmatpush1.xpose.msra.mxu0 0.0
      %1101 = vmatprep.subr.mxu0 0.0
      %1102 = vmatpush1.xpose.msra.mxu0 0.0
      %1103 = vmatprep.subr.mxu0 0.0
      %1104 = vmatpush1.xpose.msra.mxu0 0.0
      %1105 = vmatprep.subr.mxu0 0.0
      %1106 = vmatpush1.xpose.msra.mxu0 0.0
      %1107 = vmatprep.subr.mxu0 0.0
      %1108 = vmatpush1.xpose.msra.mxu0 0.0
      %1109 = vmatprep.subr.mxu0 0.0
      %1110 = vmatpush1.xpose.msra.mxu0 0.0
      %1111 = vmatprep.subr.mxu0 0.0
      %1112 = vmatpush1.xpose.msra.mxu0 0.0
      %1113 = vmatprep.subr.mxu0 0.0
      %1114 = vmatpush1.xpose.msra.mxu0 0.0
      %1115 = vmatprep.subr.mxu0 0.0
      %1116 = vmatpush1.xpose.msra.mxu0 %v1085
      %1117 = vmatprep.subr.mxu0 0.0
      %1118 = vmatpush1.xpose.msra.mxu0 %v1083
      %1119 = vmatprep.subr.mxu0 0.0
      %1120 = vmatpush2.xpose.msra.mxu0 0.0
      %1121 = vmatprep.subr.mxu0 0.0
      %1122 = vmatpush2.xpose.msra.mxu0 0.0
      %1123 = vmatprep.subr.mxu0 0.0
      %1124 = vmatpush2.xpose.msra.mxu0 0.0
      %1125 = vmatprep.subr.mxu0 0.0
      %1126 = vmatpush2.xpose.msra.mxu0 0.0
      %1127 = vmatprep.subr.mxu0 0.0
      %1128 = vmatpush2.xpose.msra.mxu0 0.0
      %1129 = vmatprep.subr.mxu0 0.0
      %1130 = vmatpush2.xpose.msra.mxu0 0.0
      %1131 = vmatprep.subr.mxu0 0.0
      %1132 = vmatpush2.xpose.msra.mxu0 0.0
      %1133 = vmatprep.subr.mxu0 0.0
      %1134 = vmatpush2.xpose.msra.mxu0 0.0
      %1135 = vmatprep.subr.mxu0 0.0
      %1136 = vmatpush2.xpose.msra.mxu0 0.0
      %1137 = vmatprep.subr.mxu0 0.0
      %1138 = vmatpush2.xpose.msra.mxu0 0.0
      %1139 = vmatprep.subr.mxu0 0.0
      %1140 = vmatpush2.xpose.msra.mxu0 0.0
      %1141 = vmatprep.subr.mxu0 0.0
      %1142 = vmatpush2.xpose.msra.mxu0 0.0
      %1143 = vmatprep.subr.mxu0 0.0
      %1144 = vmatpush2.xpose.msra.mxu0 0.0
      %1145 = vmatprep.subr.mxu0 0.0
      %1146 = vmatpush2.xpose.msra.mxu0 0.0
      %1147 = vmatprep.subr.mxu0 0.0
      %1148 = vmatpush2.xpose.msra.mxu0 0.0
      %1149 = vmatprep.subr.mxu0 0.0
      %1150 = vmatpush2.xpose.msra.mxu0 0.0
      %1151 = vmatprep.mubr.f32.mxu0 0.0
      %1152 = vmatmul.mubr.f32.gmra.mxu0 %v1079
      %v1153 = vpop.f32.mrf.mxu0
      %v1154 = vadd.f32 0.0, %v1153
      %v1155 = vpop.f32.mrf.mxu0
      %1156 = vmatprep.mubr.f32.mxu0 0.0
      %1157 = vmatmul.mubr.f32.gmra.mxu0 %v1081
      %v1158 = vpop.f32.mrf.mxu0
      %v1159 = vadd.f32 0.0, %v1158
      %v1160 = vpop.f32.mrf.mxu0
      %1161 = vdwg.mxu0
      %v1162 = vsel %vm521, %v1154, -inf
      %1163 = vmax.xlane.f32.xlu0 %v1162
      %v1164 = vpop.xlane.xlu0 %1163
      %v1165 = vsel %vm521, %v1159, -inf
      %1166 = vmax.xlane.f32.xlu0 %v1165
      %v1167 = vpop.xlane.xlu0 %1166
      %v1168 = vsub.f32 %v1154, %v1164
      %v1169 = vsub.f32 %v1159, %v1167
      %v1170 = vmul.f32 %v1168, 1.442695
      %v1171 = vpow.pop %v1170
      %v1172 = vmul.f32 %v1169, 1.442695
      %v1173 = vpow.pop %v1172
      %v1174 = vsel %vm521, %v1171, 0.0
      %1175 = vadd.xlane.f32.xlu0 %v1174
      %v1176 = vpop.xlane.xlu0 %1175
      %v1177 = vsel %vm521, %v1173, 0.0
      %1178 = vadd.xlane.f32.xlu0 %v1177
      %v1179 = vpop.xlane.xlu0 %1178
      %v1180 = vrcp.pop %v1176
      %v1181 = vmul.f32 %v1171, %v1180
      %v1182 = vrcp.pop %v1179
      %v1183 = vmul.f32 %v1173, %v1182
      %1186 = vrot.lane.b32.xlu0 %v873, 120
      %v1187 = vpop.permute.xlu0 %1186
      %1188 = vrot.lane.b32.xlu0 %v878, 120
      %v1189 = vpop.permute.xlu0 %1188
      %v1193 = vsel %vm521, %v1181, 0
      %v1196 = vsel %vm521, %v1183, 0
      %1198 = vmatprep.subr.mxu0 0.0
      %1199 = vmatpush1.msra.mxu0 0.0
      %1200 = vmatprep.subr.mxu0 0.0
      %1201 = vmatpush1.msra.mxu0 0.0
      %1202 = vmatprep.subr.mxu0 0.0
      %1203 = vmatpush1.msra.mxu0 0.0
      %1204 = vmatprep.subr.mxu0 0.0
      %1205 = vmatpush1.msra.mxu0 0.0
      %1206 = vmatprep.subr.mxu0 0.0
      %1207 = vmatpush1.msra.mxu0 0.0
      %1208 = vmatprep.subr.mxu0 0.0
      %1209 = vmatpush1.msra.mxu0 0.0
      %1210 = vmatprep.subr.mxu0 0.0
      %1211 = vmatpush1.msra.mxu0 0.0
      %1212 = vmatprep.subr.mxu0 0.0
      %1213 = vmatpush1.msra.mxu0 0.0
      %1214 = vmatprep.subr.mxu0 0.0
      %1215 = vmatpush1.msra.mxu0 0.0
      %1216 = vmatprep.subr.mxu0 0.0
      %1217 = vmatpush1.msra.mxu0 0.0
      %1218 = vmatprep.subr.mxu0 0.0
      %1219 = vmatpush1.msra.mxu0 0.0
      %1220 = vmatprep.subr.mxu0 0.0
      %1221 = vmatpush1.msra.mxu0 0.0
      %1222 = vmatprep.subr.mxu0 0.0
      %1223 = vmatpush1.msra.mxu0 0.0
      %1224 = vmatprep.subr.mxu0 0.0
      %1225 = vmatpush1.msra.mxu0 0.0
      %1226 = vmatprep.subr.mxu0 0.0
      %1227 = vmatpush1.msra.mxu0 %v1189
      %1228 = vmatprep.subr.mxu0 0.0
      %1229 = vmatpush1.msra.mxu0 %v1187
      %1230 = vmatprep.subr.mxu0 0.0
      %1231 = vmatpush2.msra.mxu0 0.0
      %1232 = vmatprep.subr.mxu0 0.0
      %1233 = vmatpush2.msra.mxu0 0.0
      %1234 = vmatprep.subr.mxu0 0.0
      %1235 = vmatpush2.msra.mxu0 0.0
      %1236 = vmatprep.subr.mxu0 0.0
      %1237 = vmatpush2.msra.mxu0 0.0
      %1238 = vmatprep.subr.mxu0 0.0
      %1239 = vmatpush2.msra.mxu0 0.0
      %1240 = vmatprep.subr.mxu0 0.0
      %1241 = vmatpush2.msra.mxu0 0.0
      %1242 = vmatprep.subr.mxu0 0.0
      %1243 = vmatpush2.msra.mxu0 0.0
      %1244 = vmatprep.subr.mxu0 0.0
      %1245 = vmatpush2.msra.mxu0 0.0
      %1246 = vmatprep.subr.mxu0 0.0
      %1247 = vmatpush2.msra.mxu0 0.0
      %1248 = vmatprep.subr.mxu0 0.0
      %1249 = vmatpush2.msra.mxu0 0.0
      %1250 = vmatprep.subr.mxu0 0.0
      %1251 = vmatpush2.msra.mxu0 0.0
      %1252 = vmatprep.subr.mxu0 0.0
      %1253 = vmatpush2.msra.mxu0 0.0
      %1254 = vmatprep.subr.mxu0 0.0
      %1255 = vmatpush2.msra.mxu0 0.0
      %1256 = vmatprep.subr.mxu0 0.0
      %1257 = vmatpush2.msra.mxu0 0.0
      %1258 = vmatprep.subr.mxu0 0.0
      %1259 = vmatpush2.msra.mxu0 0.0
      %1260 = vmatprep.subr.mxu0 0.0
      %1261 = vmatpush2.msra.mxu0 0.0
      %1262 = vmatprep.mubr.f32.mxu0 0.0
      %1263 = vmatmul.mubr.f32.gmra.mxu0 %v1193
      %v1264 = vpop.f32.mrf.mxu0
      %v1265 = vadd.f32 0.0, %v1264
      %v1266 = vpop.f32.mrf.mxu0
      %1267 = vmatprep.mubr.f32.mxu0 0.0
      %1268 = vmatmul.mubr.f32.gmra.mxu0 %v1196
      %v1269 = vpop.f32.mrf.mxu0
      %v1270 = vadd.f32 0.0, %v1269
      %v1271 = vpop.f32.mrf.mxu0
      %1272 = vdwg.mxu0
      %1273 = vrot.lane.b32.xlu0 %v687, 112
      %v1274 = vpop.permute.xlu0 %1273
      %1275 = vrot.lane.b32.xlu0 %v692, 112
      %v1276 = vpop.permute.xlu0 %1275
      %1277 = vrot.lane.b32.xlu0 %v782, 112
      %v1278 = vpop.permute.xlu0 %1277
      %1279 = vrot.lane.b32.xlu0 %v787, 112
      %v1280 = vpop.permute.xlu0 %1279
      %v1281 = vsel %vm515, %v1274, 0
      %v1283 = vsel %vm515, %v1276, 0
      %v1285 = vsel %vm515, %v1278, 0
      %v1287 = vsel %vm515, %v1280, 0
      %1289 = vmatprep.subr.mxu0 0.0
      %1290 = vmatpush1.xpose.msra.mxu0 0.0
      %1291 = vmatprep.subr.mxu0 0.0
      %1292 = vmatpush1.xpose.msra.mxu0 0.0
      %1293 = vmatprep.subr.mxu0 0.0
      %1294 = vmatpush1.xpose.msra.mxu0 0.0
      %1295 = vmatprep.subr.mxu0 0.0
      %1296 = vmatpush1.xpose.msra.mxu0 0.0
      %1297 = vmatprep.subr.mxu0 0.0
      %1298 = vmatpush1.xpose.msra.mxu0 0.0
      %1299 = vmatprep.subr.mxu0 0.0
      %1300 = vmatpush1.xpose.msra.mxu0 0.0
      %1301 = vmatprep.subr.mxu0 0.0
      %1302 = vmatpush1.xpose.msra.mxu0 0.0
      %1303 = vmatprep.subr.mxu0 0.0
      %1304 = vmatpush1.xpose.msra.mxu0 0.0
      %1305 = vmatprep.subr.mxu0 0.0
      %1306 = vmatpush1.xpose.msra.mxu0 0.0
      %1307 = vmatprep.subr.mxu0 0.0
      %1308 = vmatpush1.xpose.msra.mxu0 0.0
      %1309 = vmatprep.subr.mxu0 0.0
      %1310 = vmatpush1.xpose.msra.mxu0 0.0
      %1311 = vmatprep.subr.mxu0 0.0
      %1312 = vmatpush1.xpose.msra.mxu0 0.0
      %1313 = vmatprep.subr.mxu0 0.0
      %1314 = vmatpush1.xpose.msra.mxu0 0.0
      %1315 = vmatprep.subr.mxu0 0.0
      %1316 = vmatpush1.xpose.msra.mxu0 0.0
      %1317 = vmatprep.subr.mxu0 0.0
      %1318 = vmatpush1.xpose.msra.mxu0 %v1287
      %1319 = vmatprep.subr.mxu0 0.0
      %1320 = vmatpush1.xpose.msra.mxu0 %v1285
      %1321 = vmatprep.subr.mxu0 0.0
      %1322 = vmatpush2.xpose.msra.mxu0 0.0
      %1323 = vmatprep.subr.mxu0 0.0
      %1324 = vmatpush2.xpose.msra.mxu0 0.0
      %1325 = vmatprep.subr.mxu0 0.0
      %1326 = vmatpush2.xpose.msra.mxu0 0.0
      %1327 = vmatprep.subr.mxu0 0.0
      %1328 = vmatpush2.xpose.msra.mxu0 0.0
      %1329 = vmatprep.subr.mxu0 0.0
      %1330 = vmatpush2.xpose.msra.mxu0 0.0
      %1331 = vmatprep.subr.mxu0 0.0
      %1332 = vmatpush2.xpose.msra.mxu0 0.0
      %1333 = vmatprep.subr.mxu0 0.0
      %1334 = vmatpush2.xpose.msra.mxu0 0.0
      %1335 = vmatprep.subr.mxu0 0.0
      %1336 = vmatpush2.xpose.msra.mxu0 0.0
      %1337 = vmatprep.subr.mxu0 0.0
      %1338 = vmatpush2.xpose.msra.mxu0 0.0
      %1339 = vmatprep.subr.mxu0 0.0
      %1340 = vmatpush2.xpose.msra.mxu0 0.0
      %1341 = vmatprep.subr.mxu0 0.0
      %1342 = vmatpush2.xpose.msra.mxu0 0.0
      %1343 = vmatprep.subr.mxu0 0.0
      %1344 = vmatpush2.xpose.msra.mxu0 0.0
      %1345 = vmatprep.subr.mxu0 0.0
      %1346 = vmatpush2.xpose.msra.mxu0 0.0
      %1347 = vmatprep.subr.mxu0 0.0
      %1348 = vmatpush2.xpose.msra.mxu0 0.0
      %1349 = vmatprep.subr.mxu0 0.0
      %1350 = vmatpush2.xpose.msra.mxu0 0.0
      %1351 = vmatprep.subr.mxu0 0.0
      %1352 = vmatpush2.xpose.msra.mxu0 0.0
      %1353 = vmatprep.mubr.f32.mxu0 0.0
      %1354 = vmatmul.mubr.f32.gmra.mxu0 %v1281
      %v1355 = vpop.f32.mrf.mxu0
      %v1356 = vadd.f32 0.0, %v1355
      %v1357 = vpop.f32.mrf.mxu0
      %1358 = vmatprep.mubr.f32.mxu0 0.0
      %1359 = vmatmul.mubr.f32.gmra.mxu0 %v1283
      %v1360 = vpop.f32.mrf.mxu0
      %v1361 = vadd.f32 0.0, %v1360
      %v1362 = vpop.f32.mrf.mxu0
      %1363 = vdwg.mxu0
      %v1364 = vsel %vm521, %v1356, -inf
      %1365 = vmax.xlane.f32.xlu0 %v1364
      %v1366 = vpop.xlane.xlu0 %1365
      %v1367 = vsel %vm521, %v1361, -inf
      %1368 = vmax.xlane.f32.xlu0 %v1367
      %v1369 = vpop.xlane.xlu0 %1368
      %v1370 = vsub.f32 %v1356, %v1366
      %v1371 = vsub.f32 %v1361, %v1369
      %v1372 = vmul.f32 %v1370, 1.442695
      %v1373 = vpow.pop %v1372
      %v1374 = vmul.f32 %v1371, 1.442695
      %v1375 = vpow.pop %v1374
      %v1376 = vsel %vm521, %v1373, 0.0
      %1377 = vadd.xlane.f32.xlu0 %v1376
      %v1378 = vpop.xlane.xlu0 %1377
      %v1379 = vsel %vm521, %v1375, 0.0
      %1380 = vadd.xlane.f32.xlu0 %v1379
      %v1381 = vpop.xlane.xlu0 %1380
      %v1382 = vrcp.pop %v1378
      %v1383 = vmul.f32 %v1373, %v1382
      %v1384 = vrcp.pop %v1381
      %v1385 = vmul.f32 %v1375, %v1384
      %1386 = vrot.lane.b32.xlu0 %v873, 112
      %v1387 = vpop.permute.xlu0 %1386
      %1388 = vrot.lane.b32.xlu0 %v878, 112
      %v1389 = vpop.permute.xlu0 %1388
      %v1393 = vsel %vm521, %v1383, 0
      %v1396 = vsel %vm521, %v1385, 0
      %1398 = vmatprep.subr.mxu0 0.0
      %1399 = vmatpush1.msra.mxu0 0.0
      %1400 = vmatprep.subr.mxu0 0.0
      %1401 = vmatpush1.msra.mxu0 0.0
      %1402 = vmatprep.subr.mxu0 0.0
      %1403 = vmatpush1.msra.mxu0 0.0
      %1404 = vmatprep.subr.mxu0 0.0
      %1405 = vmatpush1.msra.mxu0 0.0
      %1406 = vmatprep.subr.mxu0 0.0
      %1407 = vmatpush1.msra.mxu0 0.0
      %1408 = vmatprep.subr.mxu0 0.0
      %1409 = vmatpush1.msra.mxu0 0.0
      %1410 = vmatprep.subr.mxu0 0.0
      %1411 = vmatpush1.msra.mxu0 0.0
      %1412 = vmatprep.subr.mxu0 0.0
      %1413 = vmatpush1.msra.mxu0 0.0
      %1414 = vmatprep.subr.mxu0 0.0
      %1415 = vmatpush1.msra.mxu0 0.0
      %1416 = vmatprep.subr.mxu0 0.0
      %1417 = vmatpush1.msra.mxu0 0.0
      %1418 = vmatprep.subr.mxu0 0.0
      %1419 = vmatpush1.msra.mxu0 0.0
      %1420 = vmatprep.subr.mxu0 0.0
      %1421 = vmatpush1.msra.mxu0 0.0
      %1422 = vmatprep.subr.mxu0 0.0
      %1423 = vmatpush1.msra.mxu0 0.0
      %1424 = vmatprep.subr.mxu0 0.0
      %1425 = vmatpush1.msra.mxu0 0.0
      %1426 = vmatprep.subr.mxu0 0.0
      %1427 = vmatpush1.msra.mxu0 %v1389
      %1428 = vmatprep.subr.mxu0 0.0
      %1429 = vmatpush1.msra.mxu0 %v1387
      %1430 = vmatprep.subr.mxu0 0.0
      %1431 = vmatpush2.msra.mxu0 0.0
      %1432 = vmatprep.subr.mxu0 0.0
      %1433 = vmatpush2.msra.mxu0 0.0
      %1434 = vmatprep.subr.mxu0 0.0
      %1435 = vmatpush2.msra.mxu0 0.0
      %1436 = vmatprep.subr.mxu0 0.0
      %1437 = vmatpush2.msra.mxu0 0.0
      %1438 = vmatprep.subr.mxu0 0.0
      %1439 = vmatpush2.msra.mxu0 0.0
      %1440 = vmatprep.subr.mxu0 0.0
      %1441 = vmatpush2.msra.mxu0 0.0
      %1442 = vmatprep.subr.mxu0 0.0
      %1443 = vmatpush2.msra.mxu0 0.0
      %1444 = vmatprep.subr.mxu0 0.0
      %1445 = vmatpush2.msra.mxu0 0.0
      %1446 = vmatprep.subr.mxu0 0.0
      %1447 = vmatpush2.msra.mxu0 0.0
      %1448 = vmatprep.subr.mxu0 0.0
      %1449 = vmatpush2.msra.mxu0 0.0
      %1450 = vmatprep.subr.mxu0 0.0
      %1451 = vmatpush2.msra.mxu0 0.0
      %1452 = vmatprep.subr.mxu0 0.0
      %1453 = vmatpush2.msra.mxu0 0.0
      %1454 = vmatprep.subr.mxu0 0.0
      %1455 = vmatpush2.msra.mxu0 0.0
      %1456 = vmatprep.subr.mxu0 0.0
      %1457 = vmatpush2.msra.mxu0 0.0
      %1458 = vmatprep.subr.mxu0 0.0
      %1459 = vmatpush2.msra.mxu0 0.0
      %1460 = vmatprep.subr.mxu0 0.0
      %1461 = vmatpush2.msra.mxu0 0.0
      %1462 = vmatprep.mubr.f32.mxu0 0.0
      %1463 = vmatmul.mubr.f32.gmra.mxu0 %v1393
      %v1464 = vpop.f32.mrf.mxu0
      %v1465 = vadd.f32 0.0, %v1464
      %v1466 = vpop.f32.mrf.mxu0
      %1467 = vmatprep.mubr.f32.mxu0 0.0
      %1468 = vmatmul.mubr.f32.gmra.mxu0 %v1396
      %v1469 = vpop.f32.mrf.mxu0
      %v1470 = vadd.f32 0.0, %v1469
      %v1471 = vpop.f32.mrf.mxu0
      %1472 = vdwg.mxu0
      %1473 = vrot.lane.b32.xlu0 %v687, 104
      %v1474 = vpop.permute.xlu0 %1473
      %1475 = vrot.lane.b32.xlu0 %v692, 104
      %v1476 = vpop.permute.xlu0 %1475
      %1477 = vrot.lane.b32.xlu0 %v782, 104
      %v1478 = vpop.permute.xlu0 %1477
      %1479 = vrot.lane.b32.xlu0 %v787, 104
      %v1480 = vpop.permute.xlu0 %1479
      %v1481 = vsel %vm515, %v1474, 0
      %v1483 = vsel %vm515, %v1476, 0
      %v1485 = vsel %vm515, %v1478, 0
      %v1487 = vsel %vm515, %v1480, 0
      %1489 = vmatprep.subr.mxu0 0.0
      %1490 = vmatpush1.xpose.msra.mxu0 0.0
      %1491 = vmatprep.subr.mxu0 0.0
      %1492 = vmatpush1.xpose.msra.mxu0 0.0
      %1493 = vmatprep.subr.mxu0 0.0
      %1494 = vmatpush1.xpose.msra.mxu0 0.0
      %1495 = vmatprep.subr.mxu0 0.0
      %1496 = vmatpush1.xpose.msra.mxu0 0.0
      %1497 = vmatprep.subr.mxu0 0.0
      %1498 = vmatpush1.xpose.msra.mxu0 0.0
      %1499 = vmatprep.subr.mxu0 0.0
      %1500 = vmatpush1.xpose.msra.mxu0 0.0
      %1501 = vmatprep.subr.mxu0 0.0
      %1502 = vmatpush1.xpose.msra.mxu0 0.0
      %1503 = vmatprep.subr.mxu0 0.0
      %1504 = vmatpush1.xpose.msra.mxu0 0.0
      %1505 = vmatprep.subr.mxu0 0.0
      %1506 = vmatpush1.xpose.msra.mxu0 0.0
      %1507 = vmatprep.subr.mxu0 0.0
      %1508 = vmatpush1.xpose.msra.mxu0 0.0
      %1509 = vmatprep.subr.mxu0 0.0
      %1510 = vmatpush1.xpose.msra.mxu0 0.0
      %1511 = vmatprep.subr.mxu0 0.0
      %1512 = vmatpush1.xpose.msra.mxu0 0.0
      %1513 = vmatprep.subr.mxu0 0.0
      %1514 = vmatpush1.xpose.msra.mxu0 0.0
      %1515 = vmatprep.subr.mxu0 0.0
      %1516 = vmatpush1.xpose.msra.mxu0 0.0
      %1517 = vmatprep.subr.mxu0 0.0
      %1518 = vmatpush1.xpose.msra.mxu0 %v1487
      %1519 = vmatprep.subr.mxu0 0.0
      %1520 = vmatpush1.xpose.msra.mxu0 %v1485
      %1521 = vmatprep.subr.mxu0 0.0
      %1522 = vmatpush2.xpose.msra.mxu0 0.0
      %1523 = vmatprep.subr.mxu0 0.0
      %1524 = vmatpush2.xpose.msra.mxu0 0.0
      %1525 = vmatprep.subr.mxu0 0.0
      %1526 = vmatpush2.xpose.msra.mxu0 0.0
      %1527 = vmatprep.subr.mxu0 0.0
      %1528 = vmatpush2.xpose.msra.mxu0 0.0
      %1529 = vmatprep.subr.mxu0 0.0
      %1530 = vmatpush2.xpose.msra.mxu0 0.0
      %1531 = vmatprep.subr.mxu0 0.0
      %1532 = vmatpush2.xpose.msra.mxu0 0.0
      %1533 = vmatprep.subr.mxu0 0.0
      %1534 = vmatpush2.xpose.msra.mxu0 0.0
      %1535 = vmatprep.subr.mxu0 0.0
      %1536 = vmatpush2.xpose.msra.mxu0 0.0
      %1537 = vmatprep.subr.mxu0 0.0
      %1538 = vmatpush2.xpose.msra.mxu0 0.0
      %1539 = vmatprep.subr.mxu0 0.0
      %1540 = vmatpush2.xpose.msra.mxu0 0.0
      %1541 = vmatprep.subr.mxu0 0.0
      %1542 = vmatpush2.xpose.msra.mxu0 0.0
      %1543 = vmatprep.subr.mxu0 0.0
      %1544 = vmatpush2.xpose.msra.mxu0 0.0
      %1545 = vmatprep.subr.mxu0 0.0
      %1546 = vmatpush2.xpose.msra.mxu0 0.0
      %1547 = vmatprep.subr.mxu0 0.0
      %1548 = vmatpush2.xpose.msra.mxu0 0.0
      %1549 = vmatprep.subr.mxu0 0.0
      %1550 = vmatpush2.xpose.msra.mxu0 0.0
      %1551 = vmatprep.subr.mxu0 0.0
      %1552 = vmatpush2.xpose.msra.mxu0 0.0
      %1553 = vmatprep.mubr.f32.mxu0 0.0
      %1554 = vmatmul.mubr.f32.gmra.mxu0 %v1481
      %v1555 = vpop.f32.mrf.mxu0
      %v1556 = vadd.f32 0.0, %v1555
      %v1557 = vpop.f32.mrf.mxu0
      %1558 = vmatprep.mubr.f32.mxu0 0.0
      %1559 = vmatmul.mubr.f32.gmra.mxu0 %v1483
      %v1560 = vpop.f32.mrf.mxu0
      %v1561 = vadd.f32 0.0, %v1560
      %v1562 = vpop.f32.mrf.mxu0
      %1563 = vdwg.mxu0
      %v1564 = vsel %vm521, %v1556, -inf
      %1565 = vmax.xlane.f32.xlu0 %v1564
      %v1566 = vpop.xlane.xlu0 %1565
      %v1567 = vsel %vm521, %v1561, -inf
      %1568 = vmax.xlane.f32.xlu0 %v1567
      %v1569 = vpop.xlane.xlu0 %1568
      %v1570 = vsub.f32 %v1556, %v1566
      %v1571 = vsub.f32 %v1561, %v1569
      %v1572 = vmul.f32 %v1570, 1.442695
      %v1573 = vpow.pop %v1572
      %v1574 = vmul.f32 %v1571, 1.442695
      %v1575 = vpow.pop %v1574
      %v1576 = vsel %vm521, %v1573, 0.0
      %1577 = vadd.xlane.f32.xlu0 %v1576
      %v1578 = vpop.xlane.xlu0 %1577
      %v1579 = vsel %vm521, %v1575, 0.0
      %1580 = vadd.xlane.f32.xlu0 %v1579
      %v1581 = vpop.xlane.xlu0 %1580
      %v1582 = vrcp.pop %v1578
      %v1583 = vmul.f32 %v1573, %v1582
      %v1584 = vrcp.pop %v1581
      %v1585 = vmul.f32 %v1575, %v1584
      %1586 = vrot.lane.b32.xlu0 %v873, 104
      %v1587 = vpop.permute.xlu0 %1586
      %1588 = vrot.lane.b32.xlu0 %v878, 104
      %v1589 = vpop.permute.xlu0 %1588
      %v1593 = vsel %vm521, %v1583, 0
      %v1596 = vsel %vm521, %v1585, 0
      %1598 = vmatprep.subr.mxu0 0.0
      %1599 = vmatpush1.msra.mxu0 0.0
      %1600 = vmatprep.subr.mxu0 0.0
      %1601 = vmatpush1.msra.mxu0 0.0
      %1602 = vmatprep.subr.mxu0 0.0
      %1603 = vmatpush1.msra.mxu0 0.0
      %1604 = vmatprep.subr.mxu0 0.0
      %1605 = vmatpush1.msra.mxu0 0.0
      %1606 = vmatprep.subr.mxu0 0.0
      %1607 = vmatpush1.msra.mxu0 0.0
      %1608 = vmatprep.subr.mxu0 0.0
      %1609 = vmatpush1.msra.mxu0 0.0
      %1610 = vmatprep.subr.mxu0 0.0
      %1611 = vmatpush1.msra.mxu0 0.0
      %1612 = vmatprep.subr.mxu0 0.0
      %1613 = vmatpush1.msra.mxu0 0.0
      %1614 = vmatprep.subr.mxu0 0.0
      %1615 = vmatpush1.msra.mxu0 0.0
      %1616 = vmatprep.subr.mxu0 0.0
      %1617 = vmatpush1.msra.mxu0 0.0
      %1618 = vmatprep.subr.mxu0 0.0
      %1619 = vmatpush1.msra.mxu0 0.0
      %1620 = vmatprep.subr.mxu0 0.0
      %1621 = vmatpush1.msra.mxu0 0.0
      %1622 = vmatprep.subr.mxu0 0.0
      %1623 = vmatpush1.msra.mxu0 0.0
      %1624 = vmatprep.subr.mxu0 0.0
      %1625 = vmatpush1.msra.mxu0 0.0
      %1626 = vmatprep.subr.mxu0 0.0
      %1627 = vmatpush1.msra.mxu0 %v1589
      %1628 = vmatprep.subr.mxu0 0.0
      %1629 = vmatpush1.msra.mxu0 %v1587
      %1630 = vmatprep.subr.mxu0 0.0
      %1631 = vmatpush2.msra.mxu0 0.0
      %1632 = vmatprep.subr.mxu0 0.0
      %1633 = vmatpush2.msra.mxu0 0.0
      %1634 = vmatprep.subr.mxu0 0.0
      %1635 = vmatpush2.msra.mxu0 0.0
      %1636 = vmatprep.subr.mxu0 0.0
      %1637 = vmatpush2.msra.mxu0 0.0
      %1638 = vmatprep.subr.mxu0 0.0
      %1639 = vmatpush2.msra.mxu0 0.0
      %1640 = vmatprep.subr.mxu0 0.0
      %1641 = vmatpush2.msra.mxu0 0.0
      %1642 = vmatprep.subr.mxu0 0.0
      %1643 = vmatpush2.msra.mxu0 0.0
      %1644 = vmatprep.subr.mxu0 0.0
      %1645 = vmatpush2.msra.mxu0 0.0
      %1646 = vmatprep.subr.mxu0 0.0
      %1647 = vmatpush2.msra.mxu0 0.0
      %1648 = vmatprep.subr.mxu0 0.0
      %1649 = vmatpush2.msra.mxu0 0.0
      %1650 = vmatprep.subr.mxu0 0.0
      %1651 = vmatpush2.msra.mxu0 0.0
      %1652 = vmatprep.subr.mxu0 0.0
      %1653 = vmatpush2.msra.mxu0 0.0
      %1654 = vmatprep.subr.mxu0 0.0
      %1655 = vmatpush2.msra.mxu0 0.0
      %1656 = vmatprep.subr.mxu0 0.0
      %1657 = vmatpush2.msra.mxu0 0.0
      %1658 = vmatprep.subr.mxu0 0.0
      %1659 = vmatpush2.msra.mxu0 0.0
      %1660 = vmatprep.subr.mxu0 0.0
      %1661 = vmatpush2.msra.mxu0 0.0
      %1662 = vmatprep.mubr.f32.mxu0 0.0
      %1663 = vmatmul.mubr.f32.gmra.mxu0 %v1593
      %v1664 = vpop.f32.mrf.mxu0
      %v1665 = vadd.f32 0.0, %v1664
      %v1666 = vpop.f32.mrf.mxu0
      %1667 = vmatprep.mubr.f32.mxu0 0.0
      %1668 = vmatmul.mubr.f32.gmra.mxu0 %v1596
      %v1669 = vpop.f32.mrf.mxu0
      %v1670 = vadd.f32 0.0, %v1669
      %v1671 = vpop.f32.mrf.mxu0
      %1672 = vdwg.mxu0
      %1675 = vrot.lane.b32.xlu0 %v1265, 8
      %v1676 = vpop.permute.xlu0 %1675
      %1677 = vrot.lane.b32.xlu0 %v1270, 8
      %v1678 = vpop.permute.xlu0 %1677
      %1683 = vrot.lane.b32.xlu0 %v1465, 16
      %v1684 = vpop.permute.xlu0 %1683
      %1685 = vrot.lane.b32.xlu0 %v1470, 16
      %v1686 = vpop.permute.xlu0 %1685
      %1691 = vrot.lane.b32.xlu0 %v1665, 24
      %v1692 = vpop.permute.xlu0 %1691
      %1693 = vrot.lane.b32.xlu0 %v1670, 24
      %v1694 = vpop.permute.xlu0 %1693
      %v1697 = vsel %vm515, %v1063, %v1676
      %v1698 = vsel %vm515, %v1068, %v1678
      %v1699 = vsel %vm521, %v1697, %v1684
      %v1700 = vsel %vm521, %v1698, %v1686
      %vm1701 = vcmask 195584
      %v1702 = vsel %vm1701, %v1699, %v1692
      %v1703 = vsel %vm1701, %v1700, %v1694
      %v1704 = vlaneseq
      %v1705 = vshrl.u32 %v1704, 7
      %v1706 = vsub.s32 3, %v1705
      %v1707 = vrot.slane %v603, %v1706
      %1708 = vrot.lane.b32.xlu0 %v605, 32
      %v1709 = vpop.permute.xlu0 %1708
      %1710 = vrot.lane.b32.xlu0 %v606, 32
      %v1711 = vpop.permute.xlu0 %1710
      %1712 = vrot.lane.b32.xlu0 %v607, 32
      %v1713 = vpop.permute.xlu0 %1712
      %1714 = vrot.lane.b32.xlu0 %v608, 32
      %v1715 = vpop.permute.xlu0 %1714
      %v1721 = vsel %vm613, %v1702, 0
      %v1724 = vsel %vm613, %v1703, 0
      %1726 = vmatprep.subr.mxu0 0.0
      %1727 = vmatpush1.msra.mxu0 0.0
      %1728 = vmatprep.subr.mxu0 0.0
      %1729 = vmatpush1.msra.mxu0 0.0
      %1730 = vmatprep.subr.mxu0 0.0
      %1731 = vmatpush1.msra.mxu0 0.0
      %1732 = vmatprep.subr.mxu0 0.0
      %1733 = vmatpush1.msra.mxu0 0.0
      %1734 = vmatprep.subr.mxu0 0.0
      %1735 = vmatpush1.msra.mxu0 0.0
      %1736 = vmatprep.subr.mxu0 0.0
      %1737 = vmatpush1.msra.mxu0 0.0
      %1738 = vmatprep.subr.mxu0 0.0
      %1739 = vmatpush1.msra.mxu0 0.0
      %1740 = vmatprep.subr.mxu0 0.0
      %1741 = vmatpush1.msra.mxu0 0.0
      %1742 = vmatprep.subr.mxu0 0.0
      %1743 = vmatpush1.msra.mxu0 0.0
      %1744 = vmatprep.subr.mxu0 0.0
      %1745 = vmatpush1.msra.mxu0 0.0
      %1746 = vmatprep.subr.mxu0 0.0
      %1747 = vmatpush1.msra.mxu0 0.0
      %1748 = vmatprep.subr.mxu0 0.0
      %1749 = vmatpush1.msra.mxu0 0.0
      %1750 = vmatprep.subr.mxu0 0.0
      %1751 = vmatpush1.msra.mxu0 %v1715
      %1752 = vmatprep.subr.mxu0 0.0
      %1753 = vmatpush1.msra.mxu0 %v1713
      %1754 = vmatprep.subr.mxu0 0.0
      %1755 = vmatpush1.msra.mxu0 %v1711
      %1756 = vmatprep.subr.mxu0 0.0
      %1757 = vmatpush1.msra.mxu0 %v1709
      %1758 = vmatprep.subr.mxu0 0.0
      %1759 = vmatpush2.msra.mxu0 0.0
      %1760 = vmatprep.subr.mxu0 0.0
      %1761 = vmatpush2.msra.mxu0 0.0
      %1762 = vmatprep.subr.mxu0 0.0
      %1763 = vmatpush2.msra.mxu0 0.0
      %1764 = vmatprep.subr.mxu0 0.0
      %1765 = vmatpush2.msra.mxu0 0.0
      %1766 = vmatprep.subr.mxu0 0.0
      %1767 = vmatpush2.msra.mxu0 0.0
      %1768 = vmatprep.subr.mxu0 0.0
      %1769 = vmatpush2.msra.mxu0 0.0
      %1770 = vmatprep.subr.mxu0 0.0
      %1771 = vmatpush2.msra.mxu0 0.0
      %1772 = vmatprep.subr.mxu0 0.0
      %1773 = vmatpush2.msra.mxu0 0.0
      %1774 = vmatprep.subr.mxu0 0.0
      %1775 = vmatpush2.msra.mxu0 0.0
      %1776 = vmatprep.subr.mxu0 0.0
      %1777 = vmatpush2.msra.mxu0 0.0
      %1778 = vmatprep.subr.mxu0 0.0
      %1779 = vmatpush2.msra.mxu0 0.0
      %1780 = vmatprep.subr.mxu0 0.0
      %1781 = vmatpush2.msra.mxu0 0.0
      %1782 = vmatprep.subr.mxu0 0.0
      %1783 = vmatpush2.msra.mxu0 0.0
      %1784 = vmatprep.subr.mxu0 0.0
      %1785 = vmatpush2.msra.mxu0 0.0
      %1786 = vmatprep.subr.mxu0 0.0
      %1787 = vmatpush2.msra.mxu0 0.0
      %1788 = vmatprep.subr.mxu0 0.0
      %1789 = vmatpush2.msra.mxu0 0.0
      %1790 = vmatprep.mubr.f32.mxu0 0.0
      %1791 = vmatmul.mubr.f32.gmra.mxu0 %v1721
      %v1792 = vpop.f32.mrf.mxu0
      %v1793 = vadd.f32 %v1707, %v1792
      %v1794 = vpop.f32.mrf.mxu0
      %1795 = vmatprep.mubr.f32.mxu0 0.0
      %1796 = vmatmul.mubr.f32.gmra.mxu0 %v1724
      %v1797 = vpop.f32.mrf.mxu0
      %v1798 = vadd.f32 %v1707, %v1797
      %v1799 = vpop.f32.mrf.mxu0
      %1800 = vdwg.mxu0
      %v1801 = vadd.f32 %v595, %v1793
      %v1802 = vadd.f32 %v600, %v1798
      %v1803 = vsel %vm613, %v1801, 0.0
      %1804 = vadd.xlane.f32.xlu0 %v1803
      %v1805 = vpop.xlane.xlu0 %1804
      %v1806 = vsel %vm613, %v1802, 0.0
      %1807 = vadd.xlane.f32.xlu0 %v1806
      %v1808 = vpop.xlane.xlu0 %1807
      %v1809 = vrcp.pop 32.0
      %v1810 = vmul.f32 %v1805, %v1809
      %v1811 = vmul.f32 %v1808, %v1809
      %v1812 = vsub.f32 %v1801, %v1810
      %v1813 = vsub.f32 %v1802, %v1811
      %v1814 = vmul.f32 %v1812, %v1812
      %v1815 = vmul.f32 %v1813, %v1813
      %v1816 = vsel %vm613, %v1814, 0.0
      %1817 = vadd.xlane.f32.xlu0 %v1816
      %v1818 = vpop.xlane.xlu0 %1817
      %v1819 = vsel %vm613, %v1815, 0.0
      %1820 = vadd.xlane.f32.xlu0 %v1819
      %v1821 = vpop.xlane.xlu0 %1820
      %v1822 = vmul.f32 %v1818, %v1809
      %v1823 = vmul.f32 %v1821, %v1809
      %v1824 = vadd.f32 %v1822, 1e-05
      %v1825 = vadd.f32 %v1823, 1e-05
      %v1826 = vrsqrt.pop %v1824
      %v1827 = vrsqrt.pop %v1825
      %v1828 = vmul.f32 %v1812, %v1826
      %v1829 = vmul.f32 %v1813, %v1827
      %v1830 = vlaneseq
      %v1831 = vshrl.u32 %v1830, 7
      %v1832 = vsub.s32 5, %v1831
      %v1833 = vrot.slane %v603, %v1832
      %v1834 = vmul.f32 %v1828, %v1833
      %v1835 = vmul.f32 %v1829, %v1833
      %v1836 = vlaneseq
      %v1837 = vshrl.u32 %v1836, 7
      %v1838 = vsub.s32 6, %v1837
      %v1839 = vrot.slane %v603, %v1838
      %v1840 = vadd.f32 %v1834, %v1839
      %v1841 = vadd.f32 %v1835, %v1839
      %v1842 = vld [vmem:[%s5] sm:$0xff]
      %v1843 = vld [vmem:[%s5 + $0x8] sm:$0xff]
      %v1844 = vld [vmem:[%s5 + $0x10] sm:$0xff]
      %v1845 = vld [vmem:[%s5 + $0x18] sm:$0xff]
      %v1846 = vld [vmem:[%s6] sm:$0x1]
      %v1847 = vld [vmem:[%s7] sm:$0xff]
      %v1848 = vld [vmem:[%s7 + $0x8] sm:$0xff]
      %v1849 = vld [vmem:[%s7 + $0x10] sm:$0xff]
      %v1850 = vld [vmem:[%s7 + $0x18] sm:$0xff]
      %v1851 = vld [vmem:[%s7 + $0x20] sm:$0xff]
      %v1852 = vld [vmem:[%s7 + $0x28] sm:$0xff]
      %v1853 = vld [vmem:[%s7 + $0x30] sm:$0xff]
      %v1854 = vld [vmem:[%s7 + $0x38] sm:$0xff]
      %v1856 = vlaneseq
      %v1857 = vshrl.u32 %v1856, 7
      %v1858 = vsub.s32 0, %v1857
      %v1859 = vrot.slane %v1846, %v1858
      %v1862 = vsel %vm613, %v1840, 0
      %v1865 = vsel %vm613, %v1841, 0
      %1867 = vmatprep.subr.mxu0 0.0
      %1868 = vmatpush1.msra.mxu0 0.0
      %1869 = vmatprep.subr.mxu0 0.0
      %1870 = vmatpush1.msra.mxu0 0.0
      %1871 = vmatprep.subr.mxu0 0.0
      %1872 = vmatpush1.msra.mxu0 0.0
      %1873 = vmatprep.subr.mxu0 0.0
      %1874 = vmatpush1.msra.mxu0 0.0
      %1875 = vmatprep.subr.mxu0 0.0
      %1876 = vmatpush1.msra.mxu0 0.0
      %1877 = vmatprep.subr.mxu0 0.0
      %1878 = vmatpush1.msra.mxu0 0.0
      %1879 = vmatprep.subr.mxu0 0.0
      %1880 = vmatpush1.msra.mxu0 0.0
      %1881 = vmatprep.subr.mxu0 0.0
      %1882 = vmatpush1.msra.mxu0 0.0
      %1883 = vmatprep.subr.mxu0 0.0
      %1884 = vmatpush1.msra.mxu0 0.0
      %1885 = vmatprep.subr.mxu0 0.0
      %1886 = vmatpush1.msra.mxu0 0.0
      %1887 = vmatprep.subr.mxu0 0.0
      %1888 = vmatpush1.msra.mxu0 0.0
      %1889 = vmatprep.subr.mxu0 0.0
      %1890 = vmatpush1.msra.mxu0 0.0
      %1891 = vmatprep.subr.mxu0 0.0
      %1892 = vmatpush1.msra.mxu0 %v1845
      %1893 = vmatprep.subr.mxu0 0.0
      %1894 = vmatpush1.msra.mxu0 %v1844
      %1895 = vmatprep.subr.mxu0 0.0
      %1896 = vmatpush1.msra.mxu0 %v1843
      %1897 = vmatprep.subr.mxu0 0.0
      %1898 = vmatpush1.msra.mxu0 %v1842
      %1899 = vmatprep.subr.mxu0 0.0
      %1900 = vmatpush2.msra.mxu0 0.0
      %1901 = vmatprep.subr.mxu0 0.0
      %1902 = vmatpush2.msra.mxu0 0.0
      %1903 = vmatprep.subr.mxu0 0.0
      %1904 = vmatpush2.msra.mxu0 0.0
      %1905 = vmatprep.subr.mxu0 0.0
      %1906 = vmatpush2.msra.mxu0 0.0
      %1907 = vmatprep.subr.mxu0 0.0
      %1908 = vmatpush2.msra.mxu0 0.0
      %1909 = vmatprep.subr.mxu0 0.0
      %1910 = vmatpush2.msra.mxu0 0.0
      %1911 = vmatprep.subr.mxu0 0.0
      %1912 = vmatpush2.msra.mxu0 0.0
      %1913 = vmatprep.subr.mxu0 0.0
      %1914 = vmatpush2.msra.mxu0 0.0
      %1915 = vmatprep.subr.mxu0 0.0
      %1916 = vmatpush2.msra.mxu0 0.0
      %1917 = vmatprep.subr.mxu0 0.0
      %1918 = vmatpush2.msra.mxu0 0.0
      %1919 = vmatprep.subr.mxu0 0.0
      %1920 = vmatpush2.msra.mxu0 0.0
      %1921 = vmatprep.subr.mxu0 0.0
      %1922 = vmatpush2.msra.mxu0 0.0
      %1923 = vmatprep.subr.mxu0 0.0
      %1924 = vmatpush2.msra.mxu0 0.0
      %1925 = vmatprep.subr.mxu0 0.0
      %1926 = vmatpush2.msra.mxu0 0.0
      %1927 = vmatprep.subr.mxu0 0.0
      %1928 = vmatpush2.msra.mxu0 0.0
      %1929 = vmatprep.subr.mxu0 0.0
      %1930 = vmatpush2.msra.mxu0 0.0
      %1931 = vmatprep.mubr.f32.mxu0 0.0
      %1932 = vmatmul.mubr.f32.gmra.mxu0 %v1862
      %v1933 = vpop.f32.mrf.mxu0
      %v1934 = vadd.f32 %v1859, %v1933
      %v1935 = vpop.f32.mrf.mxu0
      %1936 = vmatprep.mubr.f32.mxu0 0.0
      %1937 = vmatmul.mubr.f32.gmra.mxu0 %v1865
      %v1938 = vpop.f32.mrf.mxu0
      %v1939 = vadd.f32 %v1859, %v1938
      %v1940 = vpop.f32.mrf.mxu0
      %1941 = vdwg.mxu0
      %v1942 = vmax.f32 %v1934, 0.0
      %v1943 = vmax.f32 %v1939, 0.0
      %v1944 = vlaneseq
      %v1945 = vshrl.u32 %v1944, 7
      %v1946 = vsub.s32 4, %v1945
      %v1947 = vrot.slane %v603, %v1946
      %vm1948 = vcmask 523264
      %v1950 = vsel %vm1948, %v1942, 0
      %v1953 = vsel %vm1948, %v1943, 0
      %1955 = vmatprep.subr.mxu0 0.0
      %1956 = vmatpush1.msra.mxu0 0.0
      %1957 = vmatprep.subr.mxu0 0.0
      %1958 = vmatpush1.msra.mxu0 0.0
      %1959 = vmatprep.subr.mxu0 0.0
      %1960 = vmatpush1.msra.mxu0 0.0
      %1961 = vmatprep.subr.mxu0 0.0
      %1962 = vmatpush1.msra.mxu0 0.0
      %1963 = vmatprep.subr.mxu0 0.0
      %1964 = vmatpush1.msra.mxu0 0.0
      %1965 = vmatprep.subr.mxu0 0.0
      %1966 = vmatpush1.msra.mxu0 0.0
      %1967 = vmatprep.subr.mxu0 0.0
      %1968 = vmatpush1.msra.mxu0 0.0
      %1969 = vmatprep.subr.mxu0 0.0
      %1970 = vmatpush1.msra.mxu0 0.0
      %1971 = vmatprep.subr.mxu0 0.0
      %1972 = vmatpush1.msra.mxu0 %v1854
      %1973 = vmatprep.subr.mxu0 0.0
      %1974 = vmatpush1.msra.mxu0 %v1853
      %1975 = vmatprep.subr.mxu0 0.0
      %1976 = vmatpush1.msra.mxu0 %v1852
      %1977 = vmatprep.subr.mxu0 0.0
      %1978 = vmatpush1.msra.mxu0 %v1851
      %1979 = vmatprep.subr.mxu0 0.0
      %1980 = vmatpush1.msra.mxu0 %v1850
      %1981 = vmatprep.subr.mxu0 0.0
      %1982 = vmatpush1.msra.mxu0 %v1849
      %1983 = vmatprep.subr.mxu0 0.0
      %1984 = vmatpush1.msra.mxu0 %v1848
      %1985 = vmatprep.subr.mxu0 0.0
      %1986 = vmatpush1.msra.mxu0 %v1847
      %1987 = vmatprep.subr.mxu0 0.0
      %1988 = vmatpush2.msra.mxu0 0.0
      %1989 = vmatprep.subr.mxu0 0.0
      %1990 = vmatpush2.msra.mxu0 0.0
      %1991 = vmatprep.subr.mxu0 0.0
      %1992 = vmatpush2.msra.mxu0 0.0
      %1993 = vmatprep.subr.mxu0 0.0
      %1994 = vmatpush2.msra.mxu0 0.0
      %1995 = vmatprep.subr.mxu0 0.0
      %1996 = vmatpush2.msra.mxu0 0.0
      %1997 = vmatprep.subr.mxu0 0.0
      %1998 = vmatpush2.msra.mxu0 0.0
      %1999 = vmatprep.subr.mxu0 0.0
      %2000 = vmatpush2.msra.mxu0 0.0
      %2001 = vmatprep.subr.mxu0 0.0
      %2002 = vmatpush2.msra.mxu0 0.0
      %2003 = vmatprep.subr.mxu0 0.0
      %2004 = vmatpush2.msra.mxu0 0.0
      %2005 = vmatprep.subr.mxu0 0.0
      %2006 = vmatpush2.msra.mxu0 0.0
      %2007 = vmatprep.subr.mxu0 0.0
      %2008 = vmatpush2.msra.mxu0 0.0
      %2009 = vmatprep.subr.mxu0 0.0
      %2010 = vmatpush2.msra.mxu0 0.0
      %2011 = vmatprep.subr.mxu0 0.0
      %2012 = vmatpush2.msra.mxu0 0.0
      %2013 = vmatprep.subr.mxu0 0.0
      %2014 = vmatpush2.msra.mxu0 0.0
      %2015 = vmatprep.subr.mxu0 0.0
      %2016 = vmatpush2.msra.mxu0 0.0
      %2017 = vmatprep.subr.mxu0 0.0
      %2018 = vmatpush2.msra.mxu0 0.0
      %2019 = vmatprep.mubr.f32.mxu0 0.0
      %2020 = vmatmul.mubr.f32.gmra.mxu0 %v1950
      %v2021 = vpop.f32.mrf.mxu0
      %v2022 = vadd.f32 %v1947, %v2021
      %v2023 = vpop.f32.mrf.mxu0
      %2024 = vmatprep.mubr.f32.mxu0 0.0
      %2025 = vmatmul.mubr.f32.gmra.mxu0 %v1953
      %v2026 = vpop.f32.mrf.mxu0
      %v2027 = vadd.f32 %v1947, %v2026
      %v2028 = vpop.f32.mrf.mxu0
      %2029 = vdwg.mxu0
      %v2030 = vadd.f32 %v1840, %v2022
      %v2031 = vadd.f32 %v1841, %v2027
      %v2032 = vsel %vm613, %v2030, 0.0
      %2033 = vadd.xlane.f32.xlu0 %v2032
      %v2034 = vpop.xlane.xlu0 %2033
      %v2035 = vsel %vm613, %v2031, 0.0
      %2036 = vadd.xlane.f32.xlu0 %v2035
      %v2037 = vpop.xlane.xlu0 %2036
      %v2038 = vmul.f32 %v2034, %v1809
      %v2039 = vmul.f32 %v2037, %v1809
      %v2040 = vsub.f32 %v2030, %v2038
      %v2041 = vsub.f32 %v2031, %v2039
      %v2042 = vmul.f32 %v2040, %v2040
      %v2043 = vmul.f32 %v2041, %v2041
      %v2044 = vsel %vm613, %v2042, 0.0
      %2045 = vadd.xlane.f32.xlu0 %v2044
      %v2046 = vpop.xlane.xlu0 %2045
      %v2047 = vsel %vm613, %v2043, 0.0
      %2048 = vadd.xlane.f32.xlu0 %v2047
      %v2049 = vpop.xlane.xlu0 %2048
      %v2050 = vmul.f32 %v2046, %v1809
      %v2051 = vmul.f32 %v2049, %v1809
      %v2052 = vadd.f32 %v2050, 1e-05
      %v2053 = vadd.f32 %v2051, 1e-05
      %v2054 = vrsqrt.pop %v2052
      %v2055 = vrsqrt.pop %v2053
      %v2056 = vmul.f32 %v2040, %v2054
      %v2057 = vmul.f32 %v2041, %v2055
      %v2058 = vlaneseq
      %v2059 = vshrl.u32 %v2058, 7
      %v2060 = vsub.s32 7, %v2059
      %v2061 = vrot.slane %v603, %v2060
      %v2062 = vmul.f32 %v2056, %v2061
      %v2063 = vmul.f32 %v2057, %v2061
      %v2064 = vlaneseq
      %v2065 = vshrl.u32 %v2064, 7
      %v2066 = vsub.s32 0, %v2065
      %v2067 = vrot.slane %v604, %v2066
      %v2068 = vadd.f32 %v2062, %v2067
      %v2069 = vadd.f32 %v2063, %v2067
      %s2070 = scalar_lea.vmem %s8, 16
      %v2071 = vld [vmem:[%s2070] sm:$0xff]
      %v2072 = vld [vmem:[%s2070 + $0x8] sm:$0x1]
      %s2073 = scalar_lea.vmem %s4, 32
      %v2074 = vld [vmem:[%s2073] sm:$0xff]
      %v2075 = vld [vmem:[%s2073 + $0x8] sm:$0xff]
      %v2076 = vld [vmem:[%s2073 + $0x10] sm:$0xff]
      %v2077 = vld [vmem:[%s2073 + $0x18] sm:$0xff]
      %v2078 = vlaneseq
      %v2079 = vshrl.u32 %v2078, 7
      %v2080 = vsub.s32 0, %v2079
      %v2081 = vrot.slane %v2071, %v2080
      %v2083 = vsel %vm613, %v2068, 0
      %v2086 = vsel %vm613, %v2069, 0
      %2088 = vmatprep.subr.mxu0 0.0
      %2089 = vmatpush1.msra.mxu0 0.0
      %2090 = vmatprep.subr.mxu0 0.0
      %2091 = vmatpush1.msra.mxu0 0.0
      %2092 = vmatprep.subr.mxu0 0.0
      %2093 = vmatpush1.msra.mxu0 0.0
      %2094 = vmatprep.subr.mxu0 0.0
      %2095 = vmatpush1.msra.mxu0 0.0
      %2096 = vmatprep.subr.mxu0 0.0
      %2097 = vmatpush1.msra.mxu0 0.0
      %2098 = vmatprep.subr.mxu0 0.0
      %2099 = vmatpush1.msra.mxu0 0.0
      %2100 = vmatprep.subr.mxu0 0.0
      %2101 = vmatpush1.msra.mxu0 0.0
      %2102 = vmatprep.subr.mxu0 0.0
      %2103 = vmatpush1.msra.mxu0 0.0
      %2104 = vmatprep.subr.mxu0 0.0
      %2105 = vmatpush1.msra.mxu0 0.0
      %2106 = vmatprep.subr.mxu0 0.0
      %2107 = vmatpush1.msra.mxu0 0.0
      %2108 = vmatprep.subr.mxu0 0.0
      %2109 = vmatpush1.msra.mxu0 0.0
      %2110 = vmatprep.subr.mxu0 0.0
      %2111 = vmatpush1.msra.mxu0 0.0
      %2112 = vmatprep.subr.mxu0 0.0
      %2113 = vmatpush1.msra.mxu0 %v2077
      %2114 = vmatprep.subr.mxu0 0.0
      %2115 = vmatpush1.msra.mxu0 %v2076
      %2116 = vmatprep.subr.mxu0 0.0
      %2117 = vmatpush1.msra.mxu0 %v2075
      %2118 = vmatprep.subr.mxu0 0.0
      %2119 = vmatpush1.msra.mxu0 %v2074
      %2120 = vmatprep.subr.mxu0 0.0
      %2121 = vmatpush2.msra.mxu0 0.0
      %2122 = vmatprep.subr.mxu0 0.0
      %2123 = vmatpush2.msra.mxu0 0.0
      %2124 = vmatprep.subr.mxu0 0.0
      %2125 = vmatpush2.msra.mxu0 0.0
      %2126 = vmatprep.subr.mxu0 0.0
      %2127 = vmatpush2.msra.mxu0 0.0
      %2128 = vmatprep.subr.mxu0 0.0
      %2129 = vmatpush2.msra.mxu0 0.0
      %2130 = vmatprep.subr.mxu0 0.0
      %2131 = vmatpush2.msra.mxu0 0.0
      %2132 = vmatprep.subr.mxu0 0.0
      %2133 = vmatpush2.msra.mxu0 0.0
      %2134 = vmatprep.subr.mxu0 0.0
      %2135 = vmatpush2.msra.mxu0 0.0
      %2136 = vmatprep.subr.mxu0 0.0
      %2137 = vmatpush2.msra.mxu0 0.0
      %2138 = vmatprep.subr.mxu0 0.0
      %2139 = vmatpush2.msra.mxu0 0.0
      %2140 = vmatprep.subr.mxu0 0.0
      %2141 = vmatpush2.msra.mxu0 0.0
      %2142 = vmatprep.subr.mxu0 0.0
      %2143 = vmatpush2.msra.mxu0 0.0
      %2144 = vmatprep.subr.mxu0 0.0
      %2145 = vmatpush2.msra.mxu0 0.0
      %2146 = vmatprep.subr.mxu0 0.0
      %2147 = vmatpush2.msra.mxu0 0.0
      %2148 = vmatprep.subr.mxu0 0.0
      %2149 = vmatpush2.msra.mxu0 0.0
      %2150 = vmatprep.subr.mxu0 0.0
      %2151 = vmatpush2.msra.mxu0 0.0
      %2152 = vmatprep.mubr.f32.mxu0 0.0
      %2153 = vmatmul.mubr.f32.gmra.mxu0 %v2083
      %v2154 = vpop.f32.mrf.mxu0
      %v2155 = vadd.f32 %v2081, %v2154
      %v2156 = vpop.f32.mrf.mxu0
      %2157 = vmatprep.mubr.f32.mxu0 0.0
      %2158 = vmatmul.mubr.f32.gmra.mxu0 %v2086
      %v2159 = vpop.f32.mrf.mxu0
      %v2160 = vadd.f32 %v2081, %v2159
      %v2161 = vpop.f32.mrf.mxu0
      %2162 = vdwg.mxu0
      %v2163 = vlaneseq
      %v2164 = vshrl.u32 %v2163, 7
      %v2165 = vsub.s32 1, %v2164
      %v2166 = vrot.slane %v2071, %v2165
      %2171 = vrot.lane.b32.xlu0 %v2074, 96
      %v2172 = vpop.permute.xlu0 %2171
      %2173 = vrot.lane.b32.xlu0 %v2075, 96
      %v2174 = vpop.permute.xlu0 %2173
      %2175 = vrot.lane.b32.xlu0 %v2076, 96
      %v2176 = vpop.permute.xlu0 %2175
      %2177 = vrot.lane.b32.xlu0 %v2077, 96
      %v2178 = vpop.permute.xlu0 %2177
      %2183 = vmatprep.subr.mxu0 0.0
      %2184 = vmatpush1.msra.mxu0 0.0
      %2185 = vmatprep.subr.mxu0 0.0
      %2186 = vmatpush1.msra.mxu0 0.0
      %2187 = vmatprep.subr.mxu0 0.0
      %2188 = vmatpush1.msra.mxu0 0.0
      %2189 = vmatprep.subr.mxu0 0.0
      %2190 = vmatpush1.msra.mxu0 0.0
      %2191 = vmatprep.subr.mxu0 0.0
      %2192 = vmatpush1.msra.mxu0 0.0
      %2193 = vmatprep.subr.mxu0 0.0
      %2194 = vmatpush1.msra.mxu0 0.0
      %2195 = vmatprep.subr.mxu0 0.0
      %2196 = vmatpush1.msra.mxu0 0.0
      %2197 = vmatprep.subr.mxu0 0.0
      %2198 = vmatpush1.msra.mxu0 0.0
      %2199 = vmatprep.subr.mxu0 0.0
      %2200 = vmatpush1.msra.mxu0 0.0
      %2201 = vmatprep.subr.mxu0 0.0
      %2202 = vmatpush1.msra.mxu0 0.0
      %2203 = vmatprep.subr.mxu0 0.0
      %2204 = vmatpush1.msra.mxu0 0.0
      %2205 = vmatprep.subr.mxu0 0.0
      %2206 = vmatpush1.msra.mxu0 0.0
      %2207 = vmatprep.subr.mxu0 0.0
      %2208 = vmatpush1.msra.mxu0 %v2178
      %2209 = vmatprep.subr.mxu0 0.0
      %2210 = vmatpush1.msra.mxu0 %v2176
      %2211 = vmatprep.subr.mxu0 0.0
      %2212 = vmatpush1.msra.mxu0 %v2174
      %2213 = vmatprep.subr.mxu0 0.0
      %2214 = vmatpush1.msra.mxu0 %v2172
      %2215 = vmatprep.subr.mxu0 0.0
      %2216 = vmatpush2.msra.mxu0 0.0
      %2217 = vmatprep.subr.mxu0 0.0
      %2218 = vmatpush2.msra.mxu0 0.0
      %2219 = vmatprep.subr.mxu0 0.0
      %2220 = vmatpush2.msra.mxu0 0.0
      %2221 = vmatprep.subr.mxu0 0.0
      %2222 = vmatpush2.msra.mxu0 0.0
      %2223 = vmatprep.subr.mxu0 0.0
      %2224 = vmatpush2.msra.mxu0 0.0
      %2225 = vmatprep.subr.mxu0 0.0
      %2226 = vmatpush2.msra.mxu0 0.0
      %2227 = vmatprep.subr.mxu0 0.0
      %2228 = vmatpush2.msra.mxu0 0.0
      %2229 = vmatprep.subr.mxu0 0.0
      %2230 = vmatpush2.msra.mxu0 0.0
      %2231 = vmatprep.subr.mxu0 0.0
      %2232 = vmatpush2.msra.mxu0 0.0
      %2233 = vmatprep.subr.mxu0 0.0
      %2234 = vmatpush2.msra.mxu0 0.0
      %2235 = vmatprep.subr.mxu0 0.0
      %2236 = vmatpush2.msra.mxu0 0.0
      %2237 = vmatprep.subr.mxu0 0.0
      %2238 = vmatpush2.msra.mxu0 0.0
      %2239 = vmatprep.subr.mxu0 0.0
      %2240 = vmatpush2.msra.mxu0 0.0
      %2241 = vmatprep.subr.mxu0 0.0
      %2242 = vmatpush2.msra.mxu0 0.0
      %2243 = vmatprep.subr.mxu0 0.0
      %2244 = vmatpush2.msra.mxu0 0.0
      %2245 = vmatprep.subr.mxu0 0.0
      %2246 = vmatpush2.msra.mxu0 0.0
      %2247 = vmatprep.mubr.f32.mxu0 0.0
      %2248 = vmatmul.mubr.f32.gmra.mxu0 %v2083
      %v2249 = vpop.f32.mrf.mxu0
      %v2250 = vadd.f32 %v2166, %v2249
      %v2251 = vpop.f32.mrf.mxu0
      %2252 = vmatprep.mubr.f32.mxu0 0.0
      %2253 = vmatmul.mubr.f32.gmra.mxu0 %v2086
      %v2254 = vpop.f32.mrf.mxu0
      %v2255 = vadd.f32 %v2166, %v2254
      %v2256 = vpop.f32.mrf.mxu0
      %2257 = vdwg.mxu0
      %v2258 = vlaneseq
      %v2259 = vshrl.u32 %v2258, 7
      %v2260 = vsub.s32 2, %v2259
      %v2261 = vrot.slane %v2071, %v2260
      %2262 = vrot.lane.b32.xlu0 %v2074, 64
      %v2263 = vpop.permute.xlu0 %2262
      %2264 = vrot.lane.b32.xlu0 %v2075, 64
      %v2265 = vpop.permute.xlu0 %2264
      %2266 = vrot.lane.b32.xlu0 %v2076, 64
      %v2267 = vpop.permute.xlu0 %2266
      %2268 = vrot.lane.b32.xlu0 %v2077, 64
      %v2269 = vpop.permute.xlu0 %2268
      %2274 = vmatprep.subr.mxu0 0.0
      %2275 = vmatpush1.msra.mxu0 0.0
      %2276 = vmatprep.subr.mxu0 0.0
      %2277 = vmatpush1.msra.mxu0 0.0
      %2278 = vmatprep.subr.mxu0 0.0
      %2279 = vmatpush1.msra.mxu0 0.0
      %2280 = vmatprep.subr.mxu0 0.0
      %2281 = vmatpush1.msra.mxu0 0.0
      %2282 = vmatprep.subr.mxu0 0.0
      %2283 = vmatpush1.msra.mxu0 0.0
      %2284 = vmatprep.subr.mxu0 0.0
      %2285 = vmatpush1.msra.mxu0 0.0
      %2286 = vmatprep.subr.mxu0 0.0
      %2287 = vmatpush1.msra.mxu0 0.0
      %2288 = vmatprep.subr.mxu0 0.0
      %2289 = vmatpush1.msra.mxu0 0.0
      %2290 = vmatprep.subr.mxu0 0.0
      %2291 = vmatpush1.msra.mxu0 0.0
      %2292 = vmatprep.subr.mxu0 0.0
      %2293 = vmatpush1.msra.mxu0 0.0
      %2294 = vmatprep.subr.mxu0 0.0
      %2295 = vmatpush1.msra.mxu0 0.0
      %2296 = vmatprep.subr.mxu0 0.0
      %2297 = vmatpush1.msra.mxu0 0.0
      %2298 = vmatprep.subr.mxu0 0.0
      %2299 = vmatpush1.msra.mxu0 %v2269
      %2300 = vmatprep.subr.mxu0 0.0
      %2301 = vmatpush1.msra.mxu0 %v2267
      %2302 = vmatprep.subr.mxu0 0.0
      %2303 = vmatpush1.msra.mxu0 %v2265
      %2304 = vmatprep.subr.mxu0 0.0
      %2305 = vmatpush1.msra.mxu0 %v2263
      %2306 = vmatprep.subr.mxu0 0.0
      %2307 = vmatpush2.msra.mxu0 0.0
      %2308 = vmatprep.subr.mxu0 0.0
      %2309 = vmatpush2.msra.mxu0 0.0
      %2310 = vmatprep.subr.mxu0 0.0
      %2311 = vmatpush2.msra.mxu0 0.0
      %2312 = vmatprep.subr.mxu0 0.0
      %2313 = vmatpush2.msra.mxu0 0.0
      %2314 = vmatprep.subr.mxu0 0.0
      %2315 = vmatpush2.msra.mxu0 0.0
      %2316 = vmatprep.subr.mxu0 0.0
      %2317 = vmatpush2.msra.mxu0 0.0
      %2318 = vmatprep.subr.mxu0 0.0
      %2319 = vmatpush2.msra.mxu0 0.0
      %2320 = vmatprep.subr.mxu0 0.0
      %2321 = vmatpush2.msra.mxu0 0.0
      %2322 = vmatprep.subr.mxu0 0.0
      %2323 = vmatpush2.msra.mxu0 0.0
      %2324 = vmatprep.subr.mxu0 0.0
      %2325 = vmatpush2.msra.mxu0 0.0
      %2326 = vmatprep.subr.mxu0 0.0
      %2327 = vmatpush2.msra.mxu0 0.0
      %2328 = vmatprep.subr.mxu0 0.0
      %2329 = vmatpush2.msra.mxu0 0.0
      %2330 = vmatprep.subr.mxu0 0.0
      %2331 = vmatpush2.msra.mxu0 0.0
      %2332 = vmatprep.subr.mxu0 0.0
      %2333 = vmatpush2.msra.mxu0 0.0
      %2334 = vmatprep.subr.mxu0 0.0
      %2335 = vmatpush2.msra.mxu0 0.0
      %2336 = vmatprep.subr.mxu0 0.0
      %2337 = vmatpush2.msra.mxu0 0.0
      %2338 = vmatprep.mubr.f32.mxu0 0.0
      %2339 = vmatmul.mubr.f32.gmra.mxu0 %v2083
      %v2340 = vpop.f32.mrf.mxu0
      %v2341 = vadd.f32 %v2261, %v2340
      %v2342 = vpop.f32.mrf.mxu0
      %2343 = vmatprep.mubr.f32.mxu0 0.0
      %2344 = vmatmul.mubr.f32.gmra.mxu0 %v2086
      %v2345 = vpop.f32.mrf.mxu0
      %v2346 = vadd.f32 %v2261, %v2345
      %v2347 = vpop.f32.mrf.mxu0
      %2348 = vdwg.mxu0
      %v2350 = vsel %vm515, %v2155, 0
      %v2353 = vsel %vm515, %v2160, 0
      %v2356 = vsel %vm515, %v2250, 0
      %v2359 = vsel %vm515, %v2255, 0
      %2361 = vmatprep.subr.mxu0 0.0
      %2362 = vmatpush1.xpose.msra.mxu0 0.0
      %2363 = vmatprep.subr.mxu0 0.0
      %2364 = vmatpush1.xpose.msra.mxu0 0.0
      %2365 = vmatprep.subr.mxu0 0.0
      %2366 = vmatpush1.xpose.msra.mxu0 0.0
      %2367 = vmatprep.subr.mxu0 0.0
      %2368 = vmatpush1.xpose.msra.mxu0 0.0
      %2369 = vmatprep.subr.mxu0 0.0
      %2370 = vmatpush1.xpose.msra.mxu0 0.0
      %2371 = vmatprep.subr.mxu0 0.0
      %2372 = vmatpush1.xpose.msra.mxu0 0.0
      %2373 = vmatprep.subr.mxu0 0.0
      %2374 = vmatpush1.xpose.msra.mxu0 0.0
      %2375 = vmatprep.subr.mxu0 0.0
      %2376 = vmatpush1.xpose.msra.mxu0 0.0
      %2377 = vmatprep.subr.mxu0 0.0
      %2378 = vmatpush1.xpose.msra.mxu0 0.0
      %2379 = vmatprep.subr.mxu0 0.0
      %2380 = vmatpush1.xpose.msra.mxu0 0.0
      %2381 = vmatprep.subr.mxu0 0.0
      %2382 = vmatpush1.xpose.msra.mxu0 0.0
      %2383 = vmatprep.subr.mxu0 0.0
      %2384 = vmatpush1.xpose.msra.mxu0 0.0
      %2385 = vmatprep.subr.mxu0 0.0
      %2386 = vmatpush1.xpose.msra.mxu0 0.0
      %2387 = vmatprep.subr.mxu0 0.0
      %2388 = vmatpush1.xpose.msra.mxu0 0.0
      %2389 = vmatprep.subr.mxu0 0.0
      %2390 = vmatpush1.xpose.msra.mxu0 %v2359
      %2391 = vmatprep.subr.mxu0 0.0
      %2392 = vmatpush1.xpose.msra.mxu0 %v2356
      %2393 = vmatprep.subr.mxu0 0.0
      %2394 = vmatpush2.xpose.msra.mxu0 0.0
      %2395 = vmatprep.subr.mxu0 0.0
      %2396 = vmatpush2.xpose.msra.mxu0 0.0
      %2397 = vmatprep.subr.mxu0 0.0
      %2398 = vmatpush2.xpose.msra.mxu0 0.0
      %2399 = vmatprep.subr.mxu0 0.0
      %2400 = vmatpush2.xpose.msra.mxu0 0.0
      %2401 = vmatprep.subr.mxu0 0.0
      %2402 = vmatpush2.xpose.msra.mxu0 0.0
      %2403 = vmatprep.subr.mxu0 0.0
      %2404 = vmatpush2.xpose.msra.mxu0 0.0
      %2405 = vmatprep.subr.mxu0 0.0
      %2406 = vmatpush2.xpose.msra.mxu0 0.0
      %2407 = vmatprep.subr.mxu0 0.0
      %2408 = vmatpush2.xpose.msra.mxu0 0.0
      %2409 = vmatprep.subr.mxu0 0.0
      %2410 = vmatpush2.xpose.msra.mxu0 0.0
      %2411 = vmatprep.subr.mxu0 0.0
      %2412 = vmatpush2.xpose.msra.mxu0 0.0
      %2413 = vmatprep.subr.mxu0 0.0
      %2414 = vmatpush2.xpose.msra.mxu0 0.0
      %2415 = vmatprep.subr.mxu0 0.0
      %2416 = vmatpush2.xpose.msra.mxu0 0.0
      %2417 = vmatprep.subr.mxu0 0.0
      %2418 = vmatpush2.xpose.msra.mxu0 0.0
      %2419 = vmatprep.subr.mxu0 0.0
      %2420 = vmatpush2.xpose.msra.mxu0 0.0
      %2421 = vmatprep.subr.mxu0 0.0
      %2422 = vmatpush2.xpose.msra.mxu0 0.0
      %2423 = vmatprep.subr.mxu0 0.0
      %2424 = vmatpush2.xpose.msra.mxu0 0.0
      %2425 = vmatprep.mubr.f32.mxu0 0.0
      %2426 = vmatmul.mubr.f32.gmra.mxu0 %v2350
      %v2427 = vpop.f32.mrf.mxu0
      %v2428 = vadd.f32 0.0, %v2427
      %v2429 = vpop.f32.mrf.mxu0
      %2430 = vmatprep.mubr.f32.mxu0 0.0
      %2431 = vmatmul.mubr.f32.gmra.mxu0 %v2353
      %v2432 = vpop.f32.mrf.mxu0
      %v2433 = vadd.f32 0.0, %v2432
      %v2434 = vpop.f32.mrf.mxu0
      %2435 = vdwg.mxu0
      %v2436 = vsel %vm521, %v2428, -inf
      %2437 = vmax.xlane.f32.xlu0 %v2436
      %v2438 = vpop.xlane.xlu0 %2437
      %v2439 = vsel %vm521, %v2433, -inf
      %2440 = vmax.xlane.f32.xlu0 %v2439
      %v2441 = vpop.xlane.xlu0 %2440
      %v2442 = vsub.f32 %v2428, %v2438
      %v2443 = vsub.f32 %v2433, %v2441
      %v2444 = vmul.f32 %v2442, 1.442695
      %v2445 = vpow.pop %v2444
      %v2446 = vmul.f32 %v2443, 1.442695
      %v2447 = vpow.pop %v2446
      %v2448 = vsel %vm521, %v2445, 0.0
      %2449 = vadd.xlane.f32.xlu0 %v2448
      %v2450 = vpop.xlane.xlu0 %2449
      %v2451 = vsel %vm521, %v2447, 0.0
      %2452 = vadd.xlane.f32.xlu0 %v2451
      %v2453 = vpop.xlane.xlu0 %2452
      %v2454 = vrcp.pop %v2450
      %v2455 = vmul.f32 %v2445, %v2454
      %v2456 = vrcp.pop %v2453
      %v2457 = vmul.f32 %v2447, %v2456
      %v2459 = vsel %vm521, %v2455, 0
      %v2462 = vsel %vm521, %v2457, 0
      %2464 = vmatprep.subr.mxu0 0.0
      %2465 = vmatpush1.msra.mxu0 0.0
      %2466 = vmatprep.subr.mxu0 0.0
      %2467 = vmatpush1.msra.mxu0 0.0
      %2468 = vmatprep.subr.mxu0 0.0
      %2469 = vmatpush1.msra.mxu0 0.0
      %2470 = vmatprep.subr.mxu0 0.0
      %2471 = vmatpush1.msra.mxu0 0.0
      %2472 = vmatprep.subr.mxu0 0.0
      %2473 = vmatpush1.msra.mxu0 0.0
      %2474 = vmatprep.subr.mxu0 0.0
      %2475 = vmatpush1.msra.mxu0 0.0
      %2476 = vmatprep.subr.mxu0 0.0
      %2477 = vmatpush1.msra.mxu0 0.0
      %2478 = vmatprep.subr.mxu0 0.0
      %2479 = vmatpush1.msra.mxu0 0.0
      %2480 = vmatprep.subr.mxu0 0.0
      %2481 = vmatpush1.msra.mxu0 0.0
      %2482 = vmatprep.subr.mxu0 0.0
      %2483 = vmatpush1.msra.mxu0 0.0
      %2484 = vmatprep.subr.mxu0 0.0
      %2485 = vmatpush1.msra.mxu0 0.0
      %2486 = vmatprep.subr.mxu0 0.0
      %2487 = vmatpush1.msra.mxu0 0.0
      %2488 = vmatprep.subr.mxu0 0.0
      %2489 = vmatpush1.msra.mxu0 0.0
      %2490 = vmatprep.subr.mxu0 0.0
      %2491 = vmatpush1.msra.mxu0 0.0
      %2492 = vmatprep.subr.mxu0 0.0
      %2493 = vmatpush1.msra.mxu0 %v2346
      %2494 = vmatprep.subr.mxu0 0.0
      %2495 = vmatpush1.msra.mxu0 %v2341
      %2496 = vmatprep.subr.mxu0 0.0
      %2497 = vmatpush2.msra.mxu0 0.0
      %2498 = vmatprep.subr.mxu0 0.0
      %2499 = vmatpush2.msra.mxu0 0.0
      %2500 = vmatprep.subr.mxu0 0.0
      %2501 = vmatpush2.msra.mxu0 0.0
      %2502 = vmatprep.subr.mxu0 0.0
      %2503 = vmatpush2.msra.mxu0 0.0
      %2504 = vmatprep.subr.mxu0 0.0
      %2505 = vmatpush2.msra.mxu0 0.0
      %2506 = vmatprep.subr.mxu0 0.0
      %2507 = vmatpush2.msra.mxu0 0.0
      %2508 = vmatprep.subr.mxu0 0.0
      %2509 = vmatpush2.msra.mxu0 0.0
      %2510 = vmatprep.subr.mxu0 0.0
      %2511 = vmatpush2.msra.mxu0 0.0
      %2512 = vmatprep.subr.mxu0 0.0
      %2513 = vmatpush2.msra.mxu0 0.0
      %2514 = vmatprep.subr.mxu0 0.0
      %2515 = vmatpush2.msra.mxu0 0.0
      %2516 = vmatprep.subr.mxu0 0.0
      %2517 = vmatpush2.msra.mxu0 0.0
      %2518 = vmatprep.subr.mxu0 0.0
      %2519 = vmatpush2.msra.mxu0 0.0
      %2520 = vmatprep.subr.mxu0 0.0
      %2521 = vmatpush2.msra.mxu0 0.0
      %2522 = vmatprep.subr.mxu0 0.0
      %2523 = vmatpush2.msra.mxu0 0.0
      %2524 = vmatprep.subr.mxu0 0.0
      %2525 = vmatpush2.msra.mxu0 0.0
      %2526 = vmatprep.subr.mxu0 0.0
      %2527 = vmatpush2.msra.mxu0 0.0
      %2528 = vmatprep.mubr.f32.mxu0 0.0
      %2529 = vmatmul.mubr.f32.gmra.mxu0 %v2459
      %v2530 = vpop.f32.mrf.mxu0
      %v2531 = vadd.f32 0.0, %v2530
      %v2532 = vpop.f32.mrf.mxu0
      %2533 = vmatprep.mubr.f32.mxu0 0.0
      %2534 = vmatmul.mubr.f32.gmra.mxu0 %v2462
      %v2535 = vpop.f32.mrf.mxu0
      %v2536 = vadd.f32 0.0, %v2535
      %v2537 = vpop.f32.mrf.mxu0
      %2538 = vdwg.mxu0
      %2539 = vrot.lane.b32.xlu0 %v2155, 120
      %v2540 = vpop.permute.xlu0 %2539
      %2541 = vrot.lane.b32.xlu0 %v2160, 120
      %v2542 = vpop.permute.xlu0 %2541
      %2543 = vrot.lane.b32.xlu0 %v2250, 120
      %v2544 = vpop.permute.xlu0 %2543
      %2545 = vrot.lane.b32.xlu0 %v2255, 120
      %v2546 = vpop.permute.xlu0 %2545
      %v2547 = vsel %vm515, %v2540, 0
      %v2549 = vsel %vm515, %v2542, 0
      %v2551 = vsel %vm515, %v2544, 0
      %v2553 = vsel %vm515, %v2546, 0
      %2555 = vmatprep.subr.mxu0 0.0
      %2556 = vmatpush1.xpose.msra.mxu0 0.0
      %2557 = vmatprep.subr.mxu0 0.0
      %2558 = vmatpush1.xpose.msra.mxu0 0.0
      %2559 = vmatprep.subr.mxu0 0.0
      %2560 = vmatpush1.xpose.msra.mxu0 0.0
      %2561 = vmatprep.subr.mxu0 0.0
      %2562 = vmatpush1.xpose.msra.mxu0 0.0
      %2563 = vmatprep.subr.mxu0 0.0
      %2564 = vmatpush1.xpose.msra.mxu0 0.0
      %2565 = vmatprep.subr.mxu0 0.0
      %2566 = vmatpush1.xpose.msra.mxu0 0.0
      %2567 = vmatprep.subr.mxu0 0.0
      %2568 = vmatpush1.xpose.msra.mxu0 0.0
      %2569 = vmatprep.subr.mxu0 0.0
      %2570 = vmatpush1.xpose.msra.mxu0 0.0
      %2571 = vmatprep.subr.mxu0 0.0
      %2572 = vmatpush1.xpose.msra.mxu0 0.0
      %2573 = vmatprep.subr.mxu0 0.0
      %2574 = vmatpush1.xpose.msra.mxu0 0.0
      %2575 = vmatprep.subr.mxu0 0.0
      %2576 = vmatpush1.xpose.msra.mxu0 0.0
      %2577 = vmatprep.subr.mxu0 0.0
      %2578 = vmatpush1.xpose.msra.mxu0 0.0
      %2579 = vmatprep.subr.mxu0 0.0
      %2580 = vmatpush1.xpose.msra.mxu0 0.0
      %2581 = vmatprep.subr.mxu0 0.0
      %2582 = vmatpush1.xpose.msra.mxu0 0.0
      %2583 = vmatprep.subr.mxu0 0.0
      %2584 = vmatpush1.xpose.msra.mxu0 %v2553
      %2585 = vmatprep.subr.mxu0 0.0
      %2586 = vmatpush1.xpose.msra.mxu0 %v2551
      %2587 = vmatprep.subr.mxu0 0.0
      %2588 = vmatpush2.xpose.msra.mxu0 0.0
      %2589 = vmatprep.subr.mxu0 0.0
      %2590 = vmatpush2.xpose.msra.mxu0 0.0
      %2591 = vmatprep.subr.mxu0 0.0
      %2592 = vmatpush2.xpose.msra.mxu0 0.0
      %2593 = vmatprep.subr.mxu0 0.0
      %2594 = vmatpush2.xpose.msra.mxu0 0.0
      %2595 = vmatprep.subr.mxu0 0.0
      %2596 = vmatpush2.xpose.msra.mxu0 0.0
      %2597 = vmatprep.subr.mxu0 0.0
      %2598 = vmatpush2.xpose.msra.mxu0 0.0
      %2599 = vmatprep.subr.mxu0 0.0
      %2600 = vmatpush2.xpose.msra.mxu0 0.0
      %2601 = vmatprep.subr.mxu0 0.0
      %2602 = vmatpush2.xpose.msra.mxu0 0.0
      %2603 = vmatprep.subr.mxu0 0.0
      %2604 = vmatpush2.xpose.msra.mxu0 0.0
      %2605 = vmatprep.subr.mxu0 0.0
      %2606 = vmatpush2.xpose.msra.mxu0 0.0
      %2607 = vmatprep.subr.mxu0 0.0
      %2608 = vmatpush2.xpose.msra.mxu0 0.0
      %2609 = vmatprep.subr.mxu0 0.0
      %2610 = vmatpush2.xpose.msra.mxu0 0.0
      %2611 = vmatprep.subr.mxu0 0.0
      %2612 = vmatpush2.xpose.msra.mxu0 0.0
      %2613 = vmatprep.subr.mxu0 0.0
      %2614 = vmatpush2.xpose.msra.mxu0 0.0
      %2615 = vmatprep.subr.mxu0 0.0
      %2616 = vmatpush2.xpose.msra.mxu0 0.0
      %2617 = vmatprep.subr.mxu0 0.0
      %2618 = vmatpush2.xpose.msra.mxu0 0.0
      %2619 = vmatprep.mubr.f32.mxu0 0.0
      %2620 = vmatmul.mubr.f32.gmra.mxu0 %v2547
      %v2621 = vpop.f32.mrf.mxu0
      %v2622 = vadd.f32 0.0, %v2621
      %v2623 = vpop.f32.mrf.mxu0
      %2624 = vmatprep.mubr.f32.mxu0 0.0
      %2625 = vmatmul.mubr.f32.gmra.mxu0 %v2549
      %v2626 = vpop.f32.mrf.mxu0
      %v2627 = vadd.f32 0.0, %v2626
      %v2628 = vpop.f32.mrf.mxu0
      %2629 = vdwg.mxu0
      %v2630 = vsel %vm521, %v2622, -inf
      %2631 = vmax.xlane.f32.xlu0 %v2630
      %v2632 = vpop.xlane.xlu0 %2631
      %v2633 = vsel %vm521, %v2627, -inf
      %2634 = vmax.xlane.f32.xlu0 %v2633
      %v2635 = vpop.xlane.xlu0 %2634
      %v2636 = vsub.f32 %v2622, %v2632
      %v2637 = vsub.f32 %v2627, %v2635
      %v2638 = vmul.f32 %v2636, 1.442695
      %v2639 = vpow.pop %v2638
      %v2640 = vmul.f32 %v2637, 1.442695
      %v2641 = vpow.pop %v2640
      %v2642 = vsel %vm521, %v2639, 0.0
      %2643 = vadd.xlane.f32.xlu0 %v2642
      %v2644 = vpop.xlane.xlu0 %2643
      %v2645 = vsel %vm521, %v2641, 0.0
      %2646 = vadd.xlane.f32.xlu0 %v2645
      %v2647 = vpop.xlane.xlu0 %2646
      %v2648 = vrcp.pop %v2644
      %v2649 = vmul.f32 %v2639, %v2648
      %v2650 = vrcp.pop %v2647
      %v2651 = vmul.f32 %v2641, %v2650
      %2654 = vrot.lane.b32.xlu0 %v2341, 120
      %v2655 = vpop.permute.xlu0 %2654
      %2656 = vrot.lane.b32.xlu0 %v2346, 120
      %v2657 = vpop.permute.xlu0 %2656
      %v2661 = vsel %vm521, %v2649, 0
      %v2664 = vsel %vm521, %v2651, 0
      %2666 = vmatprep.subr.mxu0 0.0
      %2667 = vmatpush1.msra.mxu0 0.0
      %2668 = vmatprep.subr.mxu0 0.0
      %2669 = vmatpush1.msra.mxu0 0.0
      %2670 = vmatprep.subr.mxu0 0.0
      %2671 = vmatpush1.msra.mxu0 0.0
      %2672 = vmatprep.subr.mxu0 0.0
      %2673 = vmatpush1.msra.mxu0 0.0
      %2674 = vmatprep.subr.mxu0 0.0
      %2675 = vmatpush1.msra.mxu0 0.0
      %2676 = vmatprep.subr.mxu0 0.0
      %2677 = vmatpush1.msra.mxu0 0.0
      %2678 = vmatprep.subr.mxu0 0.0
      %2679 = vmatpush1.msra.mxu0 0.0
      %2680 = vmatprep.subr.mxu0 0.0
      %2681 = vmatpush1.msra.mxu0 0.0
      %2682 = vmatprep.subr.mxu0 0.0
      %2683 = vmatpush1.msra.mxu0 0.0
      %2684 = vmatprep.subr.mxu0 0.0
      %2685 = vmatpush1.msra.mxu0 0.0
      %2686 = vmatprep.subr.mxu0 0.0
      %2687 = vmatpush1.msra.mxu0 0.0
      %2688 = vmatprep.subr.mxu0 0.0
      %2689 = vmatpush1.msra.mxu0 0.0
      %2690 = vmatprep.subr.mxu0 0.0
      %2691 = vmatpush1.msra.mxu0 0.0
      %2692 = vmatprep.subr.mxu0 0.0
      %2693 = vmatpush1.msra.mxu0 0.0
      %2694 = vmatprep.subr.mxu0 0.0
      %2695 = vmatpush1.msra.mxu0 %v2657
      %2696 = vmatprep.subr.mxu0 0.0
      %2697 = vmatpush1.msra.mxu0 %v2655
      %2698 = vmatprep.subr.mxu0 0.0
      %2699 = vmatpush2.msra.mxu0 0.0
      %2700 = vmatprep.subr.mxu0 0.0
      %2701 = vmatpush2.msra.mxu0 0.0
      %2702 = vmatprep.subr.mxu0 0.0
      %2703 = vmatpush2.msra.mxu0 0.0
      %2704 = vmatprep.subr.mxu0 0.0
      %2705 = vmatpush2.msra.mxu0 0.0
      %2706 = vmatprep.subr.mxu0 0.0
      %2707 = vmatpush2.msra.mxu0 0.0
      %2708 = vmatprep.subr.mxu0 0.0
      %2709 = vmatpush2.msra.mxu0 0.0
      %2710 = vmatprep.subr.mxu0 0.0
      %2711 = vmatpush2.msra.mxu0 0.0
      %2712 = vmatprep.subr.mxu0 0.0
      %2713 = vmatpush2.msra.mxu0 0.0
      %2714 = vmatprep.subr.mxu0 0.0
      %2715 = vmatpush2.msra.mxu0 0.0
      %2716 = vmatprep.subr.mxu0 0.0
      %2717 = vmatpush2.msra.mxu0 0.0
      %2718 = vmatprep.subr.mxu0 0.0
      %2719 = vmatpush2.msra.mxu0 0.0
      %2720 = vmatprep.subr.mxu0 0.0
      %2721 = vmatpush2.msra.mxu0 0.0
      %2722 = vmatprep.subr.mxu0 0.0
      %2723 = vmatpush2.msra.mxu0 0.0
      %2724 = vmatprep.subr.mxu0 0.0
      %2725 = vmatpush2.msra.mxu0 0.0
      %2726 = vmatprep.subr.mxu0 0.0
      %2727 = vmatpush2.msra.mxu0 0.0
      %2728 = vmatprep.subr.mxu0 0.0
      %2729 = vmatpush2.msra.mxu0 0.0
      %2730 = vmatprep.mubr.f32.mxu0 0.0
      %2731 = vmatmul.mubr.f32.gmra.mxu0 %v2661
      %v2732 = vpop.f32.mrf.mxu0
      %v2733 = vadd.f32 0.0, %v2732
      %v2734 = vpop.f32.mrf.mxu0
      %2735 = vmatprep.mubr.f32.mxu0 0.0
      %2736 = vmatmul.mubr.f32.gmra.mxu0 %v2664
      %v2737 = vpop.f32.mrf.mxu0
      %v2738 = vadd.f32 0.0, %v2737
      %v2739 = vpop.f32.mrf.mxu0
      %2740 = vdwg.mxu0
      %2741 = vrot.lane.b32.xlu0 %v2155, 112
      %v2742 = vpop.permute.xlu0 %2741
      %2743 = vrot.lane.b32.xlu0 %v2160, 112
      %v2744 = vpop.permute.xlu0 %2743
      %2745 = vrot.lane.b32.xlu0 %v2250, 112
      %v2746 = vpop.permute.xlu0 %2745
      %2747 = vrot.lane.b32.xlu0 %v2255, 112
      %v2748 = vpop.permute.xlu0 %2747
      %v2749 = vsel %vm515, %v2742, 0
      %v2751 = vsel %vm515, %v2744, 0
      %v2753 = vsel %vm515, %v2746, 0
      %v2755 = vsel %vm515, %v2748, 0
      %2757 = vmatprep.subr.mxu0 0.0
      %2758 = vmatpush1.xpose.msra.mxu0 0.0
      %2759 = vmatprep.subr.mxu0 0.0
      %2760 = vmatpush1.xpose.msra.mxu0 0.0
      %2761 = vmatprep.subr.mxu0 0.0
      %2762 = vmatpush1.xpose.msra.mxu0 0.0
      %2763 = vmatprep.subr.mxu0 0.0
      %2764 = vmatpush1.xpose.msra.mxu0 0.0
      %2765 = vmatprep.subr.mxu0 0.0
      %2766 = vmatpush1.xpose.msra.mxu0 0.0
      %2767 = vmatprep.subr.mxu0 0.0
      %2768 = vmatpush1.xpose.msra.mxu0 0.0
      %2769 = vmatprep.subr.mxu0 0.0
      %2770 = vmatpush1.xpose.msra.mxu0 0.0
      %2771 = vmatprep.subr.mxu0 0.0
      %2772 = vmatpush1.xpose.msra.mxu0 0.0
      %2773 = vmatprep.subr.mxu0 0.0
      %2774 = vmatpush1.xpose.msra.mxu0 0.0
      %2775 = vmatprep.subr.mxu0 0.0
      %2776 = vmatpush1.xpose.msra.mxu0 0.0
      %2777 = vmatprep.subr.mxu0 0.0
      %2778 = vmatpush1.xpose.msra.mxu0 0.0
      %2779 = vmatprep.subr.mxu0 0.0
      %2780 = vmatpush1.xpose.msra.mxu0 0.0
      %2781 = vmatprep.subr.mxu0 0.0
      %2782 = vmatpush1.xpose.msra.mxu0 0.0
      %2783 = vmatprep.subr.mxu0 0.0
      %2784 = vmatpush1.xpose.msra.mxu0 0.0
      %2785 = vmatprep.subr.mxu0 0.0
      %2786 = vmatpush1.xpose.msra.mxu0 %v2755
      %2787 = vmatprep.subr.mxu0 0.0
      %2788 = vmatpush1.xpose.msra.mxu0 %v2753
      %2789 = vmatprep.subr.mxu0 0.0
      %2790 = vmatpush2.xpose.msra.mxu0 0.0
      %2791 = vmatprep.subr.mxu0 0.0
      %2792 = vmatpush2.xpose.msra.mxu0 0.0
      %2793 = vmatprep.subr.mxu0 0.0
      %2794 = vmatpush2.xpose.msra.mxu0 0.0
      %2795 = vmatprep.subr.mxu0 0.0
      %2796 = vmatpush2.xpose.msra.mxu0 0.0
      %2797 = vmatprep.subr.mxu0 0.0
      %2798 = vmatpush2.xpose.msra.mxu0 0.0
      %2799 = vmatprep.subr.mxu0 0.0
      %2800 = vmatpush2.xpose.msra.mxu0 0.0
      %2801 = vmatprep.subr.mxu0 0.0
      %2802 = vmatpush2.xpose.msra.mxu0 0.0
      %2803 = vmatprep.subr.mxu0 0.0
      %2804 = vmatpush2.xpose.msra.mxu0 0.0
      %2805 = vmatprep.subr.mxu0 0.0
      %2806 = vmatpush2.xpose.msra.mxu0 0.0
      %2807 = vmatprep.subr.mxu0 0.0
      %2808 = vmatpush2.xpose.msra.mxu0 0.0
      %2809 = vmatprep.subr.mxu0 0.0
      %2810 = vmatpush2.xpose.msra.mxu0 0.0
      %2811 = vmatprep.subr.mxu0 0.0
      %2812 = vmatpush2.xpose.msra.mxu0 0.0
      %2813 = vmatprep.subr.mxu0 0.0
      %2814 = vmatpush2.xpose.msra.mxu0 0.0
      %2815 = vmatprep.subr.mxu0 0.0
      %2816 = vmatpush2.xpose.msra.mxu0 0.0
      %2817 = vmatprep.subr.mxu0 0.0
      %2818 = vmatpush2.xpose.msra.mxu0 0.0
      %2819 = vmatprep.subr.mxu0 0.0
      %2820 = vmatpush2.xpose.msra.mxu0 0.0
      %2821 = vmatprep.mubr.f32.mxu0 0.0
      %2822 = vmatmul.mubr.f32.gmra.mxu0 %v2749
      %v2823 = vpop.f32.mrf.mxu0
      %v2824 = vadd.f32 0.0, %v2823
      %v2825 = vpop.f32.mrf.mxu0
      %2826 = vmatprep.mubr.f32.mxu0 0.0
      %2827 = vmatmul.mubr.f32.gmra.mxu0 %v2751
      %v2828 = vpop.f32.mrf.mxu0
      %v2829 = vadd.f32 0.0, %v2828
      %v2830 = vpop.f32.mrf.mxu0
      %2831 = vdwg.mxu0
      %v2832 = vsel %vm521, %v2824, -inf
      %2833 = vmax.xlane.f32.xlu0 %v2832
      %v2834 = vpop.xlane.xlu0 %2833
      %v2835 = vsel %vm521, %v2829, -inf
      %2836 = vmax.xlane.f32.xlu0 %v2835
      %v2837 = vpop.xlane.xlu0 %2836
      %v2838 = vsub.f32 %v2824, %v2834
      %v2839 = vsub.f32 %v2829, %v2837
      %v2840 = vmul.f32 %v2838, 1.442695
      %v2841 = vpow.pop %v2840
      %v2842 = vmul.f32 %v2839, 1.442695
      %v2843 = vpow.pop %v2842
      %v2844 = vsel %vm521, %v2841, 0.0
      %2845 = vadd.xlane.f32.xlu0 %v2844
      %v2846 = vpop.xlane.xlu0 %2845
      %v2847 = vsel %vm521, %v2843, 0.0
      %2848 = vadd.xlane.f32.xlu0 %v2847
      %v2849 = vpop.xlane.xlu0 %2848
      %v2850 = vrcp.pop %v2846
      %v2851 = vmul.f32 %v2841, %v2850
      %v2852 = vrcp.pop %v2849
      %v2853 = vmul.f32 %v2843, %v2852
      %2854 = vrot.lane.b32.xlu0 %v2341, 112
      %v2855 = vpop.permute.xlu0 %2854
      %2856 = vrot.lane.b32.xlu0 %v2346, 112
      %v2857 = vpop.permute.xlu0 %2856
      %v2861 = vsel %vm521, %v2851, 0
      %v2864 = vsel %vm521, %v2853, 0
      %2866 = vmatprep.subr.mxu0 0.0
      %2867 = vmatpush1.msra.mxu0 0.0
      %2868 = vmatprep.subr.mxu0 0.0
      %2869 = vmatpush1.msra.mxu0 0.0
      %2870 = vmatprep.subr.mxu0 0.0
      %2871 = vmatpush1.msra.mxu0 0.0
      %2872 = vmatprep.subr.mxu0 0.0
      %2873 = vmatpush1.msra.mxu0 0.0
      %2874 = vmatprep.subr.mxu0 0.0
      %2875 = vmatpush1.msra.mxu0 0.0
      %2876 = vmatprep.subr.mxu0 0.0
      %2877 = vmatpush1.msra.mxu0 0.0
      %2878 = vmatprep.subr.mxu0 0.0
      %2879 = vmatpush1.msra.mxu0 0.0
      %2880 = vmatprep.subr.mxu0 0.0
      %2881 = vmatpush1.msra.mxu0 0.0
      %2882 = vmatprep.subr.mxu0 0.0
      %2883 = vmatpush1.msra.mxu0 0.0
      %2884 = vmatprep.subr.mxu0 0.0
      %2885 = vmatpush1.msra.mxu0 0.0
      %2886 = vmatprep.subr.mxu0 0.0
      %2887 = vmatpush1.msra.mxu0 0.0
      %2888 = vmatprep.subr.mxu0 0.0
      %2889 = vmatpush1.msra.mxu0 0.0
      %2890 = vmatprep.subr.mxu0 0.0
      %2891 = vmatpush1.msra.mxu0 0.0
      %2892 = vmatprep.subr.mxu0 0.0
      %2893 = vmatpush1.msra.mxu0 0.0
      %2894 = vmatprep.subr.mxu0 0.0
      %2895 = vmatpush1.msra.mxu0 %v2857
      %2896 = vmatprep.subr.mxu0 0.0
      %2897 = vmatpush1.msra.mxu0 %v2855
      %2898 = vmatprep.subr.mxu0 0.0
      %2899 = vmatpush2.msra.mxu0 0.0
      %2900 = vmatprep.subr.mxu0 0.0
      %2901 = vmatpush2.msra.mxu0 0.0
      %2902 = vmatprep.subr.mxu0 0.0
      %2903 = vmatpush2.msra.mxu0 0.0
      %2904 = vmatprep.subr.mxu0 0.0
      %2905 = vmatpush2.msra.mxu0 0.0
      %2906 = vmatprep.subr.mxu0 0.0
      %2907 = vmatpush2.msra.mxu0 0.0
      %2908 = vmatprep.subr.mxu0 0.0
      %2909 = vmatpush2.msra.mxu0 0.0
      %2910 = vmatprep.subr.mxu0 0.0
      %2911 = vmatpush2.msra.mxu0 0.0
      %2912 = vmatprep.subr.mxu0 0.0
      %2913 = vmatpush2.msra.mxu0 0.0
      %2914 = vmatprep.subr.mxu0 0.0
      %2915 = vmatpush2.msra.mxu0 0.0
      %2916 = vmatprep.subr.mxu0 0.0
      %2917 = vmatpush2.msra.mxu0 0.0
      %2918 = vmatprep.subr.mxu0 0.0
      %2919 = vmatpush2.msra.mxu0 0.0
      %2920 = vmatprep.subr.mxu0 0.0
      %2921 = vmatpush2.msra.mxu0 0.0
      %2922 = vmatprep.subr.mxu0 0.0
      %2923 = vmatpush2.msra.mxu0 0.0
      %2924 = vmatprep.subr.mxu0 0.0
      %2925 = vmatpush2.msra.mxu0 0.0
      %2926 = vmatprep.subr.mxu0 0.0
      %2927 = vmatpush2.msra.mxu0 0.0
      %2928 = vmatprep.subr.mxu0 0.0
      %2929 = vmatpush2.msra.mxu0 0.0
      %2930 = vmatprep.mubr.f32.mxu0 0.0
      %2931 = vmatmul.mubr.f32.gmra.mxu0 %v2861
      %v2932 = vpop.f32.mrf.mxu0
      %v2933 = vadd.f32 0.0, %v2932
      %v2934 = vpop.f32.mrf.mxu0
      %2935 = vmatprep.mubr.f32.mxu0 0.0
      %2936 = vmatmul.mubr.f32.gmra.mxu0 %v2864
      %v2937 = vpop.f32.mrf.mxu0
      %v2938 = vadd.f32 0.0, %v2937
      %v2939 = vpop.f32.mrf.mxu0
      %2940 = vdwg.mxu0
      %2941 = vrot.lane.b32.xlu0 %v2155, 104
      %v2942 = vpop.permute.xlu0 %2941
      %2943 = vrot.lane.b32.xlu0 %v2160, 104
      %v2944 = vpop.permute.xlu0 %2943
      %2945 = vrot.lane.b32.xlu0 %v2250, 104
      %v2946 = vpop.permute.xlu0 %2945
      %2947 = vrot.lane.b32.xlu0 %v2255, 104
      %v2948 = vpop.permute.xlu0 %2947
      %v2949 = vsel %vm515, %v2942, 0
      %v2951 = vsel %vm515, %v2944, 0
      %v2953 = vsel %vm515, %v2946, 0
      %v2955 = vsel %vm515, %v2948, 0
      %2957 = vmatprep.subr.mxu0 0.0
      %2958 = vmatpush1.xpose.msra.mxu0 0.0
      %2959 = vmatprep.subr.mxu0 0.0
      %2960 = vmatpush1.xpose.msra.mxu0 0.0
      %2961 = vmatprep.subr.mxu0 0.0
      %2962 = vmatpush1.xpose.msra.mxu0 0.0
      %2963 = vmatprep.subr.mxu0 0.0
      %2964 = vmatpush1.xpose.msra.mxu0 0.0
      %2965 = vmatprep.subr.mxu0 0.0
      %2966 = vmatpush1.xpose.msra.mxu0 0.0
      %2967 = vmatprep.subr.mxu0 0.0
      %2968 = vmatpush1.xpose.msra.mxu0 0.0
      %2969 = vmatprep.subr.mxu0 0.0
      %2970 = vmatpush1.xpose.msra.mxu0 0.0
      %2971 = vmatprep.subr.mxu0 0.0
      %2972 = vmatpush1.xpose.msra.mxu0 0.0
      %2973 = vmatprep.subr.mxu0 0.0
      %2974 = vmatpush1.xpose.msra.mxu0 0.0
      %2975 = vmatprep.subr.mxu0 0.0
      %2976 = vmatpush1.xpose.msra.mxu0 0.0
      %2977 = vmatprep.subr.mxu0 0.0
      %2978 = vmatpush1.xpose.msra.mxu0 0.0
      %2979 = vmatprep.subr.mxu0 0.0
      %2980 = vmatpush1.xpose.msra.mxu0 0.0
      %2981 = vmatprep.subr.mxu0 0.0
      %2982 = vmatpush1.xpose.msra.mxu0 0.0
      %2983 = vmatprep.subr.mxu0 0.0
      %2984 = vmatpush1.xpose.msra.mxu0 0.0
      %2985 = vmatprep.subr.mxu0 0.0
      %2986 = vmatpush1.xpose.msra.mxu0 %v2955
      %2987 = vmatprep.subr.mxu0 0.0
      %2988 = vmatpush1.xpose.msra.mxu0 %v2953
      %2989 = vmatprep.subr.mxu0 0.0
      %2990 = vmatpush2.xpose.msra.mxu0 0.0
      %2991 = vmatprep.subr.mxu0 0.0
      %2992 = vmatpush2.xpose.msra.mxu0 0.0
      %2993 = vmatprep.subr.mxu0 0.0
      %2994 = vmatpush2.xpose.msra.mxu0 0.0
      %2995 = vmatprep.subr.mxu0 0.0
      %2996 = vmatpush2.xpose.msra.mxu0 0.0
      %2997 = vmatprep.subr.mxu0 0.0
      %2998 = vmatpush2.xpose.msra.mxu0 0.0
      %2999 = vmatprep.subr.mxu0 0.0
      %3000 = vmatpush2.xpose.msra.mxu0 0.0
      %3001 = vmatprep.subr.mxu0 0.0
      %3002 = vmatpush2.xpose.msra.mxu0 0.0
      %3003 = vmatprep.subr.mxu0 0.0
      %3004 = vmatpush2.xpose.msra.mxu0 0.0
      %3005 = vmatprep.subr.mxu0 0.0
      %3006 = vmatpush2.xpose.msra.mxu0 0.0
      %3007 = vmatprep.subr.mxu0 0.0
      %3008 = vmatpush2.xpose.msra.mxu0 0.0
      %3009 = vmatprep.subr.mxu0 0.0
      %3010 = vmatpush2.xpose.msra.mxu0 0.0
      %3011 = vmatprep.subr.mxu0 0.0
      %3012 = vmatpush2.xpose.msra.mxu0 0.0
      %3013 = vmatprep.subr.mxu0 0.0
      %3014 = vmatpush2.xpose.msra.mxu0 0.0
      %3015 = vmatprep.subr.mxu0 0.0
      %3016 = vmatpush2.xpose.msra.mxu0 0.0
      %3017 = vmatprep.subr.mxu0 0.0
      %3018 = vmatpush2.xpose.msra.mxu0 0.0
      %3019 = vmatprep.subr.mxu0 0.0
      %3020 = vmatpush2.xpose.msra.mxu0 0.0
      %3021 = vmatprep.mubr.f32.mxu0 0.0
      %3022 = vmatmul.mubr.f32.gmra.mxu0 %v2949
      %v3023 = vpop.f32.mrf.mxu0
      %v3024 = vadd.f32 0.0, %v3023
      %v3025 = vpop.f32.mrf.mxu0
      %3026 = vmatprep.mubr.f32.mxu0 0.0
      %3027 = vmatmul.mubr.f32.gmra.mxu0 %v2951
      %v3028 = vpop.f32.mrf.mxu0
      %v3029 = vadd.f32 0.0, %v3028
      %v3030 = vpop.f32.mrf.mxu0
      %3031 = vdwg.mxu0
      %v3032 = vsel %vm521, %v3024, -inf
      %3033 = vmax.xlane.f32.xlu0 %v3032
      %v3034 = vpop.xlane.xlu0 %3033
      %v3035 = vsel %vm521, %v3029, -inf
      %3036 = vmax.xlane.f32.xlu0 %v3035
      %v3037 = vpop.xlane.xlu0 %3036
      %v3038 = vsub.f32 %v3024, %v3034
      %v3039 = vsub.f32 %v3029, %v3037
      %v3040 = vmul.f32 %v3038, 1.442695
      %v3041 = vpow.pop %v3040
      %v3042 = vmul.f32 %v3039, 1.442695
      %v3043 = vpow.pop %v3042
      %v3044 = vsel %vm521, %v3041, 0.0
      %3045 = vadd.xlane.f32.xlu0 %v3044
      %v3046 = vpop.xlane.xlu0 %3045
      %v3047 = vsel %vm521, %v3043, 0.0
      %3048 = vadd.xlane.f32.xlu0 %v3047
      %v3049 = vpop.xlane.xlu0 %3048
      %v3050 = vrcp.pop %v3046
      %v3051 = vmul.f32 %v3041, %v3050
      %v3052 = vrcp.pop %v3049
      %v3053 = vmul.f32 %v3043, %v3052
      %3054 = vrot.lane.b32.xlu0 %v2341, 104
      %v3055 = vpop.permute.xlu0 %3054
      %3056 = vrot.lane.b32.xlu0 %v2346, 104
      %v3057 = vpop.permute.xlu0 %3056
      %v3061 = vsel %vm521, %v3051, 0
      %v3064 = vsel %vm521, %v3053, 0
      %3066 = vmatprep.subr.mxu0 0.0
      %3067 = vmatpush1.msra.mxu0 0.0
      %3068 = vmatprep.subr.mxu0 0.0
      %3069 = vmatpush1.msra.mxu0 0.0
      %3070 = vmatprep.subr.mxu0 0.0
      %3071 = vmatpush1.msra.mxu0 0.0
      %3072 = vmatprep.subr.mxu0 0.0
      %3073 = vmatpush1.msra.mxu0 0.0
      %3074 = vmatprep.subr.mxu0 0.0
      %3075 = vmatpush1.msra.mxu0 0.0
      %3076 = vmatprep.subr.mxu0 0.0
      %3077 = vmatpush1.msra.mxu0 0.0
      %3078 = vmatprep.subr.mxu0 0.0
      %3079 = vmatpush1.msra.mxu0 0.0
      %3080 = vmatprep.subr.mxu0 0.0
      %3081 = vmatpush1.msra.mxu0 0.0
      %3082 = vmatprep.subr.mxu0 0.0
      %3083 = vmatpush1.msra.mxu0 0.0
      %3084 = vmatprep.subr.mxu0 0.0
      %3085 = vmatpush1.msra.mxu0 0.0
      %3086 = vmatprep.subr.mxu0 0.0
      %3087 = vmatpush1.msra.mxu0 0.0
      %3088 = vmatprep.subr.mxu0 0.0
      %3089 = vmatpush1.msra.mxu0 0.0
      %3090 = vmatprep.subr.mxu0 0.0
      %3091 = vmatpush1.msra.mxu0 0.0
      %3092 = vmatprep.subr.mxu0 0.0
      %3093 = vmatpush1.msra.mxu0 0.0
      %3094 = vmatprep.subr.mxu0 0.0
      %3095 = vmatpush1.msra.mxu0 %v3057
      %3096 = vmatprep.subr.mxu0 0.0
      %3097 = vmatpush1.msra.mxu0 %v3055
      %3098 = vmatprep.subr.mxu0 0.0
      %3099 = vmatpush2.msra.mxu0 0.0
      %3100 = vmatprep.subr.mxu0 0.0
      %3101 = vmatpush2.msra.mxu0 0.0
      %3102 = vmatprep.subr.mxu0 0.0
      %3103 = vmatpush2.msra.mxu0 0.0
      %3104 = vmatprep.subr.mxu0 0.0
      %3105 = vmatpush2.msra.mxu0 0.0
      %3106 = vmatprep.subr.mxu0 0.0
      %3107 = vmatpush2.msra.mxu0 0.0
      %3108 = vmatprep.subr.mxu0 0.0
      %3109 = vmatpush2.msra.mxu0 0.0
      %3110 = vmatprep.subr.mxu0 0.0
      %3111 = vmatpush2.msra.mxu0 0.0
      %3112 = vmatprep.subr.mxu0 0.0
      %3113 = vmatpush2.msra.mxu0 0.0
      %3114 = vmatprep.subr.mxu0 0.0
      %3115 = vmatpush2.msra.mxu0 0.0
      %3116 = vmatprep.subr.mxu0 0.0
      %3117 = vmatpush2.msra.mxu0 0.0
      %3118 = vmatprep.subr.mxu0 0.0
      %3119 = vmatpush2.msra.mxu0 0.0
      %3120 = vmatprep.subr.mxu0 0.0
      %3121 = vmatpush2.msra.mxu0 0.0
      %3122 = vmatprep.subr.mxu0 0.0
      %3123 = vmatpush2.msra.mxu0 0.0
      %3124 = vmatprep.subr.mxu0 0.0
      %3125 = vmatpush2.msra.mxu0 0.0
      %3126 = vmatprep.subr.mxu0 0.0
      %3127 = vmatpush2.msra.mxu0 0.0
      %3128 = vmatprep.subr.mxu0 0.0
      %3129 = vmatpush2.msra.mxu0 0.0
      %3130 = vmatprep.mubr.f32.mxu0 0.0
      %3131 = vmatmul.mubr.f32.gmra.mxu0 %v3061
      %v3132 = vpop.f32.mrf.mxu0
      %v3133 = vadd.f32 0.0, %v3132
      %v3134 = vpop.f32.mrf.mxu0
      %3135 = vmatprep.mubr.f32.mxu0 0.0
      %3136 = vmatmul.mubr.f32.gmra.mxu0 %v3064
      %v3137 = vpop.f32.mrf.mxu0
      %v3138 = vadd.f32 0.0, %v3137
      %v3139 = vpop.f32.mrf.mxu0
      %3140 = vdwg.mxu0
      %3143 = vrot.lane.b32.xlu0 %v2733, 8
      %v3144 = vpop.permute.xlu0 %3143
      %3145 = vrot.lane.b32.xlu0 %v2738, 8
      %v3146 = vpop.permute.xlu0 %3145
      %3151 = vrot.lane.b32.xlu0 %v2933, 16
      %v3152 = vpop.permute.xlu0 %3151
      %3153 = vrot.lane.b32.xlu0 %v2938, 16
      %v3154 = vpop.permute.xlu0 %3153
      %3159 = vrot.lane.b32.xlu0 %v3133, 24
      %v3160 = vpop.permute.xlu0 %3159
      %3161 = vrot.lane.b32.xlu0 %v3138, 24
      %v3162 = vpop.permute.xlu0 %3161
      %v3165 = vsel %vm515, %v2531, %v3144
      %v3166 = vsel %vm515, %v2536, %v3146
      %v3167 = vsel %vm521, %v3165, %v3152
      %v3168 = vsel %vm521, %v3166, %v3154
      %v3169 = vsel %vm1701, %v3167, %v3160
      %v3170 = vsel %vm1701, %v3168, %v3162
      %v3171 = vlaneseq
      %v3172 = vshrl.u32 %v3171, 7
      %v3173 = vsub.s32 3, %v3172
      %v3174 = vrot.slane %v2071, %v3173
      %3175 = vrot.lane.b32.xlu0 %v2074, 32
      %v3176 = vpop.permute.xlu0 %3175
      %3177 = vrot.lane.b32.xlu0 %v2075, 32
      %v3178 = vpop.permute.xlu0 %3177
      %3179 = vrot.lane.b32.xlu0 %v2076, 32
      %v3180 = vpop.permute.xlu0 %3179
      %3181 = vrot.lane.b32.xlu0 %v2077, 32
      %v3182 = vpop.permute.xlu0 %3181
      %v3188 = vsel %vm613, %v3169, 0
      %v3191 = vsel %vm613, %v3170, 0
      %3193 = vmatprep.subr.mxu0 0.0
      %3194 = vmatpush1.msra.mxu0 0.0
      %3195 = vmatprep.subr.mxu0 0.0
      %3196 = vmatpush1.msra.mxu0 0.0
      %3197 = vmatprep.subr.mxu0 0.0
      %3198 = vmatpush1.msra.mxu0 0.0
      %3199 = vmatprep.subr.mxu0 0.0
      %3200 = vmatpush1.msra.mxu0 0.0
      %3201 = vmatprep.subr.mxu0 0.0
      %3202 = vmatpush1.msra.mxu0 0.0
      %3203 = vmatprep.subr.mxu0 0.0
      %3204 = vmatpush1.msra.mxu0 0.0
      %3205 = vmatprep.subr.mxu0 0.0
      %3206 = vmatpush1.msra.mxu0 0.0
      %3207 = vmatprep.subr.mxu0 0.0
      %3208 = vmatpush1.msra.mxu0 0.0
      %3209 = vmatprep.subr.mxu0 0.0
      %3210 = vmatpush1.msra.mxu0 0.0
      %3211 = vmatprep.subr.mxu0 0.0
      %3212 = vmatpush1.msra.mxu0 0.0
      %3213 = vmatprep.subr.mxu0 0.0
      %3214 = vmatpush1.msra.mxu0 0.0
      %3215 = vmatprep.subr.mxu0 0.0
      %3216 = vmatpush1.msra.mxu0 0.0
      %3217 = vmatprep.subr.mxu0 0.0
      %3218 = vmatpush1.msra.mxu0 %v3182
      %3219 = vmatprep.subr.mxu0 0.0
      %3220 = vmatpush1.msra.mxu0 %v3180
      %3221 = vmatprep.subr.mxu0 0.0
      %3222 = vmatpush1.msra.mxu0 %v3178
      %3223 = vmatprep.subr.mxu0 0.0
      %3224 = vmatpush1.msra.mxu0 %v3176
      %3225 = vmatprep.subr.mxu0 0.0
      %3226 = vmatpush2.msra.mxu0 0.0
      %3227 = vmatprep.subr.mxu0 0.0
      %3228 = vmatpush2.msra.mxu0 0.0
      %3229 = vmatprep.subr.mxu0 0.0
      %3230 = vmatpush2.msra.mxu0 0.0
      %3231 = vmatprep.subr.mxu0 0.0
      %3232 = vmatpush2.msra.mxu0 0.0
      %3233 = vmatprep.subr.mxu0 0.0
      %3234 = vmatpush2.msra.mxu0 0.0
      %3235 = vmatprep.subr.mxu0 0.0
      %3236 = vmatpush2.msra.mxu0 0.0
      %3237 = vmatprep.subr.mxu0 0.0
      %3238 = vmatpush2.msra.mxu0 0.0
      %3239 = vmatprep.subr.mxu0 0.0
      %3240 = vmatpush2.msra.mxu0 0.0
      %3241 = vmatprep.subr.mxu0 0.0
      %3242 = vmatpush2.msra.mxu0 0.0
      %3243 = vmatprep.subr.mxu0 0.0
      %3244 = vmatpush2.msra.mxu0 0.0
      %3245 = vmatprep.subr.mxu0 0.0
      %3246 = vmatpush2.msra.mxu0 0.0
      %3247 = vmatprep.subr.mxu0 0.0
      %3248 = vmatpush2.msra.mxu0 0.0
      %3249 = vmatprep.subr.mxu0 0.0
      %3250 = vmatpush2.msra.mxu0 0.0
      %3251 = vmatprep.subr.mxu0 0.0
      %3252 = vmatpush2.msra.mxu0 0.0
      %3253 = vmatprep.subr.mxu0 0.0
      %3254 = vmatpush2.msra.mxu0 0.0
      %3255 = vmatprep.subr.mxu0 0.0
      %3256 = vmatpush2.msra.mxu0 0.0
      %3257 = vmatprep.mubr.f32.mxu0 0.0
      %3258 = vmatmul.mubr.f32.gmra.mxu0 %v3188
      %v3259 = vpop.f32.mrf.mxu0
      %v3260 = vadd.f32 %v3174, %v3259
      %v3261 = vpop.f32.mrf.mxu0
      %3262 = vmatprep.mubr.f32.mxu0 0.0
      %3263 = vmatmul.mubr.f32.gmra.mxu0 %v3191
      %v3264 = vpop.f32.mrf.mxu0
      %v3265 = vadd.f32 %v3174, %v3264
      %v3266 = vpop.f32.mrf.mxu0
      %3267 = vdwg.mxu0
      %v3268 = vadd.f32 %v2068, %v3260
      %v3269 = vadd.f32 %v2069, %v3265
      %v3270 = vsel %vm613, %v3268, 0.0
      %3271 = vadd.xlane.f32.xlu0 %v3270
      %v3272 = vpop.xlane.xlu0 %3271
      %v3273 = vsel %vm613, %v3269, 0.0
      %3274 = vadd.xlane.f32.xlu0 %v3273
      %v3275 = vpop.xlane.xlu0 %3274
      %v3276 = vmul.f32 %v3272, %v1809
      %v3277 = vmul.f32 %v3275, %v1809
      %v3278 = vsub.f32 %v3268, %v3276
      %v3279 = vsub.f32 %v3269, %v3277
      %v3280 = vmul.f32 %v3278, %v3278
      %v3281 = vmul.f32 %v3279, %v3279
      %v3282 = vsel %vm613, %v3280, 0.0
      %3283 = vadd.xlane.f32.xlu0 %v3282
      %v3284 = vpop.xlane.xlu0 %3283
      %v3285 = vsel %vm613, %v3281, 0.0
      %3286 = vadd.xlane.f32.xlu0 %v3285
      %v3287 = vpop.xlane.xlu0 %3286
      %v3288 = vmul.f32 %v3284, %v1809
      %v3289 = vmul.f32 %v3287, %v1809
      %v3290 = vadd.f32 %v3288, 1e-05
      %v3291 = vadd.f32 %v3289, 1e-05
      %v3292 = vrsqrt.pop %v3290
      %v3293 = vrsqrt.pop %v3291
      %v3294 = vmul.f32 %v3278, %v3292
      %v3295 = vmul.f32 %v3279, %v3293
      %v3296 = vlaneseq
      %v3297 = vshrl.u32 %v3296, 7
      %v3298 = vsub.s32 5, %v3297
      %v3299 = vrot.slane %v2071, %v3298
      %v3300 = vmul.f32 %v3294, %v3299
      %v3301 = vmul.f32 %v3295, %v3299
      %v3302 = vlaneseq
      %v3303 = vshrl.u32 %v3302, 7
      %v3304 = vsub.s32 6, %v3303
      %v3305 = vrot.slane %v2071, %v3304
      %v3306 = vadd.f32 %v3300, %v3305
      %v3307 = vadd.f32 %v3301, %v3305
      %s3308 = scalar_lea.vmem %s5, 32
      %v3309 = vld [vmem:[%s3308] sm:$0xff]
      %v3310 = vld [vmem:[%s3308 + $0x8] sm:$0xff]
      %v3311 = vld [vmem:[%s3308 + $0x10] sm:$0xff]
      %v3312 = vld [vmem:[%s3308 + $0x18] sm:$0xff]
      %s3313 = scalar_lea.vmem %s6, 1
      %v3314 = vld [vmem:[%s3313] sm:$0x1]
      %s3315 = scalar_lea.vmem %s7, 64
      %v3316 = vld [vmem:[%s3315] sm:$0xff]
      %v3317 = vld [vmem:[%s3315 + $0x8] sm:$0xff]
      %v3318 = vld [vmem:[%s3315 + $0x10] sm:$0xff]
      %v3319 = vld [vmem:[%s3315 + $0x18] sm:$0xff]
      %v3320 = vld [vmem:[%s3315 + $0x20] sm:$0xff]
      %v3321 = vld [vmem:[%s3315 + $0x28] sm:$0xff]
      %v3322 = vld [vmem:[%s3315 + $0x30] sm:$0xff]
      %v3323 = vld [vmem:[%s3315 + $0x38] sm:$0xff]
      %v3325 = vlaneseq
      %v3326 = vshrl.u32 %v3325, 7
      %v3327 = vsub.s32 0, %v3326
      %v3328 = vrot.slane %v3314, %v3327
      %v3331 = vsel %vm613, %v3306, 0
      %v3334 = vsel %vm613, %v3307, 0
      %3336 = vmatprep.subr.mxu0 0.0
      %3337 = vmatpush1.msra.mxu0 0.0
      %3338 = vmatprep.subr.mxu0 0.0
      %3339 = vmatpush1.msra.mxu0 0.0
      %3340 = vmatprep.subr.mxu0 0.0
      %3341 = vmatpush1.msra.mxu0 0.0
      %3342 = vmatprep.subr.mxu0 0.0
      %3343 = vmatpush1.msra.mxu0 0.0
      %3344 = vmatprep.subr.mxu0 0.0
      %3345 = vmatpush1.msra.mxu0 0.0
      %3346 = vmatprep.subr.mxu0 0.0
      %3347 = vmatpush1.msra.mxu0 0.0
      %3348 = vmatprep.subr.mxu0 0.0
      %3349 = vmatpush1.msra.mxu0 0.0
      %3350 = vmatprep.subr.mxu0 0.0
      %3351 = vmatpush1.msra.mxu0 0.0
      %3352 = vmatprep.subr.mxu0 0.0
      %3353 = vmatpush1.msra.mxu0 0.0
      %3354 = vmatprep.subr.mxu0 0.0
      %3355 = vmatpush1.msra.mxu0 0.0
      %3356 = vmatprep.subr.mxu0 0.0
      %3357 = vmatpush1.msra.mxu0 0.0
      %3358 = vmatprep.subr.mxu0 0.0
      %3359 = vmatpush1.msra.mxu0 0.0
      %3360 = vmatprep.subr.mxu0 0.0
      %3361 = vmatpush1.msra.mxu0 %v3312
      %3362 = vmatprep.subr.mxu0 0.0
      %3363 = vmatpush1.msra.mxu0 %v3311
      %3364 = vmatprep.subr.mxu0 0.0
      %3365 = vmatpush1.msra.mxu0 %v3310
      %3366 = vmatprep.subr.mxu0 0.0
      %3367 = vmatpush1.msra.mxu0 %v3309
      %3368 = vmatprep.subr.mxu0 0.0
      %3369 = vmatpush2.msra.mxu0 0.0
      %3370 = vmatprep.subr.mxu0 0.0
      %3371 = vmatpush2.msra.mxu0 0.0
      %3372 = vmatprep.subr.mxu0 0.0
      %3373 = vmatpush2.msra.mxu0 0.0
      %3374 = vmatprep.subr.mxu0 0.0
      %3375 = vmatpush2.msra.mxu0 0.0
      %3376 = vmatprep.subr.mxu0 0.0
      %3377 = vmatpush2.msra.mxu0 0.0
      %3378 = vmatprep.subr.mxu0 0.0
      %3379 = vmatpush2.msra.mxu0 0.0
      %3380 = vmatprep.subr.mxu0 0.0
      %3381 = vmatpush2.msra.mxu0 0.0
      %3382 = vmatprep.subr.mxu0 0.0
      %3383 = vmatpush2.msra.mxu0 0.0
      %3384 = vmatprep.subr.mxu0 0.0
      %3385 = vmatpush2.msra.mxu0 0.0
      %3386 = vmatprep.subr.mxu0 0.0
      %3387 = vmatpush2.msra.mxu0 0.0
      %3388 = vmatprep.subr.mxu0 0.0
      %3389 = vmatpush2.msra.mxu0 0.0
      %3390 = vmatprep.subr.mxu0 0.0
      %3391 = vmatpush2.msra.mxu0 0.0
      %3392 = vmatprep.subr.mxu0 0.0
      %3393 = vmatpush2.msra.mxu0 0.0
      %3394 = vmatprep.subr.mxu0 0.0
      %3395 = vmatpush2.msra.mxu0 0.0
      %3396 = vmatprep.subr.mxu0 0.0
      %3397 = vmatpush2.msra.mxu0 0.0
      %3398 = vmatprep.subr.mxu0 0.0
      %3399 = vmatpush2.msra.mxu0 0.0
      %3400 = vmatprep.mubr.f32.mxu0 0.0
      %3401 = vmatmul.mubr.f32.gmra.mxu0 %v3331
      %v3402 = vpop.f32.mrf.mxu0
      %v3403 = vadd.f32 %v3328, %v3402
      %v3404 = vpop.f32.mrf.mxu0
      %3405 = vmatprep.mubr.f32.mxu0 0.0
      %3406 = vmatmul.mubr.f32.gmra.mxu0 %v3334
      %v3407 = vpop.f32.mrf.mxu0
      %v3408 = vadd.f32 %v3328, %v3407
      %v3409 = vpop.f32.mrf.mxu0
      %3410 = vdwg.mxu0
      %v3411 = vmax.f32 %v3403, 0.0
      %v3412 = vmax.f32 %v3408, 0.0
      %v3413 = vlaneseq
      %v3414 = vshrl.u32 %v3413, 7
      %v3415 = vsub.s32 4, %v3414
      %v3416 = vrot.slane %v2071, %v3415
      %v3418 = vsel %vm1948, %v3411, 0
      %v3421 = vsel %vm1948, %v3412, 0
      %3423 = vmatprep.subr.mxu0 0.0
      %3424 = vmatpush1.msra.mxu0 0.0
      %3425 = vmatprep.subr.mxu0 0.0
      %3426 = vmatpush1.msra.mxu0 0.0
      %3427 = vmatprep.subr.mxu0 0.0
      %3428 = vmatpush1.msra.mxu0 0.0
      %3429 = vmatprep.subr.mxu0 0.0
      %3430 = vmatpush1.msra.mxu0 0.0
      %3431 = vmatprep.subr.mxu0 0.0
      %3432 = vmatpush1.msra.mxu0 0.0
      %3433 = vmatprep.subr.mxu0 0.0
      %3434 = vmatpush1.msra.mxu0 0.0
      %3435 = vmatprep.subr.mxu0 0.0
      %3436 = vmatpush1.msra.mxu0 0.0
      %3437 = vmatprep.subr.mxu0 0.0
      %3438 = vmatpush1.msra.mxu0 0.0
      %3439 = vmatprep.subr.mxu0 0.0
      %3440 = vmatpush1.msra.mxu0 %v3323
      %3441 = vmatprep.subr.mxu0 0.0
      %3442 = vmatpush1.msra.mxu0 %v3322
      %3443 = vmatprep.subr.mxu0 0.0
      %3444 = vmatpush1.msra.mxu0 %v3321
      %3445 = vmatprep.subr.mxu0 0.0
      %3446 = vmatpush1.msra.mxu0 %v3320
      %3447 = vmatprep.subr.mxu0 0.0
      %3448 = vmatpush1.msra.mxu0 %v3319
      %3449 = vmatprep.subr.mxu0 0.0
      %3450 = vmatpush1.msra.mxu0 %v3318
      %3451 = vmatprep.subr.mxu0 0.0
      %3452 = vmatpush1.msra.mxu0 %v3317
      %3453 = vmatprep.subr.mxu0 0.0
      %3454 = vmatpush1.msra.mxu0 %v3316
      %3455 = vmatprep.subr.mxu0 0.0
      %3456 = vmatpush2.msra.mxu0 0.0
      %3457 = vmatprep.subr.mxu0 0.0
      %3458 = vmatpush2.msra.mxu0 0.0
      %3459 = vmatprep.subr.mxu0 0.0
      %3460 = vmatpush2.msra.mxu0 0.0
      %3461 = vmatprep.subr.mxu0 0.0
      %3462 = vmatpush2.msra.mxu0 0.0
      %3463 = vmatprep.subr.mxu0 0.0
      %3464 = vmatpush2.msra.mxu0 0.0
      %3465 = vmatprep.subr.mxu0 0.0
      %3466 = vmatpush2.msra.mxu0 0.0
      %3467 = vmatprep.subr.mxu0 0.0
      %3468 = vmatpush2.msra.mxu0 0.0
      %3469 = vmatprep.subr.mxu0 0.0
      %3470 = vmatpush2.msra.mxu0 0.0
      %3471 = vmatprep.subr.mxu0 0.0
      %3472 = vmatpush2.msra.mxu0 0.0
      %3473 = vmatprep.subr.mxu0 0.0
      %3474 = vmatpush2.msra.mxu0 0.0
      %3475 = vmatprep.subr.mxu0 0.0
      %3476 = vmatpush2.msra.mxu0 0.0
      %3477 = vmatprep.subr.mxu0 0.0
      %3478 = vmatpush2.msra.mxu0 0.0
      %3479 = vmatprep.subr.mxu0 0.0
      %3480 = vmatpush2.msra.mxu0 0.0
      %3481 = vmatprep.subr.mxu0 0.0
      %3482 = vmatpush2.msra.mxu0 0.0
      %3483 = vmatprep.subr.mxu0 0.0
      %3484 = vmatpush2.msra.mxu0 0.0
      %3485 = vmatprep.subr.mxu0 0.0
      %3486 = vmatpush2.msra.mxu0 0.0
      %3487 = vmatprep.mubr.f32.mxu0 0.0
      %3488 = vmatmul.mubr.f32.gmra.mxu0 %v3418
      %v3489 = vpop.f32.mrf.mxu0
      %v3490 = vadd.f32 %v3416, %v3489
      %v3491 = vpop.f32.mrf.mxu0
      %3492 = vmatprep.mubr.f32.mxu0 0.0
      %3493 = vmatmul.mubr.f32.gmra.mxu0 %v3421
      %v3494 = vpop.f32.mrf.mxu0
      %v3495 = vadd.f32 %v3416, %v3494
      %v3496 = vpop.f32.mrf.mxu0
      %3497 = vdwg.mxu0
      %v3498 = vadd.f32 %v3306, %v3490
      %v3499 = vadd.f32 %v3307, %v3495
      %v3500 = vsel %vm613, %v3498, 0.0
      %3501 = vadd.xlane.f32.xlu0 %v3500
      %v3502 = vpop.xlane.xlu0 %3501
      %v3503 = vsel %vm613, %v3499, 0.0
      %3504 = vadd.xlane.f32.xlu0 %v3503
      %v3505 = vpop.xlane.xlu0 %3504
      %v3506 = vmul.f32 %v3502, %v1809
      %v3507 = vmul.f32 %v3505, %v1809
      %v3508 = vsub.f32 %v3498, %v3506
      %v3509 = vsub.f32 %v3499, %v3507
      %v3510 = vmul.f32 %v3508, %v3508
      %v3511 = vmul.f32 %v3509, %v3509
      %v3512 = vsel %vm613, %v3510, 0.0
      %3513 = vadd.xlane.f32.xlu0 %v3512
      %v3514 = vpop.xlane.xlu0 %3513
      %v3515 = vsel %vm613, %v3511, 0.0
      %3516 = vadd.xlane.f32.xlu0 %v3515
      %v3517 = vpop.xlane.xlu0 %3516
      %v3518 = vmul.f32 %v3514, %v1809
      %v3519 = vmul.f32 %v3517, %v1809
      %v3520 = vadd.f32 %v3518, 1e-05
      %v3521 = vadd.f32 %v3519, 1e-05
      %v3522 = vrsqrt.pop %v3520
      %v3523 = vrsqrt.pop %v3521
      %v3524 = vmul.f32 %v3508, %v3522
      %v3525 = vmul.f32 %v3509, %v3523
      %v3526 = vlaneseq
      %v3527 = vshrl.u32 %v3526, 7
      %v3528 = vsub.s32 7, %v3527
      %v3529 = vrot.slane %v2071, %v3528
      %v3530 = vmul.f32 %v3524, %v3529
      %v3531 = vmul.f32 %v3525, %v3529
      %v3532 = vlaneseq
      %v3533 = vshrl.u32 %v3532, 7
      %v3534 = vsub.s32 0, %v3533
      %v3535 = vrot.slane %v2072, %v3534
      %v3536 = vadd.f32 %v3530, %v3535
      %v3537 = vadd.f32 %v3531, %v3535
      %v3538 = vsel %vm613, %v3536, 0.0
      %3539 = vadd.xlane.f32.xlu0 %v3538
      %v3540 = vpop.xlane.xlu0 %3539
      %v3541 = vsel %vm613, %v3537, 0.0
      %3542 = vadd.xlane.f32.xlu0 %v3541
      %v3543 = vpop.xlane.xlu0 %3542
      %v3544 = vmul.f32 %v3540, %v1809
      %v3545 = vmul.f32 %v3543, %v1809
      %v3546 = vsub.f32 %v3536, %v3544
      %v3547 = vsub.f32 %v3537, %v3545
      %v3548 = vmul.f32 %v3546, %v3546
      %v3549 = vmul.f32 %v3547, %v3547
      %v3550 = vsel %vm613, %v3548, 0.0
      %3551 = vadd.xlane.f32.xlu0 %v3550
      %v3552 = vpop.xlane.xlu0 %3551
      %v3553 = vsel %vm613, %v3549, 0.0
      %3554 = vadd.xlane.f32.xlu0 %v3553
      %v3555 = vpop.xlane.xlu0 %3554
      %v3556 = vmul.f32 %v3552, %v1809
      %v3557 = vmul.f32 %v3555, %v1809
      %v3558 = vadd.f32 %v3556, 1e-05
      %v3559 = vadd.f32 %v3557, 1e-05
      %v3560 = vrsqrt.pop %v3558
      %v3561 = vrsqrt.pop %v3559
      %v3562 = vmul.f32 %v3546, %v3560
      %v3563 = vmul.f32 %v3547, %v3561
      %v3564 = vlaneseq
      %v3565 = vshrl.u32 %v3564, 7
      %v3566 = vsub.s32 0, %v3565
      %v3567 = vrot.slane %v482, %v3566
      %v3568 = vmul.f32 %v3562, %v3567
      %v3569 = vmul.f32 %v3563, %v3567
      %v3570 = vlaneseq
      %v3571 = vshrl.u32 %v3570, 7
      %v3572 = vsub.s32 1, %v3571
      %v3573 = vrot.slane %v482, %v3572
      %v3574 = vadd.f32 %v3568, %v3573
      %v3575 = vadd.f32 %v3569, %v3573
      %3576 = vrot.lane.b32.xlu0 %v1181, 16
      %v3577 = vpop.permute.xlu0 %3576
      %3578 = vrot.lane.b32.xlu0 %v1183, 16
      %v3579 = vpop.permute.xlu0 %3578
      %3582 = vrot.lane.b32.xlu0 %v1383, 32
      %v3583 = vpop.permute.xlu0 %3582
      %3584 = vrot.lane.b32.xlu0 %v1385, 32
      %v3585 = vpop.permute.xlu0 %3584
      %3588 = vrot.lane.b32.xlu0 %v1583, 48
      %v3589 = vpop.permute.xlu0 %3588
      %3590 = vrot.lane.b32.xlu0 %v1585, 48
      %v3591 = vpop.permute.xlu0 %3590
      %3594 = vrot.lane.b32.xlu0 %v2455, 64
      %v3595 = vpop.permute.xlu0 %3594
      %3596 = vrot.lane.b32.xlu0 %v2457, 64
      %v3597 = vpop.permute.xlu0 %3596
      %3600 = vrot.lane.b32.xlu0 %v2649, 80
      %v3601 = vpop.permute.xlu0 %3600
      %3602 = vrot.lane.b32.xlu0 %v2651, 80
      %v3603 = vpop.permute.xlu0 %3602
      %3606 = vrot.lane.b32.xlu0 %v2851, 96
      %v3607 = vpop.permute.xlu0 %3606
      %3608 = vrot.lane.b32.xlu0 %v2853, 96
      %v3609 = vpop.permute.xlu0 %3608
      %3612 = vrot.lane.b32.xlu0 %v3051, 112
      %v3613 = vpop.permute.xlu0 %3612
      %3614 = vrot.lane.b32.xlu0 %v3053, 112
      %v3615 = vpop.permute.xlu0 %3614
      %v3618 = vsel %vm521, %v987, %v3577
      %v3619 = vsel %vm521, %v989, %v3579
      %v3620 = vsel %vm613, %v3618, %v3583
      %v3621 = vsel %vm613, %v3619, %v3585
      %vm3622 = vcmask 392192
      %v3623 = vsel %vm3622, %v3620, %v3589
      %v3624 = vsel %vm3622, %v3621, %v3591
      %v3625 = vsel %vm1948, %v3623, %v3595
      %v3626 = vsel %vm1948, %v3624, %v3597
      %vm3627 = vcmask 654336
      %v3628 = vsel %vm3627, %v3625, %v3601
      %v3629 = vsel %vm3627, %v3626, %v3603
      %vm3630 = vcmask 785408
      %v3631 = vsel %vm3630, %v3628, %v3607
      %v3632 = vsel %vm3630, %v3629, %v3609
      %vm3633 = vcmask 916480
      %v3634 = vsel %vm3633, %v3631, %v3613
      %v3635 = vsel %vm3633, %v3632, %v3615
      %3636 = vst [vmem:[%s473] sm:$0xff] %v3634
      %3637 = vst [vmem:[%s473 + $0x8] sm:$0xff] %v3635
      %v3638 = vld [vmem:[%s463] sm:$0xff]
      %v3639 = vld [vmem:[%s463 + $0x8] sm:$0xff]
      %v3641 = vrot.slane %v3639, 7
      %v3644 = vrot.slane %v3638, 7
      %v3645 = vsel %vm489, %v3644, %v3641
      %v3647 = vsel %vm489, %v3641, %v3644
      %v3648 = vrot.slane %v3638, 1
      %v3649 = vrot.slane %v3639, 1
      %v3650 = vsel %vm494, %v3648, %v3649
      %v3653 = vsel %vm494, %v3649, %v3648
      %3655 = vrot.lane.b32.xlu0 %v3647, 8
      %v3656 = vpop.permute.xlu0 %3655
      %3657 = vrot.lane.b32.xlu0 %v3645, 8
      %v3658 = vpop.permute.xlu0 %3657
      %3662 = vrot.lane.b32.xlu0 %v3650, 12
      %v3663 = vpop.permute.xlu0 %3662
      %3664 = vrot.lane.b32.xlu0 %v3653, 12
      %v3665 = vpop.permute.xlu0 %3664
      %v3668 = vsel %vm515, %v3638, %v3656
      %v3669 = vsel %vm515, %v3639, %v3658
      %v3670 = vsel %vm518, %v3668, %v3663
      %v3671 = vsel %vm518, %v3669, %v3665
      %v3673 = vsel %vm521, %v3670, 0
      %v3676 = vsel %vm521, %v3671, 0
      %3678 = vmatprep.subr.mxu0 0.0
      %3679 = vmatpush1.msra.mxu0 0.0
      %3680 = vmatprep.subr.mxu0 0.0
      %3681 = vmatpush1.msra.mxu0 0.0
      %3682 = vmatprep.subr.mxu0 0.0
      %3683 = vmatpush1.msra.mxu0 0.0
      %3684 = vmatprep.subr.mxu0 0.0
      %3685 = vmatpush1.msra.mxu0 0.0
      %3686 = vmatprep.subr.mxu0 0.0
      %3687 = vmatpush1.msra.mxu0 0.0
      %3688 = vmatprep.subr.mxu0 0.0
      %3689 = vmatpush1.msra.mxu0 0.0
      %3690 = vmatprep.subr.mxu0 0.0
      %3691 = vmatpush1.msra.mxu0 0.0
      %3692 = vmatprep.subr.mxu0 0.0
      %3693 = vmatpush1.msra.mxu0 0.0
      %3694 = vmatprep.subr.mxu0 0.0
      %3695 = vmatpush1.msra.mxu0 0.0
      %3696 = vmatprep.subr.mxu0 0.0
      %3697 = vmatpush1.msra.mxu0 0.0
      %3698 = vmatprep.subr.mxu0 0.0
      %3699 = vmatpush1.msra.mxu0 0.0
      %3700 = vmatprep.subr.mxu0 0.0
      %3701 = vmatpush1.msra.mxu0 0.0
      %3702 = vmatprep.subr.mxu0 0.0
      %3703 = vmatpush1.msra.mxu0 0.0
      %3704 = vmatprep.subr.mxu0 0.0
      %3705 = vmatpush1.msra.mxu0 0.0
      %3706 = vmatprep.subr.mxu0 0.0
      %3707 = vmatpush1.msra.mxu0 %v481
      %3708 = vmatprep.subr.mxu0 0.0
      %3709 = vmatpush1.msra.mxu0 %v480
      %3710 = vmatprep.subr.mxu0 0.0
      %3711 = vmatpush2.msra.mxu0 0.0
      %3712 = vmatprep.subr.mxu0 0.0
      %3713 = vmatpush2.msra.mxu0 0.0
      %3714 = vmatprep.subr.mxu0 0.0
      %3715 = vmatpush2.msra.mxu0 0.0
      %3716 = vmatprep.subr.mxu0 0.0
      %3717 = vmatpush2.msra.mxu0 0.0
      %3718 = vmatprep.subr.mxu0 0.0
      %3719 = vmatpush2.msra.mxu0 0.0
      %3720 = vmatprep.subr.mxu0 0.0
      %3721 = vmatpush2.msra.mxu0 0.0
      %3722 = vmatprep.subr.mxu0 0.0
      %3723 = vmatpush2.msra.mxu0 0.0
      %3724 = vmatprep.subr.mxu0 0.0
      %3725 = vmatpush2.msra.mxu0 0.0
      %3726 = vmatprep.subr.mxu0 0.0
      %3727 = vmatpush2.msra.mxu0 0.0
      %3728 = vmatprep.subr.mxu0 0.0
      %3729 = vmatpush2.msra.mxu0 0.0
      %3730 = vmatprep.subr.mxu0 0.0
      %3731 = vmatpush2.msra.mxu0 0.0
      %3732 = vmatprep.subr.mxu0 0.0
      %3733 = vmatpush2.msra.mxu0 0.0
      %3734 = vmatprep.subr.mxu0 0.0
      %3735 = vmatpush2.msra.mxu0 0.0
      %3736 = vmatprep.subr.mxu0 0.0
      %3737 = vmatpush2.msra.mxu0 0.0
      %3738 = vmatprep.subr.mxu0 0.0
      %3739 = vmatpush2.msra.mxu0 0.0
      %3740 = vmatprep.subr.mxu0 0.0
      %3741 = vmatpush2.msra.mxu0 0.0
      %3742 = vmatprep.mubr.f32.mxu0 0.0
      %3743 = vmatmul.mubr.f32.gmra.mxu0 %v3673
      %v3744 = vpop.f32.mrf.mxu0
      %v3745 = vadd.f32 %v476, %v3744
      %v3746 = vpop.f32.mrf.mxu0
      %3747 = vmatprep.mubr.f32.mxu0 0.0
      %3748 = vmatmul.mubr.f32.gmra.mxu0 %v3676
      %v3749 = vpop.f32.mrf.mxu0
      %v3750 = vadd.f32 %v477, %v3749
      %v3751 = vpop.f32.mrf.mxu0
      %3752 = vdwg.mxu0
      %v3753 = vlaneseq
      %v3754 = vshrl.u32 %v3753, 7
      %v3755 = vadd.s32 %v3754, 8
      %v3756 = vlaneseq
      %v3757 = vand.u32 %v3756, 127
      %vm3758 = vcmp.gt.s32.totalorder %v3757, %v3754
      %vm3759 = vcmp.gt.s32.totalorder %v3757, %v3755
      %v3760 = vsel %vm3758, -1e+30, 0.0
      %v3761 = vsel %vm3759, -1e+30, 0.0
      %v3762 = vld [vmem:[%s9] sm:$0xff]
      %v3763 = vld [vmem:[%s9 + $0x8] sm:$0x7f]
      %s3764 = scalar_lea.vmem %s4, 64
      %v3765 = vld [vmem:[%s3764] sm:$0xff]
      %v3766 = vld [vmem:[%s3764 + $0x8] sm:$0xff]
      %v3767 = vld [vmem:[%s3764 + $0x10] sm:$0xff]
      %v3768 = vld [vmem:[%s3764 + $0x18] sm:$0xff]
      %v3769 = vlaneseq
      %v3770 = vshrl.u32 %v3769, 7
      %v3771 = vsub.s32 0, %v3770
      %v3772 = vrot.slane %v3762, %v3771
      %v3774 = vsel %vm613, %v3745, 0
      %v3777 = vsel %vm613, %v3750, 0
      %3779 = vmatprep.subr.mxu0 0.0
      %3780 = vmatpush1.msra.mxu0 0.0
      %3781 = vmatprep.subr.mxu0 0.0
      %3782 = vmatpush1.msra.mxu0 0.0
      %3783 = vmatprep.subr.mxu0 0.0
      %3784 = vmatpush1.msra.mxu0 0.0
      %3785 = vmatprep.subr.mxu0 0.0
      %3786 = vmatpush1.msra.mxu0 0.0
      %3787 = vmatprep.subr.mxu0 0.0
      %3788 = vmatpush1.msra.mxu0 0.0
      %3789 = vmatprep.subr.mxu0 0.0
      %3790 = vmatpush1.msra.mxu0 0.0
      %3791 = vmatprep.subr.mxu0 0.0
      %3792 = vmatpush1.msra.mxu0 0.0
      %3793 = vmatprep.subr.mxu0 0.0
      %3794 = vmatpush1.msra.mxu0 0.0
      %3795 = vmatprep.subr.mxu0 0.0
      %3796 = vmatpush1.msra.mxu0 0.0
      %3797 = vmatprep.subr.mxu0 0.0
      %3798 = vmatpush1.msra.mxu0 0.0
      %3799 = vmatprep.subr.mxu0 0.0
      %3800 = vmatpush1.msra.mxu0 0.0
      %3801 = vmatprep.subr.mxu0 0.0
      %3802 = vmatpush1.msra.mxu0 0.0
      %3803 = vmatprep.subr.mxu0 0.0
      %3804 = vmatpush1.msra.mxu0 %v3768
      %3805 = vmatprep.subr.mxu0 0.0
      %3806 = vmatpush1.msra.mxu0 %v3767
      %3807 = vmatprep.subr.mxu0 0.0
      %3808 = vmatpush1.msra.mxu0 %v3766
      %3809 = vmatprep.subr.mxu0 0.0
      %3810 = vmatpush1.msra.mxu0 %v3765
      %3811 = vmatprep.subr.mxu0 0.0
      %3812 = vmatpush2.msra.mxu0 0.0
      %3813 = vmatprep.subr.mxu0 0.0
      %3814 = vmatpush2.msra.mxu0 0.0
      %3815 = vmatprep.subr.mxu0 0.0
      %3816 = vmatpush2.msra.mxu0 0.0
      %3817 = vmatprep.subr.mxu0 0.0
      %3818 = vmatpush2.msra.mxu0 0.0
      %3819 = vmatprep.subr.mxu0 0.0
      %3820 = vmatpush2.msra.mxu0 0.0
      %3821 = vmatprep.subr.mxu0 0.0
      %3822 = vmatpush2.msra.mxu0 0.0
      %3823 = vmatprep.subr.mxu0 0.0
      %3824 = vmatpush2.msra.mxu0 0.0
      %3825 = vmatprep.subr.mxu0 0.0
      %3826 = vmatpush2.msra.mxu0 0.0
      %3827 = vmatprep.subr.mxu0 0.0
      %3828 = vmatpush2.msra.mxu0 0.0
      %3829 = vmatprep.subr.mxu0 0.0
      %3830 = vmatpush2.msra.mxu0 0.0
      %3831 = vmatprep.subr.mxu0 0.0
      %3832 = vmatpush2.msra.mxu0 0.0
      %3833 = vmatprep.subr.mxu0 0.0
      %3834 = vmatpush2.msra.mxu0 0.0
      %3835 = vmatprep.subr.mxu0 0.0
      %3836 = vmatpush2.msra.mxu0 0.0
      %3837 = vmatprep.subr.mxu0 0.0
      %3838 = vmatpush2.msra.mxu0 0.0
      %3839 = vmatprep.subr.mxu0 0.0
      %3840 = vmatpush2.msra.mxu0 0.0
      %3841 = vmatprep.subr.mxu0 0.0
      %3842 = vmatpush2.msra.mxu0 0.0
      %3843 = vmatprep.mubr.f32.mxu0 0.0
      %3844 = vmatmul.mubr.f32.gmra.mxu0 %v3774
      %v3845 = vpop.f32.mrf.mxu0
      %v3846 = vadd.f32 %v3772, %v3845
      %v3847 = vpop.f32.mrf.mxu0
      %3848 = vmatprep.mubr.f32.mxu0 0.0
      %3849 = vmatmul.mubr.f32.gmra.mxu0 %v3777
      %v3850 = vpop.f32.mrf.mxu0
      %v3851 = vadd.f32 %v3772, %v3850
      %v3852 = vpop.f32.mrf.mxu0
      %3853 = vdwg.mxu0
      %v3854 = vlaneseq
      %v3855 = vshrl.u32 %v3854, 7
      %v3856 = vsub.s32 1, %v3855
      %v3857 = vrot.slane %v3762, %v3856
      %3862 = vrot.lane.b32.xlu0 %v3765, 96
      %v3863 = vpop.permute.xlu0 %3862
      %3864 = vrot.lane.b32.xlu0 %v3766, 96
      %v3865 = vpop.permute.xlu0 %3864
      %3866 = vrot.lane.b32.xlu0 %v3767, 96
      %v3867 = vpop.permute.xlu0 %3866
      %3868 = vrot.lane.b32.xlu0 %v3768, 96
      %v3869 = vpop.permute.xlu0 %3868
      %3874 = vmatprep.subr.mxu0 0.0
      %3875 = vmatpush1.msra.mxu0 0.0
      %3876 = vmatprep.subr.mxu0 0.0
      %3877 = vmatpush1.msra.mxu0 0.0
      %3878 = vmatprep.subr.mxu0 0.0
      %3879 = vmatpush1.msra.mxu0 0.0
      %3880 = vmatprep.subr.mxu0 0.0
      %3881 = vmatpush1.msra.mxu0 0.0
      %3882 = vmatprep.subr.mxu0 0.0
      %3883 = vmatpush1.msra.mxu0 0.0
      %3884 = vmatprep.subr.mxu0 0.0
      %3885 = vmatpush1.msra.mxu0 0.0
      %3886 = vmatprep.subr.mxu0 0.0
      %3887 = vmatpush1.msra.mxu0 0.0
      %3888 = vmatprep.subr.mxu0 0.0
      %3889 = vmatpush1.msra.mxu0 0.0
      %3890 = vmatprep.subr.mxu0 0.0
      %3891 = vmatpush1.msra.mxu0 0.0
      %3892 = vmatprep.subr.mxu0 0.0
      %3893 = vmatpush1.msra.mxu0 0.0
      %3894 = vmatprep.subr.mxu0 0.0
      %3895 = vmatpush1.msra.mxu0 0.0
      %3896 = vmatprep.subr.mxu0 0.0
      %3897 = vmatpush1.msra.mxu0 0.0
      %3898 = vmatprep.subr.mxu0 0.0
      %3899 = vmatpush1.msra.mxu0 %v3869
      %3900 = vmatprep.subr.mxu0 0.0
      %3901 = vmatpush1.msra.mxu0 %v3867
      %3902 = vmatprep.subr.mxu0 0.0
      %3903 = vmatpush1.msra.mxu0 %v3865
      %3904 = vmatprep.subr.mxu0 0.0
      %3905 = vmatpush1.msra.mxu0 %v3863
      %3906 = vmatprep.subr.mxu0 0.0
      %3907 = vmatpush2.msra.mxu0 0.0
      %3908 = vmatprep.subr.mxu0 0.0
      %3909 = vmatpush2.msra.mxu0 0.0
      %3910 = vmatprep.subr.mxu0 0.0
      %3911 = vmatpush2.msra.mxu0 0.0
      %3912 = vmatprep.subr.mxu0 0.0
      %3913 = vmatpush2.msra.mxu0 0.0
      %3914 = vmatprep.subr.mxu0 0.0
      %3915 = vmatpush2.msra.mxu0 0.0
      %3916 = vmatprep.subr.mxu0 0.0
      %3917 = vmatpush2.msra.mxu0 0.0
      %3918 = vmatprep.subr.mxu0 0.0
      %3919 = vmatpush2.msra.mxu0 0.0
      %3920 = vmatprep.subr.mxu0 0.0
      %3921 = vmatpush2.msra.mxu0 0.0
      %3922 = vmatprep.subr.mxu0 0.0
      %3923 = vmatpush2.msra.mxu0 0.0
      %3924 = vmatprep.subr.mxu0 0.0
      %3925 = vmatpush2.msra.mxu0 0.0
      %3926 = vmatprep.subr.mxu0 0.0
      %3927 = vmatpush2.msra.mxu0 0.0
      %3928 = vmatprep.subr.mxu0 0.0
      %3929 = vmatpush2.msra.mxu0 0.0
      %3930 = vmatprep.subr.mxu0 0.0
      %3931 = vmatpush2.msra.mxu0 0.0
      %3932 = vmatprep.subr.mxu0 0.0
      %3933 = vmatpush2.msra.mxu0 0.0
      %3934 = vmatprep.subr.mxu0 0.0
      %3935 = vmatpush2.msra.mxu0 0.0
      %3936 = vmatprep.subr.mxu0 0.0
      %3937 = vmatpush2.msra.mxu0 0.0
      %3938 = vmatprep.mubr.f32.mxu0 0.0
      %3939 = vmatmul.mubr.f32.gmra.mxu0 %v3774
      %v3940 = vpop.f32.mrf.mxu0
      %v3941 = vadd.f32 %v3857, %v3940
      %v3942 = vpop.f32.mrf.mxu0
      %3943 = vmatprep.mubr.f32.mxu0 0.0
      %3944 = vmatmul.mubr.f32.gmra.mxu0 %v3777
      %v3945 = vpop.f32.mrf.mxu0
      %v3946 = vadd.f32 %v3857, %v3945
      %v3947 = vpop.f32.mrf.mxu0
      %3948 = vdwg.mxu0
      %v3949 = vlaneseq
      %v3950 = vshrl.u32 %v3949, 7
      %v3951 = vsub.s32 2, %v3950
      %v3952 = vrot.slane %v3762, %v3951
      %3953 = vrot.lane.b32.xlu0 %v3765, 64
      %v3954 = vpop.permute.xlu0 %3953
      %3955 = vrot.lane.b32.xlu0 %v3766, 64
      %v3956 = vpop.permute.xlu0 %3955
      %3957 = vrot.lane.b32.xlu0 %v3767, 64
      %v3958 = vpop.permute.xlu0 %3957
      %3959 = vrot.lane.b32.xlu0 %v3768, 64
      %v3960 = vpop.permute.xlu0 %3959
      %3965 = vmatprep.subr.mxu0 0.0
      %3966 = vmatpush1.msra.mxu0 0.0
      %3967 = vmatprep.subr.mxu0 0.0
      %3968 = vmatpush1.msra.mxu0 0.0
      %3969 = vmatprep.subr.mxu0 0.0
      %3970 = vmatpush1.msra.mxu0 0.0
      %3971 = vmatprep.subr.mxu0 0.0
      %3972 = vmatpush1.msra.mxu0 0.0
      %3973 = vmatprep.subr.mxu0 0.0
      %3974 = vmatpush1.msra.mxu0 0.0
      %3975 = vmatprep.subr.mxu0 0.0
      %3976 = vmatpush1.msra.mxu0 0.0
      %3977 = vmatprep.subr.mxu0 0.0
      %3978 = vmatpush1.msra.mxu0 0.0
      %3979 = vmatprep.subr.mxu0 0.0
      %3980 = vmatpush1.msra.mxu0 0.0
      %3981 = vmatprep.subr.mxu0 0.0
      %3982 = vmatpush1.msra.mxu0 0.0
      %3983 = vmatprep.subr.mxu0 0.0
      %3984 = vmatpush1.msra.mxu0 0.0
      %3985 = vmatprep.subr.mxu0 0.0
      %3986 = vmatpush1.msra.mxu0 0.0
      %3987 = vmatprep.subr.mxu0 0.0
      %3988 = vmatpush1.msra.mxu0 0.0
      %3989 = vmatprep.subr.mxu0 0.0
      %3990 = vmatpush1.msra.mxu0 %v3960
      %3991 = vmatprep.subr.mxu0 0.0
      %3992 = vmatpush1.msra.mxu0 %v3958
      %3993 = vmatprep.subr.mxu0 0.0
      %3994 = vmatpush1.msra.mxu0 %v3956
      %3995 = vmatprep.subr.mxu0 0.0
      %3996 = vmatpush1.msra.mxu0 %v3954
      %3997 = vmatprep.subr.mxu0 0.0
      %3998 = vmatpush2.msra.mxu0 0.0
      %3999 = vmatprep.subr.mxu0 0.0
      %4000 = vmatpush2.msra.mxu0 0.0
      %4001 = vmatprep.subr.mxu0 0.0
      %4002 = vmatpush2.msra.mxu0 0.0
      %4003 = vmatprep.subr.mxu0 0.0
      %4004 = vmatpush2.msra.mxu0 0.0
      %4005 = vmatprep.subr.mxu0 0.0
      %4006 = vmatpush2.msra.mxu0 0.0
      %4007 = vmatprep.subr.mxu0 0.0
      %4008 = vmatpush2.msra.mxu0 0.0
      %4009 = vmatprep.subr.mxu0 0.0
      %4010 = vmatpush2.msra.mxu0 0.0
      %4011 = vmatprep.subr.mxu0 0.0
      %4012 = vmatpush2.msra.mxu0 0.0
      %4013 = vmatprep.subr.mxu0 0.0
      %4014 = vmatpush2.msra.mxu0 0.0
      %4015 = vmatprep.subr.mxu0 0.0
      %4016 = vmatpush2.msra.mxu0 0.0
      %4017 = vmatprep.subr.mxu0 0.0
      %4018 = vmatpush2.msra.mxu0 0.0
      %4019 = vmatprep.subr.mxu0 0.0
      %4020 = vmatpush2.msra.mxu0 0.0
      %4021 = vmatprep.subr.mxu0 0.0
      %4022 = vmatpush2.msra.mxu0 0.0
      %4023 = vmatprep.subr.mxu0 0.0
      %4024 = vmatpush2.msra.mxu0 0.0
      %4025 = vmatprep.subr.mxu0 0.0
      %4026 = vmatpush2.msra.mxu0 0.0
      %4027 = vmatprep.subr.mxu0 0.0
      %4028 = vmatpush2.msra.mxu0 0.0
      %4029 = vmatprep.mubr.f32.mxu0 0.0
      %4030 = vmatmul.mubr.f32.gmra.mxu0 %v3774
      %v4031 = vpop.f32.mrf.mxu0
      %v4032 = vadd.f32 %v3952, %v4031
      %v4033 = vpop.f32.mrf.mxu0
      %4034 = vmatprep.mubr.f32.mxu0 0.0
      %4035 = vmatmul.mubr.f32.gmra.mxu0 %v3777
      %v4036 = vpop.f32.mrf.mxu0
      %v4037 = vadd.f32 %v3952, %v4036
      %v4038 = vpop.f32.mrf.mxu0
      %4039 = vdwg.mxu0
      %v4041 = vsel %vm515, %v3846, 0
      %v4044 = vsel %vm515, %v3851, 0
      %v4047 = vsel %vm515, %v3941, 0
      %v4050 = vsel %vm515, %v3946, 0
      %4052 = vmatprep.subr.mxu0 0.0
      %4053 = vmatpush1.xpose.msra.mxu0 0.0
      %4054 = vmatprep.subr.mxu0 0.0
      %4055 = vmatpush1.xpose.msra.mxu0 0.0
      %4056 = vmatprep.subr.mxu0 0.0
      %4057 = vmatpush1.xpose.msra.mxu0 0.0
      %4058 = vmatprep.subr.mxu0 0.0
      %4059 = vmatpush1.xpose.msra.mxu0 0.0
      %4060 = vmatprep.subr.mxu0 0.0
      %4061 = vmatpush1.xpose.msra.mxu0 0.0
      %4062 = vmatprep.subr.mxu0 0.0
      %4063 = vmatpush1.xpose.msra.mxu0 0.0
      %4064 = vmatprep.subr.mxu0 0.0
      %4065 = vmatpush1.xpose.msra.mxu0 0.0
      %4066 = vmatprep.subr.mxu0 0.0
      %4067 = vmatpush1.xpose.msra.mxu0 0.0
      %4068 = vmatprep.subr.mxu0 0.0
      %4069 = vmatpush1.xpose.msra.mxu0 0.0
      %4070 = vmatprep.subr.mxu0 0.0
      %4071 = vmatpush1.xpose.msra.mxu0 0.0
      %4072 = vmatprep.subr.mxu0 0.0
      %4073 = vmatpush1.xpose.msra.mxu0 0.0
      %4074 = vmatprep.subr.mxu0 0.0
      %4075 = vmatpush1.xpose.msra.mxu0 0.0
      %4076 = vmatprep.subr.mxu0 0.0
      %4077 = vmatpush1.xpose.msra.mxu0 0.0
      %4078 = vmatprep.subr.mxu0 0.0
      %4079 = vmatpush1.xpose.msra.mxu0 0.0
      %4080 = vmatprep.subr.mxu0 0.0
      %4081 = vmatpush1.xpose.msra.mxu0 %v4050
      %4082 = vmatprep.subr.mxu0 0.0
      %4083 = vmatpush1.xpose.msra.mxu0 %v4047
      %4084 = vmatprep.subr.mxu0 0.0
      %4085 = vmatpush2.xpose.msra.mxu0 0.0
      %4086 = vmatprep.subr.mxu0 0.0
      %4087 = vmatpush2.xpose.msra.mxu0 0.0
      %4088 = vmatprep.subr.mxu0 0.0
      %4089 = vmatpush2.xpose.msra.mxu0 0.0
      %4090 = vmatprep.subr.mxu0 0.0
      %4091 = vmatpush2.xpose.msra.mxu0 0.0
      %4092 = vmatprep.subr.mxu0 0.0
      %4093 = vmatpush2.xpose.msra.mxu0 0.0
      %4094 = vmatprep.subr.mxu0 0.0
      %4095 = vmatpush2.xpose.msra.mxu0 0.0
      %4096 = vmatprep.subr.mxu0 0.0
      %4097 = vmatpush2.xpose.msra.mxu0 0.0
      %4098 = vmatprep.subr.mxu0 0.0
      %4099 = vmatpush2.xpose.msra.mxu0 0.0
      %4100 = vmatprep.subr.mxu0 0.0
      %4101 = vmatpush2.xpose.msra.mxu0 0.0
      %4102 = vmatprep.subr.mxu0 0.0
      %4103 = vmatpush2.xpose.msra.mxu0 0.0
      %4104 = vmatprep.subr.mxu0 0.0
      %4105 = vmatpush2.xpose.msra.mxu0 0.0
      %4106 = vmatprep.subr.mxu0 0.0
      %4107 = vmatpush2.xpose.msra.mxu0 0.0
      %4108 = vmatprep.subr.mxu0 0.0
      %4109 = vmatpush2.xpose.msra.mxu0 0.0
      %4110 = vmatprep.subr.mxu0 0.0
      %4111 = vmatpush2.xpose.msra.mxu0 0.0
      %4112 = vmatprep.subr.mxu0 0.0
      %4113 = vmatpush2.xpose.msra.mxu0 0.0
      %4114 = vmatprep.subr.mxu0 0.0
      %4115 = vmatpush2.xpose.msra.mxu0 0.0
      %4116 = vmatprep.mubr.f32.mxu0 0.0
      %4117 = vmatmul.mubr.f32.gmra.mxu0 %v4041
      %v4118 = vpop.f32.mrf.mxu0
      %v4119 = vadd.f32 %v3760, %v4118
      %v4120 = vpop.f32.mrf.mxu0
      %4121 = vmatprep.mubr.f32.mxu0 0.0
      %4122 = vmatmul.mubr.f32.gmra.mxu0 %v4044
      %v4123 = vpop.f32.mrf.mxu0
      %v4124 = vadd.f32 %v3761, %v4123
      %v4125 = vpop.f32.mrf.mxu0
      %4126 = vdwg.mxu0
      %v4127 = vsel %vm521, %v4119, -inf
      %4128 = vmax.xlane.f32.xlu0 %v4127
      %v4129 = vpop.xlane.xlu0 %4128
      %v4130 = vsel %vm521, %v4124, -inf
      %4131 = vmax.xlane.f32.xlu0 %v4130
      %v4132 = vpop.xlane.xlu0 %4131
      %v4133 = vsub.f32 %v4119, %v4129
      %v4134 = vsub.f32 %v4124, %v4132
      %v4135 = vmul.f32 %v4133, 1.442695
      %v4136 = vpow.pop %v4135
      %v4137 = vmul.f32 %v4134, 1.442695
      %v4138 = vpow.pop %v4137
      %v4139 = vsel %vm521, %v4136, 0.0
      %4140 = vadd.xlane.f32.xlu0 %v4139
      %v4141 = vpop.xlane.xlu0 %4140
      %v4142 = vsel %vm521, %v4138, 0.0
      %4143 = vadd.xlane.f32.xlu0 %v4142
      %v4144 = vpop.xlane.xlu0 %4143
      %v4145 = vrcp.pop %v4141
      %v4146 = vmul.f32 %v4136, %v4145
      %v4147 = vrcp.pop %v4144
      %v4148 = vmul.f32 %v4138, %v4147
      %v4150 = vsel %vm521, %v4146, 0
      %v4153 = vsel %vm521, %v4148, 0
      %4155 = vmatprep.subr.mxu0 0.0
      %4156 = vmatpush1.msra.mxu0 0.0
      %4157 = vmatprep.subr.mxu0 0.0
      %4158 = vmatpush1.msra.mxu0 0.0
      %4159 = vmatprep.subr.mxu0 0.0
      %4160 = vmatpush1.msra.mxu0 0.0
      %4161 = vmatprep.subr.mxu0 0.0
      %4162 = vmatpush1.msra.mxu0 0.0
      %4163 = vmatprep.subr.mxu0 0.0
      %4164 = vmatpush1.msra.mxu0 0.0
      %4165 = vmatprep.subr.mxu0 0.0
      %4166 = vmatpush1.msra.mxu0 0.0
      %4167 = vmatprep.subr.mxu0 0.0
      %4168 = vmatpush1.msra.mxu0 0.0
      %4169 = vmatprep.subr.mxu0 0.0
      %4170 = vmatpush1.msra.mxu0 0.0
      %4171 = vmatprep.subr.mxu0 0.0
      %4172 = vmatpush1.msra.mxu0 0.0
      %4173 = vmatprep.subr.mxu0 0.0
      %4174 = vmatpush1.msra.mxu0 0.0
      %4175 = vmatprep.subr.mxu0 0.0
      %4176 = vmatpush1.msra.mxu0 0.0
      %4177 = vmatprep.subr.mxu0 0.0
      %4178 = vmatpush1.msra.mxu0 0.0
      %4179 = vmatprep.subr.mxu0 0.0
      %4180 = vmatpush1.msra.mxu0 0.0
      %4181 = vmatprep.subr.mxu0 0.0
      %4182 = vmatpush1.msra.mxu0 0.0
      %4183 = vmatprep.subr.mxu0 0.0
      %4184 = vmatpush1.msra.mxu0 %v4037
      %4185 = vmatprep.subr.mxu0 0.0
      %4186 = vmatpush1.msra.mxu0 %v4032
      %4187 = vmatprep.subr.mxu0 0.0
      %4188 = vmatpush2.msra.mxu0 0.0
      %4189 = vmatprep.subr.mxu0 0.0
      %4190 = vmatpush2.msra.mxu0 0.0
      %4191 = vmatprep.subr.mxu0 0.0
      %4192 = vmatpush2.msra.mxu0 0.0
      %4193 = vmatprep.subr.mxu0 0.0
      %4194 = vmatpush2.msra.mxu0 0.0
      %4195 = vmatprep.subr.mxu0 0.0
      %4196 = vmatpush2.msra.mxu0 0.0
      %4197 = vmatprep.subr.mxu0 0.0
      %4198 = vmatpush2.msra.mxu0 0.0
      %4199 = vmatprep.subr.mxu0 0.0
      %4200 = vmatpush2.msra.mxu0 0.0
      %4201 = vmatprep.subr.mxu0 0.0
      %4202 = vmatpush2.msra.mxu0 0.0
      %4203 = vmatprep.subr.mxu0 0.0
      %4204 = vmatpush2.msra.mxu0 0.0
      %4205 = vmatprep.subr.mxu0 0.0
      %4206 = vmatpush2.msra.mxu0 0.0
      %4207 = vmatprep.subr.mxu0 0.0
      %4208 = vmatpush2.msra.mxu0 0.0
      %4209 = vmatprep.subr.mxu0 0.0
      %4210 = vmatpush2.msra.mxu0 0.0
      %4211 = vmatprep.subr.mxu0 0.0
      %4212 = vmatpush2.msra.mxu0 0.0
      %4213 = vmatprep.subr.mxu0 0.0
      %4214 = vmatpush2.msra.mxu0 0.0
      %4215 = vmatprep.subr.mxu0 0.0
      %4216 = vmatpush2.msra.mxu0 0.0
      %4217 = vmatprep.subr.mxu0 0.0
      %4218 = vmatpush2.msra.mxu0 0.0
      %4219 = vmatprep.mubr.f32.mxu0 0.0
      %4220 = vmatmul.mubr.f32.gmra.mxu0 %v4150
      %v4221 = vpop.f32.mrf.mxu0
      %v4222 = vadd.f32 0.0, %v4221
      %v4223 = vpop.f32.mrf.mxu0
      %4224 = vmatprep.mubr.f32.mxu0 0.0
      %4225 = vmatmul.mubr.f32.gmra.mxu0 %v4153
      %v4226 = vpop.f32.mrf.mxu0
      %v4227 = vadd.f32 0.0, %v4226
      %v4228 = vpop.f32.mrf.mxu0
      %4229 = vdwg.mxu0
      %4230 = vrot.lane.b32.xlu0 %v3846, 120
      %v4231 = vpop.permute.xlu0 %4230
      %4232 = vrot.lane.b32.xlu0 %v3851, 120
      %v4233 = vpop.permute.xlu0 %4232
      %4234 = vrot.lane.b32.xlu0 %v3941, 120
      %v4235 = vpop.permute.xlu0 %4234
      %4236 = vrot.lane.b32.xlu0 %v3946, 120
      %v4237 = vpop.permute.xlu0 %4236
      %v4238 = vsel %vm515, %v4231, 0
      %v4240 = vsel %vm515, %v4233, 0
      %v4242 = vsel %vm515, %v4235, 0
      %v4244 = vsel %vm515, %v4237, 0
      %4246 = vmatprep.subr.mxu0 0.0
      %4247 = vmatpush1.xpose.msra.mxu0 0.0
      %4248 = vmatprep.subr.mxu0 0.0
      %4249 = vmatpush1.xpose.msra.mxu0 0.0
      %4250 = vmatprep.subr.mxu0 0.0
      %4251 = vmatpush1.xpose.msra.mxu0 0.0
      %4252 = vmatprep.subr.mxu0 0.0
      %4253 = vmatpush1.xpose.msra.mxu0 0.0
      %4254 = vmatprep.subr.mxu0 0.0
      %4255 = vmatpush1.xpose.msra.mxu0 0.0
      %4256 = vmatprep.subr.mxu0 0.0
      %4257 = vmatpush1.xpose.msra.mxu0 0.0
      %4258 = vmatprep.subr.mxu0 0.0
      %4259 = vmatpush1.xpose.msra.mxu0 0.0
      %4260 = vmatprep.subr.mxu0 0.0
      %4261 = vmatpush1.xpose.msra.mxu0 0.0
      %4262 = vmatprep.subr.mxu0 0.0
      %4263 = vmatpush1.xpose.msra.mxu0 0.0
      %4264 = vmatprep.subr.mxu0 0.0
      %4265 = vmatpush1.xpose.msra.mxu0 0.0
      %4266 = vmatprep.subr.mxu0 0.0
      %4267 = vmatpush1.xpose.msra.mxu0 0.0
      %4268 = vmatprep.subr.mxu0 0.0
      %4269 = vmatpush1.xpose.msra.mxu0 0.0
      %4270 = vmatprep.subr.mxu0 0.0
      %4271 = vmatpush1.xpose.msra.mxu0 0.0
      %4272 = vmatprep.subr.mxu0 0.0
      %4273 = vmatpush1.xpose.msra.mxu0 0.0
      %4274 = vmatprep.subr.mxu0 0.0
      %4275 = vmatpush1.xpose.msra.mxu0 %v4244
      %4276 = vmatprep.subr.mxu0 0.0
      %4277 = vmatpush1.xpose.msra.mxu0 %v4242
      %4278 = vmatprep.subr.mxu0 0.0
      %4279 = vmatpush2.xpose.msra.mxu0 0.0
      %4280 = vmatprep.subr.mxu0 0.0
      %4281 = vmatpush2.xpose.msra.mxu0 0.0
      %4282 = vmatprep.subr.mxu0 0.0
      %4283 = vmatpush2.xpose.msra.mxu0 0.0
      %4284 = vmatprep.subr.mxu0 0.0
      %4285 = vmatpush2.xpose.msra.mxu0 0.0
      %4286 = vmatprep.subr.mxu0 0.0
      %4287 = vmatpush2.xpose.msra.mxu0 0.0
      %4288 = vmatprep.subr.mxu0 0.0
      %4289 = vmatpush2.xpose.msra.mxu0 0.0
      %4290 = vmatprep.subr.mxu0 0.0
      %4291 = vmatpush2.xpose.msra.mxu0 0.0
      %4292 = vmatprep.subr.mxu0 0.0
      %4293 = vmatpush2.xpose.msra.mxu0 0.0
      %4294 = vmatprep.subr.mxu0 0.0
      %4295 = vmatpush2.xpose.msra.mxu0 0.0
      %4296 = vmatprep.subr.mxu0 0.0
      %4297 = vmatpush2.xpose.msra.mxu0 0.0
      %4298 = vmatprep.subr.mxu0 0.0
      %4299 = vmatpush2.xpose.msra.mxu0 0.0
      %4300 = vmatprep.subr.mxu0 0.0
      %4301 = vmatpush2.xpose.msra.mxu0 0.0
      %4302 = vmatprep.subr.mxu0 0.0
      %4303 = vmatpush2.xpose.msra.mxu0 0.0
      %4304 = vmatprep.subr.mxu0 0.0
      %4305 = vmatpush2.xpose.msra.mxu0 0.0
      %4306 = vmatprep.subr.mxu0 0.0
      %4307 = vmatpush2.xpose.msra.mxu0 0.0
      %4308 = vmatprep.subr.mxu0 0.0
      %4309 = vmatpush2.xpose.msra.mxu0 0.0
      %4310 = vmatprep.mubr.f32.mxu0 0.0
      %4311 = vmatmul.mubr.f32.gmra.mxu0 %v4238
      %v4312 = vpop.f32.mrf.mxu0
      %v4313 = vadd.f32 %v3760, %v4312
      %v4314 = vpop.f32.mrf.mxu0
      %4315 = vmatprep.mubr.f32.mxu0 0.0
      %4316 = vmatmul.mubr.f32.gmra.mxu0 %v4240
      %v4317 = vpop.f32.mrf.mxu0
      %v4318 = vadd.f32 %v3761, %v4317
      %v4319 = vpop.f32.mrf.mxu0
      %4320 = vdwg.mxu0
      %v4321 = vsel %vm521, %v4313, -inf
      %4322 = vmax.xlane.f32.xlu0 %v4321
      %v4323 = vpop.xlane.xlu0 %4322
      %v4324 = vsel %vm521, %v4318, -inf
      %4325 = vmax.xlane.f32.xlu0 %v4324
      %v4326 = vpop.xlane.xlu0 %4325
      %v4327 = vsub.f32 %v4313, %v4323
      %v4328 = vsub.f32 %v4318, %v4326
      %v4329 = vmul.f32 %v4327, 1.442695
      %v4330 = vpow.pop %v4329
      %v4331 = vmul.f32 %v4328, 1.442695
      %v4332 = vpow.pop %v4331
      %v4333 = vsel %vm521, %v4330, 0.0
      %4334 = vadd.xlane.f32.xlu0 %v4333
      %v4335 = vpop.xlane.xlu0 %4334
      %v4336 = vsel %vm521, %v4332, 0.0
      %4337 = vadd.xlane.f32.xlu0 %v4336
      %v4338 = vpop.xlane.xlu0 %4337
      %v4339 = vrcp.pop %v4335
      %v4340 = vmul.f32 %v4330, %v4339
      %v4341 = vrcp.pop %v4338
      %v4342 = vmul.f32 %v4332, %v4341
      %4345 = vrot.lane.b32.xlu0 %v4032, 120
      %v4346 = vpop.permute.xlu0 %4345
      %4347 = vrot.lane.b32.xlu0 %v4037, 120
      %v4348 = vpop.permute.xlu0 %4347
      %v4352 = vsel %vm521, %v4340, 0
      %v4355 = vsel %vm521, %v4342, 0
      %4357 = vmatprep.subr.mxu0 0.0
      %4358 = vmatpush1.msra.mxu0 0.0
      %4359 = vmatprep.subr.mxu0 0.0
      %4360 = vmatpush1.msra.mxu0 0.0
      %4361 = vmatprep.subr.mxu0 0.0
      %4362 = vmatpush1.msra.mxu0 0.0
      %4363 = vmatprep.subr.mxu0 0.0
      %4364 = vmatpush1.msra.mxu0 0.0
      %4365 = vmatprep.subr.mxu0 0.0
      %4366 = vmatpush1.msra.mxu0 0.0
      %4367 = vmatprep.subr.mxu0 0.0
      %4368 = vmatpush1.msra.mxu0 0.0
      %4369 = vmatprep.subr.mxu0 0.0
      %4370 = vmatpush1.msra.mxu0 0.0
      %4371 = vmatprep.subr.mxu0 0.0
      %4372 = vmatpush1.msra.mxu0 0.0
      %4373 = vmatprep.subr.mxu0 0.0
      %4374 = vmatpush1.msra.mxu0 0.0
      %4375 = vmatprep.subr.mxu0 0.0
      %4376 = vmatpush1.msra.mxu0 0.0
      %4377 = vmatprep.subr.mxu0 0.0
      %4378 = vmatpush1.msra.mxu0 0.0
      %4379 = vmatprep.subr.mxu0 0.0
      %4380 = vmatpush1.msra.mxu0 0.0
      %4381 = vmatprep.subr.mxu0 0.0
      %4382 = vmatpush1.msra.mxu0 0.0
      %4383 = vmatprep.subr.mxu0 0.0
      %4384 = vmatpush1.msra.mxu0 0.0
      %4385 = vmatprep.subr.mxu0 0.0
      %4386 = vmatpush1.msra.mxu0 %v4348
      %4387 = vmatprep.subr.mxu0 0.0
      %4388 = vmatpush1.msra.mxu0 %v4346
      %4389 = vmatprep.subr.mxu0 0.0
      %4390 = vmatpush2.msra.mxu0 0.0
      %4391 = vmatprep.subr.mxu0 0.0
      %4392 = vmatpush2.msra.mxu0 0.0
      %4393 = vmatprep.subr.mxu0 0.0
      %4394 = vmatpush2.msra.mxu0 0.0
      %4395 = vmatprep.subr.mxu0 0.0
      %4396 = vmatpush2.msra.mxu0 0.0
      %4397 = vmatprep.subr.mxu0 0.0
      %4398 = vmatpush2.msra.mxu0 0.0
      %4399 = vmatprep.subr.mxu0 0.0
      %4400 = vmatpush2.msra.mxu0 0.0
      %4401 = vmatprep.subr.mxu0 0.0
      %4402 = vmatpush2.msra.mxu0 0.0
      %4403 = vmatprep.subr.mxu0 0.0
      %4404 = vmatpush2.msra.mxu0 0.0
      %4405 = vmatprep.subr.mxu0 0.0
      %4406 = vmatpush2.msra.mxu0 0.0
      %4407 = vmatprep.subr.mxu0 0.0
      %4408 = vmatpush2.msra.mxu0 0.0
      %4409 = vmatprep.subr.mxu0 0.0
      %4410 = vmatpush2.msra.mxu0 0.0
      %4411 = vmatprep.subr.mxu0 0.0
      %4412 = vmatpush2.msra.mxu0 0.0
      %4413 = vmatprep.subr.mxu0 0.0
      %4414 = vmatpush2.msra.mxu0 0.0
      %4415 = vmatprep.subr.mxu0 0.0
      %4416 = vmatpush2.msra.mxu0 0.0
      %4417 = vmatprep.subr.mxu0 0.0
      %4418 = vmatpush2.msra.mxu0 0.0
      %4419 = vmatprep.subr.mxu0 0.0
      %4420 = vmatpush2.msra.mxu0 0.0
      %4421 = vmatprep.mubr.f32.mxu0 0.0
      %4422 = vmatmul.mubr.f32.gmra.mxu0 %v4352
      %v4423 = vpop.f32.mrf.mxu0
      %v4424 = vadd.f32 0.0, %v4423
      %v4425 = vpop.f32.mrf.mxu0
      %4426 = vmatprep.mubr.f32.mxu0 0.0
      %4427 = vmatmul.mubr.f32.gmra.mxu0 %v4355
      %v4428 = vpop.f32.mrf.mxu0
      %v4429 = vadd.f32 0.0, %v4428
      %v4430 = vpop.f32.mrf.mxu0
      %4431 = vdwg.mxu0
      %4432 = vrot.lane.b32.xlu0 %v3846, 112
      %v4433 = vpop.permute.xlu0 %4432
      %4434 = vrot.lane.b32.xlu0 %v3851, 112
      %v4435 = vpop.permute.xlu0 %4434
      %4436 = vrot.lane.b32.xlu0 %v3941, 112
      %v4437 = vpop.permute.xlu0 %4436
      %4438 = vrot.lane.b32.xlu0 %v3946, 112
      %v4439 = vpop.permute.xlu0 %4438
      %v4440 = vsel %vm515, %v4433, 0
      %v4442 = vsel %vm515, %v4435, 0
      %v4444 = vsel %vm515, %v4437, 0
      %v4446 = vsel %vm515, %v4439, 0
      %4448 = vmatprep.subr.mxu0 0.0
      %4449 = vmatpush1.xpose.msra.mxu0 0.0
      %4450 = vmatprep.subr.mxu0 0.0
      %4451 = vmatpush1.xpose.msra.mxu0 0.0
      %4452 = vmatprep.subr.mxu0 0.0
      %4453 = vmatpush1.xpose.msra.mxu0 0.0
      %4454 = vmatprep.subr.mxu0 0.0
      %4455 = vmatpush1.xpose.msra.mxu0 0.0
      %4456 = vmatprep.subr.mxu0 0.0
      %4457 = vmatpush1.xpose.msra.mxu0 0.0
      %4458 = vmatprep.subr.mxu0 0.0
      %4459 = vmatpush1.xpose.msra.mxu0 0.0
      %4460 = vmatprep.subr.mxu0 0.0
      %4461 = vmatpush1.xpose.msra.mxu0 0.0
      %4462 = vmatprep.subr.mxu0 0.0
      %4463 = vmatpush1.xpose.msra.mxu0 0.0
      %4464 = vmatprep.subr.mxu0 0.0
      %4465 = vmatpush1.xpose.msra.mxu0 0.0
      %4466 = vmatprep.subr.mxu0 0.0
      %4467 = vmatpush1.xpose.msra.mxu0 0.0
      %4468 = vmatprep.subr.mxu0 0.0
      %4469 = vmatpush1.xpose.msra.mxu0 0.0
      %4470 = vmatprep.subr.mxu0 0.0
      %4471 = vmatpush1.xpose.msra.mxu0 0.0
      %4472 = vmatprep.subr.mxu0 0.0
      %4473 = vmatpush1.xpose.msra.mxu0 0.0
      %4474 = vmatprep.subr.mxu0 0.0
      %4475 = vmatpush1.xpose.msra.mxu0 0.0
      %4476 = vmatprep.subr.mxu0 0.0
      %4477 = vmatpush1.xpose.msra.mxu0 %v4446
      %4478 = vmatprep.subr.mxu0 0.0
      %4479 = vmatpush1.xpose.msra.mxu0 %v4444
      %4480 = vmatprep.subr.mxu0 0.0
      %4481 = vmatpush2.xpose.msra.mxu0 0.0
      %4482 = vmatprep.subr.mxu0 0.0
      %4483 = vmatpush2.xpose.msra.mxu0 0.0
      %4484 = vmatprep.subr.mxu0 0.0
      %4485 = vmatpush2.xpose.msra.mxu0 0.0
      %4486 = vmatprep.subr.mxu0 0.0
      %4487 = vmatpush2.xpose.msra.mxu0 0.0
      %4488 = vmatprep.subr.mxu0 0.0
      %4489 = vmatpush2.xpose.msra.mxu0 0.0
      %4490 = vmatprep.subr.mxu0 0.0
      %4491 = vmatpush2.xpose.msra.mxu0 0.0
      %4492 = vmatprep.subr.mxu0 0.0
      %4493 = vmatpush2.xpose.msra.mxu0 0.0
      %4494 = vmatprep.subr.mxu0 0.0
      %4495 = vmatpush2.xpose.msra.mxu0 0.0
      %4496 = vmatprep.subr.mxu0 0.0
      %4497 = vmatpush2.xpose.msra.mxu0 0.0
      %4498 = vmatprep.subr.mxu0 0.0
      %4499 = vmatpush2.xpose.msra.mxu0 0.0
      %4500 = vmatprep.subr.mxu0 0.0
      %4501 = vmatpush2.xpose.msra.mxu0 0.0
      %4502 = vmatprep.subr.mxu0 0.0
      %4503 = vmatpush2.xpose.msra.mxu0 0.0
      %4504 = vmatprep.subr.mxu0 0.0
      %4505 = vmatpush2.xpose.msra.mxu0 0.0
      %4506 = vmatprep.subr.mxu0 0.0
      %4507 = vmatpush2.xpose.msra.mxu0 0.0
      %4508 = vmatprep.subr.mxu0 0.0
      %4509 = vmatpush2.xpose.msra.mxu0 0.0
      %4510 = vmatprep.subr.mxu0 0.0
      %4511 = vmatpush2.xpose.msra.mxu0 0.0
      %4512 = vmatprep.mubr.f32.mxu0 0.0
      %4513 = vmatmul.mubr.f32.gmra.mxu0 %v4440
      %v4514 = vpop.f32.mrf.mxu0
      %v4515 = vadd.f32 %v3760, %v4514
      %v4516 = vpop.f32.mrf.mxu0
      %4517 = vmatprep.mubr.f32.mxu0 0.0
      %4518 = vmatmul.mubr.f32.gmra.mxu0 %v4442
      %v4519 = vpop.f32.mrf.mxu0
      %v4520 = vadd.f32 %v3761, %v4519
      %v4521 = vpop.f32.mrf.mxu0
      %4522 = vdwg.mxu0
      %v4523 = vsel %vm521, %v4515, -inf
      %4524 = vmax.xlane.f32.xlu0 %v4523
      %v4525 = vpop.xlane.xlu0 %4524
      %v4526 = vsel %vm521, %v4520, -inf
      %4527 = vmax.xlane.f32.xlu0 %v4526
      %v4528 = vpop.xlane.xlu0 %4527
      %v4529 = vsub.f32 %v4515, %v4525
      %v4530 = vsub.f32 %v4520, %v4528
      %v4531 = vmul.f32 %v4529, 1.442695
      %v4532 = vpow.pop %v4531
      %v4533 = vmul.f32 %v4530, 1.442695
      %v4534 = vpow.pop %v4533
      %v4535 = vsel %vm521, %v4532, 0.0
      %4536 = vadd.xlane.f32.xlu0 %v4535
      %v4537 = vpop.xlane.xlu0 %4536
      %v4538 = vsel %vm521, %v4534, 0.0
      %4539 = vadd.xlane.f32.xlu0 %v4538
      %v4540 = vpop.xlane.xlu0 %4539
      %v4541 = vrcp.pop %v4537
      %v4542 = vmul.f32 %v4532, %v4541
      %v4543 = vrcp.pop %v4540
      %v4544 = vmul.f32 %v4534, %v4543
      %4545 = vrot.lane.b32.xlu0 %v4032, 112
      %v4546 = vpop.permute.xlu0 %4545
      %4547 = vrot.lane.b32.xlu0 %v4037, 112
      %v4548 = vpop.permute.xlu0 %4547
      %v4552 = vsel %vm521, %v4542, 0
      %v4555 = vsel %vm521, %v4544, 0
      %4557 = vmatprep.subr.mxu0 0.0
      %4558 = vmatpush1.msra.mxu0 0.0
      %4559 = vmatprep.subr.mxu0 0.0
      %4560 = vmatpush1.msra.mxu0 0.0
      %4561 = vmatprep.subr.mxu0 0.0
      %4562 = vmatpush1.msra.mxu0 0.0
      %4563 = vmatprep.subr.mxu0 0.0
      %4564 = vmatpush1.msra.mxu0 0.0
      %4565 = vmatprep.subr.mxu0 0.0
      %4566 = vmatpush1.msra.mxu0 0.0
      %4567 = vmatprep.subr.mxu0 0.0
      %4568 = vmatpush1.msra.mxu0 0.0
      %4569 = vmatprep.subr.mxu0 0.0
      %4570 = vmatpush1.msra.mxu0 0.0
      %4571 = vmatprep.subr.mxu0 0.0
      %4572 = vmatpush1.msra.mxu0 0.0
      %4573 = vmatprep.subr.mxu0 0.0
      %4574 = vmatpush1.msra.mxu0 0.0
      %4575 = vmatprep.subr.mxu0 0.0
      %4576 = vmatpush1.msra.mxu0 0.0
      %4577 = vmatprep.subr.mxu0 0.0
      %4578 = vmatpush1.msra.mxu0 0.0
      %4579 = vmatprep.subr.mxu0 0.0
      %4580 = vmatpush1.msra.mxu0 0.0
      %4581 = vmatprep.subr.mxu0 0.0
      %4582 = vmatpush1.msra.mxu0 0.0
      %4583 = vmatprep.subr.mxu0 0.0
      %4584 = vmatpush1.msra.mxu0 0.0
      %4585 = vmatprep.subr.mxu0 0.0
      %4586 = vmatpush1.msra.mxu0 %v4548
      %4587 = vmatprep.subr.mxu0 0.0
      %4588 = vmatpush1.msra.mxu0 %v4546
      %4589 = vmatprep.subr.mxu0 0.0
      %4590 = vmatpush2.msra.mxu0 0.0
      %4591 = vmatprep.subr.mxu0 0.0
      %4592 = vmatpush2.msra.mxu0 0.0
      %4593 = vmatprep.subr.mxu0 0.0
      %4594 = vmatpush2.msra.mxu0 0.0
      %4595 = vmatprep.subr.mxu0 0.0
      %4596 = vmatpush2.msra.mxu0 0.0
      %4597 = vmatprep.subr.mxu0 0.0
      %4598 = vmatpush2.msra.mxu0 0.0
      %4599 = vmatprep.subr.mxu0 0.0
      %4600 = vmatpush2.msra.mxu0 0.0
      %4601 = vmatprep.subr.mxu0 0.0
      %4602 = vmatpush2.msra.mxu0 0.0
      %4603 = vmatprep.subr.mxu0 0.0
      %4604 = vmatpush2.msra.mxu0 0.0
      %4605 = vmatprep.subr.mxu0 0.0
      %4606 = vmatpush2.msra.mxu0 0.0
      %4607 = vmatprep.subr.mxu0 0.0
      %4608 = vmatpush2.msra.mxu0 0.0
      %4609 = vmatprep.subr.mxu0 0.0
      %4610 = vmatpush2.msra.mxu0 0.0
      %4611 = vmatprep.subr.mxu0 0.0
      %4612 = vmatpush2.msra.mxu0 0.0
      %4613 = vmatprep.subr.mxu0 0.0
      %4614 = vmatpush2.msra.mxu0 0.0
      %4615 = vmatprep.subr.mxu0 0.0
      %4616 = vmatpush2.msra.mxu0 0.0
      %4617 = vmatprep.subr.mxu0 0.0
      %4618 = vmatpush2.msra.mxu0 0.0
      %4619 = vmatprep.subr.mxu0 0.0
      %4620 = vmatpush2.msra.mxu0 0.0
      %4621 = vmatprep.mubr.f32.mxu0 0.0
      %4622 = vmatmul.mubr.f32.gmra.mxu0 %v4552
      %v4623 = vpop.f32.mrf.mxu0
      %v4624 = vadd.f32 0.0, %v4623
      %v4625 = vpop.f32.mrf.mxu0
      %4626 = vmatprep.mubr.f32.mxu0 0.0
      %4627 = vmatmul.mubr.f32.gmra.mxu0 %v4555
      %v4628 = vpop.f32.mrf.mxu0
      %v4629 = vadd.f32 0.0, %v4628
      %v4630 = vpop.f32.mrf.mxu0
      %4631 = vdwg.mxu0
      %4632 = vrot.lane.b32.xlu0 %v3846, 104
      %v4633 = vpop.permute.xlu0 %4632
      %4634 = vrot.lane.b32.xlu0 %v3851, 104
      %v4635 = vpop.permute.xlu0 %4634
      %4636 = vrot.lane.b32.xlu0 %v3941, 104
      %v4637 = vpop.permute.xlu0 %4636
      %4638 = vrot.lane.b32.xlu0 %v3946, 104
      %v4639 = vpop.permute.xlu0 %4638
      %v4640 = vsel %vm515, %v4633, 0
      %v4642 = vsel %vm515, %v4635, 0
      %v4644 = vsel %vm515, %v4637, 0
      %v4646 = vsel %vm515, %v4639, 0
      %4648 = vmatprep.subr.mxu0 0.0
      %4649 = vmatpush1.xpose.msra.mxu0 0.0
      %4650 = vmatprep.subr.mxu0 0.0
      %4651 = vmatpush1.xpose.msra.mxu0 0.0
      %4652 = vmatprep.subr.mxu0 0.0
      %4653 = vmatpush1.xpose.msra.mxu0 0.0
      %4654 = vmatprep.subr.mxu0 0.0
      %4655 = vmatpush1.xpose.msra.mxu0 0.0
      %4656 = vmatprep.subr.mxu0 0.0
      %4657 = vmatpush1.xpose.msra.mxu0 0.0
      %4658 = vmatprep.subr.mxu0 0.0
      %4659 = vmatpush1.xpose.msra.mxu0 0.0
      %4660 = vmatprep.subr.mxu0 0.0
      %4661 = vmatpush1.xpose.msra.mxu0 0.0
      %4662 = vmatprep.subr.mxu0 0.0
      %4663 = vmatpush1.xpose.msra.mxu0 0.0
      %4664 = vmatprep.subr.mxu0 0.0
      %4665 = vmatpush1.xpose.msra.mxu0 0.0
      %4666 = vmatprep.subr.mxu0 0.0
      %4667 = vmatpush1.xpose.msra.mxu0 0.0
      %4668 = vmatprep.subr.mxu0 0.0
      %4669 = vmatpush1.xpose.msra.mxu0 0.0
      %4670 = vmatprep.subr.mxu0 0.0
      %4671 = vmatpush1.xpose.msra.mxu0 0.0
      %4672 = vmatprep.subr.mxu0 0.0
      %4673 = vmatpush1.xpose.msra.mxu0 0.0
      %4674 = vmatprep.subr.mxu0 0.0
      %4675 = vmatpush1.xpose.msra.mxu0 0.0
      %4676 = vmatprep.subr.mxu0 0.0
      %4677 = vmatpush1.xpose.msra.mxu0 %v4646
      %4678 = vmatprep.subr.mxu0 0.0
      %4679 = vmatpush1.xpose.msra.mxu0 %v4644
      %4680 = vmatprep.subr.mxu0 0.0
      %4681 = vmatpush2.xpose.msra.mxu0 0.0
      %4682 = vmatprep.subr.mxu0 0.0
      %4683 = vmatpush2.xpose.msra.mxu0 0.0
      %4684 = vmatprep.subr.mxu0 0.0
      %4685 = vmatpush2.xpose.msra.mxu0 0.0
      %4686 = vmatprep.subr.mxu0 0.0
      %4687 = vmatpush2.xpose.msra.mxu0 0.0
      %4688 = vmatprep.subr.mxu0 0.0
      %4689 = vmatpush2.xpose.msra.mxu0 0.0
      %4690 = vmatprep.subr.mxu0 0.0
      %4691 = vmatpush2.xpose.msra.mxu0 0.0
      %4692 = vmatprep.subr.mxu0 0.0
      %4693 = vmatpush2.xpose.msra.mxu0 0.0
      %4694 = vmatprep.subr.mxu0 0.0
      %4695 = vmatpush2.xpose.msra.mxu0 0.0
      %4696 = vmatprep.subr.mxu0 0.0
      %4697 = vmatpush2.xpose.msra.mxu0 0.0
      %4698 = vmatprep.subr.mxu0 0.0
      %4699 = vmatpush2.xpose.msra.mxu0 0.0
      %4700 = vmatprep.subr.mxu0 0.0
      %4701 = vmatpush2.xpose.msra.mxu0 0.0
      %4702 = vmatprep.subr.mxu0 0.0
      %4703 = vmatpush2.xpose.msra.mxu0 0.0
      %4704 = vmatprep.subr.mxu0 0.0
      %4705 = vmatpush2.xpose.msra.mxu0 0.0
      %4706 = vmatprep.subr.mxu0 0.0
      %4707 = vmatpush2.xpose.msra.mxu0 0.0
      %4708 = vmatprep.subr.mxu0 0.0
      %4709 = vmatpush2.xpose.msra.mxu0 0.0
      %4710 = vmatprep.subr.mxu0 0.0
      %4711 = vmatpush2.xpose.msra.mxu0 0.0
      %4712 = vmatprep.mubr.f32.mxu0 0.0
      %4713 = vmatmul.mubr.f32.gmra.mxu0 %v4640
      %v4714 = vpop.f32.mrf.mxu0
      %v4715 = vadd.f32 %v3760, %v4714
      %v4716 = vpop.f32.mrf.mxu0
      %4717 = vmatprep.mubr.f32.mxu0 0.0
      %4718 = vmatmul.mubr.f32.gmra.mxu0 %v4642
      %v4719 = vpop.f32.mrf.mxu0
      %v4720 = vadd.f32 %v3761, %v4719
      %v4721 = vpop.f32.mrf.mxu0
      %4722 = vdwg.mxu0
      %v4723 = vsel %vm521, %v4715, -inf
      %4724 = vmax.xlane.f32.xlu0 %v4723
      %v4725 = vpop.xlane.xlu0 %4724
      %v4726 = vsel %vm521, %v4720, -inf
      %4727 = vmax.xlane.f32.xlu0 %v4726
      %v4728 = vpop.xlane.xlu0 %4727
      %v4729 = vsub.f32 %v4715, %v4725
      %v4730 = vsub.f32 %v4720, %v4728
      %v4731 = vmul.f32 %v4729, 1.442695
      %v4732 = vpow.pop %v4731
      %v4733 = vmul.f32 %v4730, 1.442695
      %v4734 = vpow.pop %v4733
      %v4735 = vsel %vm521, %v4732, 0.0
      %4736 = vadd.xlane.f32.xlu0 %v4735
      %v4737 = vpop.xlane.xlu0 %4736
      %v4738 = vsel %vm521, %v4734, 0.0
      %4739 = vadd.xlane.f32.xlu0 %v4738
      %v4740 = vpop.xlane.xlu0 %4739
      %v4741 = vrcp.pop %v4737
      %v4742 = vmul.f32 %v4732, %v4741
      %v4743 = vrcp.pop %v4740
      %v4744 = vmul.f32 %v4734, %v4743
      %4745 = vrot.lane.b32.xlu0 %v4032, 104
      %v4746 = vpop.permute.xlu0 %4745
      %4747 = vrot.lane.b32.xlu0 %v4037, 104
      %v4748 = vpop.permute.xlu0 %4747
      %v4752 = vsel %vm521, %v4742, 0
      %v4755 = vsel %vm521, %v4744, 0
      %4757 = vmatprep.subr.mxu0 0.0
      %4758 = vmatpush1.msra.mxu0 0.0
      %4759 = vmatprep.subr.mxu0 0.0
      %4760 = vmatpush1.msra.mxu0 0.0
      %4761 = vmatprep.subr.mxu0 0.0
      %4762 = vmatpush1.msra.mxu0 0.0
      %4763 = vmatprep.subr.mxu0 0.0
      %4764 = vmatpush1.msra.mxu0 0.0
      %4765 = vmatprep.subr.mxu0 0.0
      %4766 = vmatpush1.msra.mxu0 0.0
      %4767 = vmatprep.subr.mxu0 0.0
      %4768 = vmatpush1.msra.mxu0 0.0
      %4769 = vmatprep.subr.mxu0 0.0
      %4770 = vmatpush1.msra.mxu0 0.0
      %4771 = vmatprep.subr.mxu0 0.0
      %4772 = vmatpush1.msra.mxu0 0.0
      %4773 = vmatprep.subr.mxu0 0.0
      %4774 = vmatpush1.msra.mxu0 0.0
      %4775 = vmatprep.subr.mxu0 0.0
      %4776 = vmatpush1.msra.mxu0 0.0
      %4777 = vmatprep.subr.mxu0 0.0
      %4778 = vmatpush1.msra.mxu0 0.0
      %4779 = vmatprep.subr.mxu0 0.0
      %4780 = vmatpush1.msra.mxu0 0.0
      %4781 = vmatprep.subr.mxu0 0.0
      %4782 = vmatpush1.msra.mxu0 0.0
      %4783 = vmatprep.subr.mxu0 0.0
      %4784 = vmatpush1.msra.mxu0 0.0
      %4785 = vmatprep.subr.mxu0 0.0
      %4786 = vmatpush1.msra.mxu0 %v4748
      %4787 = vmatprep.subr.mxu0 0.0
      %4788 = vmatpush1.msra.mxu0 %v4746
      %4789 = vmatprep.subr.mxu0 0.0
      %4790 = vmatpush2.msra.mxu0 0.0
      %4791 = vmatprep.subr.mxu0 0.0
      %4792 = vmatpush2.msra.mxu0 0.0
      %4793 = vmatprep.subr.mxu0 0.0
      %4794 = vmatpush2.msra.mxu0 0.0
      %4795 = vmatprep.subr.mxu0 0.0
      %4796 = vmatpush2.msra.mxu0 0.0
      %4797 = vmatprep.subr.mxu0 0.0
      %4798 = vmatpush2.msra.mxu0 0.0
      %4799 = vmatprep.subr.mxu0 0.0
      %4800 = vmatpush2.msra.mxu0 0.0
      %4801 = vmatprep.subr.mxu0 0.0
      %4802 = vmatpush2.msra.mxu0 0.0
      %4803 = vmatprep.subr.mxu0 0.0
      %4804 = vmatpush2.msra.mxu0 0.0
      %4805 = vmatprep.subr.mxu0 0.0
      %4806 = vmatpush2.msra.mxu0 0.0
      %4807 = vmatprep.subr.mxu0 0.0
      %4808 = vmatpush2.msra.mxu0 0.0
      %4809 = vmatprep.subr.mxu0 0.0
      %4810 = vmatpush2.msra.mxu0 0.0
      %4811 = vmatprep.subr.mxu0 0.0
      %4812 = vmatpush2.msra.mxu0 0.0
      %4813 = vmatprep.subr.mxu0 0.0
      %4814 = vmatpush2.msra.mxu0 0.0
      %4815 = vmatprep.subr.mxu0 0.0
      %4816 = vmatpush2.msra.mxu0 0.0
      %4817 = vmatprep.subr.mxu0 0.0
      %4818 = vmatpush2.msra.mxu0 0.0
      %4819 = vmatprep.subr.mxu0 0.0
      %4820 = vmatpush2.msra.mxu0 0.0
      %4821 = vmatprep.mubr.f32.mxu0 0.0
      %4822 = vmatmul.mubr.f32.gmra.mxu0 %v4752
      %v4823 = vpop.f32.mrf.mxu0
      %v4824 = vadd.f32 0.0, %v4823
      %v4825 = vpop.f32.mrf.mxu0
      %4826 = vmatprep.mubr.f32.mxu0 0.0
      %4827 = vmatmul.mubr.f32.gmra.mxu0 %v4755
      %v4828 = vpop.f32.mrf.mxu0
      %v4829 = vadd.f32 0.0, %v4828
      %v4830 = vpop.f32.mrf.mxu0
      %4831 = vdwg.mxu0
      %4834 = vrot.lane.b32.xlu0 %v4424, 8
      %v4835 = vpop.permute.xlu0 %4834
      %4836 = vrot.lane.b32.xlu0 %v4429, 8
      %v4837 = vpop.permute.xlu0 %4836
      %4842 = vrot.lane.b32.xlu0 %v4624, 16
      %v4843 = vpop.permute.xlu0 %4842
      %4844 = vrot.lane.b32.xlu0 %v4629, 16
      %v4845 = vpop.permute.xlu0 %4844
      %4850 = vrot.lane.b32.xlu0 %v4824, 24
      %v4851 = vpop.permute.xlu0 %4850
      %4852 = vrot.lane.b32.xlu0 %v4829, 24
      %v4853 = vpop.permute.xlu0 %4852
      %v4856 = vsel %vm515, %v4222, %v4835
      %v4857 = vsel %vm515, %v4227, %v4837
      %v4858 = vsel %vm521, %v4856, %v4843
      %v4859 = vsel %vm521, %v4857, %v4845
      %v4860 = vsel %vm1701, %v4858, %v4851
      %v4861 = vsel %vm1701, %v4859, %v4853
      %v4862 = vlaneseq
      %v4863 = vshrl.u32 %v4862, 7
      %v4864 = vsub.s32 3, %v4863
      %v4865 = vrot.slane %v3762, %v4864
      %4866 = vrot.lane.b32.xlu0 %v3765, 32
      %v4867 = vpop.permute.xlu0 %4866
      %4868 = vrot.lane.b32.xlu0 %v3766, 32
      %v4869 = vpop.permute.xlu0 %4868
      %4870 = vrot.lane.b32.xlu0 %v3767, 32
      %v4871 = vpop.permute.xlu0 %4870
      %4872 = vrot.lane.b32.xlu0 %v3768, 32
      %v4873 = vpop.permute.xlu0 %4872
      %v4879 = vsel %vm613, %v4860, 0
      %v4882 = vsel %vm613, %v4861, 0
      %4884 = vmatprep.subr.mxu0 0.0
      %4885 = vmatpush1.msra.mxu0 0.0
      %4886 = vmatprep.subr.mxu0 0.0
      %4887 = vmatpush1.msra.mxu0 0.0
      %4888 = vmatprep.subr.mxu0 0.0
      %4889 = vmatpush1.msra.mxu0 0.0
      %4890 = vmatprep.subr.mxu0 0.0
      %4891 = vmatpush1.msra.mxu0 0.0
      %4892 = vmatprep.subr.mxu0 0.0
      %4893 = vmatpush1.msra.mxu0 0.0
      %4894 = vmatprep.subr.mxu0 0.0
      %4895 = vmatpush1.msra.mxu0 0.0
      %4896 = vmatprep.subr.mxu0 0.0
      %4897 = vmatpush1.msra.mxu0 0.0
      %4898 = vmatprep.subr.mxu0 0.0
      %4899 = vmatpush1.msra.mxu0 0.0
      %4900 = vmatprep.subr.mxu0 0.0
      %4901 = vmatpush1.msra.mxu0 0.0
      %4902 = vmatprep.subr.mxu0 0.0
      %4903 = vmatpush1.msra.mxu0 0.0
      %4904 = vmatprep.subr.mxu0 0.0
      %4905 = vmatpush1.msra.mxu0 0.0
      %4906 = vmatprep.subr.mxu0 0.0
      %4907 = vmatpush1.msra.mxu0 0.0
      %4908 = vmatprep.subr.mxu0 0.0
      %4909 = vmatpush1.msra.mxu0 %v4873
      %4910 = vmatprep.subr.mxu0 0.0
      %4911 = vmatpush1.msra.mxu0 %v4871
      %4912 = vmatprep.subr.mxu0 0.0
      %4913 = vmatpush1.msra.mxu0 %v4869
      %4914 = vmatprep.subr.mxu0 0.0
      %4915 = vmatpush1.msra.mxu0 %v4867
      %4916 = vmatprep.subr.mxu0 0.0
      %4917 = vmatpush2.msra.mxu0 0.0
      %4918 = vmatprep.subr.mxu0 0.0
      %4919 = vmatpush2.msra.mxu0 0.0
      %4920 = vmatprep.subr.mxu0 0.0
      %4921 = vmatpush2.msra.mxu0 0.0
      %4922 = vmatprep.subr.mxu0 0.0
      %4923 = vmatpush2.msra.mxu0 0.0
      %4924 = vmatprep.subr.mxu0 0.0
      %4925 = vmatpush2.msra.mxu0 0.0
      %4926 = vmatprep.subr.mxu0 0.0
      %4927 = vmatpush2.msra.mxu0 0.0
      %4928 = vmatprep.subr.mxu0 0.0
      %4929 = vmatpush2.msra.mxu0 0.0
      %4930 = vmatprep.subr.mxu0 0.0
      %4931 = vmatpush2.msra.mxu0 0.0
      %4932 = vmatprep.subr.mxu0 0.0
      %4933 = vmatpush2.msra.mxu0 0.0
      %4934 = vmatprep.subr.mxu0 0.0
      %4935 = vmatpush2.msra.mxu0 0.0
      %4936 = vmatprep.subr.mxu0 0.0
      %4937 = vmatpush2.msra.mxu0 0.0
      %4938 = vmatprep.subr.mxu0 0.0
      %4939 = vmatpush2.msra.mxu0 0.0
      %4940 = vmatprep.subr.mxu0 0.0
      %4941 = vmatpush2.msra.mxu0 0.0
      %4942 = vmatprep.subr.mxu0 0.0
      %4943 = vmatpush2.msra.mxu0 0.0
      %4944 = vmatprep.subr.mxu0 0.0
      %4945 = vmatpush2.msra.mxu0 0.0
      %4946 = vmatprep.subr.mxu0 0.0
      %4947 = vmatpush2.msra.mxu0 0.0
      %4948 = vmatprep.mubr.f32.mxu0 0.0
      %4949 = vmatmul.mubr.f32.gmra.mxu0 %v4879
      %v4950 = vpop.f32.mrf.mxu0
      %v4951 = vadd.f32 %v4865, %v4950
      %v4952 = vpop.f32.mrf.mxu0
      %4953 = vmatprep.mubr.f32.mxu0 0.0
      %4954 = vmatmul.mubr.f32.gmra.mxu0 %v4882
      %v4955 = vpop.f32.mrf.mxu0
      %v4956 = vadd.f32 %v4865, %v4955
      %v4957 = vpop.f32.mrf.mxu0
      %4958 = vdwg.mxu0
      %v4959 = vadd.f32 %v3745, %v4951
      %v4960 = vadd.f32 %v3750, %v4956
      %v4961 = vsel %vm613, %v4959, 0.0
      %4962 = vadd.xlane.f32.xlu0 %v4961
      %v4963 = vpop.xlane.xlu0 %4962
      %v4964 = vsel %vm613, %v4960, 0.0
      %4965 = vadd.xlane.f32.xlu0 %v4964
      %v4966 = vpop.xlane.xlu0 %4965
      %v4967 = vmul.f32 %v4963, %v1809
      %v4968 = vmul.f32 %v4966, %v1809
      %v4969 = vsub.f32 %v4959, %v4967
      %v4970 = vsub.f32 %v4960, %v4968
      %v4971 = vmul.f32 %v4969, %v4969
      %v4972 = vmul.f32 %v4970, %v4970
      %v4973 = vsel %vm613, %v4971, 0.0
      %4974 = vadd.xlane.f32.xlu0 %v4973
      %v4975 = vpop.xlane.xlu0 %4974
      %v4976 = vsel %vm613, %v4972, 0.0
      %4977 = vadd.xlane.f32.xlu0 %v4976
      %v4978 = vpop.xlane.xlu0 %4977
      %v4979 = vmul.f32 %v4975, %v1809
      %v4980 = vmul.f32 %v4978, %v1809
      %v4981 = vadd.f32 %v4979, 1e-05
      %v4982 = vadd.f32 %v4980, 1e-05
      %v4983 = vrsqrt.pop %v4981
      %v4984 = vrsqrt.pop %v4982
      %v4985 = vmul.f32 %v4969, %v4983
      %v4986 = vmul.f32 %v4970, %v4984
      %v4987 = vlaneseq
      %v4988 = vshrl.u32 %v4987, 7
      %v4989 = vsub.s32 1, %v4988
      %v4990 = vrot.slane %v3763, %v4989
      %v4991 = vmul.f32 %v4985, %v4990
      %v4992 = vmul.f32 %v4986, %v4990
      %v4993 = vlaneseq
      %v4994 = vshrl.u32 %v4993, 7
      %v4995 = vsub.s32 2, %v4994
      %v4996 = vrot.slane %v3763, %v4995
      %v4997 = vadd.f32 %v4991, %v4996
      %v4998 = vadd.f32 %v4992, %v4996
      %s4999 = scalar_lea.vmem %s4, 96
      %v5000 = vld [vmem:[%s4999] sm:$0xff]
      %v5001 = vld [vmem:[%s4999 + $0x8] sm:$0xff]
      %v5002 = vld [vmem:[%s4999 + $0x10] sm:$0xff]
      %v5003 = vld [vmem:[%s4999 + $0x18] sm:$0xff]
      %v5004 = vlaneseq
      %v5005 = vshrl.u32 %v5004, 7
      %v5006 = vsub.s32 4, %v5005
      %v5007 = vrot.slane %v3762, %v5006
      %v5009 = vsel %vm613, %v4997, 0
      %v5012 = vsel %vm613, %v4998, 0
      %5014 = vmatprep.subr.mxu0 0.0
      %5015 = vmatpush1.msra.mxu0 0.0
      %5016 = vmatprep.subr.mxu0 0.0
      %5017 = vmatpush1.msra.mxu0 0.0
      %5018 = vmatprep.subr.mxu0 0.0
      %5019 = vmatpush1.msra.mxu0 0.0
      %5020 = vmatprep.subr.mxu0 0.0
      %5021 = vmatpush1.msra.mxu0 0.0
      %5022 = vmatprep.subr.mxu0 0.0
      %5023 = vmatpush1.msra.mxu0 0.0
      %5024 = vmatprep.subr.mxu0 0.0
      %5025 = vmatpush1.msra.mxu0 0.0
      %5026 = vmatprep.subr.mxu0 0.0
      %5027 = vmatpush1.msra.mxu0 0.0
      %5028 = vmatprep.subr.mxu0 0.0
      %5029 = vmatpush1.msra.mxu0 0.0
      %5030 = vmatprep.subr.mxu0 0.0
      %5031 = vmatpush1.msra.mxu0 0.0
      %5032 = vmatprep.subr.mxu0 0.0
      %5033 = vmatpush1.msra.mxu0 0.0
      %5034 = vmatprep.subr.mxu0 0.0
      %5035 = vmatpush1.msra.mxu0 0.0
      %5036 = vmatprep.subr.mxu0 0.0
      %5037 = vmatpush1.msra.mxu0 0.0
      %5038 = vmatprep.subr.mxu0 0.0
      %5039 = vmatpush1.msra.mxu0 %v5003
      %5040 = vmatprep.subr.mxu0 0.0
      %5041 = vmatpush1.msra.mxu0 %v5002
      %5042 = vmatprep.subr.mxu0 0.0
      %5043 = vmatpush1.msra.mxu0 %v5001
      %5044 = vmatprep.subr.mxu0 0.0
      %5045 = vmatpush1.msra.mxu0 %v5000
      %5046 = vmatprep.subr.mxu0 0.0
      %5047 = vmatpush2.msra.mxu0 0.0
      %5048 = vmatprep.subr.mxu0 0.0
      %5049 = vmatpush2.msra.mxu0 0.0
      %5050 = vmatprep.subr.mxu0 0.0
      %5051 = vmatpush2.msra.mxu0 0.0
      %5052 = vmatprep.subr.mxu0 0.0
      %5053 = vmatpush2.msra.mxu0 0.0
      %5054 = vmatprep.subr.mxu0 0.0
      %5055 = vmatpush2.msra.mxu0 0.0
      %5056 = vmatprep.subr.mxu0 0.0
      %5057 = vmatpush2.msra.mxu0 0.0
      %5058 = vmatprep.subr.mxu0 0.0
      %5059 = vmatpush2.msra.mxu0 0.0
      %5060 = vmatprep.subr.mxu0 0.0
      %5061 = vmatpush2.msra.mxu0 0.0
      %5062 = vmatprep.subr.mxu0 0.0
      %5063 = vmatpush2.msra.mxu0 0.0
      %5064 = vmatprep.subr.mxu0 0.0
      %5065 = vmatpush2.msra.mxu0 0.0
      %5066 = vmatprep.subr.mxu0 0.0
      %5067 = vmatpush2.msra.mxu0 0.0
      %5068 = vmatprep.subr.mxu0 0.0
      %5069 = vmatpush2.msra.mxu0 0.0
      %5070 = vmatprep.subr.mxu0 0.0
      %5071 = vmatpush2.msra.mxu0 0.0
      %5072 = vmatprep.subr.mxu0 0.0
      %5073 = vmatpush2.msra.mxu0 0.0
      %5074 = vmatprep.subr.mxu0 0.0
      %5075 = vmatpush2.msra.mxu0 0.0
      %5076 = vmatprep.subr.mxu0 0.0
      %5077 = vmatpush2.msra.mxu0 0.0
      %5078 = vmatprep.mubr.f32.mxu0 0.0
      %5079 = vmatmul.mubr.f32.gmra.mxu0 %v5009
      %v5080 = vpop.f32.mrf.mxu0
      %v5081 = vadd.f32 %v5007, %v5080
      %v5082 = vpop.f32.mrf.mxu0
      %5083 = vmatprep.mubr.f32.mxu0 0.0
      %5084 = vmatmul.mubr.f32.gmra.mxu0 %v5012
      %v5085 = vpop.f32.mrf.mxu0
      %v5086 = vadd.f32 %v5007, %v5085
      %v5087 = vpop.f32.mrf.mxu0
      %5088 = vdwg.mxu0
      %v5089 = vlaneseq
      %v5090 = vshrl.u32 %v5089, 7
      %v5091 = vsub.s32 5, %v5090
      %v5092 = vrot.slane %v3762, %v5091
      %5097 = vrot.lane.b32.xlu0 %v5000, 96
      %v5098 = vpop.permute.xlu0 %5097
      %5099 = vrot.lane.b32.xlu0 %v5001, 96
      %v5100 = vpop.permute.xlu0 %5099
      %5101 = vrot.lane.b32.xlu0 %v5002, 96
      %v5102 = vpop.permute.xlu0 %5101
      %5103 = vrot.lane.b32.xlu0 %v5003, 96
      %v5104 = vpop.permute.xlu0 %5103
      %v5110 = vsel %vm613, %v3574, 0
      %v5113 = vsel %vm613, %v3575, 0
      %5115 = vmatprep.subr.mxu0 0.0
      %5116 = vmatpush1.msra.mxu0 0.0
      %5117 = vmatprep.subr.mxu0 0.0
      %5118 = vmatpush1.msra.mxu0 0.0
      %5119 = vmatprep.subr.mxu0 0.0
      %5120 = vmatpush1.msra.mxu0 0.0
      %5121 = vmatprep.subr.mxu0 0.0
      %5122 = vmatpush1.msra.mxu0 0.0
      %5123 = vmatprep.subr.mxu0 0.0
      %5124 = vmatpush1.msra.mxu0 0.0
      %5125 = vmatprep.subr.mxu0 0.0
      %5126 = vmatpush1.msra.mxu0 0.0
      %5127 = vmatprep.subr.mxu0 0.0
      %5128 = vmatpush1.msra.mxu0 0.0
      %5129 = vmatprep.subr.mxu0 0.0
      %5130 = vmatpush1.msra.mxu0 0.0
      %5131 = vmatprep.subr.mxu0 0.0
      %5132 = vmatpush1.msra.mxu0 0.0
      %5133 = vmatprep.subr.mxu0 0.0
      %5134 = vmatpush1.msra.mxu0 0.0
      %5135 = vmatprep.subr.mxu0 0.0
      %5136 = vmatpush1.msra.mxu0 0.0
      %5137 = vmatprep.subr.mxu0 0.0
      %5138 = vmatpush1.msra.mxu0 0.0
      %5139 = vmatprep.subr.mxu0 0.0
      %5140 = vmatpush1.msra.mxu0 %v5104
      %5141 = vmatprep.subr.mxu0 0.0
      %5142 = vmatpush1.msra.mxu0 %v5102
      %5143 = vmatprep.subr.mxu0 0.0
      %5144 = vmatpush1.msra.mxu0 %v5100
      %5145 = vmatprep.subr.mxu0 0.0
      %5146 = vmatpush1.msra.mxu0 %v5098
      %5147 = vmatprep.subr.mxu0 0.0
      %5148 = vmatpush2.msra.mxu0 0.0
      %5149 = vmatprep.subr.mxu0 0.0
      %5150 = vmatpush2.msra.mxu0 0.0
      %5151 = vmatprep.subr.mxu0 0.0
      %5152 = vmatpush2.msra.mxu0 0.0
      %5153 = vmatprep.subr.mxu0 0.0
      %5154 = vmatpush2.msra.mxu0 0.0
      %5155 = vmatprep.subr.mxu0 0.0
      %5156 = vmatpush2.msra.mxu0 0.0
      %5157 = vmatprep.subr.mxu0 0.0
      %5158 = vmatpush2.msra.mxu0 0.0
      %5159 = vmatprep.subr.mxu0 0.0
      %5160 = vmatpush2.msra.mxu0 0.0
      %5161 = vmatprep.subr.mxu0 0.0
      %5162 = vmatpush2.msra.mxu0 0.0
      %5163 = vmatprep.subr.mxu0 0.0
      %5164 = vmatpush2.msra.mxu0 0.0
      %5165 = vmatprep.subr.mxu0 0.0
      %5166 = vmatpush2.msra.mxu0 0.0
      %5167 = vmatprep.subr.mxu0 0.0
      %5168 = vmatpush2.msra.mxu0 0.0
      %5169 = vmatprep.subr.mxu0 0.0
      %5170 = vmatpush2.msra.mxu0 0.0
      %5171 = vmatprep.subr.mxu0 0.0
      %5172 = vmatpush2.msra.mxu0 0.0
      %5173 = vmatprep.subr.mxu0 0.0
      %5174 = vmatpush2.msra.mxu0 0.0
      %5175 = vmatprep.subr.mxu0 0.0
      %5176 = vmatpush2.msra.mxu0 0.0
      %5177 = vmatprep.subr.mxu0 0.0
      %5178 = vmatpush2.msra.mxu0 0.0
      %5179 = vmatprep.mubr.f32.mxu0 0.0
      %5180 = vmatmul.mubr.f32.gmra.mxu0 %v5110
      %v5181 = vpop.f32.mrf.mxu0
      %v5182 = vadd.f32 %v5092, %v5181
      %v5183 = vpop.f32.mrf.mxu0
      %5184 = vmatprep.mubr.f32.mxu0 0.0
      %5185 = vmatmul.mubr.f32.gmra.mxu0 %v5113
      %v5186 = vpop.f32.mrf.mxu0
      %v5187 = vadd.f32 %v5092, %v5186
      %v5188 = vpop.f32.mrf.mxu0
      %5189 = vdwg.mxu0
      %v5190 = vlaneseq
      %v5191 = vshrl.u32 %v5190, 7
      %v5192 = vsub.s32 6, %v5191
      %v5193 = vrot.slane %v3762, %v5192
      %5194 = vrot.lane.b32.xlu0 %v5000, 64
      %v5195 = vpop.permute.xlu0 %5194
      %5196 = vrot.lane.b32.xlu0 %v5001, 64
      %v5197 = vpop.permute.xlu0 %5196
      %5198 = vrot.lane.b32.xlu0 %v5002, 64
      %v5199 = vpop.permute.xlu0 %5198
      %5200 = vrot.lane.b32.xlu0 %v5003, 64
      %v5201 = vpop.permute.xlu0 %5200
      %5206 = vmatprep.subr.mxu0 0.0
      %5207 = vmatpush1.msra.mxu0 0.0
      %5208 = vmatprep.subr.mxu0 0.0
      %5209 = vmatpush1.msra.mxu0 0.0
      %5210 = vmatprep.subr.mxu0 0.0
      %5211 = vmatpush1.msra.mxu0 0.0
      %5212 = vmatprep.subr.mxu0 0.0
      %5213 = vmatpush1.msra.mxu0 0.0
      %5214 = vmatprep.subr.mxu0 0.0
      %5215 = vmatpush1.msra.mxu0 0.0
      %5216 = vmatprep.subr.mxu0 0.0
      %5217 = vmatpush1.msra.mxu0 0.0
      %5218 = vmatprep.subr.mxu0 0.0
      %5219 = vmatpush1.msra.mxu0 0.0
      %5220 = vmatprep.subr.mxu0 0.0
      %5221 = vmatpush1.msra.mxu0 0.0
      %5222 = vmatprep.subr.mxu0 0.0
      %5223 = vmatpush1.msra.mxu0 0.0
      %5224 = vmatprep.subr.mxu0 0.0
      %5225 = vmatpush1.msra.mxu0 0.0
      %5226 = vmatprep.subr.mxu0 0.0
      %5227 = vmatpush1.msra.mxu0 0.0
      %5228 = vmatprep.subr.mxu0 0.0
      %5229 = vmatpush1.msra.mxu0 0.0
      %5230 = vmatprep.subr.mxu0 0.0
      %5231 = vmatpush1.msra.mxu0 %v5201
      %5232 = vmatprep.subr.mxu0 0.0
      %5233 = vmatpush1.msra.mxu0 %v5199
      %5234 = vmatprep.subr.mxu0 0.0
      %5235 = vmatpush1.msra.mxu0 %v5197
      %5236 = vmatprep.subr.mxu0 0.0
      %5237 = vmatpush1.msra.mxu0 %v5195
      %5238 = vmatprep.subr.mxu0 0.0
      %5239 = vmatpush2.msra.mxu0 0.0
      %5240 = vmatprep.subr.mxu0 0.0
      %5241 = vmatpush2.msra.mxu0 0.0
      %5242 = vmatprep.subr.mxu0 0.0
      %5243 = vmatpush2.msra.mxu0 0.0
      %5244 = vmatprep.subr.mxu0 0.0
      %5245 = vmatpush2.msra.mxu0 0.0
      %5246 = vmatprep.subr.mxu0 0.0
      %5247 = vmatpush2.msra.mxu0 0.0
      %5248 = vmatprep.subr.mxu0 0.0
      %5249 = vmatpush2.msra.mxu0 0.0
      %5250 = vmatprep.subr.mxu0 0.0
      %5251 = vmatpush2.msra.mxu0 0.0
      %5252 = vmatprep.subr.mxu0 0.0
      %5253 = vmatpush2.msra.mxu0 0.0
      %5254 = vmatprep.subr.mxu0 0.0
      %5255 = vmatpush2.msra.mxu0 0.0
      %5256 = vmatprep.subr.mxu0 0.0
      %5257 = vmatpush2.msra.mxu0 0.0
      %5258 = vmatprep.subr.mxu0 0.0
      %5259 = vmatpush2.msra.mxu0 0.0
      %5260 = vmatprep.subr.mxu0 0.0
      %5261 = vmatpush2.msra.mxu0 0.0
      %5262 = vmatprep.subr.mxu0 0.0
      %5263 = vmatpush2.msra.mxu0 0.0
      %5264 = vmatprep.subr.mxu0 0.0
      %5265 = vmatpush2.msra.mxu0 0.0
      %5266 = vmatprep.subr.mxu0 0.0
      %5267 = vmatpush2.msra.mxu0 0.0
      %5268 = vmatprep.subr.mxu0 0.0
      %5269 = vmatpush2.msra.mxu0 0.0
      %5270 = vmatprep.mubr.f32.mxu0 0.0
      %5271 = vmatmul.mubr.f32.gmra.mxu0 %v5110
      %v5272 = vpop.f32.mrf.mxu0
      %v5273 = vadd.f32 %v5193, %v5272
      %v5274 = vpop.f32.mrf.mxu0
      %5275 = vmatprep.mubr.f32.mxu0 0.0
      %5276 = vmatmul.mubr.f32.gmra.mxu0 %v5113
      %v5277 = vpop.f32.mrf.mxu0
      %v5278 = vadd.f32 %v5193, %v5277
      %v5279 = vpop.f32.mrf.mxu0
      %5280 = vdwg.mxu0
      %v5282 = vsel %vm515, %v5081, 0
      %v5285 = vsel %vm515, %v5086, 0
      %v5288 = vsel %vm515, %v5182, 0
      %v5291 = vsel %vm515, %v5187, 0
      %5293 = vmatprep.subr.mxu0 0.0
      %5294 = vmatpush1.xpose.msra.mxu0 0.0
      %5295 = vmatprep.subr.mxu0 0.0
      %5296 = vmatpush1.xpose.msra.mxu0 0.0
      %5297 = vmatprep.subr.mxu0 0.0
      %5298 = vmatpush1.xpose.msra.mxu0 0.0
      %5299 = vmatprep.subr.mxu0 0.0
      %5300 = vmatpush1.xpose.msra.mxu0 0.0
      %5301 = vmatprep.subr.mxu0 0.0
      %5302 = vmatpush1.xpose.msra.mxu0 0.0
      %5303 = vmatprep.subr.mxu0 0.0
      %5304 = vmatpush1.xpose.msra.mxu0 0.0
      %5305 = vmatprep.subr.mxu0 0.0
      %5306 = vmatpush1.xpose.msra.mxu0 0.0
      %5307 = vmatprep.subr.mxu0 0.0
      %5308 = vmatpush1.xpose.msra.mxu0 0.0
      %5309 = vmatprep.subr.mxu0 0.0
      %5310 = vmatpush1.xpose.msra.mxu0 0.0
      %5311 = vmatprep.subr.mxu0 0.0
      %5312 = vmatpush1.xpose.msra.mxu0 0.0
      %5313 = vmatprep.subr.mxu0 0.0
      %5314 = vmatpush1.xpose.msra.mxu0 0.0
      %5315 = vmatprep.subr.mxu0 0.0
      %5316 = vmatpush1.xpose.msra.mxu0 0.0
      %5317 = vmatprep.subr.mxu0 0.0
      %5318 = vmatpush1.xpose.msra.mxu0 0.0
      %5319 = vmatprep.subr.mxu0 0.0
      %5320 = vmatpush1.xpose.msra.mxu0 0.0
      %5321 = vmatprep.subr.mxu0 0.0
      %5322 = vmatpush1.xpose.msra.mxu0 %v5291
      %5323 = vmatprep.subr.mxu0 0.0
      %5324 = vmatpush1.xpose.msra.mxu0 %v5288
      %5325 = vmatprep.subr.mxu0 0.0
      %5326 = vmatpush2.xpose.msra.mxu0 0.0
      %5327 = vmatprep.subr.mxu0 0.0
      %5328 = vmatpush2.xpose.msra.mxu0 0.0
      %5329 = vmatprep.subr.mxu0 0.0
      %5330 = vmatpush2.xpose.msra.mxu0 0.0
      %5331 = vmatprep.subr.mxu0 0.0
      %5332 = vmatpush2.xpose.msra.mxu0 0.0
      %5333 = vmatprep.subr.mxu0 0.0
      %5334 = vmatpush2.xpose.msra.mxu0 0.0
      %5335 = vmatprep.subr.mxu0 0.0
      %5336 = vmatpush2.xpose.msra.mxu0 0.0
      %5337 = vmatprep.subr.mxu0 0.0
      %5338 = vmatpush2.xpose.msra.mxu0 0.0
      %5339 = vmatprep.subr.mxu0 0.0
      %5340 = vmatpush2.xpose.msra.mxu0 0.0
      %5341 = vmatprep.subr.mxu0 0.0
      %5342 = vmatpush2.xpose.msra.mxu0 0.0
      %5343 = vmatprep.subr.mxu0 0.0
      %5344 = vmatpush2.xpose.msra.mxu0 0.0
      %5345 = vmatprep.subr.mxu0 0.0
      %5346 = vmatpush2.xpose.msra.mxu0 0.0
      %5347 = vmatprep.subr.mxu0 0.0
      %5348 = vmatpush2.xpose.msra.mxu0 0.0
      %5349 = vmatprep.subr.mxu0 0.0
      %5350 = vmatpush2.xpose.msra.mxu0 0.0
      %5351 = vmatprep.subr.mxu0 0.0
      %5352 = vmatpush2.xpose.msra.mxu0 0.0
      %5353 = vmatprep.subr.mxu0 0.0
      %5354 = vmatpush2.xpose.msra.mxu0 0.0
      %5355 = vmatprep.subr.mxu0 0.0
      %5356 = vmatpush2.xpose.msra.mxu0 0.0
      %5357 = vmatprep.mubr.f32.mxu0 0.0
      %5358 = vmatmul.mubr.f32.gmra.mxu0 %v5282
      %v5359 = vpop.f32.mrf.mxu0
      %v5360 = vadd.f32 0.0, %v5359
      %v5361 = vpop.f32.mrf.mxu0
      %5362 = vmatprep.mubr.f32.mxu0 0.0
      %5363 = vmatmul.mubr.f32.gmra.mxu0 %v5285
      %v5364 = vpop.f32.mrf.mxu0
      %v5365 = vadd.f32 0.0, %v5364
      %v5366 = vpop.f32.mrf.mxu0
      %5367 = vdwg.mxu0
      %v5368 = vsel %vm521, %v5360, -inf
      %5369 = vmax.xlane.f32.xlu0 %v5368
      %v5370 = vpop.xlane.xlu0 %5369
      %v5371 = vsel %vm521, %v5365, -inf
      %5372 = vmax.xlane.f32.xlu0 %v5371
      %v5373 = vpop.xlane.xlu0 %5372
      %v5374 = vsub.f32 %v5360, %v5370
      %v5375 = vsub.f32 %v5365, %v5373
      %v5376 = vmul.f32 %v5374, 1.442695
      %v5377 = vpow.pop %v5376
      %v5378 = vmul.f32 %v5375, 1.442695
      %v5379 = vpow.pop %v5378
      %v5380 = vsel %vm521, %v5377, 0.0
      %5381 = vadd.xlane.f32.xlu0 %v5380
      %v5382 = vpop.xlane.xlu0 %5381
      %v5383 = vsel %vm521, %v5379, 0.0
      %5384 = vadd.xlane.f32.xlu0 %v5383
      %v5385 = vpop.xlane.xlu0 %5384
      %v5386 = vrcp.pop %v5382
      %v5387 = vmul.f32 %v5377, %v5386
      %v5388 = vrcp.pop %v5385
      %v5389 = vmul.f32 %v5379, %v5388
      %v5391 = vsel %vm521, %v5387, 0
      %v5394 = vsel %vm521, %v5389, 0
      %5396 = vmatprep.subr.mxu0 0.0
      %5397 = vmatpush1.msra.mxu0 0.0
      %5398 = vmatprep.subr.mxu0 0.0
      %5399 = vmatpush1.msra.mxu0 0.0
      %5400 = vmatprep.subr.mxu0 0.0
      %5401 = vmatpush1.msra.mxu0 0.0
      %5402 = vmatprep.subr.mxu0 0.0
      %5403 = vmatpush1.msra.mxu0 0.0
      %5404 = vmatprep.subr.mxu0 0.0
      %5405 = vmatpush1.msra.mxu0 0.0
      %5406 = vmatprep.subr.mxu0 0.0
      %5407 = vmatpush1.msra.mxu0 0.0
      %5408 = vmatprep.subr.mxu0 0.0
      %5409 = vmatpush1.msra.mxu0 0.0
      %5410 = vmatprep.subr.mxu0 0.0
      %5411 = vmatpush1.msra.mxu0 0.0
      %5412 = vmatprep.subr.mxu0 0.0
      %5413 = vmatpush1.msra.mxu0 0.0
      %5414 = vmatprep.subr.mxu0 0.0
      %5415 = vmatpush1.msra.mxu0 0.0
      %5416 = vmatprep.subr.mxu0 0.0
      %5417 = vmatpush1.msra.mxu0 0.0
      %5418 = vmatprep.subr.mxu0 0.0
      %5419 = vmatpush1.msra.mxu0 0.0
      %5420 = vmatprep.subr.mxu0 0.0
      %5421 = vmatpush1.msra.mxu0 0.0
      %5422 = vmatprep.subr.mxu0 0.0
      %5423 = vmatpush1.msra.mxu0 0.0
      %5424 = vmatprep.subr.mxu0 0.0
      %5425 = vmatpush1.msra.mxu0 %v5278
      %5426 = vmatprep.subr.mxu0 0.0
      %5427 = vmatpush1.msra.mxu0 %v5273
      %5428 = vmatprep.subr.mxu0 0.0
      %5429 = vmatpush2.msra.mxu0 0.0
      %5430 = vmatprep.subr.mxu0 0.0
      %5431 = vmatpush2.msra.mxu0 0.0
      %5432 = vmatprep.subr.mxu0 0.0
      %5433 = vmatpush2.msra.mxu0 0.0
      %5434 = vmatprep.subr.mxu0 0.0
      %5435 = vmatpush2.msra.mxu0 0.0
      %5436 = vmatprep.subr.mxu0 0.0
      %5437 = vmatpush2.msra.mxu0 0.0
      %5438 = vmatprep.subr.mxu0 0.0
      %5439 = vmatpush2.msra.mxu0 0.0
      %5440 = vmatprep.subr.mxu0 0.0
      %5441 = vmatpush2.msra.mxu0 0.0
      %5442 = vmatprep.subr.mxu0 0.0
      %5443 = vmatpush2.msra.mxu0 0.0
      %5444 = vmatprep.subr.mxu0 0.0
      %5445 = vmatpush2.msra.mxu0 0.0
      %5446 = vmatprep.subr.mxu0 0.0
      %5447 = vmatpush2.msra.mxu0 0.0
      %5448 = vmatprep.subr.mxu0 0.0
      %5449 = vmatpush2.msra.mxu0 0.0
      %5450 = vmatprep.subr.mxu0 0.0
      %5451 = vmatpush2.msra.mxu0 0.0
      %5452 = vmatprep.subr.mxu0 0.0
      %5453 = vmatpush2.msra.mxu0 0.0
      %5454 = vmatprep.subr.mxu0 0.0
      %5455 = vmatpush2.msra.mxu0 0.0
      %5456 = vmatprep.subr.mxu0 0.0
      %5457 = vmatpush2.msra.mxu0 0.0
      %5458 = vmatprep.subr.mxu0 0.0
      %5459 = vmatpush2.msra.mxu0 0.0
      %5460 = vmatprep.mubr.f32.mxu0 0.0
      %5461 = vmatmul.mubr.f32.gmra.mxu0 %v5391
      %v5462 = vpop.f32.mrf.mxu0
      %v5463 = vadd.f32 0.0, %v5462
      %v5464 = vpop.f32.mrf.mxu0
      %5465 = vmatprep.mubr.f32.mxu0 0.0
      %5466 = vmatmul.mubr.f32.gmra.mxu0 %v5394
      %v5467 = vpop.f32.mrf.mxu0
      %v5468 = vadd.f32 0.0, %v5467
      %v5469 = vpop.f32.mrf.mxu0
      %5470 = vdwg.mxu0
      %5471 = vrot.lane.b32.xlu0 %v5081, 120
      %v5472 = vpop.permute.xlu0 %5471
      %5473 = vrot.lane.b32.xlu0 %v5086, 120
      %v5474 = vpop.permute.xlu0 %5473
      %5475 = vrot.lane.b32.xlu0 %v5182, 120
      %v5476 = vpop.permute.xlu0 %5475
      %5477 = vrot.lane.b32.xlu0 %v5187, 120
      %v5478 = vpop.permute.xlu0 %5477
      %v5479 = vsel %vm515, %v5472, 0
      %v5481 = vsel %vm515, %v5474, 0
      %v5483 = vsel %vm515, %v5476, 0
      %v5485 = vsel %vm515, %v5478, 0
      %5487 = vmatprep.subr.mxu0 0.0
      %5488 = vmatpush1.xpose.msra.mxu0 0.0
      %5489 = vmatprep.subr.mxu0 0.0
      %5490 = vmatpush1.xpose.msra.mxu0 0.0
      %5491 = vmatprep.subr.mxu0 0.0
      %5492 = vmatpush1.xpose.msra.mxu0 0.0
      %5493 = vmatprep.subr.mxu0 0.0
      %5494 = vmatpush1.xpose.msra.mxu0 0.0
      %5495 = vmatprep.subr.mxu0 0.0
      %5496 = vmatpush1.xpose.msra.mxu0 0.0
      %5497 = vmatprep.subr.mxu0 0.0
      %5498 = vmatpush1.xpose.msra.mxu0 0.0
      %5499 = vmatprep.subr.mxu0 0.0
      %5500 = vmatpush1.xpose.msra.mxu0 0.0
      %5501 = vmatprep.subr.mxu0 0.0
      %5502 = vmatpush1.xpose.msra.mxu0 0.0
      %5503 = vmatprep.subr.mxu0 0.0
      %5504 = vmatpush1.xpose.msra.mxu0 0.0
      %5505 = vmatprep.subr.mxu0 0.0
      %5506 = vmatpush1.xpose.msra.mxu0 0.0
      %5507 = vmatprep.subr.mxu0 0.0
      %5508 = vmatpush1.xpose.msra.mxu0 0.0
      %5509 = vmatprep.subr.mxu0 0.0
      %5510 = vmatpush1.xpose.msra.mxu0 0.0
      %5511 = vmatprep.subr.mxu0 0.0
      %5512 = vmatpush1.xpose.msra.mxu0 0.0
      %5513 = vmatprep.subr.mxu0 0.0
      %5514 = vmatpush1.xpose.msra.mxu0 0.0
      %5515 = vmatprep.subr.mxu0 0.0
      %5516 = vmatpush1.xpose.msra.mxu0 %v5485
      %5517 = vmatprep.subr.mxu0 0.0
      %5518 = vmatpush1.xpose.msra.mxu0 %v5483
      %5519 = vmatprep.subr.mxu0 0.0
      %5520 = vmatpush2.xpose.msra.mxu0 0.0
      %5521 = vmatprep.subr.mxu0 0.0
      %5522 = vmatpush2.xpose.msra.mxu0 0.0
      %5523 = vmatprep.subr.mxu0 0.0
      %5524 = vmatpush2.xpose.msra.mxu0 0.0
      %5525 = vmatprep.subr.mxu0 0.0
      %5526 = vmatpush2.xpose.msra.mxu0 0.0
      %5527 = vmatprep.subr.mxu0 0.0
      %5528 = vmatpush2.xpose.msra.mxu0 0.0
      %5529 = vmatprep.subr.mxu0 0.0
      %5530 = vmatpush2.xpose.msra.mxu0 0.0
      %5531 = vmatprep.subr.mxu0 0.0
      %5532 = vmatpush2.xpose.msra.mxu0 0.0
      %5533 = vmatprep.subr.mxu0 0.0
      %5534 = vmatpush2.xpose.msra.mxu0 0.0
      %5535 = vmatprep.subr.mxu0 0.0
      %5536 = vmatpush2.xpose.msra.mxu0 0.0
      %5537 = vmatprep.subr.mxu0 0.0
      %5538 = vmatpush2.xpose.msra.mxu0 0.0
      %5539 = vmatprep.subr.mxu0 0.0
      %5540 = vmatpush2.xpose.msra.mxu0 0.0
      %5541 = vmatprep.subr.mxu0 0.0
      %5542 = vmatpush2.xpose.msra.mxu0 0.0
      %5543 = vmatprep.subr.mxu0 0.0
      %5544 = vmatpush2.xpose.msra.mxu0 0.0
      %5545 = vmatprep.subr.mxu0 0.0
      %5546 = vmatpush2.xpose.msra.mxu0 0.0
      %5547 = vmatprep.subr.mxu0 0.0
      %5548 = vmatpush2.xpose.msra.mxu0 0.0
      %5549 = vmatprep.subr.mxu0 0.0
      %5550 = vmatpush2.xpose.msra.mxu0 0.0
      %5551 = vmatprep.mubr.f32.mxu0 0.0
      %5552 = vmatmul.mubr.f32.gmra.mxu0 %v5479
      %v5553 = vpop.f32.mrf.mxu0
      %v5554 = vadd.f32 0.0, %v5553
      %v5555 = vpop.f32.mrf.mxu0
      %5556 = vmatprep.mubr.f32.mxu0 0.0
      %5557 = vmatmul.mubr.f32.gmra.mxu0 %v5481
      %v5558 = vpop.f32.mrf.mxu0
      %v5559 = vadd.f32 0.0, %v5558
      %v5560 = vpop.f32.mrf.mxu0
      %5561 = vdwg.mxu0
      %v5562 = vsel %vm521, %v5554, -inf
      %5563 = vmax.xlane.f32.xlu0 %v5562
      %v5564 = vpop.xlane.xlu0 %5563
      %v5565 = vsel %vm521, %v5559, -inf
      %5566 = vmax.xlane.f32.xlu0 %v5565
      %v5567 = vpop.xlane.xlu0 %5566
      %v5568 = vsub.f32 %v5554, %v5564
      %v5569 = vsub.f32 %v5559, %v5567
      %v5570 = vmul.f32 %v5568, 1.442695
      %v5571 = vpow.pop %v5570
      %v5572 = vmul.f32 %v5569, 1.442695
      %v5573 = vpow.pop %v5572
      %v5574 = vsel %vm521, %v5571, 0.0
      %5575 = vadd.xlane.f32.xlu0 %v5574
      %v5576 = vpop.xlane.xlu0 %5575
      %v5577 = vsel %vm521, %v5573, 0.0
      %5578 = vadd.xlane.f32.xlu0 %v5577
      %v5579 = vpop.xlane.xlu0 %5578
      %v5580 = vrcp.pop %v5576
      %v5581 = vmul.f32 %v5571, %v5580
      %v5582 = vrcp.pop %v5579
      %v5583 = vmul.f32 %v5573, %v5582
      %5586 = vrot.lane.b32.xlu0 %v5273, 120
      %v5587 = vpop.permute.xlu0 %5586
      %5588 = vrot.lane.b32.xlu0 %v5278, 120
      %v5589 = vpop.permute.xlu0 %5588
      %v5593 = vsel %vm521, %v5581, 0
      %v5596 = vsel %vm521, %v5583, 0
      %5598 = vmatprep.subr.mxu0 0.0
      %5599 = vmatpush1.msra.mxu0 0.0
      %5600 = vmatprep.subr.mxu0 0.0
      %5601 = vmatpush1.msra.mxu0 0.0
      %5602 = vmatprep.subr.mxu0 0.0
      %5603 = vmatpush1.msra.mxu0 0.0
      %5604 = vmatprep.subr.mxu0 0.0
      %5605 = vmatpush1.msra.mxu0 0.0
      %5606 = vmatprep.subr.mxu0 0.0
      %5607 = vmatpush1.msra.mxu0 0.0
      %5608 = vmatprep.subr.mxu0 0.0
      %5609 = vmatpush1.msra.mxu0 0.0
      %5610 = vmatprep.subr.mxu0 0.0
      %5611 = vmatpush1.msra.mxu0 0.0
      %5612 = vmatprep.subr.mxu0 0.0
      %5613 = vmatpush1.msra.mxu0 0.0
      %5614 = vmatprep.subr.mxu0 0.0
      %5615 = vmatpush1.msra.mxu0 0.0
      %5616 = vmatprep.subr.mxu0 0.0
      %5617 = vmatpush1.msra.mxu0 0.0
      %5618 = vmatprep.subr.mxu0 0.0
      %5619 = vmatpush1.msra.mxu0 0.0
      %5620 = vmatprep.subr.mxu0 0.0
      %5621 = vmatpush1.msra.mxu0 0.0
      %5622 = vmatprep.subr.mxu0 0.0
      %5623 = vmatpush1.msra.mxu0 0.0
      %5624 = vmatprep.subr.mxu0 0.0
      %5625 = vmatpush1.msra.mxu0 0.0
      %5626 = vmatprep.subr.mxu0 0.0
      %5627 = vmatpush1.msra.mxu0 %v5589
      %5628 = vmatprep.subr.mxu0 0.0
      %5629 = vmatpush1.msra.mxu0 %v5587
      %5630 = vmatprep.subr.mxu0 0.0
      %5631 = vmatpush2.msra.mxu0 0.0
      %5632 = vmatprep.subr.mxu0 0.0
      %5633 = vmatpush2.msra.mxu0 0.0
      %5634 = vmatprep.subr.mxu0 0.0
      %5635 = vmatpush2.msra.mxu0 0.0
      %5636 = vmatprep.subr.mxu0 0.0
      %5637 = vmatpush2.msra.mxu0 0.0
      %5638 = vmatprep.subr.mxu0 0.0
      %5639 = vmatpush2.msra.mxu0 0.0
      %5640 = vmatprep.subr.mxu0 0.0
      %5641 = vmatpush2.msra.mxu0 0.0
      %5642 = vmatprep.subr.mxu0 0.0
      %5643 = vmatpush2.msra.mxu0 0.0
      %5644 = vmatprep.subr.mxu0 0.0
      %5645 = vmatpush2.msra.mxu0 0.0
      %5646 = vmatprep.subr.mxu0 0.0
      %5647 = vmatpush2.msra.mxu0 0.0
      %5648 = vmatprep.subr.mxu0 0.0
      %5649 = vmatpush2.msra.mxu0 0.0
      %5650 = vmatprep.subr.mxu0 0.0
      %5651 = vmatpush2.msra.mxu0 0.0
      %5652 = vmatprep.subr.mxu0 0.0
      %5653 = vmatpush2.msra.mxu0 0.0
      %5654 = vmatprep.subr.mxu0 0.0
      %5655 = vmatpush2.msra.mxu0 0.0
      %5656 = vmatprep.subr.mxu0 0.0
      %5657 = vmatpush2.msra.mxu0 0.0
      %5658 = vmatprep.subr.mxu0 0.0
      %5659 = vmatpush2.msra.mxu0 0.0
      %5660 = vmatprep.subr.mxu0 0.0
      %5661 = vmatpush2.msra.mxu0 0.0
      %5662 = vmatprep.mubr.f32.mxu0 0.0
      %5663 = vmatmul.mubr.f32.gmra.mxu0 %v5593
      %v5664 = vpop.f32.mrf.mxu0
      %v5665 = vadd.f32 0.0, %v5664
      %v5666 = vpop.f32.mrf.mxu0
      %5667 = vmatprep.mubr.f32.mxu0 0.0
      %5668 = vmatmul.mubr.f32.gmra.mxu0 %v5596
      %v5669 = vpop.f32.mrf.mxu0
      %v5670 = vadd.f32 0.0, %v5669
      %v5671 = vpop.f32.mrf.mxu0
      %5672 = vdwg.mxu0
      %5673 = vrot.lane.b32.xlu0 %v5081, 112
      %v5674 = vpop.permute.xlu0 %5673
      %5675 = vrot.lane.b32.xlu0 %v5086, 112
      %v5676 = vpop.permute.xlu0 %5675
      %5677 = vrot.lane.b32.xlu0 %v5182, 112
      %v5678 = vpop.permute.xlu0 %5677
      %5679 = vrot.lane.b32.xlu0 %v5187, 112
      %v5680 = vpop.permute.xlu0 %5679
      %v5681 = vsel %vm515, %v5674, 0
      %v5683 = vsel %vm515, %v5676, 0
      %v5685 = vsel %vm515, %v5678, 0
      %v5687 = vsel %vm515, %v5680, 0
      %5689 = vmatprep.subr.mxu0 0.0
      %5690 = vmatpush1.xpose.msra.mxu0 0.0
      %5691 = vmatprep.subr.mxu0 0.0
      %5692 = vmatpush1.xpose.msra.mxu0 0.0
      %5693 = vmatprep.subr.mxu0 0.0
      %5694 = vmatpush1.xpose.msra.mxu0 0.0
      %5695 = vmatprep.subr.mxu0 0.0
      %5696 = vmatpush1.xpose.msra.mxu0 0.0
      %5697 = vmatprep.subr.mxu0 0.0
      %5698 = vmatpush1.xpose.msra.mxu0 0.0
      %5699 = vmatprep.subr.mxu0 0.0
      %5700 = vmatpush1.xpose.msra.mxu0 0.0
      %5701 = vmatprep.subr.mxu0 0.0
      %5702 = vmatpush1.xpose.msra.mxu0 0.0
      %5703 = vmatprep.subr.mxu0 0.0
      %5704 = vmatpush1.xpose.msra.mxu0 0.0
      %5705 = vmatprep.subr.mxu0 0.0
      %5706 = vmatpush1.xpose.msra.mxu0 0.0
      %5707 = vmatprep.subr.mxu0 0.0
      %5708 = vmatpush1.xpose.msra.mxu0 0.0
      %5709 = vmatprep.subr.mxu0 0.0
      %5710 = vmatpush1.xpose.msra.mxu0 0.0
      %5711 = vmatprep.subr.mxu0 0.0
      %5712 = vmatpush1.xpose.msra.mxu0 0.0
      %5713 = vmatprep.subr.mxu0 0.0
      %5714 = vmatpush1.xpose.msra.mxu0 0.0
      %5715 = vmatprep.subr.mxu0 0.0
      %5716 = vmatpush1.xpose.msra.mxu0 0.0
      %5717 = vmatprep.subr.mxu0 0.0
      %5718 = vmatpush1.xpose.msra.mxu0 %v5687
      %5719 = vmatprep.subr.mxu0 0.0
      %5720 = vmatpush1.xpose.msra.mxu0 %v5685
      %5721 = vmatprep.subr.mxu0 0.0
      %5722 = vmatpush2.xpose.msra.mxu0 0.0
      %5723 = vmatprep.subr.mxu0 0.0
      %5724 = vmatpush2.xpose.msra.mxu0 0.0
      %5725 = vmatprep.subr.mxu0 0.0
      %5726 = vmatpush2.xpose.msra.mxu0 0.0
      %5727 = vmatprep.subr.mxu0 0.0
      %5728 = vmatpush2.xpose.msra.mxu0 0.0
      %5729 = vmatprep.subr.mxu0 0.0
      %5730 = vmatpush2.xpose.msra.mxu0 0.0
      %5731 = vmatprep.subr.mxu0 0.0
      %5732 = vmatpush2.xpose.msra.mxu0 0.0
      %5733 = vmatprep.subr.mxu0 0.0
      %5734 = vmatpush2.xpose.msra.mxu0 0.0
      %5735 = vmatprep.subr.mxu0 0.0
      %5736 = vmatpush2.xpose.msra.mxu0 0.0
      %5737 = vmatprep.subr.mxu0 0.0
      %5738 = vmatpush2.xpose.msra.mxu0 0.0
      %5739 = vmatprep.subr.mxu0 0.0
      %5740 = vmatpush2.xpose.msra.mxu0 0.0
      %5741 = vmatprep.subr.mxu0 0.0
      %5742 = vmatpush2.xpose.msra.mxu0 0.0
      %5743 = vmatprep.subr.mxu0 0.0
      %5744 = vmatpush2.xpose.msra.mxu0 0.0
      %5745 = vmatprep.subr.mxu0 0.0
      %5746 = vmatpush2.xpose.msra.mxu0 0.0
      %5747 = vmatprep.subr.mxu0 0.0
      %5748 = vmatpush2.xpose.msra.mxu0 0.0
      %5749 = vmatprep.subr.mxu0 0.0
      %5750 = vmatpush2.xpose.msra.mxu0 0.0
      %5751 = vmatprep.subr.mxu0 0.0
      %5752 = vmatpush2.xpose.msra.mxu0 0.0
      %5753 = vmatprep.mubr.f32.mxu0 0.0
      %5754 = vmatmul.mubr.f32.gmra.mxu0 %v5681
      %v5755 = vpop.f32.mrf.mxu0
      %v5756 = vadd.f32 0.0, %v5755
      %v5757 = vpop.f32.mrf.mxu0
      %5758 = vmatprep.mubr.f32.mxu0 0.0
      %5759 = vmatmul.mubr.f32.gmra.mxu0 %v5683
      %v5760 = vpop.f32.mrf.mxu0
      %v5761 = vadd.f32 0.0, %v5760
      %v5762 = vpop.f32.mrf.mxu0
      %5763 = vdwg.mxu0
      %v5764 = vsel %vm521, %v5756, -inf
      %5765 = vmax.xlane.f32.xlu0 %v5764
      %v5766 = vpop.xlane.xlu0 %5765
      %v5767 = vsel %vm521, %v5761, -inf
      %5768 = vmax.xlane.f32.xlu0 %v5767
      %v5769 = vpop.xlane.xlu0 %5768
      %v5770 = vsub.f32 %v5756, %v5766
      %v5771 = vsub.f32 %v5761, %v5769
      %v5772 = vmul.f32 %v5770, 1.442695
      %v5773 = vpow.pop %v5772
      %v5774 = vmul.f32 %v5771, 1.442695
      %v5775 = vpow.pop %v5774
      %v5776 = vsel %vm521, %v5773, 0.0
      %5777 = vadd.xlane.f32.xlu0 %v5776
      %v5778 = vpop.xlane.xlu0 %5777
      %v5779 = vsel %vm521, %v5775, 0.0
      %5780 = vadd.xlane.f32.xlu0 %v5779
      %v5781 = vpop.xlane.xlu0 %5780
      %v5782 = vrcp.pop %v5778
      %v5783 = vmul.f32 %v5773, %v5782
      %v5784 = vrcp.pop %v5781
      %v5785 = vmul.f32 %v5775, %v5784
      %5786 = vrot.lane.b32.xlu0 %v5273, 112
      %v5787 = vpop.permute.xlu0 %5786
      %5788 = vrot.lane.b32.xlu0 %v5278, 112
      %v5789 = vpop.permute.xlu0 %5788
      %v5793 = vsel %vm521, %v5783, 0
      %v5796 = vsel %vm521, %v5785, 0
      %5798 = vmatprep.subr.mxu0 0.0
      %5799 = vmatpush1.msra.mxu0 0.0
      %5800 = vmatprep.subr.mxu0 0.0
      %5801 = vmatpush1.msra.mxu0 0.0
      %5802 = vmatprep.subr.mxu0 0.0
      %5803 = vmatpush1.msra.mxu0 0.0
      %5804 = vmatprep.subr.mxu0 0.0
      %5805 = vmatpush1.msra.mxu0 0.0
      %5806 = vmatprep.subr.mxu0 0.0
      %5807 = vmatpush1.msra.mxu0 0.0
      %5808 = vmatprep.subr.mxu0 0.0
      %5809 = vmatpush1.msra.mxu0 0.0
      %5810 = vmatprep.subr.mxu0 0.0
      %5811 = vmatpush1.msra.mxu0 0.0
      %5812 = vmatprep.subr.mxu0 0.0
      %5813 = vmatpush1.msra.mxu0 0.0
      %5814 = vmatprep.subr.mxu0 0.0
      %5815 = vmatpush1.msra.mxu0 0.0
      %5816 = vmatprep.subr.mxu0 0.0
      %5817 = vmatpush1.msra.mxu0 0.0
      %5818 = vmatprep.subr.mxu0 0.0
      %5819 = vmatpush1.msra.mxu0 0.0
      %5820 = vmatprep.subr.mxu0 0.0
      %5821 = vmatpush1.msra.mxu0 0.0
      %5822 = vmatprep.subr.mxu0 0.0
      %5823 = vmatpush1.msra.mxu0 0.0
      %5824 = vmatprep.subr.mxu0 0.0
      %5825 = vmatpush1.msra.mxu0 0.0
      %5826 = vmatprep.subr.mxu0 0.0
      %5827 = vmatpush1.msra.mxu0 %v5789
      %5828 = vmatprep.subr.mxu0 0.0
      %5829 = vmatpush1.msra.mxu0 %v5787
      %5830 = vmatprep.subr.mxu0 0.0
      %5831 = vmatpush2.msra.mxu0 0.0
      %5832 = vmatprep.subr.mxu0 0.0
      %5833 = vmatpush2.msra.mxu0 0.0
      %5834 = vmatprep.subr.mxu0 0.0
      %5835 = vmatpush2.msra.mxu0 0.0
      %5836 = vmatprep.subr.mxu0 0.0
      %5837 = vmatpush2.msra.mxu0 0.0
      %5838 = vmatprep.subr.mxu0 0.0
      %5839 = vmatpush2.msra.mxu0 0.0
      %5840 = vmatprep.subr.mxu0 0.0
      %5841 = vmatpush2.msra.mxu0 0.0
      %5842 = vmatprep.subr.mxu0 0.0
      %5843 = vmatpush2.msra.mxu0 0.0
      %5844 = vmatprep.subr.mxu0 0.0
      %5845 = vmatpush2.msra.mxu0 0.0
      %5846 = vmatprep.subr.mxu0 0.0
      %5847 = vmatpush2.msra.mxu0 0.0
      %5848 = vmatprep.subr.mxu0 0.0
      %5849 = vmatpush2.msra.mxu0 0.0
      %5850 = vmatprep.subr.mxu0 0.0
      %5851 = vmatpush2.msra.mxu0 0.0
      %5852 = vmatprep.subr.mxu0 0.0
      %5853 = vmatpush2.msra.mxu0 0.0
      %5854 = vmatprep.subr.mxu0 0.0
      %5855 = vmatpush2.msra.mxu0 0.0
      %5856 = vmatprep.subr.mxu0 0.0
      %5857 = vmatpush2.msra.mxu0 0.0
      %5858 = vmatprep.subr.mxu0 0.0
      %5859 = vmatpush2.msra.mxu0 0.0
      %5860 = vmatprep.subr.mxu0 0.0
      %5861 = vmatpush2.msra.mxu0 0.0
      %5862 = vmatprep.mubr.f32.mxu0 0.0
      %5863 = vmatmul.mubr.f32.gmra.mxu0 %v5793
      %v5864 = vpop.f32.mrf.mxu0
      %v5865 = vadd.f32 0.0, %v5864
      %v5866 = vpop.f32.mrf.mxu0
      %5867 = vmatprep.mubr.f32.mxu0 0.0
      %5868 = vmatmul.mubr.f32.gmra.mxu0 %v5796
      %v5869 = vpop.f32.mrf.mxu0
      %v5870 = vadd.f32 0.0, %v5869
      %v5871 = vpop.f32.mrf.mxu0
      %5872 = vdwg.mxu0
      %5873 = vrot.lane.b32.xlu0 %v5081, 104
      %v5874 = vpop.permute.xlu0 %5873
      %5875 = vrot.lane.b32.xlu0 %v5086, 104
      %v5876 = vpop.permute.xlu0 %5875
      %5877 = vrot.lane.b32.xlu0 %v5182, 104
      %v5878 = vpop.permute.xlu0 %5877
      %5879 = vrot.lane.b32.xlu0 %v5187, 104
      %v5880 = vpop.permute.xlu0 %5879
      %v5881 = vsel %vm515, %v5874, 0
      %v5883 = vsel %vm515, %v5876, 0
      %v5885 = vsel %vm515, %v5878, 0
      %v5887 = vsel %vm515, %v5880, 0
      %5889 = vmatprep.subr.mxu0 0.0
      %5890 = vmatpush1.xpose.msra.mxu0 0.0
      %5891 = vmatprep.subr.mxu0 0.0
      %5892 = vmatpush1.xpose.msra.mxu0 0.0
      %5893 = vmatprep.subr.mxu0 0.0
      %5894 = vmatpush1.xpose.msra.mxu0 0.0
      %5895 = vmatprep.subr.mxu0 0.0
      %5896 = vmatpush1.xpose.msra.mxu0 0.0
      %5897 = vmatprep.subr.mxu0 0.0
      %5898 = vmatpush1.xpose.msra.mxu0 0.0
      %5899 = vmatprep.subr.mxu0 0.0
      %5900 = vmatpush1.xpose.msra.mxu0 0.0
      %5901 = vmatprep.subr.mxu0 0.0
      %5902 = vmatpush1.xpose.msra.mxu0 0.0
      %5903 = vmatprep.subr.mxu0 0.0
      %5904 = vmatpush1.xpose.msra.mxu0 0.0
      %5905 = vmatprep.subr.mxu0 0.0
      %5906 = vmatpush1.xpose.msra.mxu0 0.0
      %5907 = vmatprep.subr.mxu0 0.0
      %5908 = vmatpush1.xpose.msra.mxu0 0.0
      %5909 = vmatprep.subr.mxu0 0.0
      %5910 = vmatpush1.xpose.msra.mxu0 0.0
      %5911 = vmatprep.subr.mxu0 0.0
      %5912 = vmatpush1.xpose.msra.mxu0 0.0
      %5913 = vmatprep.subr.mxu0 0.0
      %5914 = vmatpush1.xpose.msra.mxu0 0.0
      %5915 = vmatprep.subr.mxu0 0.0
      %5916 = vmatpush1.xpose.msra.mxu0 0.0
      %5917 = vmatprep.subr.mxu0 0.0
      %5918 = vmatpush1.xpose.msra.mxu0 %v5887
      %5919 = vmatprep.subr.mxu0 0.0
      %5920 = vmatpush1.xpose.msra.mxu0 %v5885
      %5921 = vmatprep.subr.mxu0 0.0
      %5922 = vmatpush2.xpose.msra.mxu0 0.0
      %5923 = vmatprep.subr.mxu0 0.0
      %5924 = vmatpush2.xpose.msra.mxu0 0.0
      %5925 = vmatprep.subr.mxu0 0.0
      %5926 = vmatpush2.xpose.msra.mxu0 0.0
      %5927 = vmatprep.subr.mxu0 0.0
      %5928 = vmatpush2.xpose.msra.mxu0 0.0
      %5929 = vmatprep.subr.mxu0 0.0
      %5930 = vmatpush2.xpose.msra.mxu0 0.0
      %5931 = vmatprep.subr.mxu0 0.0
      %5932 = vmatpush2.xpose.msra.mxu0 0.0
      %5933 = vmatprep.subr.mxu0 0.0
      %5934 = vmatpush2.xpose.msra.mxu0 0.0
      %5935 = vmatprep.subr.mxu0 0.0
      %5936 = vmatpush2.xpose.msra.mxu0 0.0
      %5937 = vmatprep.subr.mxu0 0.0
      %5938 = vmatpush2.xpose.msra.mxu0 0.0
      %5939 = vmatprep.subr.mxu0 0.0
      %5940 = vmatpush2.xpose.msra.mxu0 0.0
      %5941 = vmatprep.subr.mxu0 0.0
      %5942 = vmatpush2.xpose.msra.mxu0 0.0
      %5943 = vmatprep.subr.mxu0 0.0
      %5944 = vmatpush2.xpose.msra.mxu0 0.0
      %5945 = vmatprep.subr.mxu0 0.0
      %5946 = vmatpush2.xpose.msra.mxu0 0.0
      %5947 = vmatprep.subr.mxu0 0.0
      %5948 = vmatpush2.xpose.msra.mxu0 0.0
      %5949 = vmatprep.subr.mxu0 0.0
      %5950 = vmatpush2.xpose.msra.mxu0 0.0
      %5951 = vmatprep.subr.mxu0 0.0
      %5952 = vmatpush2.xpose.msra.mxu0 0.0
      %5953 = vmatprep.mubr.f32.mxu0 0.0
      %5954 = vmatmul.mubr.f32.gmra.mxu0 %v5881
      %v5955 = vpop.f32.mrf.mxu0
      %v5956 = vadd.f32 0.0, %v5955
      %v5957 = vpop.f32.mrf.mxu0
      %5958 = vmatprep.mubr.f32.mxu0 0.0
      %5959 = vmatmul.mubr.f32.gmra.mxu0 %v5883
      %v5960 = vpop.f32.mrf.mxu0
      %v5961 = vadd.f32 0.0, %v5960
      %v5962 = vpop.f32.mrf.mxu0
      %5963 = vdwg.mxu0
      %v5964 = vsel %vm521, %v5956, -inf
      %5965 = vmax.xlane.f32.xlu0 %v5964
      %v5966 = vpop.xlane.xlu0 %5965
      %v5967 = vsel %vm521, %v5961, -inf
      %5968 = vmax.xlane.f32.xlu0 %v5967
      %v5969 = vpop.xlane.xlu0 %5968
      %v5970 = vsub.f32 %v5956, %v5966
      %v5971 = vsub.f32 %v5961, %v5969
      %v5972 = vmul.f32 %v5970, 1.442695
      %v5973 = vpow.pop %v5972
      %v5974 = vmul.f32 %v5971, 1.442695
      %v5975 = vpow.pop %v5974
      %v5976 = vsel %vm521, %v5973, 0.0
      %5977 = vadd.xlane.f32.xlu0 %v5976
      %v5978 = vpop.xlane.xlu0 %5977
      %v5979 = vsel %vm521, %v5975, 0.0
      %5980 = vadd.xlane.f32.xlu0 %v5979
      %v5981 = vpop.xlane.xlu0 %5980
      %v5982 = vrcp.pop %v5978
      %v5983 = vmul.f32 %v5973, %v5982
      %v5984 = vrcp.pop %v5981
      %v5985 = vmul.f32 %v5975, %v5984
      %5986 = vrot.lane.b32.xlu0 %v5273, 104
      %v5987 = vpop.permute.xlu0 %5986
      %5988 = vrot.lane.b32.xlu0 %v5278, 104
      %v5989 = vpop.permute.xlu0 %5988
      %v5993 = vsel %vm521, %v5983, 0
      %v5996 = vsel %vm521, %v5985, 0
      %5998 = vmatprep.subr.mxu0 0.0
      %5999 = vmatpush1.msra.mxu0 0.0
      %6000 = vmatprep.subr.mxu0 0.0
      %6001 = vmatpush1.msra.mxu0 0.0
      %6002 = vmatprep.subr.mxu0 0.0
      %6003 = vmatpush1.msra.mxu0 0.0
      %6004 = vmatprep.subr.mxu0 0.0
      %6005 = vmatpush1.msra.mxu0 0.0
      %6006 = vmatprep.subr.mxu0 0.0
      %6007 = vmatpush1.msra.mxu0 0.0
      %6008 = vmatprep.subr.mxu0 0.0
      %6009 = vmatpush1.msra.mxu0 0.0
      %6010 = vmatprep.subr.mxu0 0.0
      %6011 = vmatpush1.msra.mxu0 0.0
      %6012 = vmatprep.subr.mxu0 0.0
      %6013 = vmatpush1.msra.mxu0 0.0
      %6014 = vmatprep.subr.mxu0 0.0
      %6015 = vmatpush1.msra.mxu0 0.0
      %6016 = vmatprep.subr.mxu0 0.0
      %6017 = vmatpush1.msra.mxu0 0.0
      %6018 = vmatprep.subr.mxu0 0.0
      %6019 = vmatpush1.msra.mxu0 0.0
      %6020 = vmatprep.subr.mxu0 0.0
      %6021 = vmatpush1.msra.mxu0 0.0
      %6022 = vmatprep.subr.mxu0 0.0
      %6023 = vmatpush1.msra.mxu0 0.0
      %6024 = vmatprep.subr.mxu0 0.0
      %6025 = vmatpush1.msra.mxu0 0.0
      %6026 = vmatprep.subr.mxu0 0.0
      %6027 = vmatpush1.msra.mxu0 %v5989
      %6028 = vmatprep.subr.mxu0 0.0
      %6029 = vmatpush1.msra.mxu0 %v5987
      %6030 = vmatprep.subr.mxu0 0.0
      %6031 = vmatpush2.msra.mxu0 0.0
      %6032 = vmatprep.subr.mxu0 0.0
      %6033 = vmatpush2.msra.mxu0 0.0
      %6034 = vmatprep.subr.mxu0 0.0
      %6035 = vmatpush2.msra.mxu0 0.0
      %6036 = vmatprep.subr.mxu0 0.0
      %6037 = vmatpush2.msra.mxu0 0.0
      %6038 = vmatprep.subr.mxu0 0.0
      %6039 = vmatpush2.msra.mxu0 0.0
      %6040 = vmatprep.subr.mxu0 0.0
      %6041 = vmatpush2.msra.mxu0 0.0
      %6042 = vmatprep.subr.mxu0 0.0
      %6043 = vmatpush2.msra.mxu0 0.0
      %6044 = vmatprep.subr.mxu0 0.0
      %6045 = vmatpush2.msra.mxu0 0.0
      %6046 = vmatprep.subr.mxu0 0.0
      %6047 = vmatpush2.msra.mxu0 0.0
      %6048 = vmatprep.subr.mxu0 0.0
      %6049 = vmatpush2.msra.mxu0 0.0
      %6050 = vmatprep.subr.mxu0 0.0
      %6051 = vmatpush2.msra.mxu0 0.0
      %6052 = vmatprep.subr.mxu0 0.0
      %6053 = vmatpush2.msra.mxu0 0.0
      %6054 = vmatprep.subr.mxu0 0.0
      %6055 = vmatpush2.msra.mxu0 0.0
      %6056 = vmatprep.subr.mxu0 0.0
      %6057 = vmatpush2.msra.mxu0 0.0
      %6058 = vmatprep.subr.mxu0 0.0
      %6059 = vmatpush2.msra.mxu0 0.0
      %6060 = vmatprep.subr.mxu0 0.0
      %6061 = vmatpush2.msra.mxu0 0.0
      %6062 = vmatprep.mubr.f32.mxu0 0.0
      %6063 = vmatmul.mubr.f32.gmra.mxu0 %v5993
      %v6064 = vpop.f32.mrf.mxu0
      %v6065 = vadd.f32 0.0, %v6064
      %v6066 = vpop.f32.mrf.mxu0
      %6067 = vmatprep.mubr.f32.mxu0 0.0
      %6068 = vmatmul.mubr.f32.gmra.mxu0 %v5996
      %v6069 = vpop.f32.mrf.mxu0
      %v6070 = vadd.f32 0.0, %v6069
      %v6071 = vpop.f32.mrf.mxu0
      %6072 = vdwg.mxu0
      %6075 = vrot.lane.b32.xlu0 %v5665, 8
      %v6076 = vpop.permute.xlu0 %6075
      %6077 = vrot.lane.b32.xlu0 %v5670, 8
      %v6078 = vpop.permute.xlu0 %6077
      %6083 = vrot.lane.b32.xlu0 %v5865, 16
      %v6084 = vpop.permute.xlu0 %6083
      %6085 = vrot.lane.b32.xlu0 %v5870, 16
      %v6086 = vpop.permute.xlu0 %6085
      %6091 = vrot.lane.b32.xlu0 %v6065, 24
      %v6092 = vpop.permute.xlu0 %6091
      %6093 = vrot.lane.b32.xlu0 %v6070, 24
      %v6094 = vpop.permute.xlu0 %6093
      %v6097 = vsel %vm515, %v5463, %v6076
      %v6098 = vsel %vm515, %v5468, %v6078
      %v6099 = vsel %vm521, %v6097, %v6084
      %v6100 = vsel %vm521, %v6098, %v6086
      %v6101 = vsel %vm1701, %v6099, %v6092
      %v6102 = vsel %vm1701, %v6100, %v6094
      %v6103 = vlaneseq
      %v6104 = vshrl.u32 %v6103, 7
      %v6105 = vsub.s32 7, %v6104
      %v6106 = vrot.slane %v3762, %v6105
      %6107 = vrot.lane.b32.xlu0 %v5000, 32
      %v6108 = vpop.permute.xlu0 %6107
      %6109 = vrot.lane.b32.xlu0 %v5001, 32
      %v6110 = vpop.permute.xlu0 %6109
      %6111 = vrot.lane.b32.xlu0 %v5002, 32
      %v6112 = vpop.permute.xlu0 %6111
      %6113 = vrot.lane.b32.xlu0 %v5003, 32
      %v6114 = vpop.permute.xlu0 %6113
      %v6120 = vsel %vm613, %v6101, 0
      %v6123 = vsel %vm613, %v6102, 0
      %6125 = vmatprep.subr.mxu0 0.0
      %6126 = vmatpush1.msra.mxu0 0.0
      %6127 = vmatprep.subr.mxu0 0.0
      %6128 = vmatpush1.msra.mxu0 0.0
      %6129 = vmatprep.subr.mxu0 0.0
      %6130 = vmatpush1.msra.mxu0 0.0
      %6131 = vmatprep.subr.mxu0 0.0
      %6132 = vmatpush1.msra.mxu0 0.0
      %6133 = vmatprep.subr.mxu0 0.0
      %6134 = vmatpush1.msra.mxu0 0.0
      %6135 = vmatprep.subr.mxu0 0.0
      %6136 = vmatpush1.msra.mxu0 0.0
      %6137 = vmatprep.subr.mxu0 0.0
      %6138 = vmatpush1.msra.mxu0 0.0
      %6139 = vmatprep.subr.mxu0 0.0
      %6140 = vmatpush1.msra.mxu0 0.0
      %6141 = vmatprep.subr.mxu0 0.0
      %6142 = vmatpush1.msra.mxu0 0.0
      %6143 = vmatprep.subr.mxu0 0.0
      %6144 = vmatpush1.msra.mxu0 0.0
      %6145 = vmatprep.subr.mxu0 0.0
      %6146 = vmatpush1.msra.mxu0 0.0
      %6147 = vmatprep.subr.mxu0 0.0
      %6148 = vmatpush1.msra.mxu0 0.0
      %6149 = vmatprep.subr.mxu0 0.0
      %6150 = vmatpush1.msra.mxu0 %v6114
      %6151 = vmatprep.subr.mxu0 0.0
      %6152 = vmatpush1.msra.mxu0 %v6112
      %6153 = vmatprep.subr.mxu0 0.0
      %6154 = vmatpush1.msra.mxu0 %v6110
      %6155 = vmatprep.subr.mxu0 0.0
      %6156 = vmatpush1.msra.mxu0 %v6108
      %6157 = vmatprep.subr.mxu0 0.0
      %6158 = vmatpush2.msra.mxu0 0.0
      %6159 = vmatprep.subr.mxu0 0.0
      %6160 = vmatpush2.msra.mxu0 0.0
      %6161 = vmatprep.subr.mxu0 0.0
      %6162 = vmatpush2.msra.mxu0 0.0
      %6163 = vmatprep.subr.mxu0 0.0
      %6164 = vmatpush2.msra.mxu0 0.0
      %6165 = vmatprep.subr.mxu0 0.0
      %6166 = vmatpush2.msra.mxu0 0.0
      %6167 = vmatprep.subr.mxu0 0.0
      %6168 = vmatpush2.msra.mxu0 0.0
      %6169 = vmatprep.subr.mxu0 0.0
      %6170 = vmatpush2.msra.mxu0 0.0
      %6171 = vmatprep.subr.mxu0 0.0
      %6172 = vmatpush2.msra.mxu0 0.0
      %6173 = vmatprep.subr.mxu0 0.0
      %6174 = vmatpush2.msra.mxu0 0.0
      %6175 = vmatprep.subr.mxu0 0.0
      %6176 = vmatpush2.msra.mxu0 0.0
      %6177 = vmatprep.subr.mxu0 0.0
      %6178 = vmatpush2.msra.mxu0 0.0
      %6179 = vmatprep.subr.mxu0 0.0
      %6180 = vmatpush2.msra.mxu0 0.0
      %6181 = vmatprep.subr.mxu0 0.0
      %6182 = vmatpush2.msra.mxu0 0.0
      %6183 = vmatprep.subr.mxu0 0.0
      %6184 = vmatpush2.msra.mxu0 0.0
      %6185 = vmatprep.subr.mxu0 0.0
      %6186 = vmatpush2.msra.mxu0 0.0
      %6187 = vmatprep.subr.mxu0 0.0
      %6188 = vmatpush2.msra.mxu0 0.0
      %6189 = vmatprep.mubr.f32.mxu0 0.0
      %6190 = vmatmul.mubr.f32.gmra.mxu0 %v6120
      %v6191 = vpop.f32.mrf.mxu0
      %v6192 = vadd.f32 %v6106, %v6191
      %v6193 = vpop.f32.mrf.mxu0
      %6194 = vmatprep.mubr.f32.mxu0 0.0
      %6195 = vmatmul.mubr.f32.gmra.mxu0 %v6123
      %v6196 = vpop.f32.mrf.mxu0
      %v6197 = vadd.f32 %v6106, %v6196
      %v6198 = vpop.f32.mrf.mxu0
      %6199 = vdwg.mxu0
      %v6200 = vadd.f32 %v4997, %v6192
      %v6201 = vadd.f32 %v4998, %v6197
      %v6202 = vsel %vm613, %v6200, 0.0
      %6203 = vadd.xlane.f32.xlu0 %v6202
      %v6204 = vpop.xlane.xlu0 %6203
      %v6205 = vsel %vm613, %v6201, 0.0
      %6206 = vadd.xlane.f32.xlu0 %v6205
      %v6207 = vpop.xlane.xlu0 %6206
      %v6208 = vmul.f32 %v6204, %v1809
      %v6209 = vmul.f32 %v6207, %v1809
      %v6210 = vsub.f32 %v6200, %v6208
      %v6211 = vsub.f32 %v6201, %v6209
      %v6212 = vmul.f32 %v6210, %v6210
      %v6213 = vmul.f32 %v6211, %v6211
      %v6214 = vsel %vm613, %v6212, 0.0
      %6215 = vadd.xlane.f32.xlu0 %v6214
      %v6216 = vpop.xlane.xlu0 %6215
      %v6217 = vsel %vm613, %v6213, 0.0
      %6218 = vadd.xlane.f32.xlu0 %v6217
      %v6219 = vpop.xlane.xlu0 %6218
      %v6220 = vmul.f32 %v6216, %v1809
      %v6221 = vmul.f32 %v6219, %v1809
      %v6222 = vadd.f32 %v6220, 1e-05
      %v6223 = vadd.f32 %v6221, 1e-05
      %v6224 = vrsqrt.pop %v6222
      %v6225 = vrsqrt.pop %v6223
      %v6226 = vmul.f32 %v6210, %v6224
      %v6227 = vmul.f32 %v6211, %v6225
      %v6228 = vlaneseq
      %v6229 = vshrl.u32 %v6228, 7
      %v6230 = vsub.s32 3, %v6229
      %v6231 = vrot.slane %v3763, %v6230
      %v6232 = vmul.f32 %v6226, %v6231
      %v6233 = vmul.f32 %v6227, %v6231
      %v6234 = vlaneseq
      %v6235 = vshrl.u32 %v6234, 7
      %v6236 = vsub.s32 4, %v6235
      %v6237 = vrot.slane %v3763, %v6236
      %v6238 = vadd.f32 %v6232, %v6237
      %v6239 = vadd.f32 %v6233, %v6237
      %s6240 = scalar_lea.vmem %s5, 64
      %v6241 = vld [vmem:[%s6240] sm:$0xff]
      %v6242 = vld [vmem:[%s6240 + $0x8] sm:$0xff]
      %v6243 = vld [vmem:[%s6240 + $0x10] sm:$0xff]
      %v6244 = vld [vmem:[%s6240 + $0x18] sm:$0xff]
      %s6245 = scalar_lea.vmem %s6, 2
      %v6246 = vld [vmem:[%s6245] sm:$0x1]
      %s6247 = scalar_lea.vmem %s7, 128
      %v6248 = vld [vmem:[%s6247] sm:$0xff]
      %v6249 = vld [vmem:[%s6247 + $0x8] sm:$0xff]
      %v6250 = vld [vmem:[%s6247 + $0x10] sm:$0xff]
      %v6251 = vld [vmem:[%s6247 + $0x18] sm:$0xff]
      %v6252 = vld [vmem:[%s6247 + $0x20] sm:$0xff]
      %v6253 = vld [vmem:[%s6247 + $0x28] sm:$0xff]
      %v6254 = vld [vmem:[%s6247 + $0x30] sm:$0xff]
      %v6255 = vld [vmem:[%s6247 + $0x38] sm:$0xff]
      %v6257 = vlaneseq
      %v6258 = vshrl.u32 %v6257, 7
      %v6259 = vsub.s32 0, %v6258
      %v6260 = vrot.slane %v6246, %v6259
      %v6263 = vsel %vm613, %v6238, 0
      %v6266 = vsel %vm613, %v6239, 0
      %6268 = vmatprep.subr.mxu0 0.0
      %6269 = vmatpush1.msra.mxu0 0.0
      %6270 = vmatprep.subr.mxu0 0.0
      %6271 = vmatpush1.msra.mxu0 0.0
      %6272 = vmatprep.subr.mxu0 0.0
      %6273 = vmatpush1.msra.mxu0 0.0
      %6274 = vmatprep.subr.mxu0 0.0
      %6275 = vmatpush1.msra.mxu0 0.0
      %6276 = vmatprep.subr.mxu0 0.0
      %6277 = vmatpush1.msra.mxu0 0.0
      %6278 = vmatprep.subr.mxu0 0.0
      %6279 = vmatpush1.msra.mxu0 0.0
      %6280 = vmatprep.subr.mxu0 0.0
      %6281 = vmatpush1.msra.mxu0 0.0
      %6282 = vmatprep.subr.mxu0 0.0
      %6283 = vmatpush1.msra.mxu0 0.0
      %6284 = vmatprep.subr.mxu0 0.0
      %6285 = vmatpush1.msra.mxu0 0.0
      %6286 = vmatprep.subr.mxu0 0.0
      %6287 = vmatpush1.msra.mxu0 0.0
      %6288 = vmatprep.subr.mxu0 0.0
      %6289 = vmatpush1.msra.mxu0 0.0
      %6290 = vmatprep.subr.mxu0 0.0
      %6291 = vmatpush1.msra.mxu0 0.0
      %6292 = vmatprep.subr.mxu0 0.0
      %6293 = vmatpush1.msra.mxu0 %v6244
      %6294 = vmatprep.subr.mxu0 0.0
      %6295 = vmatpush1.msra.mxu0 %v6243
      %6296 = vmatprep.subr.mxu0 0.0
      %6297 = vmatpush1.msra.mxu0 %v6242
      %6298 = vmatprep.subr.mxu0 0.0
      %6299 = vmatpush1.msra.mxu0 %v6241
      %6300 = vmatprep.subr.mxu0 0.0
      %6301 = vmatpush2.msra.mxu0 0.0
      %6302 = vmatprep.subr.mxu0 0.0
      %6303 = vmatpush2.msra.mxu0 0.0
      %6304 = vmatprep.subr.mxu0 0.0
      %6305 = vmatpush2.msra.mxu0 0.0
      %6306 = vmatprep.subr.mxu0 0.0
      %6307 = vmatpush2.msra.mxu0 0.0
      %6308 = vmatprep.subr.mxu0 0.0
      %6309 = vmatpush2.msra.mxu0 0.0
      %6310 = vmatprep.subr.mxu0 0.0
      %6311 = vmatpush2.msra.mxu0 0.0
      %6312 = vmatprep.subr.mxu0 0.0
      %6313 = vmatpush2.msra.mxu0 0.0
      %6314 = vmatprep.subr.mxu0 0.0
      %6315 = vmatpush2.msra.mxu0 0.0
      %6316 = vmatprep.subr.mxu0 0.0
      %6317 = vmatpush2.msra.mxu0 0.0
      %6318 = vmatprep.subr.mxu0 0.0
      %6319 = vmatpush2.msra.mxu0 0.0
      %6320 = vmatprep.subr.mxu0 0.0
      %6321 = vmatpush2.msra.mxu0 0.0
      %6322 = vmatprep.subr.mxu0 0.0
      %6323 = vmatpush2.msra.mxu0 0.0
      %6324 = vmatprep.subr.mxu0 0.0
      %6325 = vmatpush2.msra.mxu0 0.0
      %6326 = vmatprep.subr.mxu0 0.0
      %6327 = vmatpush2.msra.mxu0 0.0
      %6328 = vmatprep.subr.mxu0 0.0
      %6329 = vmatpush2.msra.mxu0 0.0
      %6330 = vmatprep.subr.mxu0 0.0
      %6331 = vmatpush2.msra.mxu0 0.0
      %6332 = vmatprep.mubr.f32.mxu0 0.0
      %6333 = vmatmul.mubr.f32.gmra.mxu0 %v6263
      %v6334 = vpop.f32.mrf.mxu0
      %v6335 = vadd.f32 %v6260, %v6334
      %v6336 = vpop.f32.mrf.mxu0
      %6337 = vmatprep.mubr.f32.mxu0 0.0
      %6338 = vmatmul.mubr.f32.gmra.mxu0 %v6266
      %v6339 = vpop.f32.mrf.mxu0
      %v6340 = vadd.f32 %v6260, %v6339
      %v6341 = vpop.f32.mrf.mxu0
      %6342 = vdwg.mxu0
      %v6343 = vmax.f32 %v6335, 0.0
      %v6344 = vmax.f32 %v6340, 0.0
      %v6345 = vlaneseq
      %v6346 = vshrl.u32 %v6345, 7
      %v6347 = vsub.s32 0, %v6346
      %v6348 = vrot.slane %v3763, %v6347
      %v6350 = vsel %vm1948, %v6343, 0
      %v6353 = vsel %vm1948, %v6344, 0
      %6355 = vmatprep.subr.mxu0 0.0
      %6356 = vmatpush1.msra.mxu0 0.0
      %6357 = vmatprep.subr.mxu0 0.0
      %6358 = vmatpush1.msra.mxu0 0.0
      %6359 = vmatprep.subr.mxu0 0.0
      %6360 = vmatpush1.msra.mxu0 0.0
      %6361 = vmatprep.subr.mxu0 0.0
      %6362 = vmatpush1.msra.mxu0 0.0
      %6363 = vmatprep.subr.mxu0 0.0
      %6364 = vmatpush1.msra.mxu0 0.0
      %6365 = vmatprep.subr.mxu0 0.0
      %6366 = vmatpush1.msra.mxu0 0.0
      %6367 = vmatprep.subr.mxu0 0.0
      %6368 = vmatpush1.msra.mxu0 0.0
      %6369 = vmatprep.subr.mxu0 0.0
      %6370 = vmatpush1.msra.mxu0 0.0
      %6371 = vmatprep.subr.mxu0 0.0
      %6372 = vmatpush1.msra.mxu0 %v6255
      %6373 = vmatprep.subr.mxu0 0.0
      %6374 = vmatpush1.msra.mxu0 %v6254
      %6375 = vmatprep.subr.mxu0 0.0
      %6376 = vmatpush1.msra.mxu0 %v6253
      %6377 = vmatprep.subr.mxu0 0.0
      %6378 = vmatpush1.msra.mxu0 %v6252
      %6379 = vmatprep.subr.mxu0 0.0
      %6380 = vmatpush1.msra.mxu0 %v6251
      %6381 = vmatprep.subr.mxu0 0.0
      %6382 = vmatpush1.msra.mxu0 %v6250
      %6383 = vmatprep.subr.mxu0 0.0
      %6384 = vmatpush1.msra.mxu0 %v6249
      %6385 = vmatprep.subr.mxu0 0.0
      %6386 = vmatpush1.msra.mxu0 %v6248
      %6387 = vmatprep.subr.mxu0 0.0
      %6388 = vmatpush2.msra.mxu0 0.0
      %6389 = vmatprep.subr.mxu0 0.0
      %6390 = vmatpush2.msra.mxu0 0.0
      %6391 = vmatprep.subr.mxu0 0.0
      %6392 = vmatpush2.msra.mxu0 0.0
      %6393 = vmatprep.subr.mxu0 0.0
      %6394 = vmatpush2.msra.mxu0 0.0
      %6395 = vmatprep.subr.mxu0 0.0
      %6396 = vmatpush2.msra.mxu0 0.0
      %6397 = vmatprep.subr.mxu0 0.0
      %6398 = vmatpush2.msra.mxu0 0.0
      %6399 = vmatprep.subr.mxu0 0.0
      %6400 = vmatpush2.msra.mxu0 0.0
      %6401 = vmatprep.subr.mxu0 0.0
      %6402 = vmatpush2.msra.mxu0 0.0
      %6403 = vmatprep.subr.mxu0 0.0
      %6404 = vmatpush2.msra.mxu0 0.0
      %6405 = vmatprep.subr.mxu0 0.0
      %6406 = vmatpush2.msra.mxu0 0.0
      %6407 = vmatprep.subr.mxu0 0.0
      %6408 = vmatpush2.msra.mxu0 0.0
      %6409 = vmatprep.subr.mxu0 0.0
      %6410 = vmatpush2.msra.mxu0 0.0
      %6411 = vmatprep.subr.mxu0 0.0
      %6412 = vmatpush2.msra.mxu0 0.0
      %6413 = vmatprep.subr.mxu0 0.0
      %6414 = vmatpush2.msra.mxu0 0.0
      %6415 = vmatprep.subr.mxu0 0.0
      %6416 = vmatpush2.msra.mxu0 0.0
      %6417 = vmatprep.subr.mxu0 0.0
      %6418 = vmatpush2.msra.mxu0 0.0
      %6419 = vmatprep.mubr.f32.mxu0 0.0
      %6420 = vmatmul.mubr.f32.gmra.mxu0 %v6350
      %v6421 = vpop.f32.mrf.mxu0
      %v6422 = vadd.f32 %v6348, %v6421
      %v6423 = vpop.f32.mrf.mxu0
      %6424 = vmatprep.mubr.f32.mxu0 0.0
      %6425 = vmatmul.mubr.f32.gmra.mxu0 %v6353
      %v6426 = vpop.f32.mrf.mxu0
      %v6427 = vadd.f32 %v6348, %v6426
      %v6428 = vpop.f32.mrf.mxu0
      %6429 = vdwg.mxu0
      %v6430 = vadd.f32 %v6238, %v6422
      %v6431 = vadd.f32 %v6239, %v6427
      %v6432 = vsel %vm613, %v6430, 0.0
      %6433 = vadd.xlane.f32.xlu0 %v6432
      %v6434 = vpop.xlane.xlu0 %6433
      %v6435 = vsel %vm613, %v6431, 0.0
      %6436 = vadd.xlane.f32.xlu0 %v6435
      %v6437 = vpop.xlane.xlu0 %6436
      %v6438 = vmul.f32 %v6434, %v1809
      %v6439 = vmul.f32 %v6437, %v1809
      %v6440 = vsub.f32 %v6430, %v6438
      %v6441 = vsub.f32 %v6431, %v6439
      %v6442 = vmul.f32 %v6440, %v6440
      %v6443 = vmul.f32 %v6441, %v6441
      %v6444 = vsel %vm613, %v6442, 0.0
      %6445 = vadd.xlane.f32.xlu0 %v6444
      %v6446 = vpop.xlane.xlu0 %6445
      %v6447 = vsel %vm613, %v6443, 0.0
      %6448 = vadd.xlane.f32.xlu0 %v6447
      %v6449 = vpop.xlane.xlu0 %6448
      %v6450 = vmul.f32 %v6446, %v1809
      %v6451 = vmul.f32 %v6449, %v1809
      %v6452 = vadd.f32 %v6450, 1e-05
      %v6453 = vadd.f32 %v6451, 1e-05
      %v6454 = vrsqrt.pop %v6452
      %v6455 = vrsqrt.pop %v6453
      %v6456 = vmul.f32 %v6440, %v6454
      %v6457 = vmul.f32 %v6441, %v6455
      %v6458 = vlaneseq
      %v6459 = vshrl.u32 %v6458, 7
      %v6460 = vsub.s32 5, %v6459
      %v6461 = vrot.slane %v3763, %v6460
      %v6462 = vmul.f32 %v6456, %v6461
      %v6463 = vmul.f32 %v6457, %v6461
      %v6464 = vlaneseq
      %v6465 = vshrl.u32 %v6464, 7
      %v6466 = vsub.s32 6, %v6465
      %v6467 = vrot.slane %v3763, %v6466
      %v6468 = vadd.f32 %v6462, %v6467
      %v6469 = vadd.f32 %v6463, %v6467
      %v6470 = vsel %vm613, %v6468, 0.0
      %6471 = vadd.xlane.f32.xlu0 %v6470
      %v6472 = vpop.xlane.xlu0 %6471
      %v6473 = vsel %vm613, %v6469, 0.0
      %6474 = vadd.xlane.f32.xlu0 %v6473
      %v6475 = vpop.xlane.xlu0 %6474
      %v6476 = vmul.f32 %v6472, %v1809
      %v6477 = vmul.f32 %v6475, %v1809
      %v6478 = vsub.f32 %v6468, %v6476
      %v6479 = vsub.f32 %v6469, %v6477
      %v6480 = vmul.f32 %v6478, %v6478
      %v6481 = vmul.f32 %v6479, %v6479
      %v6482 = vsel %vm613, %v6480, 0.0
      %6483 = vadd.xlane.f32.xlu0 %v6482
      %v6484 = vpop.xlane.xlu0 %6483
      %v6485 = vsel %vm613, %v6481, 0.0
      %6486 = vadd.xlane.f32.xlu0 %v6485
      %v6487 = vpop.xlane.xlu0 %6486
      %v6488 = vmul.f32 %v6484, %v1809
      %v6489 = vmul.f32 %v6487, %v1809
      %v6490 = vadd.f32 %v6488, 1e-05
      %v6491 = vadd.f32 %v6489, 1e-05
      %v6492 = vrsqrt.pop %v6490
      %v6493 = vrsqrt.pop %v6491
      %v6494 = vmul.f32 %v6478, %v6492
      %v6495 = vmul.f32 %v6479, %v6493
      %v6496 = vlaneseq
      %v6497 = vshrl.u32 %v6496, 7
      %v6498 = vsub.s32 2, %v6497
      %v6499 = vrot.slane %v482, %v6498
      %v6500 = vmul.f32 %v6494, %v6499
      %v6501 = vmul.f32 %v6495, %v6499
      %v6502 = vlaneseq
      %v6503 = vshrl.u32 %v6502, 7
      %v6504 = vsub.s32 3, %v6503
      %v6505 = vrot.slane %v482, %v6504
      %v6506 = vadd.f32 %v6500, %v6505
      %v6507 = vadd.f32 %v6501, %v6505
      %v6508 = vld [vmem:[%s11] sm:$0xff]
      %v6509 = vld [vmem:[%s11 + $0x8] sm:$0xff]
      %v6510 = vld [vmem:[%s11 + $0x10] sm:$0xff]
      %v6511 = vld [vmem:[%s11 + $0x18] sm:$0xff]
      %v6512 = vlaneseq
      %v6513 = vshrl.u32 %v6512, 7
      %v6514 = vsub.s32 4, %v6513
      %v6515 = vrot.slane %v482, %v6514
      %v6517 = vsel %vm613, %v6506, 0
      %v6520 = vsel %vm613, %v6507, 0
      %6522 = vmatprep.subr.mxu0 0.0
      %6523 = vmatpush1.msra.mxu0 0.0
      %6524 = vmatprep.subr.mxu0 0.0
      %6525 = vmatpush1.msra.mxu0 0.0
      %6526 = vmatprep.subr.mxu0 0.0
      %6527 = vmatpush1.msra.mxu0 0.0
      %6528 = vmatprep.subr.mxu0 0.0
      %6529 = vmatpush1.msra.mxu0 0.0
      %6530 = vmatprep.subr.mxu0 0.0
      %6531 = vmatpush1.msra.mxu0 0.0
      %6532 = vmatprep.subr.mxu0 0.0
      %6533 = vmatpush1.msra.mxu0 0.0
      %6534 = vmatprep.subr.mxu0 0.0
      %6535 = vmatpush1.msra.mxu0 0.0
      %6536 = vmatprep.subr.mxu0 0.0
      %6537 = vmatpush1.msra.mxu0 0.0
      %6538 = vmatprep.subr.mxu0 0.0
      %6539 = vmatpush1.msra.mxu0 0.0
      %6540 = vmatprep.subr.mxu0 0.0
      %6541 = vmatpush1.msra.mxu0 0.0
      %6542 = vmatprep.subr.mxu0 0.0
      %6543 = vmatpush1.msra.mxu0 0.0
      %6544 = vmatprep.subr.mxu0 0.0
      %6545 = vmatpush1.msra.mxu0 0.0
      %6546 = vmatprep.subr.mxu0 0.0
      %6547 = vmatpush1.msra.mxu0 %v6511
      %6548 = vmatprep.subr.mxu0 0.0
      %6549 = vmatpush1.msra.mxu0 %v6510
      %6550 = vmatprep.subr.mxu0 0.0
      %6551 = vmatpush1.msra.mxu0 %v6509
      %6552 = vmatprep.subr.mxu0 0.0
      %6553 = vmatpush1.msra.mxu0 %v6508
      %6554 = vmatprep.subr.mxu0 0.0
      %6555 = vmatpush2.msra.mxu0 0.0
      %6556 = vmatprep.subr.mxu0 0.0
      %6557 = vmatpush2.msra.mxu0 0.0
      %6558 = vmatprep.subr.mxu0 0.0
      %6559 = vmatpush2.msra.mxu0 0.0
      %6560 = vmatprep.subr.mxu0 0.0
      %6561 = vmatpush2.msra.mxu0 0.0
      %6562 = vmatprep.subr.mxu0 0.0
      %6563 = vmatpush2.msra.mxu0 0.0
      %6564 = vmatprep.subr.mxu0 0.0
      %6565 = vmatpush2.msra.mxu0 0.0
      %6566 = vmatprep.subr.mxu0 0.0
      %6567 = vmatpush2.msra.mxu0 0.0
      %6568 = vmatprep.subr.mxu0 0.0
      %6569 = vmatpush2.msra.mxu0 0.0
      %6570 = vmatprep.subr.mxu0 0.0
      %6571 = vmatpush2.msra.mxu0 0.0
      %6572 = vmatprep.subr.mxu0 0.0
      %6573 = vmatpush2.msra.mxu0 0.0
      %6574 = vmatprep.subr.mxu0 0.0
      %6575 = vmatpush2.msra.mxu0 0.0
      %6576 = vmatprep.subr.mxu0 0.0
      %6577 = vmatpush2.msra.mxu0 0.0
      %6578 = vmatprep.subr.mxu0 0.0
      %6579 = vmatpush2.msra.mxu0 0.0
      %6580 = vmatprep.subr.mxu0 0.0
      %6581 = vmatpush2.msra.mxu0 0.0
      %6582 = vmatprep.subr.mxu0 0.0
      %6583 = vmatpush2.msra.mxu0 0.0
      %6584 = vmatprep.subr.mxu0 0.0
      %6585 = vmatpush2.msra.mxu0 0.0
      %6586 = vmatprep.mubr.f32.mxu0 0.0
      %6587 = vmatmul.mubr.f32.gmra.mxu0 %v6517
      %v6588 = vpop.f32.mrf.mxu0
      %v6589 = vadd.f32 %v6515, %v6588
      %v6590 = vpop.f32.mrf.mxu0
      %6591 = vmatprep.mubr.f32.mxu0 0.0
      %6592 = vmatmul.mubr.f32.gmra.mxu0 %v6520
      %v6593 = vpop.f32.mrf.mxu0
      %v6594 = vadd.f32 %v6515, %v6593
      %v6595 = vpop.f32.mrf.mxu0
      %6596 = vdwg.mxu0
      %vm6597 = vcmask 31744
      %6598 = vst.msk [vmem:[%s468] sm:$0xff] %vm6597, %v6589
      %6599 = vst.msk [vmem:[%s468 + $0x8] sm:$0xff] %vm6597, %v6594
      %p6600 = scmp.lt.s32.totalorder %s25, 1
      %s6601 = scalar_select %p6600, %s25, 1
      %s6602 = smul.addr %s6601, 2
      %s6603 = smul.addr %s6602, 8
      %s6604 = scalar_lea.vmem %s12, %s6603
      %p6605 = scmp.lt.s32.totalorder %s25, 1
      %s6606 = scalar_select %p6605, %s25, 1
      %s6607 = smul.addr %s6606, 2
      %s6608 = smul.addr %s6607, 8
      %s6609 = scalar_lea.vmem %s13, %s6608
      // Predicated region
      $region69: #{model_forward.1} parent=67 // pred_check
        %p6610 = pneg %p305
      $region70: #{model_forward.1} parent=67 // pred_check_branch
        %6612 = sbr.rel (%p6610) target = $region72
      $region71: #{model_forward.1} parent=67 // pred_region
        _
      $region72: #{model_forward.1} parent=67 // pred_fallthru
        _
      // Predicated region
      $region73: #{model_forward.1} parent=67 // pred_check
        %p6613 = pneg %p331
      $region74: #{model_forward.1} parent=67 // pred_check_branch
        %6615 = sbr.rel (%p6613) target = $region76
      $region75: #{model_forward.1} parent=67 // pred_region
        _
      $region76: #{model_forward.1} parent=67 // pred_fallthru
        _
    $region68: #{model_forward.1} parent=5 // pred_fallthru
      _
    %p6616 = scmp.le.s32.totalorder 2, %s20
    // Predicated region
    $region77: #{model_forward.1} parent=5 // pred_check
      %p6617 = pneg %p6616
    $region78: #{model_forward.1} parent=5 // pred_check_branch
      %6619 = sbr.rel (%p6617) target = $region80
    $region79: #{model_forward.1} parent=5 // pred_region
      %s6620 = ssub.s32 %s20, 2
      // Predicated region
      $region81: #{model_forward.1} parent=79 // pred_check
        %p6621 = pneg %p311
      $region82: #{model_forward.1} parent=79 // pred_check_branch
        %6623 = sbr.rel (%p6621) target = $region84
      $region83: #{model_forward.1} parent=79 // pred_region
        %p6624 = scmp.lt.s32.totalorder %s26, 1
        %s6625 = scalar_select %p6624, %s26, 1
        %s6626 = smul.addr %s6625, 2
        %s6627 = smul.addr %s6626, 8
        %s6628 = scalar_lea.vmem %s12, %s6627
      $region84: #{model_forward.1} parent=79 // pred_fallthru
        _
      // Predicated region
      $region85: #{model_forward.1} parent=79 // pred_check
        %p6629 = pneg %p337
      $region86: #{model_forward.1} parent=79 // pred_check_branch
        %6631 = sbr.rel (%p6629) target = $region88
      $region87: #{model_forward.1} parent=79 // pred_region
        %p6632 = scmp.lt.s32.totalorder %s26, 1
        %s6633 = scalar_select %p6632, %s26, 1
        %s6634 = smul.addr %s6633, 2
        %s6635 = smul.addr %s6634, 8
        %s6636 = scalar_lea.vmem %s13, %s6635
      $region88: #{model_forward.1} parent=79 // pred_fallthru
        _
    $region80: #{model_forward.1} parent=5 // pred_fallthru
      _
  $region6: #{model_forward.1} parent=0 // loop_footer
    %s24 = sadd.s32 1, %s20
  $region7: #{model_forward.1} parent=0 // loop_footer_branch
    %19 = sbr.rel target = $region3
  $region8: #{model_forward.1} parent=0 // loop_exit
    _

</llo_original>
